<compile_context>
chip_gen: v7x
topology: tpu7x:2x2x1
jax: 0.10.0
libtpu: 0.0.40
codegen_flags: <defaults>
</compile_context>

<pallas_src>
import jax
import jax.numpy as jnp
from jax import lax
from jax.experimental import pallas as pl
from jax.experimental.pallas import tpu as pltpu


# ------------------------------ fused kernel ----------------------------------
def _make_fused_kernel(n_enc, n_dec, edge_hidden, Bb, N, L, T):
    """Build the fused forward kernel for a fixed layer structure (static at trace)."""
    eps_scaled = 1e-5 * (L - 1)   # the two /(L-1) factors cancel; fold them into eps

    def kernel(*refs):
        # ref layout: x | (w,b)*n_enc | (w,b)*n_dec | w1e,b1e,w2e,b2e (SMEM) | y,g,xr
        idx = 0
        x_ref = refs[idx]; idx += 1
        enc = refs[idx: idx + 2 * n_enc]; idx += 2 * n_enc
        dec = refs[idx: idx + 2 * n_dec]; idx += 2 * n_dec
        w1e_ref, b1e_ref, w2e_ref, b2e_ref = refs[idx: idx + 4]; idx += 4
        y_ref, g_ref, xr_ref = refs[idx: idx + 3]

        M = Bb * N

        # ---------------- encoder MLP: single (M, ·) matmuls, bf16 MXU / f32 acc ----
        h = x_ref[...].reshape(M, T)                                  # (M, T) f32
        for li in range(n_enc):
            w_ref, b_ref = enc[2 * li], enc[2 * li + 1]
            h = jnp.dot(h.astype(jnp.bfloat16), w_ref[...],
                        preferred_element_type=jnp.float32) + b_ref[...]
            if li < n_enc - 1:
                h = jnp.tanh(h)
        y = h                                                         # (M, L) f32

        # ---------------- pearson, batched over the Bb tile -------------------------
        y3 = y.reshape(Bb, N, L)
        mean = jnp.mean(y3, axis=-1, keepdims=True)
        yc = y3 - mean
        sq = jnp.sum(yc * yc, axis=-1, keepdims=True)                 # (L-1)*var
        s_raw = jnp.sqrt(sq)                                          # (Bb, N, 1)
        cov_raw = jnp.einsum('bnl,bml->bnm', yc, yc,
                             preferred_element_type=jnp.float32)      # (L-1)*cov
        # VPU broadcast outer product (no K=1 MXU matmul); divide via EUP reciprocal.
        denom = s_raw * jnp.swapaxes(s_raw, -1, -2) + eps_scaled
        corr = cov_raw * pl.reciprocal(denom, approx=True)            # (Bb, N, N)
        row = lax.broadcasted_iota(jnp.int32, (Bb, N, N), 1)
        col = lax.broadcasted_iota(jnp.int32, (Bb, N, N), 2)
        corr = jnp.where(row == col, 0.0, corr)

        # ---------------- edge func [1, H, 1] as VPU/EUP elementwise ----------------
        # out(g) = sum_h w2[h] * tanh(g * w1[h] + b1[h]) + b2, on stacked (M, N) corr.
        cflat = corr.reshape(M, N)
        w1 = [w1e_ref[hh] for hh in range(edge_hidden)]               # hoisted scalar
        b1 = [b1e_ref[hh] for hh in range(edge_hidden)]               # reads (SMEM)
        w2 = [w2e_ref[hh] for hh in range(edge_hidden)]
        acc = w2[0] * jnp.tanh(cflat * w1[0] + b1[0])
        for hh in range(1, edge_hidden):
            acc = acc + w2[hh] * jnp.tanh(cflat * w1[hh] + b1[hh])
        edge = acc + b2e_ref[0]                                       # (M, N)

        # ---------------- decoder MLP ------------------------------------------------
        h = y
        for li in range(n_dec):
            w_ref, b_ref = dec[2 * li], dec[2 * li + 1]
            h = jnp.dot(h.astype(jnp.bfloat16), w_ref[...],
                        preferred_element_type=jnp.float32) + b_ref[...]
            if li < n_dec - 1:
                h = jnp.tanh(h)
        x_recon = h                                                   # (M, T)

        # ---------------- natural-shaped (unpadded) writebacks ----------------------
        y_ref[...] = y.reshape(Bb, N, L).astype(y_ref.dtype)
        g_ref[...] = edge.reshape(Bb, N, N).astype(g_ref.dtype)
        xr_ref[...] = x_recon.reshape(Bb, N, T).astype(xr_ref.dtype)

    return kernel


def _pick_batch_tile(B, N):
    """Batch tile: M = Bb*N >= 256 for the MXU, capped for VMEM, grid >= 2 if possible."""
    Bb = min(B, max(1, pl.cdiv(256, N)))     # MXU M target (>=128 suffices on v5e)
    Bb = min(Bb, 512)                        # VMEM headroom (v7x: 64 MiB phys / 32 MiB scoped)
    if Bb == B and B > 1:                    # keep grid >= 2 so both TensorCores get work
        Bb = pl.cdiv(B, 2)
    return Bb


# ------------------------------ forward wrapper --------------------------------
def edge_embedding_forward(x, node_params, node_inv_params, edge_params, batch_tile=None):
    """x: (B, N, T) -> (y (B,N,L), g_e (B, N*(N-1)/2), x_recon (B,N,T))."""
    B, N, T = x.shape
    n_enc = len(node_params)
    n_dec = len(node_inv_params)
    L = node_params[-1][0].shape[1]
    assert node_inv_params[0][0].shape[0] == L, "Mismatched latent dimension"

    # edge_func must be [1, H, 1] for the elementwise VPU path
    assert len(edge_params) == 2, "edge_func assumed to be a 2-layer [1,H,1] MLP"
    (w1e, b1e), (w2e, b2e) = edge_params
    assert w1e.shape[0] == 1 and w2e.shape[1] == 1
    H = w1e.shape[1]

    Bb = batch_tile if batch_tile is not None else _pick_batch_tile(B, N)
    Bpad = pl.cdiv(B, Bb) * Bb
    xp = x if Bpad == B else jnp.pad(x, ((0, Bpad - B), (0, 0), (0, 0)))

    kernel = _make_fused_kernel(n_enc, n_dec, H, Bb, N, L, T)

    def _whole_spec(shape):
        return pl.BlockSpec(shape, lambda b, _n=len(shape): (0,) * _n)

    operands = [xp]
    in_specs = [pl.BlockSpec((Bb, N, T), lambda b: (b, 0, 0))]

    # MLP weights in bf16 (f32 accumulate in-kernel), biases kept f32
    for (w, bvec) in list(node_params) + list(node_inv_params):
        wb = w.astype(jnp.bfloat16)
        b2d = bvec.reshape(1, -1).astype(jnp.float32)
        operands += [wb, b2d]
        in_specs += [_whole_spec(wb.shape), _whole_spec(b2d.shape)]

    # edge-func params: flattened 1-D f32 arrays in SMEM (cheap scalar reads in-kernel)
    for arr in (w1e.reshape(-1), b1e.reshape(-1), w2e.reshape(-1), b2e.reshape(-1)):
        operands.append(arr.astype(jnp.float32))
        in_specs.append(pl.BlockSpec(memory_space=pltpu.MemorySpace.SMEM))

    out_shapes = (
        jax.ShapeDtypeStruct((Bpad, N, L), x.dtype),
        jax.ShapeDtypeStruct((Bpad, N, N), x.dtype),
        jax.ShapeDtypeStruct((Bpad, N, T), x.dtype),
    )
    out_specs = [
        pl.BlockSpec((Bb, N, L), lambda b: (b, 0, 0)),
        pl.BlockSpec((Bb, N, N), lambda b: (b, 0, 0)),
        pl.BlockSpec((Bb, N, T), lambda b: (b, 0, 0)),
    ]

    y, g_mat, x_recon = pl.pallas_call(
        kernel,
        out_shape=out_shapes,
        grid=(Bpad // Bb,),
        in_specs=in_specs,
        out_specs=out_specs,
        compiler_params=pltpu.CompilerParams(dimension_semantics=("parallel",)),
    )(*operands)

    y = y[:B]
    x_recon = x_recon[:B]

    # upper-triangle extraction once on the final tiny result (same row-major order
    # as torch.triu_indices(N, N, offset=1)); elementwise edge_func commutes with it.
    iu, ju = jnp.triu_indices(N, k=1)
    g_e = g_mat[:B, iu, ju]                        # (B, E), E = N*(N-1)/2
    return y, g_e, x_recon


# ----------------------------- parameter setup ----------------------------------
def init_mlp(key, widths):
    params = []
    for i in range(len(widths) - 1):
        key, kw = jax.random.split(key)
        w = 0.1 * jax.random.normal(kw, (widths[i], widths[i + 1]), jnp.float32)
        b = jnp.zeros((widths[i + 1],), jnp.float32)
        params.append((w, b))
    return key, params


# ----------------------------- pure-JAX reference --------------------------------
def _reference_forward(x, node_params, node_inv_params, edge_params):
    def mlp(h, params):
        for i, (w, b) in enumerate(params):
            h = jnp.dot(h, w, precision=lax.Precision.HIGHEST) + b
            if i < len(params) - 1:
                h = jnp.tanh(h)
        return h

    y = mlp(x, node_params)
    Lr = y.shape[-1]
    m = jnp.mean(y, axis=-1, keepdims=True)
    yc = y - m
    s = jnp.sqrt(jnp.sum(yc * yc, axis=-1, keepdims=True) / (Lr - 1))
    cov = jnp.einsum("bnl,bml->bnm", yc, yc, precision=lax.Precision.HIGHEST) / (Lr - 1)
    denom = s @ jnp.swapaxes(s, -1, -2) + 1e-5
    corr = cov / denom
    eye = jnp.eye(y.shape[1], dtype=bool)
    corr = jnp.where(eye, 0.0, corr)
    iu, ju = jnp.triu_indices(y.shape[1], k=1)
    g = corr[:, iu, ju]
    g = mlp(g[..., None], edge_params)[..., 0]
    x_recon = mlp(y, node_inv_params)
    return y, g, x_recon


# ---------------------------------- main ------------------------------------------
if __name__ == "__main__":
    B, N, T, L = 64, 8, 16, 16                     # Bb*N = 256 fills the MXU M dim
    encoder_width_list = [T, 32, L]
    decoder_width_list = [L, 32, T]
    edge_func_width_list = [1, 8, 1]

    key = jax.random.PRNGKey(0)
    key, kx = jax.random.split(key)
    x = jax.random.normal(kx, (B, N, T), jnp.float32)

    key, node_params = init_mlp(key, encoder_width_list)
    key, node_inv_params = init_mlp(key, decoder_width_list)
    key, edge_params = init_mlp(key, edge_func_width_list)

    y, g_e, x_recon = edge_embedding_forward(x, node_params, node_inv_params, edge_params)
    jax.block_until_ready((y, g_e, x_recon))

    assert y.shape == (B, N, L)
    assert g_e.shape == (B, N * (N - 1) // 2)
    assert x_recon.shape == (B, N, T)

    # numerical check against a pure-JAX reference (loose tol: bf16 MXU inputs)
    y_r, g_r, xr_r = _reference_forward(x, node_params, node_inv_params, edge_params)
    assert jnp.allclose(y, y_r, rtol=3e-2, atol=3e-2)
    assert jnp.allclose(g_e, g_r, rtol=3e-2, atol=3e-2)
    assert jnp.allclose(x_recon, xr_r, rtol=3e-2, atol=3e-2)

    # TODO(synk): generic `activation` arg of the PyTorch module is assumed to be tanh.
    print("KERNEL_OK")
</pallas_src>

<mosaic_0001>
module attributes {stable_mosaic.version = 11 : i64} {
  func.func @kernel(%arg0: i32, %arg1: memref<32x8x16xf32, #tpu.memory_space<vmem>>, %arg2: memref<16x32xbf16, #tpu.memory_space<vmem>>, %arg3: memref<1x32xf32, #tpu.memory_space<vmem>>, %arg4: memref<32x16xbf16, #tpu.memory_space<vmem>>, %arg5: memref<1x16xf32, #tpu.memory_space<vmem>>, %arg6: memref<16x32xbf16, #tpu.memory_space<vmem>>, %arg7: memref<1x32xf32, #tpu.memory_space<vmem>>, %arg8: memref<32x16xbf16, #tpu.memory_space<vmem>>, %arg9: memref<1x16xf32, #tpu.memory_space<vmem>>, %arg10: memref<8xf32, #tpu.memory_space<smem>>, %arg11: memref<8xf32, #tpu.memory_space<smem>>, %arg12: memref<8xf32, #tpu.memory_space<smem>>, %arg13: memref<1xf32, #tpu.memory_space<smem>>, %arg14: memref<32x8x16xf32, #tpu.memory_space<vmem>>, %arg15: memref<32x8x8xf32, #tpu.memory_space<vmem>>, %arg16: memref<32x8x16xf32, #tpu.memory_space<vmem>>) attributes {dimension_semantics = [#tpu.dimension_semantics<parallel>], iteration_bounds = array<i64: 2>, scalar_prefetch = 0 : i64, scratch_operands = 0 : i64, tpu.core_type = #tpu.core_type<tc>, window_params = [{transform_indices = @transform_0, window_bounds = array<i64: 32, 8, 16>}, {pipeline_mode = #tpu.pipeline_mode<synchronous>, transform_indices = @transform_1, window_bounds = array<i64: 16, 32>}, {pipeline_mode = #tpu.pipeline_mode<synchronous>, transform_indices = @transform_2, window_bounds = array<i64: 1, 32>}, {pipeline_mode = #tpu.pipeline_mode<synchronous>, transform_indices = @transform_3, window_bounds = array<i64: 32, 16>}, {pipeline_mode = #tpu.pipeline_mode<synchronous>, transform_indices = @transform_4, window_bounds = array<i64: 1, 16>}, {pipeline_mode = #tpu.pipeline_mode<synchronous>, transform_indices = @transform_5, window_bounds = array<i64: 16, 32>}, {pipeline_mode = #tpu.pipeline_mode<synchronous>, transform_indices = @transform_6, window_bounds = array<i64: 1, 32>}, {pipeline_mode = #tpu.pipeline_mode<synchronous>, transform_indices = @transform_7, window_bounds = array<i64: 32, 16>}, {pipeline_mode = #tpu.pipeline_mode<synchronous>, transform_indices = @transform_8, window_bounds = array<i64: 1, 16>}, {transform_indices = @transform_9, window_bounds = array<i64: 8>}, {transform_indices = @transform_10, window_bounds = array<i64: 8>}, {transform_indices = @transform_11, window_bounds = array<i64: 8>}, {transform_indices = @transform_12, window_bounds = array<i64: 1>}, {transform_indices = @transform_13, window_bounds = array<i64: 32, 8, 16>}, {transform_indices = @transform_14, window_bounds = array<i64: 32, 8, 8>}, {transform_indices = @transform_15, window_bounds = array<i64: 32, 8, 16>}]} {
    %c0 = arith.constant 0 : index
    %c0_0 = arith.constant 0 : index
    %c0_1 = arith.constant 0 : index
    %0 = vector.load %arg1[%c0, %c0_0, %c0_1] : memref<32x8x16xf32, #tpu.memory_space<vmem>>, vector<32x8x16xf32>
    %1 = vector.shape_cast %0 : vector<32x8x16xf32> to vector<256x16xf32>
    %2 = arith.truncf %1 : vector<256x16xf32> to vector<256x16xbf16>
    %c0_2 = arith.constant 0 : index
    %c0_3 = arith.constant 0 : index
    %3 = vector.load %arg2[%c0_2, %c0_3] : memref<16x32xbf16, #tpu.memory_space<vmem>>, vector<16x32xbf16>
    %cst = arith.constant dense<0.000000e+00> : vector<256x32xf32>
    %4 = tpu.matmul %2, %3, %cst {dimension_numbers = #tpu.dot_dimension_numbers<[1], [0], [0], [1], [0, 0, 1, 1], [], []>} : vector<256x16xbf16>, vector<16x32xbf16>, vector<256x32xf32> -> vector<256x32xf32>
    %c0_4 = arith.constant 0 : index
    %c0_5 = arith.constant 0 : index
    %5 = vector.load %arg3[%c0_4, %c0_5] : memref<1x32xf32, #tpu.memory_space<vmem>>, vector<1x32xf32>
    %6 = vector.broadcast %5 : vector<1x32xf32> to vector<256x32xf32>
    %7 = arith.addf %4, %6 : vector<256x32xf32>
    %8 = math.tanh %7 : vector<256x32xf32>
    %9 = arith.truncf %8 : vector<256x32xf32> to vector<256x32xbf16>
    %c0_6 = arith.constant 0 : index
    %c0_7 = arith.constant 0 : index
    %10 = vector.load %arg4[%c0_6, %c0_7] : memref<32x16xbf16, #tpu.memory_space<vmem>>, vector<32x16xbf16>
    %cst_8 = arith.constant dense<0.000000e+00> : vector<256x16xf32>
    %11 = tpu.matmul %9, %10, %cst_8 {dimension_numbers = #tpu.dot_dimension_numbers<[1], [0], [0], [1], [0, 0, 1, 1], [], []>} : vector<256x32xbf16>, vector<32x16xbf16>, vector<256x16xf32> -> vector<256x16xf32>
    %c0_9 = arith.constant 0 : index
    %c0_10 = arith.constant 0 : index
    %12 = vector.load %arg5[%c0_9, %c0_10] : memref<1x16xf32, #tpu.memory_space<vmem>>, vector<1x16xf32>
    %13 = vector.broadcast %12 : vector<1x16xf32> to vector<256x16xf32>
    %14 = arith.addf %11, %13 : vector<256x16xf32>
    %15 = vector.shape_cast %14 : vector<256x16xf32> to vector<32x8x16xf32>
    %cst_11 = arith.constant dense<0.000000e+00> : vector<32x8xf32>
    %16 = vector.multi_reduction <add>, %15, %cst_11 [2] : vector<32x8x16xf32> to vector<32x8xf32>
    %17 = vector.shape_cast %16 : vector<32x8xf32> to vector<32x8x1xf32>
    %cst_12 = arith.constant 1.600000e+01 : f32
    %18 = vector.broadcast %cst_12 : f32 to vector<32x8x1xf32>
    %19 = arith.divf %17, %18 : vector<32x8x1xf32>
    %20 = vector.broadcast %19 : vector<32x8x1xf32> to vector<32x8x16xf32>
    %21 = arith.subf %15, %20 : vector<32x8x16xf32>
    %22 = arith.mulf %21, %21 : vector<32x8x16xf32>
    %cst_13 = arith.constant dense<0.000000e+00> : vector<32x8xf32>
    %23 = vector.multi_reduction <add>, %22, %cst_13 [2] : vector<32x8x16xf32> to vector<32x8xf32>
    %24 = vector.shape_cast %23 : vector<32x8xf32> to vector<32x8x1xf32>
    %25 = math.sqrt %24 : vector<32x8x1xf32>
    "tpu.trace_start"() <{level = 10 : i32, message = "bnl,bml->bnm"}> : () -> ()
    %cst_14 = arith.constant dense<0.000000e+00> : vector<32x8x8xf32>
    %26 = tpu.matmul %21, %21, %cst_14 {dimension_numbers = #tpu.dot_dimension_numbers<[2], [2], [1], [1], [0, 0, 0, 1, 1, 1], [0], [0]>} : vector<32x8x16xf32>, vector<32x8x16xf32>, vector<32x8x8xf32> -> vector<32x8x8xf32>
    "tpu.trace_stop"() : () -> ()
    %27 = tpu.transpose %25, [0, 2, 1] : vector<32x8x1xf32> -> vector<32x1x8xf32>
    %28 = vector.broadcast %25 : vector<32x8x1xf32> to vector<32x8x8xf32>
    %29 = vector.broadcast %27 : vector<32x1x8xf32> to vector<32x8x8xf32>
    %30 = arith.mulf %28, %29 : vector<32x8x8xf32>
    %cst_15 = arith.constant 1.500000e-04 : f32
    %31 = vector.broadcast %cst_15 : f32 to vector<32x8x8xf32>
    %32 = arith.addf %30, %31 : vector<32x8x8xf32>
    %33 = tpu.reciprocal %32 {approx = true} : vector<32x8x8xf32> -> vector<32x8x8xf32>
    %34 = arith.mulf %26, %33 : vector<32x8x8xf32>
    %35 = tpu.iota {dimensions = array<i32: 1>} : vector<32x8x8xi32>
    %36 = tpu.iota {dimensions = array<i32: 2>} : vector<32x8x8xi32>
    %37 = arith.cmpi eq, %35, %36 : vector<32x8x8xi32>
    %cst_16 = arith.constant 0.000000e+00 : f32
    %38 = vector.broadcast %cst_16 : f32 to vector<32x8x8xf32>
    %39 = arith.select %37, %38, %34 : vector<32x8x8xi1>, vector<32x8x8xf32>
    %40 = vector.shape_cast %39 : vector<32x8x8xf32> to vector<256x8xf32>
    %c0_17 = arith.constant 0 : index
    %41 = memref.load %arg10[%c0_17] : memref<8xf32, #tpu.memory_space<smem>>
    %c1 = arith.constant 1 : index
    %42 = memref.load %arg10[%c1] : memref<8xf32, #tpu.memory_space<smem>>
    %c2 = arith.constant 2 : index
    %43 = memref.load %arg10[%c2] : memref<8xf32, #tpu.memory_space<smem>>
    %c3 = arith.constant 3 : index
    %44 = memref.load %arg10[%c3] : memref<8xf32, #tpu.memory_space<smem>>
    %c4 = arith.constant 4 : index
    %45 = memref.load %arg10[%c4] : memref<8xf32, #tpu.memory_space<smem>>
    %c5 = arith.constant 5 : index
    %46 = memref.load %arg10[%c5] : memref<8xf32, #tpu.memory_space<smem>>
    %c6 = arith.constant 6 : index
    %47 = memref.load %arg10[%c6] : memref<8xf32, #tpu.memory_space<smem>>
    %c7 = arith.constant 7 : index
    %48 = memref.load %arg10[%c7] : memref<8xf32, #tpu.memory_space<smem>>
    %c0_18 = arith.constant 0 : index
    %49 = memref.load %arg11[%c0_18] : memref<8xf32, #tpu.memory_space<smem>>
    %c1_19 = arith.constant 1 : index
    %50 = memref.load %arg11[%c1_19] : memref<8xf32, #tpu.memory_space<smem>>
    %c2_20 = arith.constant 2 : index
    %51 = memref.load %arg11[%c2_20] : memref<8xf32, #tpu.memory_space<smem>>
    %c3_21 = arith.constant 3 : index
    %52 = memref.load %arg11[%c3_21] : memref<8xf32, #tpu.memory_space<smem>>
    %c4_22 = arith.constant 4 : index
    %53 = memref.load %arg11[%c4_22] : memref<8xf32, #tpu.memory_space<smem>>
    %c5_23 = arith.constant 5 : index
    %54 = memref.load %arg11[%c5_23] : memref<8xf32, #tpu.memory_space<smem>>
    %c6_24 = arith.constant 6 : index
    %55 = memref.load %arg11[%c6_24] : memref<8xf32, #tpu.memory_space<smem>>
    %c7_25 = arith.constant 7 : index
    %56 = memref.load %arg11[%c7_25] : memref<8xf32, #tpu.memory_space<smem>>
    %c0_26 = arith.constant 0 : index
    %57 = memref.load %arg12[%c0_26] : memref<8xf32, #tpu.memory_space<smem>>
    %c1_27 = arith.constant 1 : index
    %58 = memref.load %arg12[%c1_27] : memref<8xf32, #tpu.memory_space<smem>>
    %c2_28 = arith.constant 2 : index
    %59 = memref.load %arg12[%c2_28] : memref<8xf32, #tpu.memory_space<smem>>
    %c3_29 = arith.constant 3 : index
    %60 = memref.load %arg12[%c3_29] : memref<8xf32, #tpu.memory_space<smem>>
    %c4_30 = arith.constant 4 : index
    %61 = memref.load %arg12[%c4_30] : memref<8xf32, #tpu.memory_space<smem>>
    %c5_31 = arith.constant 5 : index
    %62 = memref.load %arg12[%c5_31] : memref<8xf32, #tpu.memory_space<smem>>
    %c6_32 = arith.constant 6 : index
    %63 = memref.load %arg12[%c6_32] : memref<8xf32, #tpu.memory_space<smem>>
    %c7_33 = arith.constant 7 : index
    %64 = memref.load %arg12[%c7_33] : memref<8xf32, #tpu.memory_space<smem>>
    %65 = vector.broadcast %41 : f32 to vector<256x8xf32>
    %66 = arith.mulf %40, %65 : vector<256x8xf32>
    %67 = vector.broadcast %49 : f32 to vector<256x8xf32>
    %68 = arith.addf %66, %67 : vector<256x8xf32>
    %69 = math.tanh %68 : vector<256x8xf32>
    %70 = vector.broadcast %57 : f32 to vector<256x8xf32>
    %71 = arith.mulf %70, %69 : vector<256x8xf32>
    %72 = vector.broadcast %42 : f32 to vector<256x8xf32>
    %73 = arith.mulf %40, %72 : vector<256x8xf32>
    %74 = vector.broadcast %50 : f32 to vector<256x8xf32>
    %75 = arith.addf %73, %74 : vector<256x8xf32>
    %76 = math.tanh %75 : vector<256x8xf32>
    %77 = vector.broadcast %58 : f32 to vector<256x8xf32>
    %78 = arith.mulf %77, %76 : vector<256x8xf32>
    %79 = arith.addf %71, %78 : vector<256x8xf32>
    %80 = vector.broadcast %43 : f32 to vector<256x8xf32>
    %81 = arith.mulf %40, %80 : vector<256x8xf32>
    %82 = vector.broadcast %51 : f32 to vector<256x8xf32>
    %83 = arith.addf %81, %82 : vector<256x8xf32>
    %84 = math.tanh %83 : vector<256x8xf32>
    %85 = vector.broadcast %59 : f32 to vector<256x8xf32>
    %86 = arith.mulf %85, %84 : vector<256x8xf32>
    %87 = arith.addf %79, %86 : vector<256x8xf32>
    %88 = vector.broadcast %44 : f32 to vector<256x8xf32>
    %89 = arith.mulf %40, %88 : vector<256x8xf32>
    %90 = vector.broadcast %52 : f32 to vector<256x8xf32>
    %91 = arith.addf %89, %90 : vector<256x8xf32>
    %92 = math.tanh %91 : vector<256x8xf32>
    %93 = vector.broadcast %60 : f32 to vector<256x8xf32>
    %94 = arith.mulf %93, %92 : vector<256x8xf32>
    %95 = arith.addf %87, %94 : vector<256x8xf32>
    %96 = vector.broadcast %45 : f32 to vector<256x8xf32>
    %97 = arith.mulf %40, %96 : vector<256x8xf32>
    %98 = vector.broadcast %53 : f32 to vector<256x8xf32>
    %99 = arith.addf %97, %98 : vector<256x8xf32>
    %100 = math.tanh %99 : vector<256x8xf32>
    %101 = vector.broadcast %61 : f32 to vector<256x8xf32>
    %102 = arith.mulf %101, %100 : vector<256x8xf32>
    %103 = arith.addf %95, %102 : vector<256x8xf32>
    %104 = vector.broadcast %46 : f32 to vector<256x8xf32>
    %105 = arith.mulf %40, %104 : vector<256x8xf32>
    %106 = vector.broadcast %54 : f32 to vector<256x8xf32>
    %107 = arith.addf %105, %106 : vector<256x8xf32>
    %108 = math.tanh %107 : vector<256x8xf32>
    %109 = vector.broadcast %62 : f32 to vector<256x8xf32>
    %110 = arith.mulf %109, %108 : vector<256x8xf32>
    %111 = arith.addf %103, %110 : vector<256x8xf32>
    %112 = vector.broadcast %47 : f32 to vector<256x8xf32>
    %113 = arith.mulf %40, %112 : vector<256x8xf32>
    %114 = vector.broadcast %55 : f32 to vector<256x8xf32>
    %115 = arith.addf %113, %114 : vector<256x8xf32>
    %116 = math.tanh %115 : vector<256x8xf32>
    %117 = vector.broadcast %63 : f32 to vector<256x8xf32>
    %118 = arith.mulf %117, %116 : vector<256x8xf32>
    %119 = arith.addf %111, %118 : vector<256x8xf32>
    %120 = vector.broadcast %48 : f32 to vector<256x8xf32>
    %121 = arith.mulf %40, %120 : vector<256x8xf32>
    %122 = vector.broadcast %56 : f32 to vector<256x8xf32>
    %123 = arith.addf %121, %122 : vector<256x8xf32>
    %124 = math.tanh %123 : vector<256x8xf32>
    %125 = vector.broadcast %64 : f32 to vector<256x8xf32>
    %126 = arith.mulf %125, %124 : vector<256x8xf32>
    %127 = arith.addf %119, %126 : vector<256x8xf32>
    %c0_34 = arith.constant 0 : index
    %128 = memref.load %arg13[%c0_34] : memref<1xf32, #tpu.memory_space<smem>>
    %129 = vector.broadcast %128 : f32 to vector<256x8xf32>
    %130 = arith.addf %127, %129 : vector<256x8xf32>
    %131 = arith.truncf %14 : vector<256x16xf32> to vector<256x16xbf16>
    %c0_35 = arith.constant 0 : index
    %c0_36 = arith.constant 0 : index
    %132 = vector.load %arg6[%c0_35, %c0_36] : memref<16x32xbf16, #tpu.memory_space<vmem>>, vector<16x32xbf16>
    %cst_37 = arith.constant dense<0.000000e+00> : vector<256x32xf32>
    %133 = tpu.matmul %131, %132, %cst_37 {dimension_numbers = #tpu.dot_dimension_numbers<[1], [0], [0], [1], [0, 0, 1, 1], [], []>} : vector<256x16xbf16>, vector<16x32xbf16>, vector<256x32xf32> -> vector<256x32xf32>
    %c0_38 = arith.constant 0 : index
    %c0_39 = arith.constant 0 : index
    %134 = vector.load %arg7[%c0_38, %c0_39] : memref<1x32xf32, #tpu.memory_space<vmem>>, vector<1x32xf32>
    %135 = vector.broadcast %134 : vector<1x32xf32> to vector<256x32xf32>
    %136 = arith.addf %133, %135 : vector<256x32xf32>
    %137 = math.tanh %136 : vector<256x32xf32>
    %138 = arith.truncf %137 : vector<256x32xf32> to vector<256x32xbf16>
    %c0_40 = arith.constant 0 : index
    %c0_41 = arith.constant 0 : index
    %139 = vector.load %arg8[%c0_40, %c0_41] : memref<32x16xbf16, #tpu.memory_space<vmem>>, vector<32x16xbf16>
    %cst_42 = arith.constant dense<0.000000e+00> : vector<256x16xf32>
    %140 = tpu.matmul %138, %139, %cst_42 {dimension_numbers = #tpu.dot_dimension_numbers<[1], [0], [0], [1], [0, 0, 1, 1], [], []>} : vector<256x32xbf16>, vector<32x16xbf16>, vector<256x16xf32> -> vector<256x16xf32>
    %c0_43 = arith.constant 0 : index
    %c0_44 = arith.constant 0 : index
    %141 = vector.load %arg9[%c0_43, %c0_44] : memref<1x16xf32, #tpu.memory_space<vmem>>, vector<1x16xf32>
    %142 = vector.broadcast %141 : vector<1x16xf32> to vector<256x16xf32>
    %143 = arith.addf %140, %142 : vector<256x16xf32>
    %144 = vector.shape_cast %14 : vector<256x16xf32> to vector<32x8x16xf32>
    %c0_45 = arith.constant 0 : index
    %c0_46 = arith.constant 0 : index
    %c0_47 = arith.constant 0 : index
    %145 = vector.load %arg14[%c0_45, %c0_46, %c0_47] : memref<32x8x16xf32, #tpu.memory_space<vmem>>, vector<32x8x16xf32>
    tpu.vector_store %arg14[%c0_45, %c0_46, %c0_47], %144 {strides = array<i32>} : memref<32x8x16xf32, #tpu.memory_space<vmem>>, vector<32x8x16xf32>,
    %146 = vector.shape_cast %130 : vector<256x8xf32> to vector<32x8x8xf32>
    %c0_48 = arith.constant 0 : index
    %c0_49 = arith.constant 0 : index
    %c0_50 = arith.constant 0 : index
    %147 = vector.load %arg15[%c0_48, %c0_49, %c0_50] : memref<32x8x8xf32, #tpu.memory_space<vmem>>, vector<32x8x8xf32>
    tpu.vector_store %arg15[%c0_48, %c0_49, %c0_50], %146 {strides = array<i32>} : memref<32x8x8xf32, #tpu.memory_space<vmem>>, vector<32x8x8xf32>,
    %148 = vector.shape_cast %143 : vector<256x16xf32> to vector<32x8x16xf32>
    %c0_51 = arith.constant 0 : index
    %c0_52 = arith.constant 0 : index
    %c0_53 = arith.constant 0 : index
    %149 = vector.load %arg16[%c0_51, %c0_52, %c0_53] : memref<32x8x16xf32, #tpu.memory_space<vmem>>, vector<32x8x16xf32>
    tpu.vector_store %arg16[%c0_51, %c0_52, %c0_53], %148 {strides = array<i32>} : memref<32x8x16xf32, #tpu.memory_space<vmem>>, vector<32x8x16xf32>,
    return
  }
  func.func @transform_0(%arg0: i32) -> (i32, i32, i32) {
    %c0_i32 = arith.constant 0 : i32
    %c0_i32_0 = arith.constant 0 : i32
    %c0_i32_1 = arith.constant 0 : i32
    return %arg0, %c0_i32, %c0_i32_0 : i32, i32, i32
  }
  func.func @transform_1(%arg0: i32) -> (i32, i32) {
    %c0_i32 = arith.constant 0 : i32
    %c0_i32_0 = arith.constant 0 : i32
    %c0_i32_1 = arith.constant 0 : i32
    return %c0_i32, %c0_i32_0 : i32, i32
  }
  func.func @transform_2(%arg0: i32) -> (i32, i32) {
    %c0_i32 = arith.constant 0 : i32
    %c0_i32_0 = arith.constant 0 : i32
    %c0_i32_1 = arith.constant 0 : i32
    return %c0_i32, %c0_i32_0 : i32, i32
  }
  func.func @transform_3(%arg0: i32) -> (i32, i32) {
    %c0_i32 = arith.constant 0 : i32
    %c0_i32_0 = arith.constant 0 : i32
    %c0_i32_1 = arith.constant 0 : i32
    return %c0_i32, %c0_i32_0 : i32, i32
  }
  func.func @transform_4(%arg0: i32) -> (i32, i32) {
    %c0_i32 = arith.constant 0 : i32
    %c0_i32_0 = arith.constant 0 : i32
    %c0_i32_1 = arith.constant 0 : i32
    return %c0_i32, %c0_i32_0 : i32, i32
  }
  func.func @transform_5(%arg0: i32) -> (i32, i32) {
    %c0_i32 = arith.constant 0 : i32
    %c0_i32_0 = arith.constant 0 : i32
    %c0_i32_1 = arith.constant 0 : i32
    return %c0_i32, %c0_i32_0 : i32, i32
  }
  func.func @transform_6(%arg0: i32) -> (i32, i32) {
    %c0_i32 = arith.constant 0 : i32
    %c0_i32_0 = arith.constant 0 : i32
    %c0_i32_1 = arith.constant 0 : i32
    return %c0_i32, %c0_i32_0 : i32, i32
  }
  func.func @transform_7(%arg0: i32) -> (i32, i32) {
    %c0_i32 = arith.constant 0 : i32
    %c0_i32_0 = arith.constant 0 : i32
    %c0_i32_1 = arith.constant 0 : i32
    return %c0_i32, %c0_i32_0 : i32, i32
  }
  func.func @transform_8(%arg0: i32) -> (i32, i32) {
    %c0_i32 = arith.constant 0 : i32
    %c0_i32_0 = arith.constant 0 : i32
    %c0_i32_1 = arith.constant 0 : i32
    return %c0_i32, %c0_i32_0 : i32, i32
  }
  func.func @transform_9(%arg0: i32) -> i32 {
    %c0_i32 = arith.constant 0 : i32
    %c0_i32_0 = arith.constant 0 : i32
    return %c0_i32 : i32
  }
  func.func @transform_10(%arg0: i32) -> i32 {
    %c0_i32 = arith.constant 0 : i32
    %c0_i32_0 = arith.constant 0 : i32
    return %c0_i32 : i32
  }
  func.func @transform_11(%arg0: i32) -> i32 {
    %c0_i32 = arith.constant 0 : i32
    %c0_i32_0 = arith.constant 0 : i32
    return %c0_i32 : i32
  }
  func.func @transform_12(%arg0: i32) -> i32 {
    %c0_i32 = arith.constant 0 : i32
    %c0_i32_0 = arith.constant 0 : i32
    return %c0_i32 : i32
  }
  func.func @transform_13(%arg0: i32) -> (i32, i32, i32) {
    %c0_i32 = arith.constant 0 : i32
    %c0_i32_0 = arith.constant 0 : i32
    %c0_i32_1 = arith.constant 0 : i32
    return %arg0, %c0_i32, %c0_i32_0 : i32, i32, i32
  }
  func.func @transform_14(%arg0: i32) -> (i32, i32, i32) {
    %c0_i32 = arith.constant 0 : i32
    %c0_i32_0 = arith.constant 0 : i32
    %c0_i32_1 = arith.constant 0 : i32
    return %arg0, %c0_i32, %c0_i32_0 : i32, i32, i32
  }
  func.func @transform_15(%arg0: i32) -> (i32, i32, i32) {
    %c0_i32 = arith.constant 0 : i32
    %c0_i32_0 = arith.constant 0 : i32
    %c0_i32_1 = arith.constant 0 : i32
    return %arg0, %c0_i32, %c0_i32_0 : i32, i32, i32
  }
}

</mosaic_0001>

<llo_original>
// kernel: tpu_custom_call.1
$region0: #{tpu_custom_call.1}
  #allocation0 [shape = 'u32[]', space=smem, size = 0x4, offset = 0x4, fixed_abs, tag = 'smem constant byte address 0x4 - core index']
  #allocation1 [shape = 'u32[144,128]{1,0:T(1,128)}', space=vmem, size = 0x12000, scoped, tag = 'internal scratch']
  #allocation2 [shape = 'f32[1]{0:T(128)S(6)}', space=smem, size = 0x200, scoped, tag = 'scoped memory for tpu_custom_call.1']
  %s0 = inlined_call_operand.vmem [shape: f32[64,8,16], index: 0, kind: input, shape index: {}]
  %s1 = inlined_call_operand.vmem [shape: bf16[16,32], index: 1, kind: input, shape index: {}]
  %s2 = inlined_call_operand.vmem [shape: f32[1,32], index: 2, kind: input, shape index: {}]
  %s3 = inlined_call_operand.vmem [shape: bf16[32,16], index: 3, kind: input, shape index: {}]
  %s4 = inlined_call_operand.vmem [shape: f32[1,16], index: 4, kind: input, shape index: {}]
  %s5 = inlined_call_operand.vmem [shape: bf16[16,32], index: 5, kind: input, shape index: {}]
  %s6 = inlined_call_operand.vmem [shape: f32[1,32], index: 6, kind: input, shape index: {}]
  %s7 = inlined_call_operand.vmem [shape: bf16[32,16], index: 7, kind: input, shape index: {}]
  %s8 = inlined_call_operand.vmem [shape: f32[1,16], index: 8, kind: input, shape index: {}]
  %s9 = inlined_call_operand.vmem [shape: f32[8], index: 9, kind: input, shape index: {}]
  %s10 = inlined_call_operand.vmem [shape: f32[8], index: 10, kind: input, shape index: {}]
  %s11 = inlined_call_operand.vmem [shape: f32[8], index: 11, kind: input, shape index: {}]
  %s12 = inlined_call_operand.<no memory space> [shape: f32[1], index: 12, kind: input, shape index: {}]
  %s13 = inlined_call_operand.vmem [shape: f32[64,8,16], index: 13, kind: output, shape index: {0}]
  %s14 = inlined_call_operand.vmem [shape: f32[64,8,8], index: 14, kind: output, shape index: {1}]
  %s15 = inlined_call_operand.vmem [shape: f32[64,8,16], index: 15, kind: output, shape index: {2}]
  %16 = xla_tuple %s13, %s14, %s15
  %s17 = sld [smem:[#allocation0]]
  $region113: #{tpu_custom_call.1} parent=0
    _
  %s19 = ssub.s32 1, %s17
  %s20 = scalar_select 0, %s19, %s17
  %21 = sst [smem:[#allocation2]] %s12
  $region1: #{tpu_custom_call.1} parent=0
    #allocation3 [shape = 'u8[512]{0}', space=smem, size = 0x200, scoped, tag = 'input window, operand 9, single buffered']
    #allocation4 [shape = 's32[2]{0}', space=sflag, size = 0x8, scoped, tag = 'scoped memory for tpu_custom_call.1']
    #allocation5 [shape = 'u8[512]{0}', space=smem, size = 0x200, scoped, tag = 'input window, operand 10, single buffered']
    #allocation6 [shape = 's32[1]{0}', space=sflag, size = 0x4, scoped, tag = 'scoped memory for tpu_custom_call.1']
    #allocation7 [shape = 'u8[512]{0}', space=smem, size = 0x200, scoped, tag = 'input window, operand 11, single buffered']
    %22 = vsyncpa [#allocation4], 0
    %23 = vsyncpa [#allocation6], 0
    loop: start=0, step=1, limit=4
    $region2: #{tpu_custom_call.1} parent=1 // loop_pre_header
      _
    $region3: #{tpu_custom_call.1} parent=1 // loop_header
      %s25 = sphi 0, %s29
      %p26 = scmp.ge.s32.totalorder %s25, 4
      %s35 = sphi 0, %s37
      %s38 = sphi 0, %s35
      %s39 = sphi 0, %s38
      %s55 = sphi 0, %s39
      %s59 = sphi 0, %s59
      %s61 = sphi 0, %s59
      %s62 = sphi 0, %s61
      %s76 = sphi 0, %s62
      %s80 = sphi 0, %s80
      %s82 = sphi 0, %s80
      %s83 = sphi 0, %s82
      %s97 = sphi 0, %s83
      %s101 = sphi 0, %s101
      %s103 = sphi 0, %s101
      %s104 = sphi 0, %s103
      %s118 = sphi 0, %s104
      %s122 = sphi 0, %s122
      %s124 = sphi 0, %s122
      %s125 = sphi 0, %s124
      %s139 = sphi 0, %s125
      %s143 = sphi 0, %s143
      %s145 = sphi 0, %s143
      %s146 = sphi 0, %s145
      %s160 = sphi 0, %s146
      %s164 = sphi 0, %s164
      %s166 = sphi 0, %s164
      %s167 = sphi 0, %s166
      %s181 = sphi 0, %s167
      %s185 = sphi 0, %s185
      %s187 = sphi 0, %s185
      %s188 = sphi 0, %s187
      %s202 = sphi 0, %s188
      %s206 = sphi 0, %s206
      %s208 = sphi 0, %s206
      %s209 = sphi 0, %s208
      %s223 = sphi 0, %s209
      %s227 = sphi 0, %s227
      %s229 = sphi 0, %s227
      %s230 = sphi 0, %s229
      %s244 = sphi 0, %s230
      %s248 = sphi 0, %s248
      %s250 = sphi 0, %s248
      %s251 = sphi 0, %s250
      %s265 = sphi 0, %s251
      %s269 = sphi 0, %s269
      %s271 = sphi 0, %s269
      %s272 = sphi 0, %s271
      %s286 = sphi 0, %s272
      %s290 = sphi 0, %s290
      %s292 = sphi 0, %s290
      %s293 = sphi 0, %s292
      %s307 = sphi 0, %s293
      %s313 = sphi 0, %s315
      %s316 = sphi 0, %s313
      %s317 = sphi 0, %s316
      %s333 = sphi 0, %s317
      %s339 = sphi 0, %s341
      %s342 = sphi 0, %s339
      %s343 = sphi 0, %s342
      %s359 = sphi 0, %s343
      %s365 = sphi 0, %s367
      %s368 = sphi 0, %s365
      %s369 = sphi 0, %s368
      %s385 = sphi 0, %s369
    $region4: #{tpu_custom_call.1} parent=1 // loop_header_branch
      %28 = sbr.rel (%p26) target = $region8
    $region5: #{tpu_custom_call.1} parent=1 // loop_body
      %s30 = ssub.s32 %s25, 1
      %s31 = ssub.s32 %s25, 2
      %s32 = sadd.s32 %s25, 1
      %s33 = ssub.s32 %s25, %s32
      %p34 = scmp.eq.s32.totalorder %s33, 0
      %s36 = sadd.s32 %s35, 1
      %s37 = scalar_select %p34, %s35, %s36
      %p40 = pneg %p34
      %p41 = scmp.eq.s32.totalorder %s25, 1
      %p42 = por %p40, %p41
      %p43 = scmp.ne.s32.totalorder %s35, %s38
      %p44 = scmp.eq.s32.totalorder %s25, 0
      %p45 = por %p43, %p44
      %p46 = scmp.ne.s32.totalorder %s35, %s38
      %p47 = scmp.eq.s32.totalorder %s30, 1
      %p48 = por %p46, %p47
      %p49 = scmp.ne.s32.totalorder %s38, %s39
      %p50 = scmp.eq.s32.totalorder %s30, 0
      %p51 = por %p49, %p50
      %p52 = scmp.ne.s32.totalorder %s38, %s39
      %p53 = scmp.eq.s32.totalorder %s31, 1
      %p54 = por %p52, %p53
      %p56 = scmp.ne.s32.totalorder %s39, %s55
      %p57 = scmp.eq.s32.totalorder %s31, 0
      %p58 = por %p56, %p57
      %s60 = sadd.s32 %s59, 1
      %p63 = scmp.eq.s32.totalorder %s25, 1
      %p64 = scmp.ne.s32.totalorder %s59, %s61
      %p65 = scmp.eq.s32.totalorder %s25, 0
      %p66 = por %p64, %p65
      %p67 = scmp.ne.s32.totalorder %s59, %s61
      %p68 = scmp.eq.s32.totalorder %s30, 1
      %p69 = por %p67, %p68
      %p70 = scmp.ne.s32.totalorder %s61, %s62
      %p71 = scmp.eq.s32.totalorder %s30, 0
      %p72 = por %p70, %p71
      %p73 = scmp.ne.s32.totalorder %s61, %s62
      %p74 = scmp.eq.s32.totalorder %s31, 1
      %p75 = por %p73, %p74
      %p77 = scmp.ne.s32.totalorder %s62, %s76
      %p78 = scmp.eq.s32.totalorder %s31, 0
      %p79 = por %p77, %p78
      %s81 = sadd.s32 %s80, 1
      %p84 = scmp.eq.s32.totalorder %s25, 1
      %p85 = scmp.ne.s32.totalorder %s80, %s82
      %p86 = scmp.eq.s32.totalorder %s25, 0
      %p87 = por %p85, %p86
      %p88 = scmp.ne.s32.totalorder %s80, %s82
      %p89 = scmp.eq.s32.totalorder %s30, 1
      %p90 = por %p88, %p89
      %p91 = scmp.ne.s32.totalorder %s82, %s83
      %p92 = scmp.eq.s32.totalorder %s30, 0
      %p93 = por %p91, %p92
      %p94 = scmp.ne.s32.totalorder %s82, %s83
      %p95 = scmp.eq.s32.totalorder %s31, 1
      %p96 = por %p94, %p95
      %p98 = scmp.ne.s32.totalorder %s83, %s97
      %p99 = scmp.eq.s32.totalorder %s31, 0
      %p100 = por %p98, %p99
      %s102 = sadd.s32 %s101, 1
      %p105 = scmp.eq.s32.totalorder %s25, 1
      %p106 = scmp.ne.s32.totalorder %s101, %s103
      %p107 = scmp.eq.s32.totalorder %s25, 0
      %p108 = por %p106, %p107
      %p109 = scmp.ne.s32.totalorder %s101, %s103
      %p110 = scmp.eq.s32.totalorder %s30, 1
      %p111 = por %p109, %p110
      %p112 = scmp.ne.s32.totalorder %s103, %s104
      %p113 = scmp.eq.s32.totalorder %s30, 0
      %p114 = por %p112, %p113
      %p115 = scmp.ne.s32.totalorder %s103, %s104
      %p116 = scmp.eq.s32.totalorder %s31, 1
      %p117 = por %p115, %p116
      %p119 = scmp.ne.s32.totalorder %s104, %s118
      %p120 = scmp.eq.s32.totalorder %s31, 0
      %p121 = por %p119, %p120
      %s123 = sadd.s32 %s122, 1
      %p126 = scmp.eq.s32.totalorder %s25, 1
      %p127 = scmp.ne.s32.totalorder %s122, %s124
      %p128 = scmp.eq.s32.totalorder %s25, 0
      %p129 = por %p127, %p128
      %p130 = scmp.ne.s32.totalorder %s122, %s124
      %p131 = scmp.eq.s32.totalorder %s30, 1
      %p132 = por %p130, %p131
      %p133 = scmp.ne.s32.totalorder %s124, %s125
      %p134 = scmp.eq.s32.totalorder %s30, 0
      %p135 = por %p133, %p134
      %p136 = scmp.ne.s32.totalorder %s124, %s125
      %p137 = scmp.eq.s32.totalorder %s31, 1
      %p138 = por %p136, %p137
      %p140 = scmp.ne.s32.totalorder %s125, %s139
      %p141 = scmp.eq.s32.totalorder %s31, 0
      %p142 = por %p140, %p141
      %s144 = sadd.s32 %s143, 1
      %p147 = scmp.eq.s32.totalorder %s25, 1
      %p148 = scmp.ne.s32.totalorder %s143, %s145
      %p149 = scmp.eq.s32.totalorder %s25, 0
      %p150 = por %p148, %p149
      %p151 = scmp.ne.s32.totalorder %s143, %s145
      %p152 = scmp.eq.s32.totalorder %s30, 1
      %p153 = por %p151, %p152
      %p154 = scmp.ne.s32.totalorder %s145, %s146
      %p155 = scmp.eq.s32.totalorder %s30, 0
      %p156 = por %p154, %p155
      %p157 = scmp.ne.s32.totalorder %s145, %s146
      %p158 = scmp.eq.s32.totalorder %s31, 1
      %p159 = por %p157, %p158
      %p161 = scmp.ne.s32.totalorder %s146, %s160
      %p162 = scmp.eq.s32.totalorder %s31, 0
      %p163 = por %p161, %p162
      %s165 = sadd.s32 %s164, 1
      %p168 = scmp.eq.s32.totalorder %s25, 1
      %p169 = scmp.ne.s32.totalorder %s164, %s166
      %p170 = scmp.eq.s32.totalorder %s25, 0
      %p171 = por %p169, %p170
      %p172 = scmp.ne.s32.totalorder %s164, %s166
      %p173 = scmp.eq.s32.totalorder %s30, 1
      %p174 = por %p172, %p173
      %p175 = scmp.ne.s32.totalorder %s166, %s167
      %p176 = scmp.eq.s32.totalorder %s30, 0
      %p177 = por %p175, %p176
      %p178 = scmp.ne.s32.totalorder %s166, %s167
      %p179 = scmp.eq.s32.totalorder %s31, 1
      %p180 = por %p178, %p179
      %p182 = scmp.ne.s32.totalorder %s167, %s181
      %p183 = scmp.eq.s32.totalorder %s31, 0
      %p184 = por %p182, %p183
      %s186 = sadd.s32 %s185, 1
      %p189 = scmp.eq.s32.totalorder %s25, 1
      %p190 = scmp.ne.s32.totalorder %s185, %s187
      %p191 = scmp.eq.s32.totalorder %s25, 0
      %p192 = por %p190, %p191
      %p193 = scmp.ne.s32.totalorder %s185, %s187
      %p194 = scmp.eq.s32.totalorder %s30, 1
      %p195 = por %p193, %p194
      %p196 = scmp.ne.s32.totalorder %s187, %s188
      %p197 = scmp.eq.s32.totalorder %s30, 0
      %p198 = por %p196, %p197
      %p199 = scmp.ne.s32.totalorder %s187, %s188
      %p200 = scmp.eq.s32.totalorder %s31, 1
      %p201 = por %p199, %p200
      %p203 = scmp.ne.s32.totalorder %s188, %s202
      %p204 = scmp.eq.s32.totalorder %s31, 0
      %p205 = por %p203, %p204
      %s207 = sadd.s32 %s206, 1
      %p210 = scmp.eq.s32.totalorder %s25, 1
      %p211 = scmp.ne.s32.totalorder %s206, %s208
      %p212 = scmp.eq.s32.totalorder %s25, 0
      %p213 = por %p211, %p212
      %p214 = scmp.ne.s32.totalorder %s206, %s208
      %p215 = scmp.eq.s32.totalorder %s30, 1
      %p216 = por %p214, %p215
      %p217 = scmp.ne.s32.totalorder %s208, %s209
      %p218 = scmp.eq.s32.totalorder %s30, 0
      %p219 = por %p217, %p218
      %p220 = scmp.ne.s32.totalorder %s208, %s209
      %p221 = scmp.eq.s32.totalorder %s31, 1
      %p222 = por %p220, %p221
      %p224 = scmp.ne.s32.totalorder %s209, %s223
      %p225 = scmp.eq.s32.totalorder %s31, 0
      %p226 = por %p224, %p225
      %s228 = sadd.s32 %s227, 1
      %p231 = scmp.eq.s32.totalorder %s25, 1
      %p232 = scmp.ne.s32.totalorder %s227, %s229
      %p233 = scmp.eq.s32.totalorder %s25, 0
      %p234 = por %p232, %p233
      %p235 = scmp.ne.s32.totalorder %s227, %s229
      %p236 = scmp.eq.s32.totalorder %s30, 1
      %p237 = por %p235, %p236
      %p238 = scmp.ne.s32.totalorder %s229, %s230
      %p239 = scmp.eq.s32.totalorder %s30, 0
      %p240 = por %p238, %p239
      %p241 = scmp.ne.s32.totalorder %s229, %s230
      %p242 = scmp.eq.s32.totalorder %s31, 1
      %p243 = por %p241, %p242
      %p245 = scmp.ne.s32.totalorder %s230, %s244
      %p246 = scmp.eq.s32.totalorder %s31, 0
      %p247 = por %p245, %p246
      %s249 = sadd.s32 %s248, 1
      %p252 = scmp.eq.s32.totalorder %s25, 1
      %p253 = scmp.ne.s32.totalorder %s248, %s250
      %p254 = scmp.eq.s32.totalorder %s25, 0
      %p255 = por %p253, %p254
      %p256 = scmp.ne.s32.totalorder %s248, %s250
      %p257 = scmp.eq.s32.totalorder %s30, 1
      %p258 = por %p256, %p257
      %p259 = scmp.ne.s32.totalorder %s250, %s251
      %p260 = scmp.eq.s32.totalorder %s30, 0
      %p261 = por %p259, %p260
      %p262 = scmp.ne.s32.totalorder %s250, %s251
      %p263 = scmp.eq.s32.totalorder %s31, 1
      %p264 = por %p262, %p263
      %p266 = scmp.ne.s32.totalorder %s251, %s265
      %p267 = scmp.eq.s32.totalorder %s31, 0
      %p268 = por %p266, %p267
      %s270 = sadd.s32 %s269, 1
      %p273 = scmp.eq.s32.totalorder %s25, 1
      %p274 = scmp.ne.s32.totalorder %s269, %s271
      %p275 = scmp.eq.s32.totalorder %s25, 0
      %p276 = por %p274, %p275
      %p277 = scmp.ne.s32.totalorder %s269, %s271
      %p278 = scmp.eq.s32.totalorder %s30, 1
      %p279 = por %p277, %p278
      %p280 = scmp.ne.s32.totalorder %s271, %s272
      %p281 = scmp.eq.s32.totalorder %s30, 0
      %p282 = por %p280, %p281
      %p283 = scmp.ne.s32.totalorder %s271, %s272
      %p284 = scmp.eq.s32.totalorder %s31, 1
      %p285 = por %p283, %p284
      %p287 = scmp.ne.s32.totalorder %s272, %s286
      %p288 = scmp.eq.s32.totalorder %s31, 0
      %p289 = por %p287, %p288
      %s291 = sadd.s32 %s290, 1
      %p294 = scmp.eq.s32.totalorder %s25, 1
      %p295 = scmp.ne.s32.totalorder %s290, %s292
      %p296 = scmp.eq.s32.totalorder %s25, 0
      %p297 = por %p295, %p296
      %p298 = scmp.ne.s32.totalorder %s290, %s292
      %p299 = scmp.eq.s32.totalorder %s30, 1
      %p300 = por %p298, %p299
      %p301 = scmp.ne.s32.totalorder %s292, %s293
      %p302 = scmp.eq.s32.totalorder %s30, 0
      %p303 = por %p301, %p302
      %p304 = scmp.ne.s32.totalorder %s292, %s293
      %p305 = scmp.eq.s32.totalorder %s31, 1
      %p306 = por %p304, %p305
      %p308 = scmp.ne.s32.totalorder %s293, %s307
      %p309 = scmp.eq.s32.totalorder %s31, 0
      %p310 = por %p308, %p309
      %s311 = ssub.s32 %s25, %s32
      %p312 = scmp.eq.s32.totalorder %s311, 0
      %s314 = sadd.s32 %s313, 1
      %s315 = scalar_select %p312, %s313, %s314
      %p318 = pneg %p312
      %p319 = scmp.eq.s32.totalorder %s25, 1
      %p320 = por %p318, %p319
      %p321 = scmp.ne.s32.totalorder %s313, %s316
      %p322 = scmp.eq.s32.totalorder %s25, 0
      %p323 = por %p321, %p322
      %p324 = scmp.ne.s32.totalorder %s313, %s316
      %p325 = scmp.eq.s32.totalorder %s30, 1
      %p326 = por %p324, %p325
      %p327 = scmp.ne.s32.totalorder %s316, %s317
      %p328 = scmp.eq.s32.totalorder %s30, 0
      %p329 = por %p327, %p328
      %p330 = scmp.ne.s32.totalorder %s316, %s317
      %p331 = scmp.eq.s32.totalorder %s31, 1
      %p332 = por %p330, %p331
      %p334 = scmp.ne.s32.totalorder %s317, %s333
      %p335 = scmp.eq.s32.totalorder %s31, 0
      %p336 = por %p334, %p335
      %s337 = ssub.s32 %s25, %s32
      %p338 = scmp.eq.s32.totalorder %s337, 0
      %s340 = sadd.s32 %s339, 1
      %s341 = scalar_select %p338, %s339, %s340
      %p344 = pneg %p338
      %p345 = scmp.eq.s32.totalorder %s25, 1
      %p346 = por %p344, %p345
      %p347 = scmp.ne.s32.totalorder %s339, %s342
      %p348 = scmp.eq.s32.totalorder %s25, 0
      %p349 = por %p347, %p348
      %p350 = scmp.ne.s32.totalorder %s339, %s342
      %p351 = scmp.eq.s32.totalorder %s30, 1
      %p352 = por %p350, %p351
      %p353 = scmp.ne.s32.totalorder %s342, %s343
      %p354 = scmp.eq.s32.totalorder %s30, 0
      %p355 = por %p353, %p354
      %p356 = scmp.ne.s32.totalorder %s342, %s343
      %p357 = scmp.eq.s32.totalorder %s31, 1
      %p358 = por %p356, %p357
      %p360 = scmp.ne.s32.totalorder %s343, %s359
      %p361 = scmp.eq.s32.totalorder %s31, 0
      %p362 = por %p360, %p361
      %s363 = ssub.s32 %s25, %s32
      %p364 = scmp.eq.s32.totalorder %s363, 0
      %s366 = sadd.s32 %s365, 1
      %s367 = scalar_select %p364, %s365, %s366
      %p370 = pneg %p364
      %p371 = scmp.eq.s32.totalorder %s25, 1
      %p372 = por %p370, %p371
      %p373 = scmp.ne.s32.totalorder %s365, %s368
      %p374 = scmp.eq.s32.totalorder %s25, 0
      %p375 = por %p373, %p374
      %p376 = scmp.ne.s32.totalorder %s365, %s368
      %p377 = scmp.eq.s32.totalorder %s30, 1
      %p378 = por %p376, %p377
      %p379 = scmp.ne.s32.totalorder %s368, %s369
      %p380 = scmp.eq.s32.totalorder %s30, 0
      %p381 = por %p379, %p380
      %p382 = scmp.ne.s32.totalorder %s368, %s369
      %p383 = scmp.eq.s32.totalorder %s31, 1
      %p384 = por %p382, %p383
      %p386 = scmp.ne.s32.totalorder %s369, %s385
      %p387 = scmp.eq.s32.totalorder %s31, 0
      %p388 = por %p386, %p387
      %p389 = scmp.le.s32.totalorder 1, %s25
      %p390 = scmp.lt.s32.totalorder %s25, 3
      %p391 = pnand %p389, %p390
      %p392 = pneg %p391
      // Predicated region
      $region9: #{tpu_custom_call.1} parent=5 // pred_check
        _
      $region10: #{tpu_custom_call.1} parent=5 // pred_check_branch
        %394 = sbr.rel (%p391) target = $region12
      $region11: #{tpu_custom_call.1} parent=5 // pred_region
        %s395 = ssub.s32 %s25, 1
        // Predicated region
        $region13: #{tpu_custom_call.1} parent=11 // pred_check
          %p396 = pneg %p72
        $region14: #{tpu_custom_call.1} parent=11 // pred_check_branch
          %398 = sbr.rel (%p396) target = $region16
        $region15: #{tpu_custom_call.1} parent=11 // pred_region
          _
        $region16: #{tpu_custom_call.1} parent=11 // pred_fallthru
          _
        // Predicated region
        $region17: #{tpu_custom_call.1} parent=11 // pred_check
          %p399 = pneg %p93
        $region18: #{tpu_custom_call.1} parent=11 // pred_check_branch
          %401 = sbr.rel (%p399) target = $region20
        $region19: #{tpu_custom_call.1} parent=11 // pred_region
          _
        $region20: #{tpu_custom_call.1} parent=11 // pred_fallthru
          _
        // Predicated region
        $region21: #{tpu_custom_call.1} parent=11 // pred_check
          %p402 = pneg %p114
        $region22: #{tpu_custom_call.1} parent=11 // pred_check_branch
          %404 = sbr.rel (%p402) target = $region24
        $region23: #{tpu_custom_call.1} parent=11 // pred_region
          _
        $region24: #{tpu_custom_call.1} parent=11 // pred_fallthru
          _
        // Predicated region
        $region25: #{tpu_custom_call.1} parent=11 // pred_check
          %p405 = pneg %p135
        $region26: #{tpu_custom_call.1} parent=11 // pred_check_branch
          %407 = sbr.rel (%p405) target = $region28
        $region27: #{tpu_custom_call.1} parent=11 // pred_region
          _
        $region28: #{tpu_custom_call.1} parent=11 // pred_fallthru
          _
        // Predicated region
        $region29: #{tpu_custom_call.1} parent=11 // pred_check
          %p408 = pneg %p156
        $region30: #{tpu_custom_call.1} parent=11 // pred_check_branch
          %410 = sbr.rel (%p408) target = $region32
        $region31: #{tpu_custom_call.1} parent=11 // pred_region
          _
        $region32: #{tpu_custom_call.1} parent=11 // pred_fallthru
          _
        // Predicated region
        $region33: #{tpu_custom_call.1} parent=11 // pred_check
          %p411 = pneg %p177
        $region34: #{tpu_custom_call.1} parent=11 // pred_check_branch
          %413 = sbr.rel (%p411) target = $region36
        $region35: #{tpu_custom_call.1} parent=11 // pred_region
          _
        $region36: #{tpu_custom_call.1} parent=11 // pred_fallthru
          _
        // Predicated region
        $region37: #{tpu_custom_call.1} parent=11 // pred_check
          %p414 = pneg %p198
        $region38: #{tpu_custom_call.1} parent=11 // pred_check_branch
          %416 = sbr.rel (%p414) target = $region40
        $region39: #{tpu_custom_call.1} parent=11 // pred_region
          _
        $region40: #{tpu_custom_call.1} parent=11 // pred_fallthru
          _
        // Predicated region
        $region41: #{tpu_custom_call.1} parent=11 // pred_check
          %p417 = pneg %p219
        $region42: #{tpu_custom_call.1} parent=11 // pred_check_branch
          %419 = sbr.rel (%p417) target = $region44
        $region43: #{tpu_custom_call.1} parent=11 // pred_region
          _
        $region44: #{tpu_custom_call.1} parent=11 // pred_fallthru
          _
        // Predicated region
        $region45: #{tpu_custom_call.1} parent=11 // pred_check
          %p420 = pneg %p240
        $region46: #{tpu_custom_call.1} parent=11 // pred_check_branch
          %422 = sbr.rel (%p420) target = $region48
        $region47: #{tpu_custom_call.1} parent=11 // pred_region
          %s424 = ssub.s32 16, 16
          %425 = vsyncadd [#allocation4], %s424
          %s427 = sshll.u32 %s9, 4
          %s428 = int_to_ptr.vmem [resolvable:$true] %s427
          %430 = dma.vmem_to_smem %s428, 16, [#allocation3], [#allocation4]
        $region48: #{tpu_custom_call.1} parent=11 // pred_fallthru
          _
        // Predicated region
        $region49: #{tpu_custom_call.1} parent=11 // pred_check
          %p431 = pneg %p261
        $region50: #{tpu_custom_call.1} parent=11 // pred_check_branch
          %433 = sbr.rel (%p431) target = $region52
        $region51: #{tpu_custom_call.1} parent=11 // pred_region
          %s435 = ssub.s32 16, 16
          %436 = vsyncadd [#allocation6], %s435
          %s438 = sshll.u32 %s10, 4
          %s439 = int_to_ptr.vmem [resolvable:$true] %s438
          %441 = dma.vmem_to_smem %s439, 16, [#allocation5], [#allocation6]
        $region52: #{tpu_custom_call.1} parent=11 // pred_fallthru
          _
        // Predicated region
        $region53: #{tpu_custom_call.1} parent=11 // pred_check
          %p442 = pneg %p282
        $region54: #{tpu_custom_call.1} parent=11 // pred_check_branch
          %444 = sbr.rel (%p442) target = $region56
        $region55: #{tpu_custom_call.1} parent=11 // pred_region
          %s446 = ssub.s32 16, 16
          %447 = vsyncadd [#allocation6], %s446
          %s449 = sshll.u32 %s11, 4
          %s450 = int_to_ptr.vmem [resolvable:$true] %s449
          %452 = dma.vmem_to_smem %s450, 16, [#allocation7], [#allocation6]
        $region56: #{tpu_custom_call.1} parent=11 // pred_fallthru
          _
        // Predicated region
        $region57: #{tpu_custom_call.1} parent=11 // pred_check
          %p453 = pneg %p303
        $region58: #{tpu_custom_call.1} parent=11 // pred_check_branch
          %455 = sbr.rel (%p453) target = $region60
        $region59: #{tpu_custom_call.1} parent=11 // pred_region
          _
        $region60: #{tpu_custom_call.1} parent=11 // pred_fallthru
          _
      $region12: #{tpu_custom_call.1} parent=5 // pred_fallthru
        _
      %p456 = scmp.lt.s32.totalorder %s25, 2
      // Predicated region
      $region61: #{tpu_custom_call.1} parent=5 // pred_check
        %p457 = pneg %p456
      $region62: #{tpu_custom_call.1} parent=5 // pred_check_branch
        %459 = sbr.rel (%p457) target = $region64
      $region63: #{tpu_custom_call.1} parent=5 // pred_region
        // Predicated region
        $region65: #{tpu_custom_call.1} parent=63 // pred_check
          %p460 = pneg %p45
        $region66: #{tpu_custom_call.1} parent=63 // pred_check_branch
          %462 = sbr.rel (%p460) target = $region68
        $region67: #{tpu_custom_call.1} parent=63 // pred_region
          %s463 = smul.u32 32, %s25
          %p464 = scmp.lt.s32.totalorder %s463, 63
          %s465 = scalar_select %p464, %s463, 63
          %s466 = smul.addr %s465, 8
          %s467 = scalar_lea.vmem %s0, %s466
          %s468 = smul.u32 32, %s25
        $region68: #{tpu_custom_call.1} parent=63 // pred_fallthru
          _
      $region64: #{tpu_custom_call.1} parent=5 // pred_fallthru
        _
      %p469 = scmp.le.s32.totalorder 1, %s25
      %p470 = scmp.lt.s32.totalorder %s25, 3
      %p471 = pnand %p469, %p470
      %p472 = pneg %p471
      // Predicated region
      $region69: #{tpu_custom_call.1} parent=5 // pred_check
        _
      $region70: #{tpu_custom_call.1} parent=5 // pred_check_branch
        %474 = sbr.rel (%p471) target = $region72
      $region71: #{tpu_custom_call.1} parent=5 // pred_region
        %s475 = ssub.s32 %s25, 1
        // Predicated region
        $region73: #{tpu_custom_call.1} parent=71 // pred_check
          %p476 = pneg %p240
        $region74: #{tpu_custom_call.1} parent=71 // pred_check_branch
          %478 = sbr.rel (%p476) target = $region76
        $region75: #{tpu_custom_call.1} parent=71 // pred_region
          %479 = dma.done [#allocation4], 16
        $region76: #{tpu_custom_call.1} parent=71 // pred_fallthru
          _
        // Predicated region
        $region77: #{tpu_custom_call.1} parent=71 // pred_check
          %p480 = pneg %p261
        $region78: #{tpu_custom_call.1} parent=71 // pred_check_branch
          %482 = sbr.rel (%p480) target = $region80
        $region79: #{tpu_custom_call.1} parent=71 // pred_region
          %483 = dma.done [#allocation6], 16
        $region80: #{tpu_custom_call.1} parent=71 // pred_fallthru
          _
        // Predicated region
        $region81: #{tpu_custom_call.1} parent=71 // pred_check
          %p484 = pneg %p282
        $region82: #{tpu_custom_call.1} parent=71 // pred_check_branch
          %486 = sbr.rel (%p484) target = $region84
        $region83: #{tpu_custom_call.1} parent=71 // pred_region
          %487 = dma.done [#allocation6], 16
        $region84: #{tpu_custom_call.1} parent=71 // pred_fallthru
          _
        %488 = sfence
        %s489 = smul.u32 32, %s30
        %p490 = scmp.lt.s32.totalorder %s489, 63
        %s491 = scalar_select %p490, %s489, 63
        %s492 = smul.addr %s491, 8
        %s493 = scalar_lea.vmem %s0, %s492
        %p494 = pneg %p51
        %p495 = pneg %p48
        %p496 = pneg %p72
        %p497 = pneg %p69
        %p498 = pneg %p93
        %p499 = pneg %p90
        %p500 = pneg %p114
        %p501 = pneg %p111
        %p502 = pneg %p135
        %p503 = pneg %p132
        %p504 = pneg %p156
        %p505 = pneg %p153
        %p506 = pneg %p177
        %p507 = pneg %p174
        %p508 = pneg %p198
        %p509 = pneg %p195
        %p510 = pneg %p219
        %p511 = pneg %p216
        %p512 = pneg %p240
        %p513 = pneg %p237
        %p514 = pneg %p261
        %p515 = pneg %p258
        %p516 = pneg %p282
        %p517 = pneg %p279
        %p518 = pneg %p303
        %p519 = pneg %p300
        %p520 = pneg %p329
        %p521 = pneg %p326
        %s522 = smul.u32 32, %s30
        %p523 = scmp.lt.s32.totalorder %s522, 63
        %s524 = scalar_select %p523, %s522, 63
        %s525 = smul.addr %s524, 8
        %s526 = scalar_lea.vmem %s13, %s525
        %p527 = pneg %p355
        %p528 = pneg %p352
        %s529 = smul.u32 32, %s30
        %p530 = scmp.lt.s32.totalorder %s529, 63
        %s531 = scalar_select %p530, %s529, 63
        %s532 = smul.addr %s531, 8
        %s533 = scalar_lea.vmem %s14, %s532
        %p534 = pneg %p381
        %p535 = pneg %p378
        %s536 = smul.u32 32, %s30
        %p537 = scmp.lt.s32.totalorder %s536, 63
        %s538 = scalar_select %p537, %s536, 63
        %s539 = smul.addr %s538, 8
        %s540 = scalar_lea.vmem %s15, %s539
        %s541 = smul.u32 32, %s30
        %p542 = scmp.lt.s32.totalorder %s541, 63
        %s543 = scalar_select %p542, %s541, 63
        %s544 = smul.addr %s543, 8
        %s545 = scalar_lea.vmem %s0, %s544
        %s546 = smul.u32 32, %s30
        %s547 = smul.u32 32, %s30
        %p548 = scmp.lt.s32.totalorder %s547, 63
        %s549 = scalar_select %p548, %s547, 63
        %s550 = smul.addr %s549, 8
        %s551 = scalar_lea.vmem %s13, %s550
        %s552 = smul.u32 32, %s30
        %s553 = smul.u32 32, %s30
        %p554 = scmp.lt.s32.totalorder %s553, 63
        %s555 = scalar_select %p554, %s553, 63
        %s556 = smul.addr %s555, 8
        %s557 = scalar_lea.vmem %s14, %s556
        %s558 = smul.u32 32, %s30
        %s559 = smul.u32 32, %s30
        %p560 = scmp.lt.s32.totalorder %s559, 63
        %s561 = scalar_select %p560, %s559, 63
        %s562 = smul.addr %s561, 8
        %s563 = scalar_lea.vmem %s15, %s562
        %s564 = smul.u32 32, %s30
        %v566 = vld [vmem:[%s545] sm:$0xff]
        %v567 = vld [vmem:[%s545 + $0x8] sm:$0xff]
        %v568 = vld [vmem:[%s545 + $0x10] sm:$0xff]
        %v569 = vld [vmem:[%s545 + $0x18] sm:$0xff]
        %v570 = vld [vmem:[%s545 + $0x20] sm:$0xff]
        %v571 = vld [vmem:[%s545 + $0x28] sm:$0xff]
        %v572 = vld [vmem:[%s545 + $0x30] sm:$0xff]
        %v573 = vld [vmem:[%s545 + $0x38] sm:$0xff]
        %v574 = vld [vmem:[%s545 + $0x40] sm:$0xff]
        %v575 = vld [vmem:[%s545 + $0x48] sm:$0xff]
        %v576 = vld [vmem:[%s545 + $0x50] sm:$0xff]
        %v577 = vld [vmem:[%s545 + $0x58] sm:$0xff]
        %v578 = vld [vmem:[%s545 + $0x60] sm:$0xff]
        %v579 = vld [vmem:[%s545 + $0x68] sm:$0xff]
        %v580 = vld [vmem:[%s545 + $0x70] sm:$0xff]
        %v581 = vld [vmem:[%s545 + $0x78] sm:$0xff]
        %v582 = vld [vmem:[%s545 + $0x80] sm:$0xff]
        %v583 = vld [vmem:[%s545 + $0x88] sm:$0xff]
        %v584 = vld [vmem:[%s545 + $0x90] sm:$0xff]
        %v585 = vld [vmem:[%s545 + $0x98] sm:$0xff]
        %v586 = vld [vmem:[%s545 + $0xa0] sm:$0xff]
        %v587 = vld [vmem:[%s545 + $0xa8] sm:$0xff]
        %v588 = vld [vmem:[%s545 + $0xb0] sm:$0xff]
        %v589 = vld [vmem:[%s545 + $0xb8] sm:$0xff]
        %v590 = vld [vmem:[%s545 + $0xc0] sm:$0xff]
        %v591 = vld [vmem:[%s545 + $0xc8] sm:$0xff]
        %v592 = vld [vmem:[%s545 + $0xd0] sm:$0xff]
        %v593 = vld [vmem:[%s545 + $0xd8] sm:$0xff]
        %v594 = vld [vmem:[%s545 + $0xe0] sm:$0xff]
        %v595 = vld [vmem:[%s545 + $0xe8] sm:$0xff]
        %v596 = vld [vmem:[%s545 + $0xf0] sm:$0xff]
        %v597 = vld [vmem:[%s545 + $0xf8] sm:$0xff]
        %v598 = vpack.c.bf16 %v567, %v566
        %v599 = vpack.c.bf16 %v569, %v568
        %v600 = vpack.c.bf16 %v571, %v570
        %v601 = vpack.c.bf16 %v573, %v572
        %v602 = vpack.c.bf16 %v575, %v574
        %v603 = vpack.c.bf16 %v577, %v576
        %v604 = vpack.c.bf16 %v579, %v578
        %v605 = vpack.c.bf16 %v581, %v580
        %v606 = vpack.c.bf16 %v583, %v582
        %v607 = vpack.c.bf16 %v585, %v584
        %v608 = vpack.c.bf16 %v587, %v586
        %v609 = vpack.c.bf16 %v589, %v588
        %v610 = vpack.c.bf16 %v591, %v590
        %v611 = vpack.c.bf16 %v593, %v592
        %v612 = vpack.c.bf16 %v595, %v594
        %v613 = vpack.c.bf16 %v597, %v596
        %v614 = vld [vmem:[%s1] sm:$0xf]
        %v615 = vld [vmem:[%s1 + $0x4] sm:$0xf]
        %v616 = vld [vmem:[%s2] sm:$0x1]
        %v618 = vlaneseq
        %v619 = vshrl.u32 %v618, 7
        %v620 = vsub.s32 0, %v619
        %v621 = vrot.slane %v616, %v620
        %v625 = vunpack.c.l.b16 %v614
        %v626 = vunpack.c.l.b16 %v615
        %v627 = vpack.c.b16 %v626, %v625
        %vm629 = vcmask 130048
        %v631 = vsel %vm629, %v598, 0
        %v634 = vsel %vm629, %v599, 0
        %v637 = vsel %vm629, %v600, 0
        %v640 = vsel %vm629, %v601, 0
        %v643 = vsel %vm629, %v602, 0
        %v646 = vsel %vm629, %v603, 0
        %v649 = vsel %vm629, %v604, 0
        %v652 = vsel %vm629, %v605, 0
        %v655 = vsel %vm629, %v606, 0
        %v658 = vsel %vm629, %v607, 0
        %v661 = vsel %vm629, %v608, 0
        %v664 = vsel %vm629, %v609, 0
        %v667 = vsel %vm629, %v610, 0
        %v670 = vsel %vm629, %v611, 0
        %v673 = vsel %vm629, %v612, 0
        %v676 = vsel %vm629, %v613, 0
        %678 = vmatprep.subr.bf16.mxu0 0
        %679 = vmatpush1.bf16.msra.mxu0 %v627
        %680 = vmatprep.subr.bf16.mxu0 0
        %681 = vmatpush1.bf16.msra.mxu0 0
        %682 = vmatprep.subr.bf16.mxu0 0
        %683 = vmatpush1.bf16.msra.mxu0 0
        %684 = vmatprep.subr.bf16.mxu0 0
        %685 = vmatpush1.bf16.msra.mxu0 0
        %686 = vmatprep.subr.bf16.mxu0 0
        %687 = vmatpush1.bf16.msra.mxu0 0
        %688 = vmatprep.subr.bf16.mxu0 0
        %689 = vmatpush1.bf16.msra.mxu0 0
        %690 = vmatprep.subr.bf16.mxu0 0
        %691 = vmatpush1.bf16.msra.mxu0 0
        %692 = vmatprep.subr.bf16.mxu0 0
        %693 = vmatpush1.bf16.msra.mxu0 0
        %694 = vmatprep.subr.bf16.mxu0 0
        %695 = vmatpush1.bf16.msra.mxu0 0
        %696 = vmatprep.subr.bf16.mxu0 0
        %697 = vmatpush1.bf16.msra.mxu0 0
        %698 = vmatprep.subr.bf16.mxu0 0
        %699 = vmatpush1.bf16.msra.mxu0 0
        %700 = vmatprep.subr.bf16.mxu0 0
        %701 = vmatpush1.bf16.msra.mxu0 0
        %702 = vmatprep.subr.bf16.mxu0 0
        %703 = vmatpush1.bf16.msra.mxu0 0
        %704 = vmatprep.subr.bf16.mxu0 0
        %705 = vmatpush1.bf16.msra.mxu0 0
        %706 = vmatprep.subr.bf16.mxu0 0
        %707 = vmatpush1.bf16.msra.mxu0 0
        %708 = vmatprep.subr.bf16.mxu0 0
        %709 = vmatpush1.bf16.msra.mxu0 0
        %710 = vmatprep.mubr.bf16.mxu0 0
        %711 = vmatmul.mubr.bf16.gmra.mrb[0].mxu0 %v631
        %v712 = vpop.f32.mrb[0].mxu0
        %v713 = vadd.f32 %v621, %v712
        %v714 = vpop.f32.mrb[0].mxu0
        %v715 = vpop.f32.mrb[0].mxu0
        %v716 = vadd.f32 %v621, %v715
        %v717 = vpop.f32.mrb[0].mxu0
        %718 = vmatprep.mubr.bf16.mxu0 0
        %719 = vmatmul.mubr.bf16.gmra.mrb[0].mxu0 %v634
        %v720 = vpop.f32.mrb[0].mxu0
        %v721 = vadd.f32 %v621, %v720
        %v722 = vpop.f32.mrb[0].mxu0
        %v723 = vpop.f32.mrb[0].mxu0
        %v724 = vadd.f32 %v621, %v723
        %v725 = vpop.f32.mrb[0].mxu0
        %726 = vmatprep.mubr.bf16.mxu0 0
        %727 = vmatmul.mubr.bf16.gmra.mrb[0].mxu0 %v637
        %v728 = vpop.f32.mrb[0].mxu0
        %v729 = vadd.f32 %v621, %v728
        %v730 = vpop.f32.mrb[0].mxu0
        %v731 = vpop.f32.mrb[0].mxu0
        %v732 = vadd.f32 %v621, %v731
        %v733 = vpop.f32.mrb[0].mxu0
        %734 = vmatprep.mubr.bf16.mxu0 0
        %735 = vmatmul.mubr.bf16.gmra.mrb[0].mxu0 %v640
        %v736 = vpop.f32.mrb[0].mxu0
        %v737 = vadd.f32 %v621, %v736
        %v738 = vpop.f32.mrb[0].mxu0
        %v739 = vpop.f32.mrb[0].mxu0
        %v740 = vadd.f32 %v621, %v739
        %v741 = vpop.f32.mrb[0].mxu0
        %742 = vmatprep.mubr.bf16.mxu0 0
        %743 = vmatmul.mubr.bf16.gmra.mrb[0].mxu0 %v643
        %v744 = vpop.f32.mrb[0].mxu0
        %v745 = vadd.f32 %v621, %v744
        %v746 = vpop.f32.mrb[0].mxu0
        %v747 = vpop.f32.mrb[0].mxu0
        %v748 = vadd.f32 %v621, %v747
        %v749 = vpop.f32.mrb[0].mxu0
        %750 = vmatprep.mubr.bf16.mxu0 0
        %751 = vmatmul.mubr.bf16.gmra.mrb[0].mxu0 %v646
        %v752 = vpop.f32.mrb[0].mxu0
        %v753 = vadd.f32 %v621, %v752
        %v754 = vpop.f32.mrb[0].mxu0
        %v755 = vpop.f32.mrb[0].mxu0
        %v756 = vadd.f32 %v621, %v755
        %v757 = vpop.f32.mrb[0].mxu0
        %758 = vmatprep.mubr.bf16.mxu0 0
        %759 = vmatmul.mubr.bf16.gmra.mrb[0].mxu0 %v649
        %v760 = vpop.f32.mrb[0].mxu0
        %v761 = vadd.f32 %v621, %v760
        %v762 = vpop.f32.mrb[0].mxu0
        %v763 = vpop.f32.mrb[0].mxu0
        %v764 = vadd.f32 %v621, %v763
        %v765 = vpop.f32.mrb[0].mxu0
        %766 = vmatprep.mubr.bf16.mxu0 0
        %767 = vmatmul.mubr.bf16.gmra.mrb[0].mxu0 %v652
        %v768 = vpop.f32.mrb[0].mxu0
        %v769 = vadd.f32 %v621, %v768
        %v770 = vpop.f32.mrb[0].mxu0
        %v771 = vpop.f32.mrb[0].mxu0
        %v772 = vadd.f32 %v621, %v771
        %v773 = vpop.f32.mrb[0].mxu0
        %774 = vmatprep.mubr.bf16.mxu0 0
        %775 = vmatmul.mubr.bf16.gmra.mrb[0].mxu0 %v655
        %v776 = vpop.f32.mrb[0].mxu0
        %v777 = vadd.f32 %v621, %v776
        %v778 = vpop.f32.mrb[0].mxu0
        %v779 = vpop.f32.mrb[0].mxu0
        %v780 = vadd.f32 %v621, %v779
        %v781 = vpop.f32.mrb[0].mxu0
        %782 = vmatprep.mubr.bf16.mxu0 0
        %783 = vmatmul.mubr.bf16.gmra.mrb[0].mxu0 %v658
        %v784 = vpop.f32.mrb[0].mxu0
        %v785 = vadd.f32 %v621, %v784
        %v786 = vpop.f32.mrb[0].mxu0
        %v787 = vpop.f32.mrb[0].mxu0
        %v788 = vadd.f32 %v621, %v787
        %v789 = vpop.f32.mrb[0].mxu0
        %790 = vmatprep.mubr.bf16.mxu0 0
        %791 = vmatmul.mubr.bf16.gmra.mrb[0].mxu0 %v661
        %v792 = vpop.f32.mrb[0].mxu0
        %v793 = vadd.f32 %v621, %v792
        %v794 = vpop.f32.mrb[0].mxu0
        %v795 = vpop.f32.mrb[0].mxu0
        %v796 = vadd.f32 %v621, %v795
        %v797 = vpop.f32.mrb[0].mxu0
        %798 = vmatprep.mubr.bf16.mxu0 0
        %799 = vmatmul.mubr.bf16.gmra.mrb[0].mxu0 %v664
        %v800 = vpop.f32.mrb[0].mxu0
        %v801 = vadd.f32 %v621, %v800
        %v802 = vpop.f32.mrb[0].mxu0
        %v803 = vpop.f32.mrb[0].mxu0
        %v804 = vadd.f32 %v621, %v803
        %v805 = vpop.f32.mrb[0].mxu0
        %806 = vmatprep.mubr.bf16.mxu0 0
        %807 = vmatmul.mubr.bf16.gmra.mrb[0].mxu0 %v667
        %v808 = vpop.f32.mrb[0].mxu0
        %v809 = vadd.f32 %v621, %v808
        %v810 = vpop.f32.mrb[0].mxu0
        %v811 = vpop.f32.mrb[0].mxu0
        %v812 = vadd.f32 %v621, %v811
        %v813 = vpop.f32.mrb[0].mxu0
        %814 = vmatprep.mubr.bf16.mxu0 0
        %815 = vmatmul.mubr.bf16.gmra.mrb[0].mxu0 %v670
        %v816 = vpop.f32.mrb[0].mxu0
        %v817 = vadd.f32 %v621, %v816
        %v818 = vpop.f32.mrb[0].mxu0
        %v819 = vpop.f32.mrb[0].mxu0
        %v820 = vadd.f32 %v621, %v819
        %v821 = vpop.f32.mrb[0].mxu0
        %822 = vmatprep.mubr.bf16.mxu0 0
        %823 = vmatmul.mubr.bf16.gmra.mrb[0].mxu0 %v673
        %v824 = vpop.f32.mrb[0].mxu0
        %v825 = vadd.f32 %v621, %v824
        %v826 = vpop.f32.mrb[0].mxu0
        %v827 = vpop.f32.mrb[0].mxu0
        %v828 = vadd.f32 %v621, %v827
        %v829 = vpop.f32.mrb[0].mxu0
        %830 = vmatprep.mubr.bf16.mxu0 0
        %831 = vmatmul.mubr.bf16.gmra.mrb[0].mxu0 %v676
        %v832 = vpop.f32.mrb[0].mxu0
        %v833 = vadd.f32 %v621, %v832
        %v834 = vpop.f32.mrb[0].mxu0
        %v835 = vpop.f32.mrb[0].mxu0
        %v836 = vadd.f32 %v621, %v835
        %v837 = vpop.f32.mrb[0].mxu0
        %838 = vdwg.mxu0
        %v839 = vtanh.pop %v713
        %v840 = vtanh.pop %v716
        %v841 = vtanh.pop %v721
        %v842 = vtanh.pop %v724
        %v843 = vtanh.pop %v729
        %v844 = vtanh.pop %v732
        %v845 = vtanh.pop %v737
        %v846 = vtanh.pop %v740
        %v847 = vtanh.pop %v745
        %v848 = vtanh.pop %v748
        %v849 = vtanh.pop %v753
        %v850 = vtanh.pop %v756
        %v851 = vtanh.pop %v761
        %v852 = vtanh.pop %v764
        %v853 = vtanh.pop %v769
        %v854 = vtanh.pop %v772
        %v855 = vtanh.pop %v777
        %v856 = vtanh.pop %v780
        %v857 = vtanh.pop %v785
        %v858 = vtanh.pop %v788
        %v859 = vtanh.pop %v793
        %v860 = vtanh.pop %v796
        %v861 = vtanh.pop %v801
        %v862 = vtanh.pop %v804
        %v863 = vtanh.pop %v809
        %v864 = vtanh.pop %v812
        %v865 = vtanh.pop %v817
        %v866 = vtanh.pop %v820
        %v867 = vtanh.pop %v825
        %v868 = vtanh.pop %v828
        %v869 = vtanh.pop %v833
        %v870 = vtanh.pop %v836
        %v871 = vpack.c.bf16 %v840, %v839
        %v872 = vpack.c.bf16 %v842, %v841
        %v873 = vpack.c.bf16 %v844, %v843
        %v874 = vpack.c.bf16 %v846, %v845
        %v875 = vpack.c.bf16 %v848, %v847
        %v876 = vpack.c.bf16 %v850, %v849
        %v877 = vpack.c.bf16 %v852, %v851
        %v878 = vpack.c.bf16 %v854, %v853
        %v879 = vpack.c.bf16 %v856, %v855
        %v880 = vpack.c.bf16 %v858, %v857
        %v881 = vpack.c.bf16 %v860, %v859
        %v882 = vpack.c.bf16 %v862, %v861
        %v883 = vpack.c.bf16 %v864, %v863
        %v884 = vpack.c.bf16 %v866, %v865
        %v885 = vpack.c.bf16 %v868, %v867
        %v886 = vpack.c.bf16 %v870, %v869
        %v887 = vld [vmem:[%s3] sm:$0xf]
        %v888 = vld [vmem:[%s3 + $0x4] sm:$0xf]
        %v889 = vld [vmem:[%s3 + $0x8] sm:$0xf]
        %v890 = vld [vmem:[%s3 + $0xc] sm:$0xf]
        %v891 = vld [vmem:[%s4] sm:$0x1]
        %v893 = vlaneseq
        %v894 = vshrl.u32 %v893, 7
        %v895 = vsub.s32 0, %v894
        %v896 = vrot.slane %v891, %v895
        %v902 = vunpack.c.l.b16 %v887
        %v903 = vunpack.c.l.b16 %v888
        %v904 = vunpack.c.l.b16 %v889
        %v905 = vunpack.c.l.b16 %v890
        %v906 = vpack.c.b16 %v903, %v902
        %v907 = vpack.c.b16 %v905, %v904
        %vm910 = vcmask 261120
        %v912 = vsel %vm910, %v871, 0
        %v915 = vsel %vm910, %v872, 0
        %v918 = vsel %vm910, %v873, 0
        %v921 = vsel %vm910, %v874, 0
        %v924 = vsel %vm910, %v875, 0
        %v927 = vsel %vm910, %v876, 0
        %v930 = vsel %vm910, %v877, 0
        %v933 = vsel %vm910, %v878, 0
        %v936 = vsel %vm910, %v879, 0
        %v939 = vsel %vm910, %v880, 0
        %v942 = vsel %vm910, %v881, 0
        %v945 = vsel %vm910, %v882, 0
        %v948 = vsel %vm910, %v883, 0
        %v951 = vsel %vm910, %v884, 0
        %v954 = vsel %vm910, %v885, 0
        %v957 = vsel %vm910, %v886, 0
        %959 = vmatprep.subr.bf16.mxu0 0
        %960 = vmatpush1.bf16.msra.mxu0 %v906
        %961 = vmatprep.subr.bf16.mxu0 0
        %962 = vmatpush1.bf16.msra.mxu0 %v907
        %963 = vmatprep.subr.bf16.mxu0 0
        %964 = vmatpush1.bf16.msra.mxu0 0
        %965 = vmatprep.subr.bf16.mxu0 0
        %966 = vmatpush1.bf16.msra.mxu0 0
        %967 = vmatprep.subr.bf16.mxu0 0
        %968 = vmatpush1.bf16.msra.mxu0 0
        %969 = vmatprep.subr.bf16.mxu0 0
        %970 = vmatpush1.bf16.msra.mxu0 0
        %971 = vmatprep.subr.bf16.mxu0 0
        %972 = vmatpush1.bf16.msra.mxu0 0
        %973 = vmatprep.subr.bf16.mxu0 0
        %974 = vmatpush1.bf16.msra.mxu0 0
        %975 = vmatprep.subr.bf16.mxu0 0
        %976 = vmatpush1.bf16.msra.mxu0 0
        %977 = vmatprep.subr.bf16.mxu0 0
        %978 = vmatpush1.bf16.msra.mxu0 0
        %979 = vmatprep.subr.bf16.mxu0 0
        %980 = vmatpush1.bf16.msra.mxu0 0
        %981 = vmatprep.subr.bf16.mxu0 0
        %982 = vmatpush1.bf16.msra.mxu0 0
        %983 = vmatprep.subr.bf16.mxu0 0
        %984 = vmatpush1.bf16.msra.mxu0 0
        %985 = vmatprep.subr.bf16.mxu0 0
        %986 = vmatpush1.bf16.msra.mxu0 0
        %987 = vmatprep.subr.bf16.mxu0 0
        %988 = vmatpush1.bf16.msra.mxu0 0
        %989 = vmatprep.subr.bf16.mxu0 0
        %990 = vmatpush1.bf16.msra.mxu0 0
        %991 = vmatprep.mubr.bf16.mxu0 0
        %992 = vmatmul.mubr.bf16.gmra.mrb[0].mxu0 %v912
        %v993 = vpop.f32.mrb[0].mxu0
        %v994 = vadd.f32 %v896, %v993
        %v995 = vpop.f32.mrb[0].mxu0
        %v996 = vpop.f32.mrb[0].mxu0
        %v997 = vadd.f32 %v896, %v996
        %v998 = vpop.f32.mrb[0].mxu0
        %999 = vmatprep.mubr.bf16.mxu0 0
        %1000 = vmatmul.mubr.bf16.gmra.mrb[0].mxu0 %v915
        %v1001 = vpop.f32.mrb[0].mxu0
        %v1002 = vadd.f32 %v896, %v1001
        %v1003 = vpop.f32.mrb[0].mxu0
        %v1004 = vpop.f32.mrb[0].mxu0
        %v1005 = vadd.f32 %v896, %v1004
        %v1006 = vpop.f32.mrb[0].mxu0
        %1007 = vmatprep.mubr.bf16.mxu0 0
        %1008 = vmatmul.mubr.bf16.gmra.mrb[0].mxu0 %v918
        %v1009 = vpop.f32.mrb[0].mxu0
        %v1010 = vadd.f32 %v896, %v1009
        %v1011 = vpop.f32.mrb[0].mxu0
        %v1012 = vpop.f32.mrb[0].mxu0
        %v1013 = vadd.f32 %v896, %v1012
        %v1014 = vpop.f32.mrb[0].mxu0
        %1015 = vmatprep.mubr.bf16.mxu0 0
        %1016 = vmatmul.mubr.bf16.gmra.mrb[0].mxu0 %v921
        %v1017 = vpop.f32.mrb[0].mxu0
        %v1018 = vadd.f32 %v896, %v1017
        %v1019 = vpop.f32.mrb[0].mxu0
        %v1020 = vpop.f32.mrb[0].mxu0
        %v1021 = vadd.f32 %v896, %v1020
        %v1022 = vpop.f32.mrb[0].mxu0
        %1023 = vmatprep.mubr.bf16.mxu0 0
        %1024 = vmatmul.mubr.bf16.gmra.mrb[0].mxu0 %v924
        %v1025 = vpop.f32.mrb[0].mxu0
        %v1026 = vadd.f32 %v896, %v1025
        %v1027 = vpop.f32.mrb[0].mxu0
        %v1028 = vpop.f32.mrb[0].mxu0
        %v1029 = vadd.f32 %v896, %v1028
        %v1030 = vpop.f32.mrb[0].mxu0
        %1031 = vmatprep.mubr.bf16.mxu0 0
        %1032 = vmatmul.mubr.bf16.gmra.mrb[0].mxu0 %v927
        %v1033 = vpop.f32.mrb[0].mxu0
        %v1034 = vadd.f32 %v896, %v1033
        %v1035 = vpop.f32.mrb[0].mxu0
        %v1036 = vpop.f32.mrb[0].mxu0
        %v1037 = vadd.f32 %v896, %v1036
        %v1038 = vpop.f32.mrb[0].mxu0
        %1039 = vmatprep.mubr.bf16.mxu0 0
        %1040 = vmatmul.mubr.bf16.gmra.mrb[0].mxu0 %v930
        %v1041 = vpop.f32.mrb[0].mxu0
        %v1042 = vadd.f32 %v896, %v1041
        %v1043 = vpop.f32.mrb[0].mxu0
        %v1044 = vpop.f32.mrb[0].mxu0
        %v1045 = vadd.f32 %v896, %v1044
        %v1046 = vpop.f32.mrb[0].mxu0
        %1047 = vmatprep.mubr.bf16.mxu0 0
        %1048 = vmatmul.mubr.bf16.gmra.mrb[0].mxu0 %v933
        %v1049 = vpop.f32.mrb[0].mxu0
        %v1050 = vadd.f32 %v896, %v1049
        %v1051 = vpop.f32.mrb[0].mxu0
        %v1052 = vpop.f32.mrb[0].mxu0
        %v1053 = vadd.f32 %v896, %v1052
        %v1054 = vpop.f32.mrb[0].mxu0
        %1055 = vmatprep.mubr.bf16.mxu0 0
        %1056 = vmatmul.mubr.bf16.gmra.mrb[0].mxu0 %v936
        %v1057 = vpop.f32.mrb[0].mxu0
        %v1058 = vadd.f32 %v896, %v1057
        %v1059 = vpop.f32.mrb[0].mxu0
        %v1060 = vpop.f32.mrb[0].mxu0
        %v1061 = vadd.f32 %v896, %v1060
        %v1062 = vpop.f32.mrb[0].mxu0
        %1063 = vmatprep.mubr.bf16.mxu0 0
        %1064 = vmatmul.mubr.bf16.gmra.mrb[0].mxu0 %v939
        %v1065 = vpop.f32.mrb[0].mxu0
        %v1066 = vadd.f32 %v896, %v1065
        %v1067 = vpop.f32.mrb[0].mxu0
        %v1068 = vpop.f32.mrb[0].mxu0
        %v1069 = vadd.f32 %v896, %v1068
        %v1070 = vpop.f32.mrb[0].mxu0
        %1071 = vmatprep.mubr.bf16.mxu0 0
        %1072 = vmatmul.mubr.bf16.gmra.mrb[0].mxu0 %v942
        %v1073 = vpop.f32.mrb[0].mxu0
        %v1074 = vadd.f32 %v896, %v1073
        %v1075 = vpop.f32.mrb[0].mxu0
        %v1076 = vpop.f32.mrb[0].mxu0
        %v1077 = vadd.f32 %v896, %v1076
        %v1078 = vpop.f32.mrb[0].mxu0
        %1079 = vmatprep.mubr.bf16.mxu0 0
        %1080 = vmatmul.mubr.bf16.gmra.mrb[0].mxu0 %v945
        %v1081 = vpop.f32.mrb[0].mxu0
        %v1082 = vadd.f32 %v896, %v1081
        %v1083 = vpop.f32.mrb[0].mxu0
        %v1084 = vpop.f32.mrb[0].mxu0
        %v1085 = vadd.f32 %v896, %v1084
        %v1086 = vpop.f32.mrb[0].mxu0
        %1087 = vmatprep.mubr.bf16.mxu0 0
        %1088 = vmatmul.mubr.bf16.gmra.mrb[0].mxu0 %v948
        %v1089 = vpop.f32.mrb[0].mxu0
        %v1090 = vadd.f32 %v896, %v1089
        %v1091 = vpop.f32.mrb[0].mxu0
        %v1092 = vpop.f32.mrb[0].mxu0
        %v1093 = vadd.f32 %v896, %v1092
        %v1094 = vpop.f32.mrb[0].mxu0
        %1095 = vmatprep.mubr.bf16.mxu0 0
        %1096 = vmatmul.mubr.bf16.gmra.mrb[0].mxu0 %v951
        %v1097 = vpop.f32.mrb[0].mxu0
        %v1098 = vadd.f32 %v896, %v1097
        %v1099 = vpop.f32.mrb[0].mxu0
        %v1100 = vpop.f32.mrb[0].mxu0
        %v1101 = vadd.f32 %v896, %v1100
        %v1102 = vpop.f32.mrb[0].mxu0
        %1103 = vmatprep.mubr.bf16.mxu0 0
        %1104 = vmatmul.mubr.bf16.gmra.mrb[0].mxu0 %v954
        %v1105 = vpop.f32.mrb[0].mxu0
        %v1106 = vadd.f32 %v896, %v1105
        %v1107 = vpop.f32.mrb[0].mxu0
        %v1108 = vpop.f32.mrb[0].mxu0
        %v1109 = vadd.f32 %v896, %v1108
        %v1110 = vpop.f32.mrb[0].mxu0
        %1111 = vmatprep.mubr.bf16.mxu0 0
        %1112 = vmatmul.mubr.bf16.gmra.mrb[0].mxu0 %v957
        %v1113 = vpop.f32.mrb[0].mxu0
        %v1114 = vadd.f32 %v896, %v1113
        %v1115 = vpop.f32.mrb[0].mxu0
        %v1116 = vpop.f32.mrb[0].mxu0
        %v1117 = vadd.f32 %v896, %v1116
        %v1118 = vpop.f32.mrb[0].mxu0
        %1119 = vdwg.mxu0
        %v1120 = vsel %vm629, %v994, 0.0
        %1121 = vadd.xlane.f32.xlu0 %v1120
        %v1122 = vpop.xlane.xlu0 %1121
        %v1123 = vsel %vm629, %v997, 0.0
        %1124 = vadd.xlane.f32.xlu0 %v1123
        %v1125 = vpop.xlane.xlu0 %1124
        %v1126 = vsel %vm629, %v1002, 0.0
        %1127 = vadd.xlane.f32.xlu0 %v1126
        %v1128 = vpop.xlane.xlu0 %1127
        %v1129 = vsel %vm629, %v1005, 0.0
        %1130 = vadd.xlane.f32.xlu0 %v1129
        %v1131 = vpop.xlane.xlu0 %1130
        %v1132 = vsel %vm629, %v1010, 0.0
        %1133 = vadd.xlane.f32.xlu0 %v1132
        %v1134 = vpop.xlane.xlu0 %1133
        %v1135 = vsel %vm629, %v1013, 0.0
        %1136 = vadd.xlane.f32.xlu0 %v1135
        %v1137 = vpop.xlane.xlu0 %1136
        %v1138 = vsel %vm629, %v1018, 0.0
        %1139 = vadd.xlane.f32.xlu0 %v1138
        %v1140 = vpop.xlane.xlu0 %1139
        %v1141 = vsel %vm629, %v1021, 0.0
        %1142 = vadd.xlane.f32.xlu0 %v1141
        %v1143 = vpop.xlane.xlu0 %1142
        %v1144 = vsel %vm629, %v1026, 0.0
        %1145 = vadd.xlane.f32.xlu0 %v1144
        %v1146 = vpop.xlane.xlu0 %1145
        %v1147 = vsel %vm629, %v1029, 0.0
        %1148 = vadd.xlane.f32.xlu0 %v1147
        %v1149 = vpop.xlane.xlu0 %1148
        %v1150 = vsel %vm629, %v1034, 0.0
        %1151 = vadd.xlane.f32.xlu0 %v1150
        %v1152 = vpop.xlane.xlu0 %1151
        %v1153 = vsel %vm629, %v1037, 0.0
        %1154 = vadd.xlane.f32.xlu0 %v1153
        %v1155 = vpop.xlane.xlu0 %1154
        %v1156 = vsel %vm629, %v1042, 0.0
        %1157 = vadd.xlane.f32.xlu0 %v1156
        %v1158 = vpop.xlane.xlu0 %1157
        %v1159 = vsel %vm629, %v1045, 0.0
        %1160 = vadd.xlane.f32.xlu0 %v1159
        %v1161 = vpop.xlane.xlu0 %1160
        %v1162 = vsel %vm629, %v1050, 0.0
        %1163 = vadd.xlane.f32.xlu0 %v1162
        %v1164 = vpop.xlane.xlu0 %1163
        %v1165 = vsel %vm629, %v1053, 0.0
        %1166 = vadd.xlane.f32.xlu0 %v1165
        %v1167 = vpop.xlane.xlu0 %1166
        %v1168 = vsel %vm629, %v1058, 0.0
        %1169 = vadd.xlane.f32.xlu0 %v1168
        %v1170 = vpop.xlane.xlu0 %1169
        %v1171 = vsel %vm629, %v1061, 0.0
        %1172 = vadd.xlane.f32.xlu0 %v1171
        %v1173 = vpop.xlane.xlu0 %1172
        %v1174 = vsel %vm629, %v1066, 0.0
        %1175 = vadd.xlane.f32.xlu0 %v1174
        %v1176 = vpop.xlane.xlu0 %1175
        %v1177 = vsel %vm629, %v1069, 0.0
        %1178 = vadd.xlane.f32.xlu0 %v1177
        %v1179 = vpop.xlane.xlu0 %1178
        %v1180 = vsel %vm629, %v1074, 0.0
        %1181 = vadd.xlane.f32.xlu0 %v1180
        %v1182 = vpop.xlane.xlu0 %1181
        %v1183 = vsel %vm629, %v1077, 0.0
        %1184 = vadd.xlane.f32.xlu0 %v1183
        %v1185 = vpop.xlane.xlu0 %1184
        %v1186 = vsel %vm629, %v1082, 0.0
        %1187 = vadd.xlane.f32.xlu0 %v1186
        %v1188 = vpop.xlane.xlu0 %1187
        %v1189 = vsel %vm629, %v1085, 0.0
        %1190 = vadd.xlane.f32.xlu0 %v1189
        %v1191 = vpop.xlane.xlu0 %1190
        %v1192 = vsel %vm629, %v1090, 0.0
        %1193 = vadd.xlane.f32.xlu0 %v1192
        %v1194 = vpop.xlane.xlu0 %1193
        %v1195 = vsel %vm629, %v1093, 0.0
        %1196 = vadd.xlane.f32.xlu0 %v1195
        %v1197 = vpop.xlane.xlu0 %1196
        %v1198 = vsel %vm629, %v1098, 0.0
        %1199 = vadd.xlane.f32.xlu0 %v1198
        %v1200 = vpop.xlane.xlu0 %1199
        %v1201 = vsel %vm629, %v1101, 0.0
        %1202 = vadd.xlane.f32.xlu0 %v1201
        %v1203 = vpop.xlane.xlu0 %1202
        %v1204 = vsel %vm629, %v1106, 0.0
        %1205 = vadd.xlane.f32.xlu0 %v1204
        %v1206 = vpop.xlane.xlu0 %1205
        %v1207 = vsel %vm629, %v1109, 0.0
        %1208 = vadd.xlane.f32.xlu0 %v1207
        %v1209 = vpop.xlane.xlu0 %1208
        %v1210 = vsel %vm629, %v1114, 0.0
        %1211 = vadd.xlane.f32.xlu0 %v1210
        %v1212 = vpop.xlane.xlu0 %1211
        %v1213 = vsel %vm629, %v1117, 0.0
        %1214 = vadd.xlane.f32.xlu0 %v1213
        %v1215 = vpop.xlane.xlu0 %1214
        %v1216 = vrcp.pop 16.0
        %v1217 = vmul.f32 %v1122, %v1216
        %v1218 = vmul.f32 %v1125, %v1216
        %v1219 = vmul.f32 %v1128, %v1216
        %v1220 = vmul.f32 %v1131, %v1216
        %v1221 = vmul.f32 %v1134, %v1216
        %v1222 = vmul.f32 %v1137, %v1216
        %v1223 = vmul.f32 %v1140, %v1216
        %v1224 = vmul.f32 %v1143, %v1216
        %v1225 = vmul.f32 %v1146, %v1216
        %v1226 = vmul.f32 %v1149, %v1216
        %v1227 = vmul.f32 %v1152, %v1216
        %v1228 = vmul.f32 %v1155, %v1216
        %v1229 = vmul.f32 %v1158, %v1216
        %v1230 = vmul.f32 %v1161, %v1216
        %v1231 = vmul.f32 %v1164, %v1216
        %v1232 = vmul.f32 %v1167, %v1216
        %v1233 = vmul.f32 %v1170, %v1216
        %v1234 = vmul.f32 %v1173, %v1216
        %v1235 = vmul.f32 %v1176, %v1216
        %v1236 = vmul.f32 %v1179, %v1216
        %v1237 = vmul.f32 %v1182, %v1216
        %v1238 = vmul.f32 %v1185, %v1216
        %v1239 = vmul.f32 %v1188, %v1216
        %v1240 = vmul.f32 %v1191, %v1216
        %v1241 = vmul.f32 %v1194, %v1216
        %v1242 = vmul.f32 %v1197, %v1216
        %v1243 = vmul.f32 %v1200, %v1216
        %v1244 = vmul.f32 %v1203, %v1216
        %v1245 = vmul.f32 %v1206, %v1216
        %v1246 = vmul.f32 %v1209, %v1216
        %v1247 = vmul.f32 %v1212, %v1216
        %v1248 = vmul.f32 %v1215, %v1216
        %v1249 = vsub.f32 %v994, %v1217
        %v1250 = vsub.f32 %v997, %v1218
        %v1251 = vsub.f32 %v1002, %v1219
        %v1252 = vsub.f32 %v1005, %v1220
        %v1253 = vsub.f32 %v1010, %v1221
        %v1254 = vsub.f32 %v1013, %v1222
        %v1255 = vsub.f32 %v1018, %v1223
        %v1256 = vsub.f32 %v1021, %v1224
        %v1257 = vsub.f32 %v1026, %v1225
        %v1258 = vsub.f32 %v1029, %v1226
        %v1259 = vsub.f32 %v1034, %v1227
        %v1260 = vsub.f32 %v1037, %v1228
        %v1261 = vsub.f32 %v1042, %v1229
        %v1262 = vsub.f32 %v1045, %v1230
        %v1263 = vsub.f32 %v1050, %v1231
        %v1264 = vsub.f32 %v1053, %v1232
        %v1265 = vsub.f32 %v1058, %v1233
        %v1266 = vsub.f32 %v1061, %v1234
        %v1267 = vsub.f32 %v1066, %v1235
        %v1268 = vsub.f32 %v1069, %v1236
        %v1269 = vsub.f32 %v1074, %v1237
        %v1270 = vsub.f32 %v1077, %v1238
        %v1271 = vsub.f32 %v1082, %v1239
        %v1272 = vsub.f32 %v1085, %v1240
        %v1273 = vsub.f32 %v1090, %v1241
        %v1274 = vsub.f32 %v1093, %v1242
        %v1275 = vsub.f32 %v1098, %v1243
        %v1276 = vsub.f32 %v1101, %v1244
        %v1277 = vsub.f32 %v1106, %v1245
        %v1278 = vsub.f32 %v1109, %v1246
        %v1279 = vsub.f32 %v1114, %v1247
        %v1280 = vsub.f32 %v1117, %v1248
        %v1281 = vmul.f32 %v1249, %v1249
        %v1282 = vmul.f32 %v1250, %v1250
        %v1283 = vmul.f32 %v1251, %v1251
        %v1284 = vmul.f32 %v1252, %v1252
        %v1285 = vmul.f32 %v1253, %v1253
        %v1286 = vmul.f32 %v1254, %v1254
        %v1287 = vmul.f32 %v1255, %v1255
        %v1288 = vmul.f32 %v1256, %v1256
        %v1289 = vmul.f32 %v1257, %v1257
        %v1290 = vmul.f32 %v1258, %v1258
        %v1291 = vmul.f32 %v1259, %v1259
        %v1292 = vmul.f32 %v1260, %v1260
        %v1293 = vmul.f32 %v1261, %v1261
        %v1294 = vmul.f32 %v1262, %v1262
        %v1295 = vmul.f32 %v1263, %v1263
        %v1296 = vmul.f32 %v1264, %v1264
        %v1297 = vmul.f32 %v1265, %v1265
        %v1298 = vmul.f32 %v1266, %v1266
        %v1299 = vmul.f32 %v1267, %v1267
        %v1300 = vmul.f32 %v1268, %v1268
        %v1301 = vmul.f32 %v1269, %v1269
        %v1302 = vmul.f32 %v1270, %v1270
        %v1303 = vmul.f32 %v1271, %v1271
        %v1304 = vmul.f32 %v1272, %v1272
        %v1305 = vmul.f32 %v1273, %v1273
        %v1306 = vmul.f32 %v1274, %v1274
        %v1307 = vmul.f32 %v1275, %v1275
        %v1308 = vmul.f32 %v1276, %v1276
        %v1309 = vmul.f32 %v1277, %v1277
        %v1310 = vmul.f32 %v1278, %v1278
        %v1311 = vmul.f32 %v1279, %v1279
        %v1312 = vmul.f32 %v1280, %v1280
        %v1313 = vsel %vm629, %v1281, 0.0
        %1314 = vadd.xlane.f32.xlu0 %v1313
        %v1315 = vpop.xlane.xlu0 %1314
        %v1316 = vsel %vm629, %v1282, 0.0
        %1317 = vadd.xlane.f32.xlu0 %v1316
        %v1318 = vpop.xlane.xlu0 %1317
        %v1319 = vsel %vm629, %v1283, 0.0
        %1320 = vadd.xlane.f32.xlu0 %v1319
        %v1321 = vpop.xlane.xlu0 %1320
        %v1322 = vsel %vm629, %v1284, 0.0
        %1323 = vadd.xlane.f32.xlu0 %v1322
        %v1324 = vpop.xlane.xlu0 %1323
        %v1325 = vsel %vm629, %v1285, 0.0
        %1326 = vadd.xlane.f32.xlu0 %v1325
        %v1327 = vpop.xlane.xlu0 %1326
        %v1328 = vsel %vm629, %v1286, 0.0
        %1329 = vadd.xlane.f32.xlu0 %v1328
        %v1330 = vpop.xlane.xlu0 %1329
        %v1331 = vsel %vm629, %v1287, 0.0
        %1332 = vadd.xlane.f32.xlu0 %v1331
        %v1333 = vpop.xlane.xlu0 %1332
        %v1334 = vsel %vm629, %v1288, 0.0
        %1335 = vadd.xlane.f32.xlu0 %v1334
        %v1336 = vpop.xlane.xlu0 %1335
        %v1337 = vsel %vm629, %v1289, 0.0
        %1338 = vadd.xlane.f32.xlu0 %v1337
        %v1339 = vpop.xlane.xlu0 %1338
        %v1340 = vsel %vm629, %v1290, 0.0
        %1341 = vadd.xlane.f32.xlu0 %v1340
        %v1342 = vpop.xlane.xlu0 %1341
        %v1343 = vsel %vm629, %v1291, 0.0
        %1344 = vadd.xlane.f32.xlu0 %v1343
        %v1345 = vpop.xlane.xlu0 %1344
        %v1346 = vsel %vm629, %v1292, 0.0
        %1347 = vadd.xlane.f32.xlu0 %v1346
        %v1348 = vpop.xlane.xlu0 %1347
        %v1349 = vsel %vm629, %v1293, 0.0
        %1350 = vadd.xlane.f32.xlu0 %v1349
        %v1351 = vpop.xlane.xlu0 %1350
        %v1352 = vsel %vm629, %v1294, 0.0
        %1353 = vadd.xlane.f32.xlu0 %v1352
        %v1354 = vpop.xlane.xlu0 %1353
        %v1355 = vsel %vm629, %v1295, 0.0
        %1356 = vadd.xlane.f32.xlu0 %v1355
        %v1357 = vpop.xlane.xlu0 %1356
        %v1358 = vsel %vm629, %v1296, 0.0
        %1359 = vadd.xlane.f32.xlu0 %v1358
        %v1360 = vpop.xlane.xlu0 %1359
        %v1361 = vsel %vm629, %v1297, 0.0
        %1362 = vadd.xlane.f32.xlu0 %v1361
        %v1363 = vpop.xlane.xlu0 %1362
        %v1364 = vsel %vm629, %v1298, 0.0
        %1365 = vadd.xlane.f32.xlu0 %v1364
        %v1366 = vpop.xlane.xlu0 %1365
        %v1367 = vsel %vm629, %v1299, 0.0
        %1368 = vadd.xlane.f32.xlu0 %v1367
        %v1369 = vpop.xlane.xlu0 %1368
        %v1370 = vsel %vm629, %v1300, 0.0
        %1371 = vadd.xlane.f32.xlu0 %v1370
        %v1372 = vpop.xlane.xlu0 %1371
        %v1373 = vsel %vm629, %v1301, 0.0
        %1374 = vadd.xlane.f32.xlu0 %v1373
        %v1375 = vpop.xlane.xlu0 %1374
        %v1376 = vsel %vm629, %v1302, 0.0
        %1377 = vadd.xlane.f32.xlu0 %v1376
        %v1378 = vpop.xlane.xlu0 %1377
        %v1379 = vsel %vm629, %v1303, 0.0
        %1380 = vadd.xlane.f32.xlu0 %v1379
        %v1381 = vpop.xlane.xlu0 %1380
        %v1382 = vsel %vm629, %v1304, 0.0
        %1383 = vadd.xlane.f32.xlu0 %v1382
        %v1384 = vpop.xlane.xlu0 %1383
        %v1385 = vsel %vm629, %v1305, 0.0
        %1386 = vadd.xlane.f32.xlu0 %v1385
        %v1387 = vpop.xlane.xlu0 %1386
        %v1388 = vsel %vm629, %v1306, 0.0
        %1389 = vadd.xlane.f32.xlu0 %v1388
        %v1390 = vpop.xlane.xlu0 %1389
        %v1391 = vsel %vm629, %v1307, 0.0
        %1392 = vadd.xlane.f32.xlu0 %v1391
        %v1393 = vpop.xlane.xlu0 %1392
        %v1394 = vsel %vm629, %v1308, 0.0
        %1395 = vadd.xlane.f32.xlu0 %v1394
        %v1396 = vpop.xlane.xlu0 %1395
        %v1397 = vsel %vm629, %v1309, 0.0
        %1398 = vadd.xlane.f32.xlu0 %v1397
        %v1399 = vpop.xlane.xlu0 %1398
        %v1400 = vsel %vm629, %v1310, 0.0
        %1401 = vadd.xlane.f32.xlu0 %v1400
        %v1402 = vpop.xlane.xlu0 %1401
        %v1403 = vsel %vm629, %v1311, 0.0
        %1404 = vadd.xlane.f32.xlu0 %v1403
        %v1405 = vpop.xlane.xlu0 %1404
        %v1406 = vsel %vm629, %v1312, 0.0
        %1407 = vadd.xlane.f32.xlu0 %v1406
        %v1408 = vpop.xlane.xlu0 %1407
        %v1409 = vrsqrt.pop %v1315
        %v1410 = vmul.f32 %v1315, %v1409
        %vm1411 = vcmp.eq.f32.partialorder %v1315, inf
        %v1412 = vsel %vm1411, %v1315, %v1410
        %vm1413 = vcmp.eq.f32.partialorder %v1315, 0.0
        %v1414 = vand.u32 %v1315, 2147483648
        %v1415 = vsel %vm1413, %v1414, %v1412
        %v1416 = vrsqrt.pop %v1318
        %v1417 = vmul.f32 %v1318, %v1416
        %vm1418 = vcmp.eq.f32.partialorder %v1318, inf
        %v1419 = vsel %vm1418, %v1318, %v1417
        %vm1420 = vcmp.eq.f32.partialorder %v1318, 0.0
        %v1421 = vand.u32 %v1318, 2147483648
        %v1422 = vsel %vm1420, %v1421, %v1419
        %v1423 = vrsqrt.pop %v1321
        %v1424 = vmul.f32 %v1321, %v1423
        %vm1425 = vcmp.eq.f32.partialorder %v1321, inf
        %v1426 = vsel %vm1425, %v1321, %v1424
        %vm1427 = vcmp.eq.f32.partialorder %v1321, 0.0
        %v1428 = vand.u32 %v1321, 2147483648
        %v1429 = vsel %vm1427, %v1428, %v1426
        %v1430 = vrsqrt.pop %v1324
        %v1431 = vmul.f32 %v1324, %v1430
        %vm1432 = vcmp.eq.f32.partialorder %v1324, inf
        %v1433 = vsel %vm1432, %v1324, %v1431
        %vm1434 = vcmp.eq.f32.partialorder %v1324, 0.0
        %v1435 = vand.u32 %v1324, 2147483648
        %v1436 = vsel %vm1434, %v1435, %v1433
        %v1437 = vrsqrt.pop %v1327
        %v1438 = vmul.f32 %v1327, %v1437
        %vm1439 = vcmp.eq.f32.partialorder %v1327, inf
        %v1440 = vsel %vm1439, %v1327, %v1438
        %vm1441 = vcmp.eq.f32.partialorder %v1327, 0.0
        %v1442 = vand.u32 %v1327, 2147483648
        %v1443 = vsel %vm1441, %v1442, %v1440
        %v1444 = vrsqrt.pop %v1330
        %v1445 = vmul.f32 %v1330, %v1444
        %vm1446 = vcmp.eq.f32.partialorder %v1330, inf
        %v1447 = vsel %vm1446, %v1330, %v1445
        %vm1448 = vcmp.eq.f32.partialorder %v1330, 0.0
        %v1449 = vand.u32 %v1330, 2147483648
        %v1450 = vsel %vm1448, %v1449, %v1447
        %v1451 = vrsqrt.pop %v1333
        %v1452 = vmul.f32 %v1333, %v1451
        %vm1453 = vcmp.eq.f32.partialorder %v1333, inf
        %v1454 = vsel %vm1453, %v1333, %v1452
        %vm1455 = vcmp.eq.f32.partialorder %v1333, 0.0
        %v1456 = vand.u32 %v1333, 2147483648
        %v1457 = vsel %vm1455, %v1456, %v1454
        %v1458 = vrsqrt.pop %v1336
        %v1459 = vmul.f32 %v1336, %v1458
        %vm1460 = vcmp.eq.f32.partialorder %v1336, inf
        %v1461 = vsel %vm1460, %v1336, %v1459
        %vm1462 = vcmp.eq.f32.partialorder %v1336, 0.0
        %v1463 = vand.u32 %v1336, 2147483648
        %v1464 = vsel %vm1462, %v1463, %v1461
        %v1465 = vrsqrt.pop %v1339
        %v1466 = vmul.f32 %v1339, %v1465
        %vm1467 = vcmp.eq.f32.partialorder %v1339, inf
        %v1468 = vsel %vm1467, %v1339, %v1466
        %vm1469 = vcmp.eq.f32.partialorder %v1339, 0.0
        %v1470 = vand.u32 %v1339, 2147483648
        %v1471 = vsel %vm1469, %v1470, %v1468
        %v1472 = vrsqrt.pop %v1342
        %v1473 = vmul.f32 %v1342, %v1472
        %vm1474 = vcmp.eq.f32.partialorder %v1342, inf
        %v1475 = vsel %vm1474, %v1342, %v1473
        %vm1476 = vcmp.eq.f32.partialorder %v1342, 0.0
        %v1477 = vand.u32 %v1342, 2147483648
        %v1478 = vsel %vm1476, %v1477, %v1475
        %v1479 = vrsqrt.pop %v1345
        %v1480 = vmul.f32 %v1345, %v1479
        %vm1481 = vcmp.eq.f32.partialorder %v1345, inf
        %v1482 = vsel %vm1481, %v1345, %v1480
        %vm1483 = vcmp.eq.f32.partialorder %v1345, 0.0
        %v1484 = vand.u32 %v1345, 2147483648
        %v1485 = vsel %vm1483, %v1484, %v1482
        %v1486 = vrsqrt.pop %v1348
        %v1487 = vmul.f32 %v1348, %v1486
        %vm1488 = vcmp.eq.f32.partialorder %v1348, inf
        %v1489 = vsel %vm1488, %v1348, %v1487
        %vm1490 = vcmp.eq.f32.partialorder %v1348, 0.0
        %v1491 = vand.u32 %v1348, 2147483648
        %v1492 = vsel %vm1490, %v1491, %v1489
        %v1493 = vrsqrt.pop %v1351
        %v1494 = vmul.f32 %v1351, %v1493
        %vm1495 = vcmp.eq.f32.partialorder %v1351, inf
        %v1496 = vsel %vm1495, %v1351, %v1494
        %vm1497 = vcmp.eq.f32.partialorder %v1351, 0.0
        %v1498 = vand.u32 %v1351, 2147483648
        %v1499 = vsel %vm1497, %v1498, %v1496
        %v1500 = vrsqrt.pop %v1354
        %v1501 = vmul.f32 %v1354, %v1500
        %vm1502 = vcmp.eq.f32.partialorder %v1354, inf
        %v1503 = vsel %vm1502, %v1354, %v1501
        %vm1504 = vcmp.eq.f32.partialorder %v1354, 0.0
        %v1505 = vand.u32 %v1354, 2147483648
        %v1506 = vsel %vm1504, %v1505, %v1503
        %v1507 = vrsqrt.pop %v1357
        %v1508 = vmul.f32 %v1357, %v1507
        %vm1509 = vcmp.eq.f32.partialorder %v1357, inf
        %v1510 = vsel %vm1509, %v1357, %v1508
        %vm1511 = vcmp.eq.f32.partialorder %v1357, 0.0
        %v1512 = vand.u32 %v1357, 2147483648
        %v1513 = vsel %vm1511, %v1512, %v1510
        %v1514 = vrsqrt.pop %v1360
        %v1515 = vmul.f32 %v1360, %v1514
        %vm1516 = vcmp.eq.f32.partialorder %v1360, inf
        %v1517 = vsel %vm1516, %v1360, %v1515
        %vm1518 = vcmp.eq.f32.partialorder %v1360, 0.0
        %v1519 = vand.u32 %v1360, 2147483648
        %v1520 = vsel %vm1518, %v1519, %v1517
        %v1521 = vrsqrt.pop %v1363
        %v1522 = vmul.f32 %v1363, %v1521
        %vm1523 = vcmp.eq.f32.partialorder %v1363, inf
        %v1524 = vsel %vm1523, %v1363, %v1522
        %vm1525 = vcmp.eq.f32.partialorder %v1363, 0.0
        %v1526 = vand.u32 %v1363, 2147483648
        %v1527 = vsel %vm1525, %v1526, %v1524
        %v1528 = vrsqrt.pop %v1366
        %v1529 = vmul.f32 %v1366, %v1528
        %vm1530 = vcmp.eq.f32.partialorder %v1366, inf
        %v1531 = vsel %vm1530, %v1366, %v1529
        %vm1532 = vcmp.eq.f32.partialorder %v1366, 0.0
        %v1533 = vand.u32 %v1366, 2147483648
        %v1534 = vsel %vm1532, %v1533, %v1531
        %v1535 = vrsqrt.pop %v1369
        %v1536 = vmul.f32 %v1369, %v1535
        %vm1537 = vcmp.eq.f32.partialorder %v1369, inf
        %v1538 = vsel %vm1537, %v1369, %v1536
        %vm1539 = vcmp.eq.f32.partialorder %v1369, 0.0
        %v1540 = vand.u32 %v1369, 2147483648
        %v1541 = vsel %vm1539, %v1540, %v1538
        %v1542 = vrsqrt.pop %v1372
        %v1543 = vmul.f32 %v1372, %v1542
        %vm1544 = vcmp.eq.f32.partialorder %v1372, inf
        %v1545 = vsel %vm1544, %v1372, %v1543
        %vm1546 = vcmp.eq.f32.partialorder %v1372, 0.0
        %v1547 = vand.u32 %v1372, 2147483648
        %v1548 = vsel %vm1546, %v1547, %v1545
        %v1549 = vrsqrt.pop %v1375
        %v1550 = vmul.f32 %v1375, %v1549
        %vm1551 = vcmp.eq.f32.partialorder %v1375, inf
        %v1552 = vsel %vm1551, %v1375, %v1550
        %vm1553 = vcmp.eq.f32.partialorder %v1375, 0.0
        %v1554 = vand.u32 %v1375, 2147483648
        %v1555 = vsel %vm1553, %v1554, %v1552
        %v1556 = vrsqrt.pop %v1378
        %v1557 = vmul.f32 %v1378, %v1556
        %vm1558 = vcmp.eq.f32.partialorder %v1378, inf
        %v1559 = vsel %vm1558, %v1378, %v1557
        %vm1560 = vcmp.eq.f32.partialorder %v1378, 0.0
        %v1561 = vand.u32 %v1378, 2147483648
        %v1562 = vsel %vm1560, %v1561, %v1559
        %v1563 = vrsqrt.pop %v1381
        %v1564 = vmul.f32 %v1381, %v1563
        %vm1565 = vcmp.eq.f32.partialorder %v1381, inf
        %v1566 = vsel %vm1565, %v1381, %v1564
        %vm1567 = vcmp.eq.f32.partialorder %v1381, 0.0
        %v1568 = vand.u32 %v1381, 2147483648
        %v1569 = vsel %vm1567, %v1568, %v1566
        %v1570 = vrsqrt.pop %v1384
        %v1571 = vmul.f32 %v1384, %v1570
        %vm1572 = vcmp.eq.f32.partialorder %v1384, inf
        %v1573 = vsel %vm1572, %v1384, %v1571
        %vm1574 = vcmp.eq.f32.partialorder %v1384, 0.0
        %v1575 = vand.u32 %v1384, 2147483648
        %v1576 = vsel %vm1574, %v1575, %v1573
        %v1577 = vrsqrt.pop %v1387
        %v1578 = vmul.f32 %v1387, %v1577
        %vm1579 = vcmp.eq.f32.partialorder %v1387, inf
        %v1580 = vsel %vm1579, %v1387, %v1578
        %vm1581 = vcmp.eq.f32.partialorder %v1387, 0.0
        %v1582 = vand.u32 %v1387, 2147483648
        %v1583 = vsel %vm1581, %v1582, %v1580
        %v1584 = vrsqrt.pop %v1390
        %v1585 = vmul.f32 %v1390, %v1584
        %vm1586 = vcmp.eq.f32.partialorder %v1390, inf
        %v1587 = vsel %vm1586, %v1390, %v1585
        %vm1588 = vcmp.eq.f32.partialorder %v1390, 0.0
        %v1589 = vand.u32 %v1390, 2147483648
        %v1590 = vsel %vm1588, %v1589, %v1587
        %v1591 = vrsqrt.pop %v1393
        %v1592 = vmul.f32 %v1393, %v1591
        %vm1593 = vcmp.eq.f32.partialorder %v1393, inf
        %v1594 = vsel %vm1593, %v1393, %v1592
        %vm1595 = vcmp.eq.f32.partialorder %v1393, 0.0
        %v1596 = vand.u32 %v1393, 2147483648
        %v1597 = vsel %vm1595, %v1596, %v1594
        %v1598 = vrsqrt.pop %v1396
        %v1599 = vmul.f32 %v1396, %v1598
        %vm1600 = vcmp.eq.f32.partialorder %v1396, inf
        %v1601 = vsel %vm1600, %v1396, %v1599
        %vm1602 = vcmp.eq.f32.partialorder %v1396, 0.0
        %v1603 = vand.u32 %v1396, 2147483648
        %v1604 = vsel %vm1602, %v1603, %v1601
        %v1605 = vrsqrt.pop %v1399
        %v1606 = vmul.f32 %v1399, %v1605
        %vm1607 = vcmp.eq.f32.partialorder %v1399, inf
        %v1608 = vsel %vm1607, %v1399, %v1606
        %vm1609 = vcmp.eq.f32.partialorder %v1399, 0.0
        %v1610 = vand.u32 %v1399, 2147483648
        %v1611 = vsel %vm1609, %v1610, %v1608
        %v1612 = vrsqrt.pop %v1402
        %v1613 = vmul.f32 %v1402, %v1612
        %vm1614 = vcmp.eq.f32.partialorder %v1402, inf
        %v1615 = vsel %vm1614, %v1402, %v1613
        %vm1616 = vcmp.eq.f32.partialorder %v1402, 0.0
        %v1617 = vand.u32 %v1402, 2147483648
        %v1618 = vsel %vm1616, %v1617, %v1615
        %v1619 = vrsqrt.pop %v1405
        %v1620 = vmul.f32 %v1405, %v1619
        %vm1621 = vcmp.eq.f32.partialorder %v1405, inf
        %v1622 = vsel %vm1621, %v1405, %v1620
        %vm1623 = vcmp.eq.f32.partialorder %v1405, 0.0
        %v1624 = vand.u32 %v1405, 2147483648
        %v1625 = vsel %vm1623, %v1624, %v1622
        %v1626 = vrsqrt.pop %v1408
        %v1627 = vmul.f32 %v1408, %v1626
        %vm1628 = vcmp.eq.f32.partialorder %v1408, inf
        %v1629 = vsel %vm1628, %v1408, %v1627
        %vm1630 = vcmp.eq.f32.partialorder %v1408, 0.0
        %v1631 = vand.u32 %v1408, 2147483648
        %v1632 = vsel %vm1630, %v1631, %v1629
        %v1634 = vsel %vm629, %v1249, 0
        %1636 = vmatprep.subr.mxu0 0.0
        %1637 = vmatpush1.xpose.msra.mxu0 %v1634
        %1638 = vmatprep.subr.mxu0 0.0
        %1639 = vmatpush1.xpose.msra.mxu0 0.0
        %1640 = vmatprep.subr.mxu0 0.0
        %1641 = vmatpush1.xpose.msra.mxu0 0.0
        %1642 = vmatprep.subr.mxu0 0.0
        %1643 = vmatpush1.xpose.msra.mxu0 0.0
        %1644 = vmatprep.subr.mxu0 0.0
        %1645 = vmatpush1.xpose.msra.mxu0 0.0
        %1646 = vmatprep.subr.mxu0 0.0
        %1647 = vmatpush1.xpose.msra.mxu0 0.0
        %1648 = vmatprep.subr.mxu0 0.0
        %1649 = vmatpush1.xpose.msra.mxu0 0.0
        %1650 = vmatprep.subr.mxu0 0.0
        %1651 = vmatpush1.xpose.msra.mxu0 0.0
        %1652 = vmatprep.subr.mxu0 0.0
        %1653 = vmatpush1.xpose.msra.mxu0 0.0
        %1654 = vmatprep.subr.mxu0 0.0
        %1655 = vmatpush1.xpose.msra.mxu0 0.0
        %1656 = vmatprep.subr.mxu0 0.0
        %1657 = vmatpush1.xpose.msra.mxu0 0.0
        %1658 = vmatprep.subr.mxu0 0.0
        %1659 = vmatpush1.xpose.msra.mxu0 0.0
        %1660 = vmatprep.subr.mxu0 0.0
        %1661 = vmatpush1.xpose.msra.mxu0 0.0
        %1662 = vmatprep.subr.mxu0 0.0
        %1663 = vmatpush1.xpose.msra.mxu0 0.0
        %1664 = vmatprep.subr.mxu0 0.0
        %1665 = vmatpush1.xpose.msra.mxu0 0.0
        %1666 = vmatprep.subr.mxu0 0.0
        %1667 = vmatpush1.xpose.msra.mxu0 0.0
        %1668 = vmatprep.subr.mxu0 0.0
        %1669 = vmatpush1.xpose.msra.mxu0 0.0
        %1670 = vmatprep.subr.mxu0 0.0
        %1671 = vmatpush1.xpose.msra.mxu0 0.0
        %1672 = vmatprep.subr.mxu0 0.0
        %1673 = vmatpush1.xpose.msra.mxu0 0.0
        %1674 = vmatprep.subr.mxu0 0.0
        %1675 = vmatpush1.xpose.msra.mxu0 0.0
        %1676 = vmatprep.subr.mxu0 0.0
        %1677 = vmatpush1.xpose.msra.mxu0 0.0
        %1678 = vmatprep.subr.mxu0 0.0
        %1679 = vmatpush1.xpose.msra.mxu0 0.0
        %1680 = vmatprep.subr.mxu0 0.0
        %1681 = vmatpush1.xpose.msra.mxu0 0.0
        %1682 = vmatprep.subr.mxu0 0.0
        %1683 = vmatpush1.xpose.msra.mxu0 0.0
        %1684 = vmatprep.subr.mxu0 0.0
        %1685 = vmatpush1.xpose.msra.mxu0 0.0
        %1686 = vmatprep.subr.mxu0 0.0
        %1687 = vmatpush1.xpose.msra.mxu0 0.0
        %1688 = vmatprep.subr.mxu0 0.0
        %1689 = vmatpush1.xpose.msra.mxu0 0.0
        %1690 = vmatprep.subr.mxu0 0.0
        %1691 = vmatpush1.xpose.msra.mxu0 0.0
        %1692 = vmatprep.subr.mxu0 0.0
        %1693 = vmatpush1.xpose.msra.mxu0 0.0
        %1694 = vmatprep.subr.mxu0 0.0
        %1695 = vmatpush1.xpose.msra.mxu0 0.0
        %1696 = vmatprep.subr.mxu0 0.0
        %1697 = vmatpush1.xpose.msra.mxu0 0.0
        %1698 = vmatprep.subr.mxu0 0.0
        %1699 = vmatpush1.xpose.msra.mxu0 0.0
        %1700 = vmatprep.mubr.f32.mxu0 0.0
        %1701 = vmatmul.mubr.f32.gmra.mrb[0].mxu0 %v1634
        %v1702 = vpop.f32.mrb[0].mxu0
        %v1703 = vadd.f32 0.0, %v1702
        %v1704 = vpop.f32.mrb[0].mxu0
        %1705 = vdwg.mxu0
        %v1707 = vsel %vm629, %v1250, 0
        %1709 = vmatprep.subr.mxu0 0.0
        %1710 = vmatpush1.xpose.msra.mxu0 %v1707
        %1711 = vmatprep.subr.mxu0 0.0
        %1712 = vmatpush1.xpose.msra.mxu0 0.0
        %1713 = vmatprep.subr.mxu0 0.0
        %1714 = vmatpush1.xpose.msra.mxu0 0.0
        %1715 = vmatprep.subr.mxu0 0.0
        %1716 = vmatpush1.xpose.msra.mxu0 0.0
        %1717 = vmatprep.subr.mxu0 0.0
        %1718 = vmatpush1.xpose.msra.mxu0 0.0
        %1719 = vmatprep.subr.mxu0 0.0
        %1720 = vmatpush1.xpose.msra.mxu0 0.0
        %1721 = vmatprep.subr.mxu0 0.0
        %1722 = vmatpush1.xpose.msra.mxu0 0.0
        %1723 = vmatprep.subr.mxu0 0.0
        %1724 = vmatpush1.xpose.msra.mxu0 0.0
        %1725 = vmatprep.subr.mxu0 0.0
        %1726 = vmatpush1.xpose.msra.mxu0 0.0
        %1727 = vmatprep.subr.mxu0 0.0
        %1728 = vmatpush1.xpose.msra.mxu0 0.0
        %1729 = vmatprep.subr.mxu0 0.0
        %1730 = vmatpush1.xpose.msra.mxu0 0.0
        %1731 = vmatprep.subr.mxu0 0.0
        %1732 = vmatpush1.xpose.msra.mxu0 0.0
        %1733 = vmatprep.subr.mxu0 0.0
        %1734 = vmatpush1.xpose.msra.mxu0 0.0
        %1735 = vmatprep.subr.mxu0 0.0
        %1736 = vmatpush1.xpose.msra.mxu0 0.0
        %1737 = vmatprep.subr.mxu0 0.0
        %1738 = vmatpush1.xpose.msra.mxu0 0.0
        %1739 = vmatprep.subr.mxu0 0.0
        %1740 = vmatpush1.xpose.msra.mxu0 0.0
        %1741 = vmatprep.subr.mxu0 0.0
        %1742 = vmatpush1.xpose.msra.mxu0 0.0
        %1743 = vmatprep.subr.mxu0 0.0
        %1744 = vmatpush1.xpose.msra.mxu0 0.0
        %1745 = vmatprep.subr.mxu0 0.0
        %1746 = vmatpush1.xpose.msra.mxu0 0.0
        %1747 = vmatprep.subr.mxu0 0.0
        %1748 = vmatpush1.xpose.msra.mxu0 0.0
        %1749 = vmatprep.subr.mxu0 0.0
        %1750 = vmatpush1.xpose.msra.mxu0 0.0
        %1751 = vmatprep.subr.mxu0 0.0
        %1752 = vmatpush1.xpose.msra.mxu0 0.0
        %1753 = vmatprep.subr.mxu0 0.0
        %1754 = vmatpush1.xpose.msra.mxu0 0.0
        %1755 = vmatprep.subr.mxu0 0.0
        %1756 = vmatpush1.xpose.msra.mxu0 0.0
        %1757 = vmatprep.subr.mxu0 0.0
        %1758 = vmatpush1.xpose.msra.mxu0 0.0
        %1759 = vmatprep.subr.mxu0 0.0
        %1760 = vmatpush1.xpose.msra.mxu0 0.0
        %1761 = vmatprep.subr.mxu0 0.0
        %1762 = vmatpush1.xpose.msra.mxu0 0.0
        %1763 = vmatprep.subr.mxu0 0.0
        %1764 = vmatpush1.xpose.msra.mxu0 0.0
        %1765 = vmatprep.subr.mxu0 0.0
        %1766 = vmatpush1.xpose.msra.mxu0 0.0
        %1767 = vmatprep.subr.mxu0 0.0
        %1768 = vmatpush1.xpose.msra.mxu0 0.0
        %1769 = vmatprep.subr.mxu0 0.0
        %1770 = vmatpush1.xpose.msra.mxu0 0.0
        %1771 = vmatprep.subr.mxu0 0.0
        %1772 = vmatpush1.xpose.msra.mxu0 0.0
        %1773 = vmatprep.mubr.f32.mxu0 0.0
        %1774 = vmatmul.mubr.f32.gmra.mrb[0].mxu0 %v1707
        %v1775 = vpop.f32.mrb[0].mxu0
        %v1776 = vadd.f32 0.0, %v1775
        %v1777 = vpop.f32.mrb[0].mxu0
        %1778 = vdwg.mxu0
        %v1780 = vsel %vm629, %v1251, 0
        %1782 = vmatprep.subr.mxu0 0.0
        %1783 = vmatpush1.xpose.msra.mxu0 %v1780
        %1784 = vmatprep.subr.mxu0 0.0
        %1785 = vmatpush1.xpose.msra.mxu0 0.0
        %1786 = vmatprep.subr.mxu0 0.0
        %1787 = vmatpush1.xpose.msra.mxu0 0.0
        %1788 = vmatprep.subr.mxu0 0.0
        %1789 = vmatpush1.xpose.msra.mxu0 0.0
        %1790 = vmatprep.subr.mxu0 0.0
        %1791 = vmatpush1.xpose.msra.mxu0 0.0
        %1792 = vmatprep.subr.mxu0 0.0
        %1793 = vmatpush1.xpose.msra.mxu0 0.0
        %1794 = vmatprep.subr.mxu0 0.0
        %1795 = vmatpush1.xpose.msra.mxu0 0.0
        %1796 = vmatprep.subr.mxu0 0.0
        %1797 = vmatpush1.xpose.msra.mxu0 0.0
        %1798 = vmatprep.subr.mxu0 0.0
        %1799 = vmatpush1.xpose.msra.mxu0 0.0
        %1800 = vmatprep.subr.mxu0 0.0
        %1801 = vmatpush1.xpose.msra.mxu0 0.0
        %1802 = vmatprep.subr.mxu0 0.0
        %1803 = vmatpush1.xpose.msra.mxu0 0.0
        %1804 = vmatprep.subr.mxu0 0.0
        %1805 = vmatpush1.xpose.msra.mxu0 0.0
        %1806 = vmatprep.subr.mxu0 0.0
        %1807 = vmatpush1.xpose.msra.mxu0 0.0
        %1808 = vmatprep.subr.mxu0 0.0
        %1809 = vmatpush1.xpose.msra.mxu0 0.0
        %1810 = vmatprep.subr.mxu0 0.0
        %1811 = vmatpush1.xpose.msra.mxu0 0.0
        %1812 = vmatprep.subr.mxu0 0.0
        %1813 = vmatpush1.xpose.msra.mxu0 0.0
        %1814 = vmatprep.subr.mxu0 0.0
        %1815 = vmatpush1.xpose.msra.mxu0 0.0
        %1816 = vmatprep.subr.mxu0 0.0
        %1817 = vmatpush1.xpose.msra.mxu0 0.0
        %1818 = vmatprep.subr.mxu0 0.0
        %1819 = vmatpush1.xpose.msra.mxu0 0.0
        %1820 = vmatprep.subr.mxu0 0.0
        %1821 = vmatpush1.xpose.msra.mxu0 0.0
        %1822 = vmatprep.subr.mxu0 0.0
        %1823 = vmatpush1.xpose.msra.mxu0 0.0
        %1824 = vmatprep.subr.mxu0 0.0
        %1825 = vmatpush1.xpose.msra.mxu0 0.0
        %1826 = vmatprep.subr.mxu0 0.0
        %1827 = vmatpush1.xpose.msra.mxu0 0.0
        %1828 = vmatprep.subr.mxu0 0.0
        %1829 = vmatpush1.xpose.msra.mxu0 0.0
        %1830 = vmatprep.subr.mxu0 0.0
        %1831 = vmatpush1.xpose.msra.mxu0 0.0
        %1832 = vmatprep.subr.mxu0 0.0
        %1833 = vmatpush1.xpose.msra.mxu0 0.0
        %1834 = vmatprep.subr.mxu0 0.0
        %1835 = vmatpush1.xpose.msra.mxu0 0.0
        %1836 = vmatprep.subr.mxu0 0.0
        %1837 = vmatpush1.xpose.msra.mxu0 0.0
        %1838 = vmatprep.subr.mxu0 0.0
        %1839 = vmatpush1.xpose.msra.mxu0 0.0
        %1840 = vmatprep.subr.mxu0 0.0
        %1841 = vmatpush1.xpose.msra.mxu0 0.0
        %1842 = vmatprep.subr.mxu0 0.0
        %1843 = vmatpush1.xpose.msra.mxu0 0.0
        %1844 = vmatprep.subr.mxu0 0.0
        %1845 = vmatpush1.xpose.msra.mxu0 0.0
        %1846 = vmatprep.mubr.f32.mxu0 0.0
        %1847 = vmatmul.mubr.f32.gmra.mrb[0].mxu0 %v1780
        %v1848 = vpop.f32.mrb[0].mxu0
        %v1849 = vadd.f32 0.0, %v1848
        %v1850 = vpop.f32.mrb[0].mxu0
        %1851 = vdwg.mxu0
        %v1853 = vsel %vm629, %v1252, 0
        %1855 = vmatprep.subr.mxu0 0.0
        %1856 = vmatpush1.xpose.msra.mxu0 %v1853
        %1857 = vmatprep.subr.mxu0 0.0
        %1858 = vmatpush1.xpose.msra.mxu0 0.0
        %1859 = vmatprep.subr.mxu0 0.0
        %1860 = vmatpush1.xpose.msra.mxu0 0.0
        %1861 = vmatprep.subr.mxu0 0.0
        %1862 = vmatpush1.xpose.msra.mxu0 0.0
        %1863 = vmatprep.subr.mxu0 0.0
        %1864 = vmatpush1.xpose.msra.mxu0 0.0
        %1865 = vmatprep.subr.mxu0 0.0
        %1866 = vmatpush1.xpose.msra.mxu0 0.0
        %1867 = vmatprep.subr.mxu0 0.0
        %1868 = vmatpush1.xpose.msra.mxu0 0.0
        %1869 = vmatprep.subr.mxu0 0.0
        %1870 = vmatpush1.xpose.msra.mxu0 0.0
        %1871 = vmatprep.subr.mxu0 0.0
        %1872 = vmatpush1.xpose.msra.mxu0 0.0
        %1873 = vmatprep.subr.mxu0 0.0
        %1874 = vmatpush1.xpose.msra.mxu0 0.0
        %1875 = vmatprep.subr.mxu0 0.0
        %1876 = vmatpush1.xpose.msra.mxu0 0.0
        %1877 = vmatprep.subr.mxu0 0.0
        %1878 = vmatpush1.xpose.msra.mxu0 0.0
        %1879 = vmatprep.subr.mxu0 0.0
        %1880 = vmatpush1.xpose.msra.mxu0 0.0
        %1881 = vmatprep.subr.mxu0 0.0
        %1882 = vmatpush1.xpose.msra.mxu0 0.0
        %1883 = vmatprep.subr.mxu0 0.0
        %1884 = vmatpush1.xpose.msra.mxu0 0.0
        %1885 = vmatprep.subr.mxu0 0.0
        %1886 = vmatpush1.xpose.msra.mxu0 0.0
        %1887 = vmatprep.subr.mxu0 0.0
        %1888 = vmatpush1.xpose.msra.mxu0 0.0
        %1889 = vmatprep.subr.mxu0 0.0
        %1890 = vmatpush1.xpose.msra.mxu0 0.0
        %1891 = vmatprep.subr.mxu0 0.0
        %1892 = vmatpush1.xpose.msra.mxu0 0.0
        %1893 = vmatprep.subr.mxu0 0.0
        %1894 = vmatpush1.xpose.msra.mxu0 0.0
        %1895 = vmatprep.subr.mxu0 0.0
        %1896 = vmatpush1.xpose.msra.mxu0 0.0
        %1897 = vmatprep.subr.mxu0 0.0
        %1898 = vmatpush1.xpose.msra.mxu0 0.0
        %1899 = vmatprep.subr.mxu0 0.0
        %1900 = vmatpush1.xpose.msra.mxu0 0.0
        %1901 = vmatprep.subr.mxu0 0.0
        %1902 = vmatpush1.xpose.msra.mxu0 0.0
        %1903 = vmatprep.subr.mxu0 0.0
        %1904 = vmatpush1.xpose.msra.mxu0 0.0
        %1905 = vmatprep.subr.mxu0 0.0
        %1906 = vmatpush1.xpose.msra.mxu0 0.0
        %1907 = vmatprep.subr.mxu0 0.0
        %1908 = vmatpush1.xpose.msra.mxu0 0.0
        %1909 = vmatprep.subr.mxu0 0.0
        %1910 = vmatpush1.xpose.msra.mxu0 0.0
        %1911 = vmatprep.subr.mxu0 0.0
        %1912 = vmatpush1.xpose.msra.mxu0 0.0
        %1913 = vmatprep.subr.mxu0 0.0
        %1914 = vmatpush1.xpose.msra.mxu0 0.0
        %1915 = vmatprep.subr.mxu0 0.0
        %1916 = vmatpush1.xpose.msra.mxu0 0.0
        %1917 = vmatprep.subr.mxu0 0.0
        %1918 = vmatpush1.xpose.msra.mxu0 0.0
        %1919 = vmatprep.mubr.f32.mxu0 0.0
        %1920 = vmatmul.mubr.f32.gmra.mrb[0].mxu0 %v1853
        %v1921 = vpop.f32.mrb[0].mxu0
        %v1922 = vadd.f32 0.0, %v1921
        %v1923 = vpop.f32.mrb[0].mxu0
        %1924 = vdwg.mxu0
        %v1926 = vsel %vm629, %v1253, 0
        %1928 = vmatprep.subr.mxu0 0.0
        %1929 = vmatpush1.xpose.msra.mxu0 %v1926
        %1930 = vmatprep.subr.mxu0 0.0
        %1931 = vmatpush1.xpose.msra.mxu0 0.0
        %1932 = vmatprep.subr.mxu0 0.0
        %1933 = vmatpush1.xpose.msra.mxu0 0.0
        %1934 = vmatprep.subr.mxu0 0.0
        %1935 = vmatpush1.xpose.msra.mxu0 0.0
        %1936 = vmatprep.subr.mxu0 0.0
        %1937 = vmatpush1.xpose.msra.mxu0 0.0
        %1938 = vmatprep.subr.mxu0 0.0
        %1939 = vmatpush1.xpose.msra.mxu0 0.0
        %1940 = vmatprep.subr.mxu0 0.0
        %1941 = vmatpush1.xpose.msra.mxu0 0.0
        %1942 = vmatprep.subr.mxu0 0.0
        %1943 = vmatpush1.xpose.msra.mxu0 0.0
        %1944 = vmatprep.subr.mxu0 0.0
        %1945 = vmatpush1.xpose.msra.mxu0 0.0
        %1946 = vmatprep.subr.mxu0 0.0
        %1947 = vmatpush1.xpose.msra.mxu0 0.0
        %1948 = vmatprep.subr.mxu0 0.0
        %1949 = vmatpush1.xpose.msra.mxu0 0.0
        %1950 = vmatprep.subr.mxu0 0.0
        %1951 = vmatpush1.xpose.msra.mxu0 0.0
        %1952 = vmatprep.subr.mxu0 0.0
        %1953 = vmatpush1.xpose.msra.mxu0 0.0
        %1954 = vmatprep.subr.mxu0 0.0
        %1955 = vmatpush1.xpose.msra.mxu0 0.0
        %1956 = vmatprep.subr.mxu0 0.0
        %1957 = vmatpush1.xpose.msra.mxu0 0.0
        %1958 = vmatprep.subr.mxu0 0.0
        %1959 = vmatpush1.xpose.msra.mxu0 0.0
        %1960 = vmatprep.subr.mxu0 0.0
        %1961 = vmatpush1.xpose.msra.mxu0 0.0
        %1962 = vmatprep.subr.mxu0 0.0
        %1963 = vmatpush1.xpose.msra.mxu0 0.0
        %1964 = vmatprep.subr.mxu0 0.0
        %1965 = vmatpush1.xpose.msra.mxu0 0.0
        %1966 = vmatprep.subr.mxu0 0.0
        %1967 = vmatpush1.xpose.msra.mxu0 0.0
        %1968 = vmatprep.subr.mxu0 0.0
        %1969 = vmatpush1.xpose.msra.mxu0 0.0
        %1970 = vmatprep.subr.mxu0 0.0
        %1971 = vmatpush1.xpose.msra.mxu0 0.0
        %1972 = vmatprep.subr.mxu0 0.0
        %1973 = vmatpush1.xpose.msra.mxu0 0.0
        %1974 = vmatprep.subr.mxu0 0.0
        %1975 = vmatpush1.xpose.msra.mxu0 0.0
        %1976 = vmatprep.subr.mxu0 0.0
        %1977 = vmatpush1.xpose.msra.mxu0 0.0
        %1978 = vmatprep.subr.mxu0 0.0
        %1979 = vmatpush1.xpose.msra.mxu0 0.0
        %1980 = vmatprep.subr.mxu0 0.0
        %1981 = vmatpush1.xpose.msra.mxu0 0.0
        %1982 = vmatprep.subr.mxu0 0.0
        %1983 = vmatpush1.xpose.msra.mxu0 0.0
        %1984 = vmatprep.subr.mxu0 0.0
        %1985 = vmatpush1.xpose.msra.mxu0 0.0
        %1986 = vmatprep.subr.mxu0 0.0
        %1987 = vmatpush1.xpose.msra.mxu0 0.0
        %1988 = vmatprep.subr.mxu0 0.0
        %1989 = vmatpush1.xpose.msra.mxu0 0.0
        %1990 = vmatprep.subr.mxu0 0.0
        %1991 = vmatpush1.xpose.msra.mxu0 0.0
        %1992 = vmatprep.mubr.f32.mxu0 0.0
        %1993 = vmatmul.mubr.f32.gmra.mrb[0].mxu0 %v1926
        %v1994 = vpop.f32.mrb[0].mxu0
        %v1995 = vadd.f32 0.0, %v1994
        %v1996 = vpop.f32.mrb[0].mxu0
        %1997 = vdwg.mxu0
        %v1999 = vsel %vm629, %v1254, 0
        %2001 = vmatprep.subr.mxu0 0.0
        %2002 = vmatpush1.xpose.msra.mxu0 %v1999
        %2003 = vmatprep.subr.mxu0 0.0
        %2004 = vmatpush1.xpose.msra.mxu0 0.0
        %2005 = vmatprep.subr.mxu0 0.0
        %2006 = vmatpush1.xpose.msra.mxu0 0.0
        %2007 = vmatprep.subr.mxu0 0.0
        %2008 = vmatpush1.xpose.msra.mxu0 0.0
        %2009 = vmatprep.subr.mxu0 0.0
        %2010 = vmatpush1.xpose.msra.mxu0 0.0
        %2011 = vmatprep.subr.mxu0 0.0
        %2012 = vmatpush1.xpose.msra.mxu0 0.0
        %2013 = vmatprep.subr.mxu0 0.0
        %2014 = vmatpush1.xpose.msra.mxu0 0.0
        %2015 = vmatprep.subr.mxu0 0.0
        %2016 = vmatpush1.xpose.msra.mxu0 0.0
        %2017 = vmatprep.subr.mxu0 0.0
        %2018 = vmatpush1.xpose.msra.mxu0 0.0
        %2019 = vmatprep.subr.mxu0 0.0
        %2020 = vmatpush1.xpose.msra.mxu0 0.0
        %2021 = vmatprep.subr.mxu0 0.0
        %2022 = vmatpush1.xpose.msra.mxu0 0.0
        %2023 = vmatprep.subr.mxu0 0.0
        %2024 = vmatpush1.xpose.msra.mxu0 0.0
        %2025 = vmatprep.subr.mxu0 0.0
        %2026 = vmatpush1.xpose.msra.mxu0 0.0
        %2027 = vmatprep.subr.mxu0 0.0
        %2028 = vmatpush1.xpose.msra.mxu0 0.0
        %2029 = vmatprep.subr.mxu0 0.0
        %2030 = vmatpush1.xpose.msra.mxu0 0.0
        %2031 = vmatprep.subr.mxu0 0.0
        %2032 = vmatpush1.xpose.msra.mxu0 0.0
        %2033 = vmatprep.subr.mxu0 0.0
        %2034 = vmatpush1.xpose.msra.mxu0 0.0
        %2035 = vmatprep.subr.mxu0 0.0
        %2036 = vmatpush1.xpose.msra.mxu0 0.0
        %2037 = vmatprep.subr.mxu0 0.0
        %2038 = vmatpush1.xpose.msra.mxu0 0.0
        %2039 = vmatprep.subr.mxu0 0.0
        %2040 = vmatpush1.xpose.msra.mxu0 0.0
        %2041 = vmatprep.subr.mxu0 0.0
        %2042 = vmatpush1.xpose.msra.mxu0 0.0
        %2043 = vmatprep.subr.mxu0 0.0
        %2044 = vmatpush1.xpose.msra.mxu0 0.0
        %2045 = vmatprep.subr.mxu0 0.0
        %2046 = vmatpush1.xpose.msra.mxu0 0.0
        %2047 = vmatprep.subr.mxu0 0.0
        %2048 = vmatpush1.xpose.msra.mxu0 0.0
        %2049 = vmatprep.subr.mxu0 0.0
        %2050 = vmatpush1.xpose.msra.mxu0 0.0
        %2051 = vmatprep.subr.mxu0 0.0
        %2052 = vmatpush1.xpose.msra.mxu0 0.0
        %2053 = vmatprep.subr.mxu0 0.0
        %2054 = vmatpush1.xpose.msra.mxu0 0.0
        %2055 = vmatprep.subr.mxu0 0.0
        %2056 = vmatpush1.xpose.msra.mxu0 0.0
        %2057 = vmatprep.subr.mxu0 0.0
        %2058 = vmatpush1.xpose.msra.mxu0 0.0
        %2059 = vmatprep.subr.mxu0 0.0
        %2060 = vmatpush1.xpose.msra.mxu0 0.0
        %2061 = vmatprep.subr.mxu0 0.0
        %2062 = vmatpush1.xpose.msra.mxu0 0.0
        %2063 = vmatprep.subr.mxu0 0.0
        %2064 = vmatpush1.xpose.msra.mxu0 0.0
        %2065 = vmatprep.mubr.f32.mxu0 0.0
        %2066 = vmatmul.mubr.f32.gmra.mrb[0].mxu0 %v1999
        %v2067 = vpop.f32.mrb[0].mxu0
        %v2068 = vadd.f32 0.0, %v2067
        %v2069 = vpop.f32.mrb[0].mxu0
        %2070 = vdwg.mxu0
        %v2072 = vsel %vm629, %v1255, 0
        %2074 = vmatprep.subr.mxu0 0.0
        %2075 = vmatpush1.xpose.msra.mxu0 %v2072
        %2076 = vmatprep.subr.mxu0 0.0
        %2077 = vmatpush1.xpose.msra.mxu0 0.0
        %2078 = vmatprep.subr.mxu0 0.0
        %2079 = vmatpush1.xpose.msra.mxu0 0.0
        %2080 = vmatprep.subr.mxu0 0.0
        %2081 = vmatpush1.xpose.msra.mxu0 0.0
        %2082 = vmatprep.subr.mxu0 0.0
        %2083 = vmatpush1.xpose.msra.mxu0 0.0
        %2084 = vmatprep.subr.mxu0 0.0
        %2085 = vmatpush1.xpose.msra.mxu0 0.0
        %2086 = vmatprep.subr.mxu0 0.0
        %2087 = vmatpush1.xpose.msra.mxu0 0.0
        %2088 = vmatprep.subr.mxu0 0.0
        %2089 = vmatpush1.xpose.msra.mxu0 0.0
        %2090 = vmatprep.subr.mxu0 0.0
        %2091 = vmatpush1.xpose.msra.mxu0 0.0
        %2092 = vmatprep.subr.mxu0 0.0
        %2093 = vmatpush1.xpose.msra.mxu0 0.0
        %2094 = vmatprep.subr.mxu0 0.0
        %2095 = vmatpush1.xpose.msra.mxu0 0.0
        %2096 = vmatprep.subr.mxu0 0.0
        %2097 = vmatpush1.xpose.msra.mxu0 0.0
        %2098 = vmatprep.subr.mxu0 0.0
        %2099 = vmatpush1.xpose.msra.mxu0 0.0
        %2100 = vmatprep.subr.mxu0 0.0
        %2101 = vmatpush1.xpose.msra.mxu0 0.0
        %2102 = vmatprep.subr.mxu0 0.0
        %2103 = vmatpush1.xpose.msra.mxu0 0.0
        %2104 = vmatprep.subr.mxu0 0.0
        %2105 = vmatpush1.xpose.msra.mxu0 0.0
        %2106 = vmatprep.subr.mxu0 0.0
        %2107 = vmatpush1.xpose.msra.mxu0 0.0
        %2108 = vmatprep.subr.mxu0 0.0
        %2109 = vmatpush1.xpose.msra.mxu0 0.0
        %2110 = vmatprep.subr.mxu0 0.0
        %2111 = vmatpush1.xpose.msra.mxu0 0.0
        %2112 = vmatprep.subr.mxu0 0.0
        %2113 = vmatpush1.xpose.msra.mxu0 0.0
        %2114 = vmatprep.subr.mxu0 0.0
        %2115 = vmatpush1.xpose.msra.mxu0 0.0
        %2116 = vmatprep.subr.mxu0 0.0
        %2117 = vmatpush1.xpose.msra.mxu0 0.0
        %2118 = vmatprep.subr.mxu0 0.0
        %2119 = vmatpush1.xpose.msra.mxu0 0.0
        %2120 = vmatprep.subr.mxu0 0.0
        %2121 = vmatpush1.xpose.msra.mxu0 0.0
        %2122 = vmatprep.subr.mxu0 0.0
        %2123 = vmatpush1.xpose.msra.mxu0 0.0
        %2124 = vmatprep.subr.mxu0 0.0
        %2125 = vmatpush1.xpose.msra.mxu0 0.0
        %2126 = vmatprep.subr.mxu0 0.0
        %2127 = vmatpush1.xpose.msra.mxu0 0.0
        %2128 = vmatprep.subr.mxu0 0.0
        %2129 = vmatpush1.xpose.msra.mxu0 0.0
        %2130 = vmatprep.subr.mxu0 0.0
        %2131 = vmatpush1.xpose.msra.mxu0 0.0
        %2132 = vmatprep.subr.mxu0 0.0
        %2133 = vmatpush1.xpose.msra.mxu0 0.0
        %2134 = vmatprep.subr.mxu0 0.0
        %2135 = vmatpush1.xpose.msra.mxu0 0.0
        %2136 = vmatprep.subr.mxu0 0.0
        %2137 = vmatpush1.xpose.msra.mxu0 0.0
        %2138 = vmatprep.mubr.f32.mxu0 0.0
        %2139 = vmatmul.mubr.f32.gmra.mrb[0].mxu0 %v2072
        %v2140 = vpop.f32.mrb[0].mxu0
        %v2141 = vadd.f32 0.0, %v2140
        %v2142 = vpop.f32.mrb[0].mxu0
        %2143 = vdwg.mxu0
        %v2145 = vsel %vm629, %v1256, 0
        %2147 = vmatprep.subr.mxu0 0.0
        %2148 = vmatpush1.xpose.msra.mxu0 %v2145
        %2149 = vmatprep.subr.mxu0 0.0
        %2150 = vmatpush1.xpose.msra.mxu0 0.0
        %2151 = vmatprep.subr.mxu0 0.0
        %2152 = vmatpush1.xpose.msra.mxu0 0.0
        %2153 = vmatprep.subr.mxu0 0.0
        %2154 = vmatpush1.xpose.msra.mxu0 0.0
        %2155 = vmatprep.subr.mxu0 0.0
        %2156 = vmatpush1.xpose.msra.mxu0 0.0
        %2157 = vmatprep.subr.mxu0 0.0
        %2158 = vmatpush1.xpose.msra.mxu0 0.0
        %2159 = vmatprep.subr.mxu0 0.0
        %2160 = vmatpush1.xpose.msra.mxu0 0.0
        %2161 = vmatprep.subr.mxu0 0.0
        %2162 = vmatpush1.xpose.msra.mxu0 0.0
        %2163 = vmatprep.subr.mxu0 0.0
        %2164 = vmatpush1.xpose.msra.mxu0 0.0
        %2165 = vmatprep.subr.mxu0 0.0
        %2166 = vmatpush1.xpose.msra.mxu0 0.0
        %2167 = vmatprep.subr.mxu0 0.0
        %2168 = vmatpush1.xpose.msra.mxu0 0.0
        %2169 = vmatprep.subr.mxu0 0.0
        %2170 = vmatpush1.xpose.msra.mxu0 0.0
        %2171 = vmatprep.subr.mxu0 0.0
        %2172 = vmatpush1.xpose.msra.mxu0 0.0
        %2173 = vmatprep.subr.mxu0 0.0
        %2174 = vmatpush1.xpose.msra.mxu0 0.0
        %2175 = vmatprep.subr.mxu0 0.0
        %2176 = vmatpush1.xpose.msra.mxu0 0.0
        %2177 = vmatprep.subr.mxu0 0.0
        %2178 = vmatpush1.xpose.msra.mxu0 0.0
        %2179 = vmatprep.subr.mxu0 0.0
        %2180 = vmatpush1.xpose.msra.mxu0 0.0
        %2181 = vmatprep.subr.mxu0 0.0
        %2182 = vmatpush1.xpose.msra.mxu0 0.0
        %2183 = vmatprep.subr.mxu0 0.0
        %2184 = vmatpush1.xpose.msra.mxu0 0.0
        %2185 = vmatprep.subr.mxu0 0.0
        %2186 = vmatpush1.xpose.msra.mxu0 0.0
        %2187 = vmatprep.subr.mxu0 0.0
        %2188 = vmatpush1.xpose.msra.mxu0 0.0
        %2189 = vmatprep.subr.mxu0 0.0
        %2190 = vmatpush1.xpose.msra.mxu0 0.0
        %2191 = vmatprep.subr.mxu0 0.0
        %2192 = vmatpush1.xpose.msra.mxu0 0.0
        %2193 = vmatprep.subr.mxu0 0.0
        %2194 = vmatpush1.xpose.msra.mxu0 0.0
        %2195 = vmatprep.subr.mxu0 0.0
        %2196 = vmatpush1.xpose.msra.mxu0 0.0
        %2197 = vmatprep.subr.mxu0 0.0
        %2198 = vmatpush1.xpose.msra.mxu0 0.0
        %2199 = vmatprep.subr.mxu0 0.0
        %2200 = vmatpush1.xpose.msra.mxu0 0.0
        %2201 = vmatprep.subr.mxu0 0.0
        %2202 = vmatpush1.xpose.msra.mxu0 0.0
        %2203 = vmatprep.subr.mxu0 0.0
        %2204 = vmatpush1.xpose.msra.mxu0 0.0
        %2205 = vmatprep.subr.mxu0 0.0
        %2206 = vmatpush1.xpose.msra.mxu0 0.0
        %2207 = vmatprep.subr.mxu0 0.0
        %2208 = vmatpush1.xpose.msra.mxu0 0.0
        %2209 = vmatprep.subr.mxu0 0.0
        %2210 = vmatpush1.xpose.msra.mxu0 0.0
        %2211 = vmatprep.mubr.f32.mxu0 0.0
        %2212 = vmatmul.mubr.f32.gmra.mrb[0].mxu0 %v2145
        %v2213 = vpop.f32.mrb[0].mxu0
        %v2214 = vadd.f32 0.0, %v2213
        %v2215 = vpop.f32.mrb[0].mxu0
        %2216 = vdwg.mxu0
        %v2218 = vsel %vm629, %v1257, 0
        %2220 = vmatprep.subr.mxu0 0.0
        %2221 = vmatpush1.xpose.msra.mxu0 %v2218
        %2222 = vmatprep.subr.mxu0 0.0
        %2223 = vmatpush1.xpose.msra.mxu0 0.0
        %2224 = vmatprep.subr.mxu0 0.0
        %2225 = vmatpush1.xpose.msra.mxu0 0.0
        %2226 = vmatprep.subr.mxu0 0.0
        %2227 = vmatpush1.xpose.msra.mxu0 0.0
        %2228 = vmatprep.subr.mxu0 0.0
        %2229 = vmatpush1.xpose.msra.mxu0 0.0
        %2230 = vmatprep.subr.mxu0 0.0
        %2231 = vmatpush1.xpose.msra.mxu0 0.0
        %2232 = vmatprep.subr.mxu0 0.0
        %2233 = vmatpush1.xpose.msra.mxu0 0.0
        %2234 = vmatprep.subr.mxu0 0.0
        %2235 = vmatpush1.xpose.msra.mxu0 0.0
        %2236 = vmatprep.subr.mxu0 0.0
        %2237 = vmatpush1.xpose.msra.mxu0 0.0
        %2238 = vmatprep.subr.mxu0 0.0
        %2239 = vmatpush1.xpose.msra.mxu0 0.0
        %2240 = vmatprep.subr.mxu0 0.0
        %2241 = vmatpush1.xpose.msra.mxu0 0.0
        %2242 = vmatprep.subr.mxu0 0.0
        %2243 = vmatpush1.xpose.msra.mxu0 0.0
        %2244 = vmatprep.subr.mxu0 0.0
        %2245 = vmatpush1.xpose.msra.mxu0 0.0
        %2246 = vmatprep.subr.mxu0 0.0
        %2247 = vmatpush1.xpose.msra.mxu0 0.0
        %2248 = vmatprep.subr.mxu0 0.0
        %2249 = vmatpush1.xpose.msra.mxu0 0.0
        %2250 = vmatprep.subr.mxu0 0.0
        %2251 = vmatpush1.xpose.msra.mxu0 0.0
        %2252 = vmatprep.subr.mxu0 0.0
        %2253 = vmatpush1.xpose.msra.mxu0 0.0
        %2254 = vmatprep.subr.mxu0 0.0
        %2255 = vmatpush1.xpose.msra.mxu0 0.0
        %2256 = vmatprep.subr.mxu0 0.0
        %2257 = vmatpush1.xpose.msra.mxu0 0.0
        %2258 = vmatprep.subr.mxu0 0.0
        %2259 = vmatpush1.xpose.msra.mxu0 0.0
        %2260 = vmatprep.subr.mxu0 0.0
        %2261 = vmatpush1.xpose.msra.mxu0 0.0
        %2262 = vmatprep.subr.mxu0 0.0
        %2263 = vmatpush1.xpose.msra.mxu0 0.0
        %2264 = vmatprep.subr.mxu0 0.0
        %2265 = vmatpush1.xpose.msra.mxu0 0.0
        %2266 = vmatprep.subr.mxu0 0.0
        %2267 = vmatpush1.xpose.msra.mxu0 0.0
        %2268 = vmatprep.subr.mxu0 0.0
        %2269 = vmatpush1.xpose.msra.mxu0 0.0
        %2270 = vmatprep.subr.mxu0 0.0
        %2271 = vmatpush1.xpose.msra.mxu0 0.0
        %2272 = vmatprep.subr.mxu0 0.0
        %2273 = vmatpush1.xpose.msra.mxu0 0.0
        %2274 = vmatprep.subr.mxu0 0.0
        %2275 = vmatpush1.xpose.msra.mxu0 0.0
        %2276 = vmatprep.subr.mxu0 0.0
        %2277 = vmatpush1.xpose.msra.mxu0 0.0
        %2278 = vmatprep.subr.mxu0 0.0
        %2279 = vmatpush1.xpose.msra.mxu0 0.0
        %2280 = vmatprep.subr.mxu0 0.0
        %2281 = vmatpush1.xpose.msra.mxu0 0.0
        %2282 = vmatprep.subr.mxu0 0.0
        %2283 = vmatpush1.xpose.msra.mxu0 0.0
        %2284 = vmatprep.mubr.f32.mxu0 0.0
        %2285 = vmatmul.mubr.f32.gmra.mrb[0].mxu0 %v2218
        %v2286 = vpop.f32.mrb[0].mxu0
        %v2287 = vadd.f32 0.0, %v2286
        %v2288 = vpop.f32.mrb[0].mxu0
        %2289 = vdwg.mxu0
        %v2291 = vsel %vm629, %v1258, 0
        %2293 = vmatprep.subr.mxu0 0.0
        %2294 = vmatpush1.xpose.msra.mxu0 %v2291
        %2295 = vmatprep.subr.mxu0 0.0
        %2296 = vmatpush1.xpose.msra.mxu0 0.0
        %2297 = vmatprep.subr.mxu0 0.0
        %2298 = vmatpush1.xpose.msra.mxu0 0.0
        %2299 = vmatprep.subr.mxu0 0.0
        %2300 = vmatpush1.xpose.msra.mxu0 0.0
        %2301 = vmatprep.subr.mxu0 0.0
        %2302 = vmatpush1.xpose.msra.mxu0 0.0
        %2303 = vmatprep.subr.mxu0 0.0
        %2304 = vmatpush1.xpose.msra.mxu0 0.0
        %2305 = vmatprep.subr.mxu0 0.0
        %2306 = vmatpush1.xpose.msra.mxu0 0.0
        %2307 = vmatprep.subr.mxu0 0.0
        %2308 = vmatpush1.xpose.msra.mxu0 0.0
        %2309 = vmatprep.subr.mxu0 0.0
        %2310 = vmatpush1.xpose.msra.mxu0 0.0
        %2311 = vmatprep.subr.mxu0 0.0
        %2312 = vmatpush1.xpose.msra.mxu0 0.0
        %2313 = vmatprep.subr.mxu0 0.0
        %2314 = vmatpush1.xpose.msra.mxu0 0.0
        %2315 = vmatprep.subr.mxu0 0.0
        %2316 = vmatpush1.xpose.msra.mxu0 0.0
        %2317 = vmatprep.subr.mxu0 0.0
        %2318 = vmatpush1.xpose.msra.mxu0 0.0
        %2319 = vmatprep.subr.mxu0 0.0
        %2320 = vmatpush1.xpose.msra.mxu0 0.0
        %2321 = vmatprep.subr.mxu0 0.0
        %2322 = vmatpush1.xpose.msra.mxu0 0.0
        %2323 = vmatprep.subr.mxu0 0.0
        %2324 = vmatpush1.xpose.msra.mxu0 0.0
        %2325 = vmatprep.subr.mxu0 0.0
        %2326 = vmatpush1.xpose.msra.mxu0 0.0
        %2327 = vmatprep.subr.mxu0 0.0
        %2328 = vmatpush1.xpose.msra.mxu0 0.0
        %2329 = vmatprep.subr.mxu0 0.0
        %2330 = vmatpush1.xpose.msra.mxu0 0.0
        %2331 = vmatprep.subr.mxu0 0.0
        %2332 = vmatpush1.xpose.msra.mxu0 0.0
        %2333 = vmatprep.subr.mxu0 0.0
        %2334 = vmatpush1.xpose.msra.mxu0 0.0
        %2335 = vmatprep.subr.mxu0 0.0
        %2336 = vmatpush1.xpose.msra.mxu0 0.0
        %2337 = vmatprep.subr.mxu0 0.0
        %2338 = vmatpush1.xpose.msra.mxu0 0.0
        %2339 = vmatprep.subr.mxu0 0.0
        %2340 = vmatpush1.xpose.msra.mxu0 0.0
        %2341 = vmatprep.subr.mxu0 0.0
        %2342 = vmatpush1.xpose.msra.mxu0 0.0
        %2343 = vmatprep.subr.mxu0 0.0
        %2344 = vmatpush1.xpose.msra.mxu0 0.0
        %2345 = vmatprep.subr.mxu0 0.0
        %2346 = vmatpush1.xpose.msra.mxu0 0.0
        %2347 = vmatprep.subr.mxu0 0.0
        %2348 = vmatpush1.xpose.msra.mxu0 0.0
        %2349 = vmatprep.subr.mxu0 0.0
        %2350 = vmatpush1.xpose.msra.mxu0 0.0
        %2351 = vmatprep.subr.mxu0 0.0
        %2352 = vmatpush1.xpose.msra.mxu0 0.0
        %2353 = vmatprep.subr.mxu0 0.0
        %2354 = vmatpush1.xpose.msra.mxu0 0.0
        %2355 = vmatprep.subr.mxu0 0.0
        %2356 = vmatpush1.xpose.msra.mxu0 0.0
        %2357 = vmatprep.mubr.f32.mxu0 0.0
        %2358 = vmatmul.mubr.f32.gmra.mrb[0].mxu0 %v2291
        %v2359 = vpop.f32.mrb[0].mxu0
        %v2360 = vadd.f32 0.0, %v2359
        %v2361 = vpop.f32.mrb[0].mxu0
        %2362 = vdwg.mxu0
        %v2364 = vsel %vm629, %v1259, 0
        %2366 = vmatprep.subr.mxu0 0.0
        %2367 = vmatpush1.xpose.msra.mxu0 %v2364
        %2368 = vmatprep.subr.mxu0 0.0
        %2369 = vmatpush1.xpose.msra.mxu0 0.0
        %2370 = vmatprep.subr.mxu0 0.0
        %2371 = vmatpush1.xpose.msra.mxu0 0.0
        %2372 = vmatprep.subr.mxu0 0.0
        %2373 = vmatpush1.xpose.msra.mxu0 0.0
        %2374 = vmatprep.subr.mxu0 0.0
        %2375 = vmatpush1.xpose.msra.mxu0 0.0
        %2376 = vmatprep.subr.mxu0 0.0
        %2377 = vmatpush1.xpose.msra.mxu0 0.0
        %2378 = vmatprep.subr.mxu0 0.0
        %2379 = vmatpush1.xpose.msra.mxu0 0.0
        %2380 = vmatprep.subr.mxu0 0.0
        %2381 = vmatpush1.xpose.msra.mxu0 0.0
        %2382 = vmatprep.subr.mxu0 0.0
        %2383 = vmatpush1.xpose.msra.mxu0 0.0
        %2384 = vmatprep.subr.mxu0 0.0
        %2385 = vmatpush1.xpose.msra.mxu0 0.0
        %2386 = vmatprep.subr.mxu0 0.0
        %2387 = vmatpush1.xpose.msra.mxu0 0.0
        %2388 = vmatprep.subr.mxu0 0.0
        %2389 = vmatpush1.xpose.msra.mxu0 0.0
        %2390 = vmatprep.subr.mxu0 0.0
        %2391 = vmatpush1.xpose.msra.mxu0 0.0
        %2392 = vmatprep.subr.mxu0 0.0
        %2393 = vmatpush1.xpose.msra.mxu0 0.0
        %2394 = vmatprep.subr.mxu0 0.0
        %2395 = vmatpush1.xpose.msra.mxu0 0.0
        %2396 = vmatprep.subr.mxu0 0.0
        %2397 = vmatpush1.xpose.msra.mxu0 0.0
        %2398 = vmatprep.subr.mxu0 0.0
        %2399 = vmatpush1.xpose.msra.mxu0 0.0
        %2400 = vmatprep.subr.mxu0 0.0
        %2401 = vmatpush1.xpose.msra.mxu0 0.0
        %2402 = vmatprep.subr.mxu0 0.0
        %2403 = vmatpush1.xpose.msra.mxu0 0.0
        %2404 = vmatprep.subr.mxu0 0.0
        %2405 = vmatpush1.xpose.msra.mxu0 0.0
        %2406 = vmatprep.subr.mxu0 0.0
        %2407 = vmatpush1.xpose.msra.mxu0 0.0
        %2408 = vmatprep.subr.mxu0 0.0
        %2409 = vmatpush1.xpose.msra.mxu0 0.0
        %2410 = vmatprep.subr.mxu0 0.0
        %2411 = vmatpush1.xpose.msra.mxu0 0.0
        %2412 = vmatprep.subr.mxu0 0.0
        %2413 = vmatpush1.xpose.msra.mxu0 0.0
        %2414 = vmatprep.subr.mxu0 0.0
        %2415 = vmatpush1.xpose.msra.mxu0 0.0
        %2416 = vmatprep.subr.mxu0 0.0
        %2417 = vmatpush1.xpose.msra.mxu0 0.0
        %2418 = vmatprep.subr.mxu0 0.0
        %2419 = vmatpush1.xpose.msra.mxu0 0.0
        %2420 = vmatprep.subr.mxu0 0.0
        %2421 = vmatpush1.xpose.msra.mxu0 0.0
        %2422 = vmatprep.subr.mxu0 0.0
        %2423 = vmatpush1.xpose.msra.mxu0 0.0
        %2424 = vmatprep.subr.mxu0 0.0
        %2425 = vmatpush1.xpose.msra.mxu0 0.0
        %2426 = vmatprep.subr.mxu0 0.0
        %2427 = vmatpush1.xpose.msra.mxu0 0.0
        %2428 = vmatprep.subr.mxu0 0.0
        %2429 = vmatpush1.xpose.msra.mxu0 0.0
        %2430 = vmatprep.mubr.f32.mxu0 0.0
        %2431 = vmatmul.mubr.f32.gmra.mrb[0].mxu0 %v2364
        %v2432 = vpop.f32.mrb[0].mxu0
        %v2433 = vadd.f32 0.0, %v2432
        %v2434 = vpop.f32.mrb[0].mxu0
        %2435 = vdwg.mxu0
        %v2437 = vsel %vm629, %v1260, 0
        %2439 = vmatprep.subr.mxu0 0.0
        %2440 = vmatpush1.xpose.msra.mxu0 %v2437
        %2441 = vmatprep.subr.mxu0 0.0
        %2442 = vmatpush1.xpose.msra.mxu0 0.0
        %2443 = vmatprep.subr.mxu0 0.0
        %2444 = vmatpush1.xpose.msra.mxu0 0.0
        %2445 = vmatprep.subr.mxu0 0.0
        %2446 = vmatpush1.xpose.msra.mxu0 0.0
        %2447 = vmatprep.subr.mxu0 0.0
        %2448 = vmatpush1.xpose.msra.mxu0 0.0
        %2449 = vmatprep.subr.mxu0 0.0
        %2450 = vmatpush1.xpose.msra.mxu0 0.0
        %2451 = vmatprep.subr.mxu0 0.0
        %2452 = vmatpush1.xpose.msra.mxu0 0.0
        %2453 = vmatprep.subr.mxu0 0.0
        %2454 = vmatpush1.xpose.msra.mxu0 0.0
        %2455 = vmatprep.subr.mxu0 0.0
        %2456 = vmatpush1.xpose.msra.mxu0 0.0
        %2457 = vmatprep.subr.mxu0 0.0
        %2458 = vmatpush1.xpose.msra.mxu0 0.0
        %2459 = vmatprep.subr.mxu0 0.0
        %2460 = vmatpush1.xpose.msra.mxu0 0.0
        %2461 = vmatprep.subr.mxu0 0.0
        %2462 = vmatpush1.xpose.msra.mxu0 0.0
        %2463 = vmatprep.subr.mxu0 0.0
        %2464 = vmatpush1.xpose.msra.mxu0 0.0
        %2465 = vmatprep.subr.mxu0 0.0
        %2466 = vmatpush1.xpose.msra.mxu0 0.0
        %2467 = vmatprep.subr.mxu0 0.0
        %2468 = vmatpush1.xpose.msra.mxu0 0.0
        %2469 = vmatprep.subr.mxu0 0.0
        %2470 = vmatpush1.xpose.msra.mxu0 0.0
        %2471 = vmatprep.subr.mxu0 0.0
        %2472 = vmatpush1.xpose.msra.mxu0 0.0
        %2473 = vmatprep.subr.mxu0 0.0
        %2474 = vmatpush1.xpose.msra.mxu0 0.0
        %2475 = vmatprep.subr.mxu0 0.0
        %2476 = vmatpush1.xpose.msra.mxu0 0.0
        %2477 = vmatprep.subr.mxu0 0.0
        %2478 = vmatpush1.xpose.msra.mxu0 0.0
        %2479 = vmatprep.subr.mxu0 0.0
        %2480 = vmatpush1.xpose.msra.mxu0 0.0
        %2481 = vmatprep.subr.mxu0 0.0
        %2482 = vmatpush1.xpose.msra.mxu0 0.0
        %2483 = vmatprep.subr.mxu0 0.0
        %2484 = vmatpush1.xpose.msra.mxu0 0.0
        %2485 = vmatprep.subr.mxu0 0.0
        %2486 = vmatpush1.xpose.msra.mxu0 0.0
        %2487 = vmatprep.subr.mxu0 0.0
        %2488 = vmatpush1.xpose.msra.mxu0 0.0
        %2489 = vmatprep.subr.mxu0 0.0
        %2490 = vmatpush1.xpose.msra.mxu0 0.0
        %2491 = vmatprep.subr.mxu0 0.0
        %2492 = vmatpush1.xpose.msra.mxu0 0.0
        %2493 = vmatprep.subr.mxu0 0.0
        %2494 = vmatpush1.xpose.msra.mxu0 0.0
        %2495 = vmatprep.subr.mxu0 0.0
        %2496 = vmatpush1.xpose.msra.mxu0 0.0
        %2497 = vmatprep.subr.mxu0 0.0
        %2498 = vmatpush1.xpose.msra.mxu0 0.0
        %2499 = vmatprep.subr.mxu0 0.0
        %2500 = vmatpush1.xpose.msra.mxu0 0.0
        %2501 = vmatprep.subr.mxu0 0.0
        %2502 = vmatpush1.xpose.msra.mxu0 0.0
        %2503 = vmatprep.mubr.f32.mxu0 0.0
        %2504 = vmatmul.mubr.f32.gmra.mrb[0].mxu0 %v2437
        %v2505 = vpop.f32.mrb[0].mxu0
        %v2506 = vadd.f32 0.0, %v2505
        %v2507 = vpop.f32.mrb[0].mxu0
        %2508 = vdwg.mxu0
        %v2510 = vsel %vm629, %v1261, 0
        %2512 = vmatprep.subr.mxu0 0.0
        %2513 = vmatpush1.xpose.msra.mxu0 %v2510
        %2514 = vmatprep.subr.mxu0 0.0
        %2515 = vmatpush1.xpose.msra.mxu0 0.0
        %2516 = vmatprep.subr.mxu0 0.0
        %2517 = vmatpush1.xpose.msra.mxu0 0.0
        %2518 = vmatprep.subr.mxu0 0.0
        %2519 = vmatpush1.xpose.msra.mxu0 0.0
        %2520 = vmatprep.subr.mxu0 0.0
        %2521 = vmatpush1.xpose.msra.mxu0 0.0
        %2522 = vmatprep.subr.mxu0 0.0
        %2523 = vmatpush1.xpose.msra.mxu0 0.0
        %2524 = vmatprep.subr.mxu0 0.0
        %2525 = vmatpush1.xpose.msra.mxu0 0.0
        %2526 = vmatprep.subr.mxu0 0.0
        %2527 = vmatpush1.xpose.msra.mxu0 0.0
        %2528 = vmatprep.subr.mxu0 0.0
        %2529 = vmatpush1.xpose.msra.mxu0 0.0
        %2530 = vmatprep.subr.mxu0 0.0
        %2531 = vmatpush1.xpose.msra.mxu0 0.0
        %2532 = vmatprep.subr.mxu0 0.0
        %2533 = vmatpush1.xpose.msra.mxu0 0.0
        %2534 = vmatprep.subr.mxu0 0.0
        %2535 = vmatpush1.xpose.msra.mxu0 0.0
        %2536 = vmatprep.subr.mxu0 0.0
        %2537 = vmatpush1.xpose.msra.mxu0 0.0
        %2538 = vmatprep.subr.mxu0 0.0
        %2539 = vmatpush1.xpose.msra.mxu0 0.0
        %2540 = vmatprep.subr.mxu0 0.0
        %2541 = vmatpush1.xpose.msra.mxu0 0.0
        %2542 = vmatprep.subr.mxu0 0.0
        %2543 = vmatpush1.xpose.msra.mxu0 0.0
        %2544 = vmatprep.subr.mxu0 0.0
        %2545 = vmatpush1.xpose.msra.mxu0 0.0
        %2546 = vmatprep.subr.mxu0 0.0
        %2547 = vmatpush1.xpose.msra.mxu0 0.0
        %2548 = vmatprep.subr.mxu0 0.0
        %2549 = vmatpush1.xpose.msra.mxu0 0.0
        %2550 = vmatprep.subr.mxu0 0.0
        %2551 = vmatpush1.xpose.msra.mxu0 0.0
        %2552 = vmatprep.subr.mxu0 0.0
        %2553 = vmatpush1.xpose.msra.mxu0 0.0
        %2554 = vmatprep.subr.mxu0 0.0
        %2555 = vmatpush1.xpose.msra.mxu0 0.0
        %2556 = vmatprep.subr.mxu0 0.0
        %2557 = vmatpush1.xpose.msra.mxu0 0.0
        %2558 = vmatprep.subr.mxu0 0.0
        %2559 = vmatpush1.xpose.msra.mxu0 0.0
        %2560 = vmatprep.subr.mxu0 0.0
        %2561 = vmatpush1.xpose.msra.mxu0 0.0
        %2562 = vmatprep.subr.mxu0 0.0
        %2563 = vmatpush1.xpose.msra.mxu0 0.0
        %2564 = vmatprep.subr.mxu0 0.0
        %2565 = vmatpush1.xpose.msra.mxu0 0.0
        %2566 = vmatprep.subr.mxu0 0.0
        %2567 = vmatpush1.xpose.msra.mxu0 0.0
        %2568 = vmatprep.subr.mxu0 0.0
        %2569 = vmatpush1.xpose.msra.mxu0 0.0
        %2570 = vmatprep.subr.mxu0 0.0
        %2571 = vmatpush1.xpose.msra.mxu0 0.0
        %2572 = vmatprep.subr.mxu0 0.0
        %2573 = vmatpush1.xpose.msra.mxu0 0.0
        %2574 = vmatprep.subr.mxu0 0.0
        %2575 = vmatpush1.xpose.msra.mxu0 0.0
        %2576 = vmatprep.mubr.f32.mxu0 0.0
        %2577 = vmatmul.mubr.f32.gmra.mrb[0].mxu0 %v2510
        %v2578 = vpop.f32.mrb[0].mxu0
        %v2579 = vadd.f32 0.0, %v2578
        %v2580 = vpop.f32.mrb[0].mxu0
        %2581 = vdwg.mxu0
        %v2583 = vsel %vm629, %v1262, 0
        %2585 = vmatprep.subr.mxu0 0.0
        %2586 = vmatpush1.xpose.msra.mxu0 %v2583
        %2587 = vmatprep.subr.mxu0 0.0
        %2588 = vmatpush1.xpose.msra.mxu0 0.0
        %2589 = vmatprep.subr.mxu0 0.0
        %2590 = vmatpush1.xpose.msra.mxu0 0.0
        %2591 = vmatprep.subr.mxu0 0.0
        %2592 = vmatpush1.xpose.msra.mxu0 0.0
        %2593 = vmatprep.subr.mxu0 0.0
        %2594 = vmatpush1.xpose.msra.mxu0 0.0
        %2595 = vmatprep.subr.mxu0 0.0
        %2596 = vmatpush1.xpose.msra.mxu0 0.0
        %2597 = vmatprep.subr.mxu0 0.0
        %2598 = vmatpush1.xpose.msra.mxu0 0.0
        %2599 = vmatprep.subr.mxu0 0.0
        %2600 = vmatpush1.xpose.msra.mxu0 0.0
        %2601 = vmatprep.subr.mxu0 0.0
        %2602 = vmatpush1.xpose.msra.mxu0 0.0
        %2603 = vmatprep.subr.mxu0 0.0
        %2604 = vmatpush1.xpose.msra.mxu0 0.0
        %2605 = vmatprep.subr.mxu0 0.0
        %2606 = vmatpush1.xpose.msra.mxu0 0.0
        %2607 = vmatprep.subr.mxu0 0.0
        %2608 = vmatpush1.xpose.msra.mxu0 0.0
        %2609 = vmatprep.subr.mxu0 0.0
        %2610 = vmatpush1.xpose.msra.mxu0 0.0
        %2611 = vmatprep.subr.mxu0 0.0
        %2612 = vmatpush1.xpose.msra.mxu0 0.0
        %2613 = vmatprep.subr.mxu0 0.0
        %2614 = vmatpush1.xpose.msra.mxu0 0.0
        %2615 = vmatprep.subr.mxu0 0.0
        %2616 = vmatpush1.xpose.msra.mxu0 0.0
        %2617 = vmatprep.subr.mxu0 0.0
        %2618 = vmatpush1.xpose.msra.mxu0 0.0
        %2619 = vmatprep.subr.mxu0 0.0
        %2620 = vmatpush1.xpose.msra.mxu0 0.0
        %2621 = vmatprep.subr.mxu0 0.0
        %2622 = vmatpush1.xpose.msra.mxu0 0.0
        %2623 = vmatprep.subr.mxu0 0.0
        %2624 = vmatpush1.xpose.msra.mxu0 0.0
        %2625 = vmatprep.subr.mxu0 0.0
        %2626 = vmatpush1.xpose.msra.mxu0 0.0
        %2627 = vmatprep.subr.mxu0 0.0
        %2628 = vmatpush1.xpose.msra.mxu0 0.0
        %2629 = vmatprep.subr.mxu0 0.0
        %2630 = vmatpush1.xpose.msra.mxu0 0.0
        %2631 = vmatprep.subr.mxu0 0.0
        %2632 = vmatpush1.xpose.msra.mxu0 0.0
        %2633 = vmatprep.subr.mxu0 0.0
        %2634 = vmatpush1.xpose.msra.mxu0 0.0
        %2635 = vmatprep.subr.mxu0 0.0
        %2636 = vmatpush1.xpose.msra.mxu0 0.0
        %2637 = vmatprep.subr.mxu0 0.0
        %2638 = vmatpush1.xpose.msra.mxu0 0.0
        %2639 = vmatprep.subr.mxu0 0.0
        %2640 = vmatpush1.xpose.msra.mxu0 0.0
        %2641 = vmatprep.subr.mxu0 0.0
        %2642 = vmatpush1.xpose.msra.mxu0 0.0
        %2643 = vmatprep.subr.mxu0 0.0
        %2644 = vmatpush1.xpose.msra.mxu0 0.0
        %2645 = vmatprep.subr.mxu0 0.0
        %2646 = vmatpush1.xpose.msra.mxu0 0.0
        %2647 = vmatprep.subr.mxu0 0.0
        %2648 = vmatpush1.xpose.msra.mxu0 0.0
        %2649 = vmatprep.mubr.f32.mxu0 0.0
        %2650 = vmatmul.mubr.f32.gmra.mrb[0].mxu0 %v2583
        %v2651 = vpop.f32.mrb[0].mxu0
        %v2652 = vadd.f32 0.0, %v2651
        %v2653 = vpop.f32.mrb[0].mxu0
        %2654 = vdwg.mxu0
        %v2656 = vsel %vm629, %v1263, 0
        %2658 = vmatprep.subr.mxu0 0.0
        %2659 = vmatpush1.xpose.msra.mxu0 %v2656
        %2660 = vmatprep.subr.mxu0 0.0
        %2661 = vmatpush1.xpose.msra.mxu0 0.0
        %2662 = vmatprep.subr.mxu0 0.0
        %2663 = vmatpush1.xpose.msra.mxu0 0.0
        %2664 = vmatprep.subr.mxu0 0.0
        %2665 = vmatpush1.xpose.msra.mxu0 0.0
        %2666 = vmatprep.subr.mxu0 0.0
        %2667 = vmatpush1.xpose.msra.mxu0 0.0
        %2668 = vmatprep.subr.mxu0 0.0
        %2669 = vmatpush1.xpose.msra.mxu0 0.0
        %2670 = vmatprep.subr.mxu0 0.0
        %2671 = vmatpush1.xpose.msra.mxu0 0.0
        %2672 = vmatprep.subr.mxu0 0.0
        %2673 = vmatpush1.xpose.msra.mxu0 0.0
        %2674 = vmatprep.subr.mxu0 0.0
        %2675 = vmatpush1.xpose.msra.mxu0 0.0
        %2676 = vmatprep.subr.mxu0 0.0
        %2677 = vmatpush1.xpose.msra.mxu0 0.0
        %2678 = vmatprep.subr.mxu0 0.0
        %2679 = vmatpush1.xpose.msra.mxu0 0.0
        %2680 = vmatprep.subr.mxu0 0.0
        %2681 = vmatpush1.xpose.msra.mxu0 0.0
        %2682 = vmatprep.subr.mxu0 0.0
        %2683 = vmatpush1.xpose.msra.mxu0 0.0
        %2684 = vmatprep.subr.mxu0 0.0
        %2685 = vmatpush1.xpose.msra.mxu0 0.0
        %2686 = vmatprep.subr.mxu0 0.0
        %2687 = vmatpush1.xpose.msra.mxu0 0.0
        %2688 = vmatprep.subr.mxu0 0.0
        %2689 = vmatpush1.xpose.msra.mxu0 0.0
        %2690 = vmatprep.subr.mxu0 0.0
        %2691 = vmatpush1.xpose.msra.mxu0 0.0
        %2692 = vmatprep.subr.mxu0 0.0
        %2693 = vmatpush1.xpose.msra.mxu0 0.0
        %2694 = vmatprep.subr.mxu0 0.0
        %2695 = vmatpush1.xpose.msra.mxu0 0.0
        %2696 = vmatprep.subr.mxu0 0.0
        %2697 = vmatpush1.xpose.msra.mxu0 0.0
        %2698 = vmatprep.subr.mxu0 0.0
        %2699 = vmatpush1.xpose.msra.mxu0 0.0
        %2700 = vmatprep.subr.mxu0 0.0
        %2701 = vmatpush1.xpose.msra.mxu0 0.0
        %2702 = vmatprep.subr.mxu0 0.0
        %2703 = vmatpush1.xpose.msra.mxu0 0.0
        %2704 = vmatprep.subr.mxu0 0.0
        %2705 = vmatpush1.xpose.msra.mxu0 0.0
        %2706 = vmatprep.subr.mxu0 0.0
        %2707 = vmatpush1.xpose.msra.mxu0 0.0
        %2708 = vmatprep.subr.mxu0 0.0
        %2709 = vmatpush1.xpose.msra.mxu0 0.0
        %2710 = vmatprep.subr.mxu0 0.0
        %2711 = vmatpush1.xpose.msra.mxu0 0.0
        %2712 = vmatprep.subr.mxu0 0.0
        %2713 = vmatpush1.xpose.msra.mxu0 0.0
        %2714 = vmatprep.subr.mxu0 0.0
        %2715 = vmatpush1.xpose.msra.mxu0 0.0
        %2716 = vmatprep.subr.mxu0 0.0
        %2717 = vmatpush1.xpose.msra.mxu0 0.0
        %2718 = vmatprep.subr.mxu0 0.0
        %2719 = vmatpush1.xpose.msra.mxu0 0.0
        %2720 = vmatprep.subr.mxu0 0.0
        %2721 = vmatpush1.xpose.msra.mxu0 0.0
        %2722 = vmatprep.mubr.f32.mxu0 0.0
        %2723 = vmatmul.mubr.f32.gmra.mrb[0].mxu0 %v2656
        %v2724 = vpop.f32.mrb[0].mxu0
        %v2725 = vadd.f32 0.0, %v2724
        %v2726 = vpop.f32.mrb[0].mxu0
        %2727 = vdwg.mxu0
        %v2729 = vsel %vm629, %v1264, 0
        %2731 = vmatprep.subr.mxu0 0.0
        %2732 = vmatpush1.xpose.msra.mxu0 %v2729
        %2733 = vmatprep.subr.mxu0 0.0
        %2734 = vmatpush1.xpose.msra.mxu0 0.0
        %2735 = vmatprep.subr.mxu0 0.0
        %2736 = vmatpush1.xpose.msra.mxu0 0.0
        %2737 = vmatprep.subr.mxu0 0.0
        %2738 = vmatpush1.xpose.msra.mxu0 0.0
        %2739 = vmatprep.subr.mxu0 0.0
        %2740 = vmatpush1.xpose.msra.mxu0 0.0
        %2741 = vmatprep.subr.mxu0 0.0
        %2742 = vmatpush1.xpose.msra.mxu0 0.0
        %2743 = vmatprep.subr.mxu0 0.0
        %2744 = vmatpush1.xpose.msra.mxu0 0.0
        %2745 = vmatprep.subr.mxu0 0.0
        %2746 = vmatpush1.xpose.msra.mxu0 0.0
        %2747 = vmatprep.subr.mxu0 0.0
        %2748 = vmatpush1.xpose.msra.mxu0 0.0
        %2749 = vmatprep.subr.mxu0 0.0
        %2750 = vmatpush1.xpose.msra.mxu0 0.0
        %2751 = vmatprep.subr.mxu0 0.0
        %2752 = vmatpush1.xpose.msra.mxu0 0.0
        %2753 = vmatprep.subr.mxu0 0.0
        %2754 = vmatpush1.xpose.msra.mxu0 0.0
        %2755 = vmatprep.subr.mxu0 0.0
        %2756 = vmatpush1.xpose.msra.mxu0 0.0
        %2757 = vmatprep.subr.mxu0 0.0
        %2758 = vmatpush1.xpose.msra.mxu0 0.0
        %2759 = vmatprep.subr.mxu0 0.0
        %2760 = vmatpush1.xpose.msra.mxu0 0.0
        %2761 = vmatprep.subr.mxu0 0.0
        %2762 = vmatpush1.xpose.msra.mxu0 0.0
        %2763 = vmatprep.subr.mxu0 0.0
        %2764 = vmatpush1.xpose.msra.mxu0 0.0
        %2765 = vmatprep.subr.mxu0 0.0
        %2766 = vmatpush1.xpose.msra.mxu0 0.0
        %2767 = vmatprep.subr.mxu0 0.0
        %2768 = vmatpush1.xpose.msra.mxu0 0.0
        %2769 = vmatprep.subr.mxu0 0.0
        %2770 = vmatpush1.xpose.msra.mxu0 0.0
        %2771 = vmatprep.subr.mxu0 0.0
        %2772 = vmatpush1.xpose.msra.mxu0 0.0
        %2773 = vmatprep.subr.mxu0 0.0
        %2774 = vmatpush1.xpose.msra.mxu0 0.0
        %2775 = vmatprep.subr.mxu0 0.0
        %2776 = vmatpush1.xpose.msra.mxu0 0.0
        %2777 = vmatprep.subr.mxu0 0.0
        %2778 = vmatpush1.xpose.msra.mxu0 0.0
        %2779 = vmatprep.subr.mxu0 0.0
        %2780 = vmatpush1.xpose.msra.mxu0 0.0
        %2781 = vmatprep.subr.mxu0 0.0
        %2782 = vmatpush1.xpose.msra.mxu0 0.0
        %2783 = vmatprep.subr.mxu0 0.0
        %2784 = vmatpush1.xpose.msra.mxu0 0.0
        %2785 = vmatprep.subr.mxu0 0.0
        %2786 = vmatpush1.xpose.msra.mxu0 0.0
        %2787 = vmatprep.subr.mxu0 0.0
        %2788 = vmatpush1.xpose.msra.mxu0 0.0
        %2789 = vmatprep.subr.mxu0 0.0
        %2790 = vmatpush1.xpose.msra.mxu0 0.0
        %2791 = vmatprep.subr.mxu0 0.0
        %2792 = vmatpush1.xpose.msra.mxu0 0.0
        %2793 = vmatprep.subr.mxu0 0.0
        %2794 = vmatpush1.xpose.msra.mxu0 0.0
        %2795 = vmatprep.mubr.f32.mxu0 0.0
        %2796 = vmatmul.mubr.f32.gmra.mrb[0].mxu0 %v2729
        %v2797 = vpop.f32.mrb[0].mxu0
        %v2798 = vadd.f32 0.0, %v2797
        %v2799 = vpop.f32.mrb[0].mxu0
        %2800 = vdwg.mxu0
        %v2802 = vsel %vm629, %v1265, 0
        %2804 = vmatprep.subr.mxu0 0.0
        %2805 = vmatpush1.xpose.msra.mxu0 %v2802
        %2806 = vmatprep.subr.mxu0 0.0
        %2807 = vmatpush1.xpose.msra.mxu0 0.0
        %2808 = vmatprep.subr.mxu0 0.0
        %2809 = vmatpush1.xpose.msra.mxu0 0.0
        %2810 = vmatprep.subr.mxu0 0.0
        %2811 = vmatpush1.xpose.msra.mxu0 0.0
        %2812 = vmatprep.subr.mxu0 0.0
        %2813 = vmatpush1.xpose.msra.mxu0 0.0
        %2814 = vmatprep.subr.mxu0 0.0
        %2815 = vmatpush1.xpose.msra.mxu0 0.0
        %2816 = vmatprep.subr.mxu0 0.0
        %2817 = vmatpush1.xpose.msra.mxu0 0.0
        %2818 = vmatprep.subr.mxu0 0.0
        %2819 = vmatpush1.xpose.msra.mxu0 0.0
        %2820 = vmatprep.subr.mxu0 0.0
        %2821 = vmatpush1.xpose.msra.mxu0 0.0
        %2822 = vmatprep.subr.mxu0 0.0
        %2823 = vmatpush1.xpose.msra.mxu0 0.0
        %2824 = vmatprep.subr.mxu0 0.0
        %2825 = vmatpush1.xpose.msra.mxu0 0.0
        %2826 = vmatprep.subr.mxu0 0.0
        %2827 = vmatpush1.xpose.msra.mxu0 0.0
        %2828 = vmatprep.subr.mxu0 0.0
        %2829 = vmatpush1.xpose.msra.mxu0 0.0
        %2830 = vmatprep.subr.mxu0 0.0
        %2831 = vmatpush1.xpose.msra.mxu0 0.0
        %2832 = vmatprep.subr.mxu0 0.0
        %2833 = vmatpush1.xpose.msra.mxu0 0.0
        %2834 = vmatprep.subr.mxu0 0.0
        %2835 = vmatpush1.xpose.msra.mxu0 0.0
        %2836 = vmatprep.subr.mxu0 0.0
        %2837 = vmatpush1.xpose.msra.mxu0 0.0
        %2838 = vmatprep.subr.mxu0 0.0
        %2839 = vmatpush1.xpose.msra.mxu0 0.0
        %2840 = vmatprep.subr.mxu0 0.0
        %2841 = vmatpush1.xpose.msra.mxu0 0.0
        %2842 = vmatprep.subr.mxu0 0.0
        %2843 = vmatpush1.xpose.msra.mxu0 0.0
        %2844 = vmatprep.subr.mxu0 0.0
        %2845 = vmatpush1.xpose.msra.mxu0 0.0
        %2846 = vmatprep.subr.mxu0 0.0
        %2847 = vmatpush1.xpose.msra.mxu0 0.0
        %2848 = vmatprep.subr.mxu0 0.0
        %2849 = vmatpush1.xpose.msra.mxu0 0.0
        %2850 = vmatprep.subr.mxu0 0.0
        %2851 = vmatpush1.xpose.msra.mxu0 0.0
        %2852 = vmatprep.subr.mxu0 0.0
        %2853 = vmatpush1.xpose.msra.mxu0 0.0
        %2854 = vmatprep.subr.mxu0 0.0
        %2855 = vmatpush1.xpose.msra.mxu0 0.0
        %2856 = vmatprep.subr.mxu0 0.0
        %2857 = vmatpush1.xpose.msra.mxu0 0.0
        %2858 = vmatprep.subr.mxu0 0.0
        %2859 = vmatpush1.xpose.msra.mxu0 0.0
        %2860 = vmatprep.subr.mxu0 0.0
        %2861 = vmatpush1.xpose.msra.mxu0 0.0
        %2862 = vmatprep.subr.mxu0 0.0
        %2863 = vmatpush1.xpose.msra.mxu0 0.0
        %2864 = vmatprep.subr.mxu0 0.0
        %2865 = vmatpush1.xpose.msra.mxu0 0.0
        %2866 = vmatprep.subr.mxu0 0.0
        %2867 = vmatpush1.xpose.msra.mxu0 0.0
        %2868 = vmatprep.mubr.f32.mxu0 0.0
        %2869 = vmatmul.mubr.f32.gmra.mrb[0].mxu0 %v2802
        %v2870 = vpop.f32.mrb[0].mxu0
        %v2871 = vadd.f32 0.0, %v2870
        %v2872 = vpop.f32.mrb[0].mxu0
        %2873 = vdwg.mxu0
        %v2875 = vsel %vm629, %v1266, 0
        %2877 = vmatprep.subr.mxu0 0.0
        %2878 = vmatpush1.xpose.msra.mxu0 %v2875
        %2879 = vmatprep.subr.mxu0 0.0
        %2880 = vmatpush1.xpose.msra.mxu0 0.0
        %2881 = vmatprep.subr.mxu0 0.0
        %2882 = vmatpush1.xpose.msra.mxu0 0.0
        %2883 = vmatprep.subr.mxu0 0.0
        %2884 = vmatpush1.xpose.msra.mxu0 0.0
        %2885 = vmatprep.subr.mxu0 0.0
        %2886 = vmatpush1.xpose.msra.mxu0 0.0
        %2887 = vmatprep.subr.mxu0 0.0
        %2888 = vmatpush1.xpose.msra.mxu0 0.0
        %2889 = vmatprep.subr.mxu0 0.0
        %2890 = vmatpush1.xpose.msra.mxu0 0.0
        %2891 = vmatprep.subr.mxu0 0.0
        %2892 = vmatpush1.xpose.msra.mxu0 0.0
        %2893 = vmatprep.subr.mxu0 0.0
        %2894 = vmatpush1.xpose.msra.mxu0 0.0
        %2895 = vmatprep.subr.mxu0 0.0
        %2896 = vmatpush1.xpose.msra.mxu0 0.0
        %2897 = vmatprep.subr.mxu0 0.0
        %2898 = vmatpush1.xpose.msra.mxu0 0.0
        %2899 = vmatprep.subr.mxu0 0.0
        %2900 = vmatpush1.xpose.msra.mxu0 0.0
        %2901 = vmatprep.subr.mxu0 0.0
        %2902 = vmatpush1.xpose.msra.mxu0 0.0
        %2903 = vmatprep.subr.mxu0 0.0
        %2904 = vmatpush1.xpose.msra.mxu0 0.0
        %2905 = vmatprep.subr.mxu0 0.0
        %2906 = vmatpush1.xpose.msra.mxu0 0.0
        %2907 = vmatprep.subr.mxu0 0.0
        %2908 = vmatpush1.xpose.msra.mxu0 0.0
        %2909 = vmatprep.subr.mxu0 0.0
        %2910 = vmatpush1.xpose.msra.mxu0 0.0
        %2911 = vmatprep.subr.mxu0 0.0
        %2912 = vmatpush1.xpose.msra.mxu0 0.0
        %2913 = vmatprep.subr.mxu0 0.0
        %2914 = vmatpush1.xpose.msra.mxu0 0.0
        %2915 = vmatprep.subr.mxu0 0.0
        %2916 = vmatpush1.xpose.msra.mxu0 0.0
        %2917 = vmatprep.subr.mxu0 0.0
        %2918 = vmatpush1.xpose.msra.mxu0 0.0
        %2919 = vmatprep.subr.mxu0 0.0
        %2920 = vmatpush1.xpose.msra.mxu0 0.0
        %2921 = vmatprep.subr.mxu0 0.0
        %2922 = vmatpush1.xpose.msra.mxu0 0.0
        %2923 = vmatprep.subr.mxu0 0.0
        %2924 = vmatpush1.xpose.msra.mxu0 0.0
        %2925 = vmatprep.subr.mxu0 0.0
        %2926 = vmatpush1.xpose.msra.mxu0 0.0
        %2927 = vmatprep.subr.mxu0 0.0
        %2928 = vmatpush1.xpose.msra.mxu0 0.0
        %2929 = vmatprep.subr.mxu0 0.0
        %2930 = vmatpush1.xpose.msra.mxu0 0.0
        %2931 = vmatprep.subr.mxu0 0.0
        %2932 = vmatpush1.xpose.msra.mxu0 0.0
        %2933 = vmatprep.subr.mxu0 0.0
        %2934 = vmatpush1.xpose.msra.mxu0 0.0
        %2935 = vmatprep.subr.mxu0 0.0
        %2936 = vmatpush1.xpose.msra.mxu0 0.0
        %2937 = vmatprep.subr.mxu0 0.0
        %2938 = vmatpush1.xpose.msra.mxu0 0.0
        %2939 = vmatprep.subr.mxu0 0.0
        %2940 = vmatpush1.xpose.msra.mxu0 0.0
        %2941 = vmatprep.mubr.f32.mxu0 0.0
        %2942 = vmatmul.mubr.f32.gmra.mrb[0].mxu0 %v2875
        %v2943 = vpop.f32.mrb[0].mxu0
        %v2944 = vadd.f32 0.0, %v2943
        %v2945 = vpop.f32.mrb[0].mxu0
        %2946 = vdwg.mxu0
        %v2948 = vsel %vm629, %v1267, 0
        %2950 = vmatprep.subr.mxu0 0.0
        %2951 = vmatpush1.xpose.msra.mxu0 %v2948
        %2952 = vmatprep.subr.mxu0 0.0
        %2953 = vmatpush1.xpose.msra.mxu0 0.0
        %2954 = vmatprep.subr.mxu0 0.0
        %2955 = vmatpush1.xpose.msra.mxu0 0.0
        %2956 = vmatprep.subr.mxu0 0.0
        %2957 = vmatpush1.xpose.msra.mxu0 0.0
        %2958 = vmatprep.subr.mxu0 0.0
        %2959 = vmatpush1.xpose.msra.mxu0 0.0
        %2960 = vmatprep.subr.mxu0 0.0
        %2961 = vmatpush1.xpose.msra.mxu0 0.0
        %2962 = vmatprep.subr.mxu0 0.0
        %2963 = vmatpush1.xpose.msra.mxu0 0.0
        %2964 = vmatprep.subr.mxu0 0.0
        %2965 = vmatpush1.xpose.msra.mxu0 0.0
        %2966 = vmatprep.subr.mxu0 0.0
        %2967 = vmatpush1.xpose.msra.mxu0 0.0
        %2968 = vmatprep.subr.mxu0 0.0
        %2969 = vmatpush1.xpose.msra.mxu0 0.0
        %2970 = vmatprep.subr.mxu0 0.0
        %2971 = vmatpush1.xpose.msra.mxu0 0.0
        %2972 = vmatprep.subr.mxu0 0.0
        %2973 = vmatpush1.xpose.msra.mxu0 0.0
        %2974 = vmatprep.subr.mxu0 0.0
        %2975 = vmatpush1.xpose.msra.mxu0 0.0
        %2976 = vmatprep.subr.mxu0 0.0
        %2977 = vmatpush1.xpose.msra.mxu0 0.0
        %2978 = vmatprep.subr.mxu0 0.0
        %2979 = vmatpush1.xpose.msra.mxu0 0.0
        %2980 = vmatprep.subr.mxu0 0.0
        %2981 = vmatpush1.xpose.msra.mxu0 0.0
        %2982 = vmatprep.subr.mxu0 0.0
        %2983 = vmatpush1.xpose.msra.mxu0 0.0
        %2984 = vmatprep.subr.mxu0 0.0
        %2985 = vmatpush1.xpose.msra.mxu0 0.0
        %2986 = vmatprep.subr.mxu0 0.0
        %2987 = vmatpush1.xpose.msra.mxu0 0.0
        %2988 = vmatprep.subr.mxu0 0.0
        %2989 = vmatpush1.xpose.msra.mxu0 0.0
        %2990 = vmatprep.subr.mxu0 0.0
        %2991 = vmatpush1.xpose.msra.mxu0 0.0
        %2992 = vmatprep.subr.mxu0 0.0
        %2993 = vmatpush1.xpose.msra.mxu0 0.0
        %2994 = vmatprep.subr.mxu0 0.0
        %2995 = vmatpush1.xpose.msra.mxu0 0.0
        %2996 = vmatprep.subr.mxu0 0.0
        %2997 = vmatpush1.xpose.msra.mxu0 0.0
        %2998 = vmatprep.subr.mxu0 0.0
        %2999 = vmatpush1.xpose.msra.mxu0 0.0
        %3000 = vmatprep.subr.mxu0 0.0
        %3001 = vmatpush1.xpose.msra.mxu0 0.0
        %3002 = vmatprep.subr.mxu0 0.0
        %3003 = vmatpush1.xpose.msra.mxu0 0.0
        %3004 = vmatprep.subr.mxu0 0.0
        %3005 = vmatpush1.xpose.msra.mxu0 0.0
        %3006 = vmatprep.subr.mxu0 0.0
        %3007 = vmatpush1.xpose.msra.mxu0 0.0
        %3008 = vmatprep.subr.mxu0 0.0
        %3009 = vmatpush1.xpose.msra.mxu0 0.0
        %3010 = vmatprep.subr.mxu0 0.0
        %3011 = vmatpush1.xpose.msra.mxu0 0.0
        %3012 = vmatprep.subr.mxu0 0.0
        %3013 = vmatpush1.xpose.msra.mxu0 0.0
        %3014 = vmatprep.mubr.f32.mxu0 0.0
        %3015 = vmatmul.mubr.f32.gmra.mrb[0].mxu0 %v2948
        %v3016 = vpop.f32.mrb[0].mxu0
        %v3017 = vadd.f32 0.0, %v3016
        %v3018 = vpop.f32.mrb[0].mxu0
        %3019 = vdwg.mxu0
        %v3021 = vsel %vm629, %v1268, 0
        %3023 = vmatprep.subr.mxu0 0.0
        %3024 = vmatpush1.xpose.msra.mxu0 %v3021
        %3025 = vmatprep.subr.mxu0 0.0
        %3026 = vmatpush1.xpose.msra.mxu0 0.0
        %3027 = vmatprep.subr.mxu0 0.0
        %3028 = vmatpush1.xpose.msra.mxu0 0.0
        %3029 = vmatprep.subr.mxu0 0.0
        %3030 = vmatpush1.xpose.msra.mxu0 0.0
        %3031 = vmatprep.subr.mxu0 0.0
        %3032 = vmatpush1.xpose.msra.mxu0 0.0
        %3033 = vmatprep.subr.mxu0 0.0
        %3034 = vmatpush1.xpose.msra.mxu0 0.0
        %3035 = vmatprep.subr.mxu0 0.0
        %3036 = vmatpush1.xpose.msra.mxu0 0.0
        %3037 = vmatprep.subr.mxu0 0.0
        %3038 = vmatpush1.xpose.msra.mxu0 0.0
        %3039 = vmatprep.subr.mxu0 0.0
        %3040 = vmatpush1.xpose.msra.mxu0 0.0
        %3041 = vmatprep.subr.mxu0 0.0
        %3042 = vmatpush1.xpose.msra.mxu0 0.0
        %3043 = vmatprep.subr.mxu0 0.0
        %3044 = vmatpush1.xpose.msra.mxu0 0.0
        %3045 = vmatprep.subr.mxu0 0.0
        %3046 = vmatpush1.xpose.msra.mxu0 0.0
        %3047 = vmatprep.subr.mxu0 0.0
        %3048 = vmatpush1.xpose.msra.mxu0 0.0
        %3049 = vmatprep.subr.mxu0 0.0
        %3050 = vmatpush1.xpose.msra.mxu0 0.0
        %3051 = vmatprep.subr.mxu0 0.0
        %3052 = vmatpush1.xpose.msra.mxu0 0.0
        %3053 = vmatprep.subr.mxu0 0.0
        %3054 = vmatpush1.xpose.msra.mxu0 0.0
        %3055 = vmatprep.subr.mxu0 0.0
        %3056 = vmatpush1.xpose.msra.mxu0 0.0
        %3057 = vmatprep.subr.mxu0 0.0
        %3058 = vmatpush1.xpose.msra.mxu0 0.0
        %3059 = vmatprep.subr.mxu0 0.0
        %3060 = vmatpush1.xpose.msra.mxu0 0.0
        %3061 = vmatprep.subr.mxu0 0.0
        %3062 = vmatpush1.xpose.msra.mxu0 0.0
        %3063 = vmatprep.subr.mxu0 0.0
        %3064 = vmatpush1.xpose.msra.mxu0 0.0
        %3065 = vmatprep.subr.mxu0 0.0
        %3066 = vmatpush1.xpose.msra.mxu0 0.0
        %3067 = vmatprep.subr.mxu0 0.0
        %3068 = vmatpush1.xpose.msra.mxu0 0.0
        %3069 = vmatprep.subr.mxu0 0.0
        %3070 = vmatpush1.xpose.msra.mxu0 0.0
        %3071 = vmatprep.subr.mxu0 0.0
        %3072 = vmatpush1.xpose.msra.mxu0 0.0
        %3073 = vmatprep.subr.mxu0 0.0
        %3074 = vmatpush1.xpose.msra.mxu0 0.0
        %3075 = vmatprep.subr.mxu0 0.0
        %3076 = vmatpush1.xpose.msra.mxu0 0.0
        %3077 = vmatprep.subr.mxu0 0.0
        %3078 = vmatpush1.xpose.msra.mxu0 0.0
        %3079 = vmatprep.subr.mxu0 0.0
        %3080 = vmatpush1.xpose.msra.mxu0 0.0
        %3081 = vmatprep.subr.mxu0 0.0
        %3082 = vmatpush1.xpose.msra.mxu0 0.0
        %3083 = vmatprep.subr.mxu0 0.0
        %3084 = vmatpush1.xpose.msra.mxu0 0.0
        %3085 = vmatprep.subr.mxu0 0.0
        %3086 = vmatpush1.xpose.msra.mxu0 0.0
        %3087 = vmatprep.mubr.f32.mxu0 0.0
        %3088 = vmatmul.mubr.f32.gmra.mrb[0].mxu0 %v3021
        %v3089 = vpop.f32.mrb[0].mxu0
        %v3090 = vadd.f32 0.0, %v3089
        %v3091 = vpop.f32.mrb[0].mxu0
        %3092 = vdwg.mxu0
        %v3094 = vsel %vm629, %v1269, 0
        %3096 = vmatprep.subr.mxu0 0.0
        %3097 = vmatpush1.xpose.msra.mxu0 %v3094
        %3098 = vmatprep.subr.mxu0 0.0
        %3099 = vmatpush1.xpose.msra.mxu0 0.0
        %3100 = vmatprep.subr.mxu0 0.0
        %3101 = vmatpush1.xpose.msra.mxu0 0.0
        %3102 = vmatprep.subr.mxu0 0.0
        %3103 = vmatpush1.xpose.msra.mxu0 0.0
        %3104 = vmatprep.subr.mxu0 0.0
        %3105 = vmatpush1.xpose.msra.mxu0 0.0
        %3106 = vmatprep.subr.mxu0 0.0
        %3107 = vmatpush1.xpose.msra.mxu0 0.0
        %3108 = vmatprep.subr.mxu0 0.0
        %3109 = vmatpush1.xpose.msra.mxu0 0.0
        %3110 = vmatprep.subr.mxu0 0.0
        %3111 = vmatpush1.xpose.msra.mxu0 0.0
        %3112 = vmatprep.subr.mxu0 0.0
        %3113 = vmatpush1.xpose.msra.mxu0 0.0
        %3114 = vmatprep.subr.mxu0 0.0
        %3115 = vmatpush1.xpose.msra.mxu0 0.0
        %3116 = vmatprep.subr.mxu0 0.0
        %3117 = vmatpush1.xpose.msra.mxu0 0.0
        %3118 = vmatprep.subr.mxu0 0.0
        %3119 = vmatpush1.xpose.msra.mxu0 0.0
        %3120 = vmatprep.subr.mxu0 0.0
        %3121 = vmatpush1.xpose.msra.mxu0 0.0
        %3122 = vmatprep.subr.mxu0 0.0
        %3123 = vmatpush1.xpose.msra.mxu0 0.0
        %3124 = vmatprep.subr.mxu0 0.0
        %3125 = vmatpush1.xpose.msra.mxu0 0.0
        %3126 = vmatprep.subr.mxu0 0.0
        %3127 = vmatpush1.xpose.msra.mxu0 0.0
        %3128 = vmatprep.subr.mxu0 0.0
        %3129 = vmatpush1.xpose.msra.mxu0 0.0
        %3130 = vmatprep.subr.mxu0 0.0
        %3131 = vmatpush1.xpose.msra.mxu0 0.0
        %3132 = vmatprep.subr.mxu0 0.0
        %3133 = vmatpush1.xpose.msra.mxu0 0.0
        %3134 = vmatprep.subr.mxu0 0.0
        %3135 = vmatpush1.xpose.msra.mxu0 0.0
        %3136 = vmatprep.subr.mxu0 0.0
        %3137 = vmatpush1.xpose.msra.mxu0 0.0
        %3138 = vmatprep.subr.mxu0 0.0
        %3139 = vmatpush1.xpose.msra.mxu0 0.0
        %3140 = vmatprep.subr.mxu0 0.0
        %3141 = vmatpush1.xpose.msra.mxu0 0.0
        %3142 = vmatprep.subr.mxu0 0.0
        %3143 = vmatpush1.xpose.msra.mxu0 0.0
        %3144 = vmatprep.subr.mxu0 0.0
        %3145 = vmatpush1.xpose.msra.mxu0 0.0
        %3146 = vmatprep.subr.mxu0 0.0
        %3147 = vmatpush1.xpose.msra.mxu0 0.0
        %3148 = vmatprep.subr.mxu0 0.0
        %3149 = vmatpush1.xpose.msra.mxu0 0.0
        %3150 = vmatprep.subr.mxu0 0.0
        %3151 = vmatpush1.xpose.msra.mxu0 0.0
        %3152 = vmatprep.subr.mxu0 0.0
        %3153 = vmatpush1.xpose.msra.mxu0 0.0
        %3154 = vmatprep.subr.mxu0 0.0
        %3155 = vmatpush1.xpose.msra.mxu0 0.0
        %3156 = vmatprep.subr.mxu0 0.0
        %3157 = vmatpush1.xpose.msra.mxu0 0.0
        %3158 = vmatprep.subr.mxu0 0.0
        %3159 = vmatpush1.xpose.msra.mxu0 0.0
        %3160 = vmatprep.mubr.f32.mxu0 0.0
        %3161 = vmatmul.mubr.f32.gmra.mrb[0].mxu0 %v3094
        %v3162 = vpop.f32.mrb[0].mxu0
        %v3163 = vadd.f32 0.0, %v3162
        %v3164 = vpop.f32.mrb[0].mxu0
        %3165 = vdwg.mxu0
        %v3167 = vsel %vm629, %v1270, 0
        %3169 = vmatprep.subr.mxu0 0.0
        %3170 = vmatpush1.xpose.msra.mxu0 %v3167
        %3171 = vmatprep.subr.mxu0 0.0
        %3172 = vmatpush1.xpose.msra.mxu0 0.0
        %3173 = vmatprep.subr.mxu0 0.0
        %3174 = vmatpush1.xpose.msra.mxu0 0.0
        %3175 = vmatprep.subr.mxu0 0.0
        %3176 = vmatpush1.xpose.msra.mxu0 0.0
        %3177 = vmatprep.subr.mxu0 0.0
        %3178 = vmatpush1.xpose.msra.mxu0 0.0
        %3179 = vmatprep.subr.mxu0 0.0
        %3180 = vmatpush1.xpose.msra.mxu0 0.0
        %3181 = vmatprep.subr.mxu0 0.0
        %3182 = vmatpush1.xpose.msra.mxu0 0.0
        %3183 = vmatprep.subr.mxu0 0.0
        %3184 = vmatpush1.xpose.msra.mxu0 0.0
        %3185 = vmatprep.subr.mxu0 0.0
        %3186 = vmatpush1.xpose.msra.mxu0 0.0
        %3187 = vmatprep.subr.mxu0 0.0
        %3188 = vmatpush1.xpose.msra.mxu0 0.0
        %3189 = vmatprep.subr.mxu0 0.0
        %3190 = vmatpush1.xpose.msra.mxu0 0.0
        %3191 = vmatprep.subr.mxu0 0.0
        %3192 = vmatpush1.xpose.msra.mxu0 0.0
        %3193 = vmatprep.subr.mxu0 0.0
        %3194 = vmatpush1.xpose.msra.mxu0 0.0
        %3195 = vmatprep.subr.mxu0 0.0
        %3196 = vmatpush1.xpose.msra.mxu0 0.0
        %3197 = vmatprep.subr.mxu0 0.0
        %3198 = vmatpush1.xpose.msra.mxu0 0.0
        %3199 = vmatprep.subr.mxu0 0.0
        %3200 = vmatpush1.xpose.msra.mxu0 0.0
        %3201 = vmatprep.subr.mxu0 0.0
        %3202 = vmatpush1.xpose.msra.mxu0 0.0
        %3203 = vmatprep.subr.mxu0 0.0
        %3204 = vmatpush1.xpose.msra.mxu0 0.0
        %3205 = vmatprep.subr.mxu0 0.0
        %3206 = vmatpush1.xpose.msra.mxu0 0.0
        %3207 = vmatprep.subr.mxu0 0.0
        %3208 = vmatpush1.xpose.msra.mxu0 0.0
        %3209 = vmatprep.subr.mxu0 0.0
        %3210 = vmatpush1.xpose.msra.mxu0 0.0
        %3211 = vmatprep.subr.mxu0 0.0
        %3212 = vmatpush1.xpose.msra.mxu0 0.0
        %3213 = vmatprep.subr.mxu0 0.0
        %3214 = vmatpush1.xpose.msra.mxu0 0.0
        %3215 = vmatprep.subr.mxu0 0.0
        %3216 = vmatpush1.xpose.msra.mxu0 0.0
        %3217 = vmatprep.subr.mxu0 0.0
        %3218 = vmatpush1.xpose.msra.mxu0 0.0
        %3219 = vmatprep.subr.mxu0 0.0
        %3220 = vmatpush1.xpose.msra.mxu0 0.0
        %3221 = vmatprep.subr.mxu0 0.0
        %3222 = vmatpush1.xpose.msra.mxu0 0.0
        %3223 = vmatprep.subr.mxu0 0.0
        %3224 = vmatpush1.xpose.msra.mxu0 0.0
        %3225 = vmatprep.subr.mxu0 0.0
        %3226 = vmatpush1.xpose.msra.mxu0 0.0
        %3227 = vmatprep.subr.mxu0 0.0
        %3228 = vmatpush1.xpose.msra.mxu0 0.0
        %3229 = vmatprep.subr.mxu0 0.0
        %3230 = vmatpush1.xpose.msra.mxu0 0.0
        %3231 = vmatprep.subr.mxu0 0.0
        %3232 = vmatpush1.xpose.msra.mxu0 0.0
        %3233 = vmatprep.mubr.f32.mxu0 0.0
        %3234 = vmatmul.mubr.f32.gmra.mrb[0].mxu0 %v3167
        %v3235 = vpop.f32.mrb[0].mxu0
        %v3236 = vadd.f32 0.0, %v3235
        %v3237 = vpop.f32.mrb[0].mxu0
        %3238 = vdwg.mxu0
        %v3240 = vsel %vm629, %v1271, 0
        %3242 = vmatprep.subr.mxu0 0.0
        %3243 = vmatpush1.xpose.msra.mxu0 %v3240
        %3244 = vmatprep.subr.mxu0 0.0
        %3245 = vmatpush1.xpose.msra.mxu0 0.0
        %3246 = vmatprep.subr.mxu0 0.0
        %3247 = vmatpush1.xpose.msra.mxu0 0.0
        %3248 = vmatprep.subr.mxu0 0.0
        %3249 = vmatpush1.xpose.msra.mxu0 0.0
        %3250 = vmatprep.subr.mxu0 0.0
        %3251 = vmatpush1.xpose.msra.mxu0 0.0
        %3252 = vmatprep.subr.mxu0 0.0
        %3253 = vmatpush1.xpose.msra.mxu0 0.0
        %3254 = vmatprep.subr.mxu0 0.0
        %3255 = vmatpush1.xpose.msra.mxu0 0.0
        %3256 = vmatprep.subr.mxu0 0.0
        %3257 = vmatpush1.xpose.msra.mxu0 0.0
        %3258 = vmatprep.subr.mxu0 0.0
        %3259 = vmatpush1.xpose.msra.mxu0 0.0
        %3260 = vmatprep.subr.mxu0 0.0
        %3261 = vmatpush1.xpose.msra.mxu0 0.0
        %3262 = vmatprep.subr.mxu0 0.0
        %3263 = vmatpush1.xpose.msra.mxu0 0.0
        %3264 = vmatprep.subr.mxu0 0.0
        %3265 = vmatpush1.xpose.msra.mxu0 0.0
        %3266 = vmatprep.subr.mxu0 0.0
        %3267 = vmatpush1.xpose.msra.mxu0 0.0
        %3268 = vmatprep.subr.mxu0 0.0
        %3269 = vmatpush1.xpose.msra.mxu0 0.0
        %3270 = vmatprep.subr.mxu0 0.0
        %3271 = vmatpush1.xpose.msra.mxu0 0.0
        %3272 = vmatprep.subr.mxu0 0.0
        %3273 = vmatpush1.xpose.msra.mxu0 0.0
        %3274 = vmatprep.subr.mxu0 0.0
        %3275 = vmatpush1.xpose.msra.mxu0 0.0
        %3276 = vmatprep.subr.mxu0 0.0
        %3277 = vmatpush1.xpose.msra.mxu0 0.0
        %3278 = vmatprep.subr.mxu0 0.0
        %3279 = vmatpush1.xpose.msra.mxu0 0.0
        %3280 = vmatprep.subr.mxu0 0.0
        %3281 = vmatpush1.xpose.msra.mxu0 0.0
        %3282 = vmatprep.subr.mxu0 0.0
        %3283 = vmatpush1.xpose.msra.mxu0 0.0
        %3284 = vmatprep.subr.mxu0 0.0
        %3285 = vmatpush1.xpose.msra.mxu0 0.0
        %3286 = vmatprep.subr.mxu0 0.0
        %3287 = vmatpush1.xpose.msra.mxu0 0.0
        %3288 = vmatprep.subr.mxu0 0.0
        %3289 = vmatpush1.xpose.msra.mxu0 0.0
        %3290 = vmatprep.subr.mxu0 0.0
        %3291 = vmatpush1.xpose.msra.mxu0 0.0
        %3292 = vmatprep.subr.mxu0 0.0
        %3293 = vmatpush1.xpose.msra.mxu0 0.0
        %3294 = vmatprep.subr.mxu0 0.0
        %3295 = vmatpush1.xpose.msra.mxu0 0.0
        %3296 = vmatprep.subr.mxu0 0.0
        %3297 = vmatpush1.xpose.msra.mxu0 0.0
        %3298 = vmatprep.subr.mxu0 0.0
        %3299 = vmatpush1.xpose.msra.mxu0 0.0
        %3300 = vmatprep.subr.mxu0 0.0
        %3301 = vmatpush1.xpose.msra.mxu0 0.0
        %3302 = vmatprep.subr.mxu0 0.0
        %3303 = vmatpush1.xpose.msra.mxu0 0.0
        %3304 = vmatprep.subr.mxu0 0.0
        %3305 = vmatpush1.xpose.msra.mxu0 0.0
        %3306 = vmatprep.mubr.f32.mxu0 0.0
        %3307 = vmatmul.mubr.f32.gmra.mrb[0].mxu0 %v3240
        %v3308 = vpop.f32.mrb[0].mxu0
        %v3309 = vadd.f32 0.0, %v3308
        %v3310 = vpop.f32.mrb[0].mxu0
        %3311 = vdwg.mxu0
        %v3313 = vsel %vm629, %v1272, 0
        %3315 = vmatprep.subr.mxu0 0.0
        %3316 = vmatpush1.xpose.msra.mxu0 %v3313
        %3317 = vmatprep.subr.mxu0 0.0
        %3318 = vmatpush1.xpose.msra.mxu0 0.0
        %3319 = vmatprep.subr.mxu0 0.0
        %3320 = vmatpush1.xpose.msra.mxu0 0.0
        %3321 = vmatprep.subr.mxu0 0.0
        %3322 = vmatpush1.xpose.msra.mxu0 0.0
        %3323 = vmatprep.subr.mxu0 0.0
        %3324 = vmatpush1.xpose.msra.mxu0 0.0
        %3325 = vmatprep.subr.mxu0 0.0
        %3326 = vmatpush1.xpose.msra.mxu0 0.0
        %3327 = vmatprep.subr.mxu0 0.0
        %3328 = vmatpush1.xpose.msra.mxu0 0.0
        %3329 = vmatprep.subr.mxu0 0.0
        %3330 = vmatpush1.xpose.msra.mxu0 0.0
        %3331 = vmatprep.subr.mxu0 0.0
        %3332 = vmatpush1.xpose.msra.mxu0 0.0
        %3333 = vmatprep.subr.mxu0 0.0
        %3334 = vmatpush1.xpose.msra.mxu0 0.0
        %3335 = vmatprep.subr.mxu0 0.0
        %3336 = vmatpush1.xpose.msra.mxu0 0.0
        %3337 = vmatprep.subr.mxu0 0.0
        %3338 = vmatpush1.xpose.msra.mxu0 0.0
        %3339 = vmatprep.subr.mxu0 0.0
        %3340 = vmatpush1.xpose.msra.mxu0 0.0
        %3341 = vmatprep.subr.mxu0 0.0
        %3342 = vmatpush1.xpose.msra.mxu0 0.0
        %3343 = vmatprep.subr.mxu0 0.0
        %3344 = vmatpush1.xpose.msra.mxu0 0.0
        %3345 = vmatprep.subr.mxu0 0.0
        %3346 = vmatpush1.xpose.msra.mxu0 0.0
        %3347 = vmatprep.subr.mxu0 0.0
        %3348 = vmatpush1.xpose.msra.mxu0 0.0
        %3349 = vmatprep.subr.mxu0 0.0
        %3350 = vmatpush1.xpose.msra.mxu0 0.0
        %3351 = vmatprep.subr.mxu0 0.0
        %3352 = vmatpush1.xpose.msra.mxu0 0.0
        %3353 = vmatprep.subr.mxu0 0.0
        %3354 = vmatpush1.xpose.msra.mxu0 0.0
        %3355 = vmatprep.subr.mxu0 0.0
        %3356 = vmatpush1.xpose.msra.mxu0 0.0
        %3357 = vmatprep.subr.mxu0 0.0
        %3358 = vmatpush1.xpose.msra.mxu0 0.0
        %3359 = vmatprep.subr.mxu0 0.0
        %3360 = vmatpush1.xpose.msra.mxu0 0.0
        %3361 = vmatprep.subr.mxu0 0.0
        %3362 = vmatpush1.xpose.msra.mxu0 0.0
        %3363 = vmatprep.subr.mxu0 0.0
        %3364 = vmatpush1.xpose.msra.mxu0 0.0
        %3365 = vmatprep.subr.mxu0 0.0
        %3366 = vmatpush1.xpose.msra.mxu0 0.0
        %3367 = vmatprep.subr.mxu0 0.0
        %3368 = vmatpush1.xpose.msra.mxu0 0.0
        %3369 = vmatprep.subr.mxu0 0.0
        %3370 = vmatpush1.xpose.msra.mxu0 0.0
        %3371 = vmatprep.subr.mxu0 0.0
        %3372 = vmatpush1.xpose.msra.mxu0 0.0
        %3373 = vmatprep.subr.mxu0 0.0
        %3374 = vmatpush1.xpose.msra.mxu0 0.0
        %3375 = vmatprep.subr.mxu0 0.0
        %3376 = vmatpush1.xpose.msra.mxu0 0.0
        %3377 = vmatprep.subr.mxu0 0.0
        %3378 = vmatpush1.xpose.msra.mxu0 0.0
        %3379 = vmatprep.mubr.f32.mxu0 0.0
        %3380 = vmatmul.mubr.f32.gmra.mrb[0].mxu0 %v3313
        %v3381 = vpop.f32.mrb[0].mxu0
        %v3382 = vadd.f32 0.0, %v3381
        %v3383 = vpop.f32.mrb[0].mxu0
        %3384 = vdwg.mxu0
        %v3386 = vsel %vm629, %v1273, 0
        %3388 = vmatprep.subr.mxu0 0.0
        %3389 = vmatpush1.xpose.msra.mxu0 %v3386
        %3390 = vmatprep.subr.mxu0 0.0
        %3391 = vmatpush1.xpose.msra.mxu0 0.0
        %3392 = vmatprep.subr.mxu0 0.0
        %3393 = vmatpush1.xpose.msra.mxu0 0.0
        %3394 = vmatprep.subr.mxu0 0.0
        %3395 = vmatpush1.xpose.msra.mxu0 0.0
        %3396 = vmatprep.subr.mxu0 0.0
        %3397 = vmatpush1.xpose.msra.mxu0 0.0
        %3398 = vmatprep.subr.mxu0 0.0
        %3399 = vmatpush1.xpose.msra.mxu0 0.0
        %3400 = vmatprep.subr.mxu0 0.0
        %3401 = vmatpush1.xpose.msra.mxu0 0.0
        %3402 = vmatprep.subr.mxu0 0.0
        %3403 = vmatpush1.xpose.msra.mxu0 0.0
        %3404 = vmatprep.subr.mxu0 0.0
        %3405 = vmatpush1.xpose.msra.mxu0 0.0
        %3406 = vmatprep.subr.mxu0 0.0
        %3407 = vmatpush1.xpose.msra.mxu0 0.0
        %3408 = vmatprep.subr.mxu0 0.0
        %3409 = vmatpush1.xpose.msra.mxu0 0.0
        %3410 = vmatprep.subr.mxu0 0.0
        %3411 = vmatpush1.xpose.msra.mxu0 0.0
        %3412 = vmatprep.subr.mxu0 0.0
        %3413 = vmatpush1.xpose.msra.mxu0 0.0
        %3414 = vmatprep.subr.mxu0 0.0
        %3415 = vmatpush1.xpose.msra.mxu0 0.0
        %3416 = vmatprep.subr.mxu0 0.0
        %3417 = vmatpush1.xpose.msra.mxu0 0.0
        %3418 = vmatprep.subr.mxu0 0.0
        %3419 = vmatpush1.xpose.msra.mxu0 0.0
        %3420 = vmatprep.subr.mxu0 0.0
        %3421 = vmatpush1.xpose.msra.mxu0 0.0
        %3422 = vmatprep.subr.mxu0 0.0
        %3423 = vmatpush1.xpose.msra.mxu0 0.0
        %3424 = vmatprep.subr.mxu0 0.0
        %3425 = vmatpush1.xpose.msra.mxu0 0.0
        %3426 = vmatprep.subr.mxu0 0.0
        %3427 = vmatpush1.xpose.msra.mxu0 0.0
        %3428 = vmatprep.subr.mxu0 0.0
        %3429 = vmatpush1.xpose.msra.mxu0 0.0
        %3430 = vmatprep.subr.mxu0 0.0
        %3431 = vmatpush1.xpose.msra.mxu0 0.0
        %3432 = vmatprep.subr.mxu0 0.0
        %3433 = vmatpush1.xpose.msra.mxu0 0.0
        %3434 = vmatprep.subr.mxu0 0.0
        %3435 = vmatpush1.xpose.msra.mxu0 0.0
        %3436 = vmatprep.subr.mxu0 0.0
        %3437 = vmatpush1.xpose.msra.mxu0 0.0
        %3438 = vmatprep.subr.mxu0 0.0
        %3439 = vmatpush1.xpose.msra.mxu0 0.0
        %3440 = vmatprep.subr.mxu0 0.0
        %3441 = vmatpush1.xpose.msra.mxu0 0.0
        %3442 = vmatprep.subr.mxu0 0.0
        %3443 = vmatpush1.xpose.msra.mxu0 0.0
        %3444 = vmatprep.subr.mxu0 0.0
        %3445 = vmatpush1.xpose.msra.mxu0 0.0
        %3446 = vmatprep.subr.mxu0 0.0
        %3447 = vmatpush1.xpose.msra.mxu0 0.0
        %3448 = vmatprep.subr.mxu0 0.0
        %3449 = vmatpush1.xpose.msra.mxu0 0.0
        %3450 = vmatprep.subr.mxu0 0.0
        %3451 = vmatpush1.xpose.msra.mxu0 0.0
        %3452 = vmatprep.mubr.f32.mxu0 0.0
        %3453 = vmatmul.mubr.f32.gmra.mrb[0].mxu0 %v3386
        %v3454 = vpop.f32.mrb[0].mxu0
        %v3455 = vadd.f32 0.0, %v3454
        %v3456 = vpop.f32.mrb[0].mxu0
        %3457 = vdwg.mxu0
        %v3459 = vsel %vm629, %v1274, 0
        %3461 = vmatprep.subr.mxu0 0.0
        %3462 = vmatpush1.xpose.msra.mxu0 %v3459
        %3463 = vmatprep.subr.mxu0 0.0
        %3464 = vmatpush1.xpose.msra.mxu0 0.0
        %3465 = vmatprep.subr.mxu0 0.0
        %3466 = vmatpush1.xpose.msra.mxu0 0.0
        %3467 = vmatprep.subr.mxu0 0.0
        %3468 = vmatpush1.xpose.msra.mxu0 0.0
        %3469 = vmatprep.subr.mxu0 0.0
        %3470 = vmatpush1.xpose.msra.mxu0 0.0
        %3471 = vmatprep.subr.mxu0 0.0
        %3472 = vmatpush1.xpose.msra.mxu0 0.0
        %3473 = vmatprep.subr.mxu0 0.0
        %3474 = vmatpush1.xpose.msra.mxu0 0.0
        %3475 = vmatprep.subr.mxu0 0.0
        %3476 = vmatpush1.xpose.msra.mxu0 0.0
        %3477 = vmatprep.subr.mxu0 0.0
        %3478 = vmatpush1.xpose.msra.mxu0 0.0
        %3479 = vmatprep.subr.mxu0 0.0
        %3480 = vmatpush1.xpose.msra.mxu0 0.0
        %3481 = vmatprep.subr.mxu0 0.0
        %3482 = vmatpush1.xpose.msra.mxu0 0.0
        %3483 = vmatprep.subr.mxu0 0.0
        %3484 = vmatpush1.xpose.msra.mxu0 0.0
        %3485 = vmatprep.subr.mxu0 0.0
        %3486 = vmatpush1.xpose.msra.mxu0 0.0
        %3487 = vmatprep.subr.mxu0 0.0
        %3488 = vmatpush1.xpose.msra.mxu0 0.0
        %3489 = vmatprep.subr.mxu0 0.0
        %3490 = vmatpush1.xpose.msra.mxu0 0.0
        %3491 = vmatprep.subr.mxu0 0.0
        %3492 = vmatpush1.xpose.msra.mxu0 0.0
        %3493 = vmatprep.subr.mxu0 0.0
        %3494 = vmatpush1.xpose.msra.mxu0 0.0
        %3495 = vmatprep.subr.mxu0 0.0
        %3496 = vmatpush1.xpose.msra.mxu0 0.0
        %3497 = vmatprep.subr.mxu0 0.0
        %3498 = vmatpush1.xpose.msra.mxu0 0.0
        %3499 = vmatprep.subr.mxu0 0.0
        %3500 = vmatpush1.xpose.msra.mxu0 0.0
        %3501 = vmatprep.subr.mxu0 0.0
        %3502 = vmatpush1.xpose.msra.mxu0 0.0
        %3503 = vmatprep.subr.mxu0 0.0
        %3504 = vmatpush1.xpose.msra.mxu0 0.0
        %3505 = vmatprep.subr.mxu0 0.0
        %3506 = vmatpush1.xpose.msra.mxu0 0.0
        %3507 = vmatprep.subr.mxu0 0.0
        %3508 = vmatpush1.xpose.msra.mxu0 0.0
        %3509 = vmatprep.subr.mxu0 0.0
        %3510 = vmatpush1.xpose.msra.mxu0 0.0
        %3511 = vmatprep.subr.mxu0 0.0
        %3512 = vmatpush1.xpose.msra.mxu0 0.0
        %3513 = vmatprep.subr.mxu0 0.0
        %3514 = vmatpush1.xpose.msra.mxu0 0.0
        %3515 = vmatprep.subr.mxu0 0.0
        %3516 = vmatpush1.xpose.msra.mxu0 0.0
        %3517 = vmatprep.subr.mxu0 0.0
        %3518 = vmatpush1.xpose.msra.mxu0 0.0
        %3519 = vmatprep.subr.mxu0 0.0
        %3520 = vmatpush1.xpose.msra.mxu0 0.0
        %3521 = vmatprep.subr.mxu0 0.0
        %3522 = vmatpush1.xpose.msra.mxu0 0.0
        %3523 = vmatprep.subr.mxu0 0.0
        %3524 = vmatpush1.xpose.msra.mxu0 0.0
        %3525 = vmatprep.mubr.f32.mxu0 0.0
        %3526 = vmatmul.mubr.f32.gmra.mrb[0].mxu0 %v3459
        %v3527 = vpop.f32.mrb[0].mxu0
        %v3528 = vadd.f32 0.0, %v3527
        %v3529 = vpop.f32.mrb[0].mxu0
        %3530 = vdwg.mxu0
        %v3532 = vsel %vm629, %v1275, 0
        %3534 = vmatprep.subr.mxu0 0.0
        %3535 = vmatpush1.xpose.msra.mxu0 %v3532
        %3536 = vmatprep.subr.mxu0 0.0
        %3537 = vmatpush1.xpose.msra.mxu0 0.0
        %3538 = vmatprep.subr.mxu0 0.0
        %3539 = vmatpush1.xpose.msra.mxu0 0.0
        %3540 = vmatprep.subr.mxu0 0.0
        %3541 = vmatpush1.xpose.msra.mxu0 0.0
        %3542 = vmatprep.subr.mxu0 0.0
        %3543 = vmatpush1.xpose.msra.mxu0 0.0
        %3544 = vmatprep.subr.mxu0 0.0
        %3545 = vmatpush1.xpose.msra.mxu0 0.0
        %3546 = vmatprep.subr.mxu0 0.0
        %3547 = vmatpush1.xpose.msra.mxu0 0.0
        %3548 = vmatprep.subr.mxu0 0.0
        %3549 = vmatpush1.xpose.msra.mxu0 0.0
        %3550 = vmatprep.subr.mxu0 0.0
        %3551 = vmatpush1.xpose.msra.mxu0 0.0
        %3552 = vmatprep.subr.mxu0 0.0
        %3553 = vmatpush1.xpose.msra.mxu0 0.0
        %3554 = vmatprep.subr.mxu0 0.0
        %3555 = vmatpush1.xpose.msra.mxu0 0.0
        %3556 = vmatprep.subr.mxu0 0.0
        %3557 = vmatpush1.xpose.msra.mxu0 0.0
        %3558 = vmatprep.subr.mxu0 0.0
        %3559 = vmatpush1.xpose.msra.mxu0 0.0
        %3560 = vmatprep.subr.mxu0 0.0
        %3561 = vmatpush1.xpose.msra.mxu0 0.0
        %3562 = vmatprep.subr.mxu0 0.0
        %3563 = vmatpush1.xpose.msra.mxu0 0.0
        %3564 = vmatprep.subr.mxu0 0.0
        %3565 = vmatpush1.xpose.msra.mxu0 0.0
        %3566 = vmatprep.subr.mxu0 0.0
        %3567 = vmatpush1.xpose.msra.mxu0 0.0
        %3568 = vmatprep.subr.mxu0 0.0
        %3569 = vmatpush1.xpose.msra.mxu0 0.0
        %3570 = vmatprep.subr.mxu0 0.0
        %3571 = vmatpush1.xpose.msra.mxu0 0.0
        %3572 = vmatprep.subr.mxu0 0.0
        %3573 = vmatpush1.xpose.msra.mxu0 0.0
        %3574 = vmatprep.subr.mxu0 0.0
        %3575 = vmatpush1.xpose.msra.mxu0 0.0
        %3576 = vmatprep.subr.mxu0 0.0
        %3577 = vmatpush1.xpose.msra.mxu0 0.0
        %3578 = vmatprep.subr.mxu0 0.0
        %3579 = vmatpush1.xpose.msra.mxu0 0.0
        %3580 = vmatprep.subr.mxu0 0.0
        %3581 = vmatpush1.xpose.msra.mxu0 0.0
        %3582 = vmatprep.subr.mxu0 0.0
        %3583 = vmatpush1.xpose.msra.mxu0 0.0
        %3584 = vmatprep.subr.mxu0 0.0
        %3585 = vmatpush1.xpose.msra.mxu0 0.0
        %3586 = vmatprep.subr.mxu0 0.0
        %3587 = vmatpush1.xpose.msra.mxu0 0.0
        %3588 = vmatprep.subr.mxu0 0.0
        %3589 = vmatpush1.xpose.msra.mxu0 0.0
        %3590 = vmatprep.subr.mxu0 0.0
        %3591 = vmatpush1.xpose.msra.mxu0 0.0
        %3592 = vmatprep.subr.mxu0 0.0
        %3593 = vmatpush1.xpose.msra.mxu0 0.0
        %3594 = vmatprep.subr.mxu0 0.0
        %3595 = vmatpush1.xpose.msra.mxu0 0.0
        %3596 = vmatprep.subr.mxu0 0.0
        %3597 = vmatpush1.xpose.msra.mxu0 0.0
        %3598 = vmatprep.mubr.f32.mxu0 0.0
        %3599 = vmatmul.mubr.f32.gmra.mrb[0].mxu0 %v3532
        %v3600 = vpop.f32.mrb[0].mxu0
        %v3601 = vadd.f32 0.0, %v3600
        %v3602 = vpop.f32.mrb[0].mxu0
        %3603 = vdwg.mxu0
        %v3605 = vsel %vm629, %v1276, 0
        %3607 = vmatprep.subr.mxu0 0.0
        %3608 = vmatpush1.xpose.msra.mxu0 %v3605
        %3609 = vmatprep.subr.mxu0 0.0
        %3610 = vmatpush1.xpose.msra.mxu0 0.0
        %3611 = vmatprep.subr.mxu0 0.0
        %3612 = vmatpush1.xpose.msra.mxu0 0.0
        %3613 = vmatprep.subr.mxu0 0.0
        %3614 = vmatpush1.xpose.msra.mxu0 0.0
        %3615 = vmatprep.subr.mxu0 0.0
        %3616 = vmatpush1.xpose.msra.mxu0 0.0
        %3617 = vmatprep.subr.mxu0 0.0
        %3618 = vmatpush1.xpose.msra.mxu0 0.0
        %3619 = vmatprep.subr.mxu0 0.0
        %3620 = vmatpush1.xpose.msra.mxu0 0.0
        %3621 = vmatprep.subr.mxu0 0.0
        %3622 = vmatpush1.xpose.msra.mxu0 0.0
        %3623 = vmatprep.subr.mxu0 0.0
        %3624 = vmatpush1.xpose.msra.mxu0 0.0
        %3625 = vmatprep.subr.mxu0 0.0
        %3626 = vmatpush1.xpose.msra.mxu0 0.0
        %3627 = vmatprep.subr.mxu0 0.0
        %3628 = vmatpush1.xpose.msra.mxu0 0.0
        %3629 = vmatprep.subr.mxu0 0.0
        %3630 = vmatpush1.xpose.msra.mxu0 0.0
        %3631 = vmatprep.subr.mxu0 0.0
        %3632 = vmatpush1.xpose.msra.mxu0 0.0
        %3633 = vmatprep.subr.mxu0 0.0
        %3634 = vmatpush1.xpose.msra.mxu0 0.0
        %3635 = vmatprep.subr.mxu0 0.0
        %3636 = vmatpush1.xpose.msra.mxu0 0.0
        %3637 = vmatprep.subr.mxu0 0.0
        %3638 = vmatpush1.xpose.msra.mxu0 0.0
        %3639 = vmatprep.subr.mxu0 0.0
        %3640 = vmatpush1.xpose.msra.mxu0 0.0
        %3641 = vmatprep.subr.mxu0 0.0
        %3642 = vmatpush1.xpose.msra.mxu0 0.0
        %3643 = vmatprep.subr.mxu0 0.0
        %3644 = vmatpush1.xpose.msra.mxu0 0.0
        %3645 = vmatprep.subr.mxu0 0.0
        %3646 = vmatpush1.xpose.msra.mxu0 0.0
        %3647 = vmatprep.subr.mxu0 0.0
        %3648 = vmatpush1.xpose.msra.mxu0 0.0
        %3649 = vmatprep.subr.mxu0 0.0
        %3650 = vmatpush1.xpose.msra.mxu0 0.0
        %3651 = vmatprep.subr.mxu0 0.0
        %3652 = vmatpush1.xpose.msra.mxu0 0.0
        %3653 = vmatprep.subr.mxu0 0.0
        %3654 = vmatpush1.xpose.msra.mxu0 0.0
        %3655 = vmatprep.subr.mxu0 0.0
        %3656 = vmatpush1.xpose.msra.mxu0 0.0
        %3657 = vmatprep.subr.mxu0 0.0
        %3658 = vmatpush1.xpose.msra.mxu0 0.0
        %3659 = vmatprep.subr.mxu0 0.0
        %3660 = vmatpush1.xpose.msra.mxu0 0.0
        %3661 = vmatprep.subr.mxu0 0.0
        %3662 = vmatpush1.xpose.msra.mxu0 0.0
        %3663 = vmatprep.subr.mxu0 0.0
        %3664 = vmatpush1.xpose.msra.mxu0 0.0
        %3665 = vmatprep.subr.mxu0 0.0
        %3666 = vmatpush1.xpose.msra.mxu0 0.0
        %3667 = vmatprep.subr.mxu0 0.0
        %3668 = vmatpush1.xpose.msra.mxu0 0.0
        %3669 = vmatprep.subr.mxu0 0.0
        %3670 = vmatpush1.xpose.msra.mxu0 0.0
        %3671 = vmatprep.mubr.f32.mxu0 0.0
        %3672 = vmatmul.mubr.f32.gmra.mrb[0].mxu0 %v3605
        %v3673 = vpop.f32.mrb[0].mxu0
        %v3674 = vadd.f32 0.0, %v3673
        %v3675 = vpop.f32.mrb[0].mxu0
        %3676 = vdwg.mxu0
        %v3678 = vsel %vm629, %v1277, 0
        %3680 = vmatprep.subr.mxu0 0.0
        %3681 = vmatpush1.xpose.msra.mxu0 %v3678
        %3682 = vmatprep.subr.mxu0 0.0
        %3683 = vmatpush1.xpose.msra.mxu0 0.0
        %3684 = vmatprep.subr.mxu0 0.0
        %3685 = vmatpush1.xpose.msra.mxu0 0.0
        %3686 = vmatprep.subr.mxu0 0.0
        %3687 = vmatpush1.xpose.msra.mxu0 0.0
        %3688 = vmatprep.subr.mxu0 0.0
        %3689 = vmatpush1.xpose.msra.mxu0 0.0
        %3690 = vmatprep.subr.mxu0 0.0
        %3691 = vmatpush1.xpose.msra.mxu0 0.0
        %3692 = vmatprep.subr.mxu0 0.0
        %3693 = vmatpush1.xpose.msra.mxu0 0.0
        %3694 = vmatprep.subr.mxu0 0.0
        %3695 = vmatpush1.xpose.msra.mxu0 0.0
        %3696 = vmatprep.subr.mxu0 0.0
        %3697 = vmatpush1.xpose.msra.mxu0 0.0
        %3698 = vmatprep.subr.mxu0 0.0
        %3699 = vmatpush1.xpose.msra.mxu0 0.0
        %3700 = vmatprep.subr.mxu0 0.0
        %3701 = vmatpush1.xpose.msra.mxu0 0.0
        %3702 = vmatprep.subr.mxu0 0.0
        %3703 = vmatpush1.xpose.msra.mxu0 0.0
        %3704 = vmatprep.subr.mxu0 0.0
        %3705 = vmatpush1.xpose.msra.mxu0 0.0
        %3706 = vmatprep.subr.mxu0 0.0
        %3707 = vmatpush1.xpose.msra.mxu0 0.0
        %3708 = vmatprep.subr.mxu0 0.0
        %3709 = vmatpush1.xpose.msra.mxu0 0.0
        %3710 = vmatprep.subr.mxu0 0.0
        %3711 = vmatpush1.xpose.msra.mxu0 0.0
        %3712 = vmatprep.subr.mxu0 0.0
        %3713 = vmatpush1.xpose.msra.mxu0 0.0
        %3714 = vmatprep.subr.mxu0 0.0
        %3715 = vmatpush1.xpose.msra.mxu0 0.0
        %3716 = vmatprep.subr.mxu0 0.0
        %3717 = vmatpush1.xpose.msra.mxu0 0.0
        %3718 = vmatprep.subr.mxu0 0.0
        %3719 = vmatpush1.xpose.msra.mxu0 0.0
        %3720 = vmatprep.subr.mxu0 0.0
        %3721 = vmatpush1.xpose.msra.mxu0 0.0
        %3722 = vmatprep.subr.mxu0 0.0
        %3723 = vmatpush1.xpose.msra.mxu0 0.0
        %3724 = vmatprep.subr.mxu0 0.0
        %3725 = vmatpush1.xpose.msra.mxu0 0.0
        %3726 = vmatprep.subr.mxu0 0.0
        %3727 = vmatpush1.xpose.msra.mxu0 0.0
        %3728 = vmatprep.subr.mxu0 0.0
        %3729 = vmatpush1.xpose.msra.mxu0 0.0
        %3730 = vmatprep.subr.mxu0 0.0
        %3731 = vmatpush1.xpose.msra.mxu0 0.0
        %3732 = vmatprep.subr.mxu0 0.0
        %3733 = vmatpush1.xpose.msra.mxu0 0.0
        %3734 = vmatprep.subr.mxu0 0.0
        %3735 = vmatpush1.xpose.msra.mxu0 0.0
        %3736 = vmatprep.subr.mxu0 0.0
        %3737 = vmatpush1.xpose.msra.mxu0 0.0
        %3738 = vmatprep.subr.mxu0 0.0
        %3739 = vmatpush1.xpose.msra.mxu0 0.0
        %3740 = vmatprep.subr.mxu0 0.0
        %3741 = vmatpush1.xpose.msra.mxu0 0.0
        %3742 = vmatprep.subr.mxu0 0.0
        %3743 = vmatpush1.xpose.msra.mxu0 0.0
        %3744 = vmatprep.mubr.f32.mxu0 0.0
        %3745 = vmatmul.mubr.f32.gmra.mrb[0].mxu0 %v3678
        %v3746 = vpop.f32.mrb[0].mxu0
        %v3747 = vadd.f32 0.0, %v3746
        %v3748 = vpop.f32.mrb[0].mxu0
        %3749 = vdwg.mxu0
        %v3751 = vsel %vm629, %v1278, 0
        %3753 = vmatprep.subr.mxu0 0.0
        %3754 = vmatpush1.xpose.msra.mxu0 %v3751
        %3755 = vmatprep.subr.mxu0 0.0
        %3756 = vmatpush1.xpose.msra.mxu0 0.0
        %3757 = vmatprep.subr.mxu0 0.0
        %3758 = vmatpush1.xpose.msra.mxu0 0.0
        %3759 = vmatprep.subr.mxu0 0.0
        %3760 = vmatpush1.xpose.msra.mxu0 0.0
        %3761 = vmatprep.subr.mxu0 0.0
        %3762 = vmatpush1.xpose.msra.mxu0 0.0
        %3763 = vmatprep.subr.mxu0 0.0
        %3764 = vmatpush1.xpose.msra.mxu0 0.0
        %3765 = vmatprep.subr.mxu0 0.0
        %3766 = vmatpush1.xpose.msra.mxu0 0.0
        %3767 = vmatprep.subr.mxu0 0.0
        %3768 = vmatpush1.xpose.msra.mxu0 0.0
        %3769 = vmatprep.subr.mxu0 0.0
        %3770 = vmatpush1.xpose.msra.mxu0 0.0
        %3771 = vmatprep.subr.mxu0 0.0
        %3772 = vmatpush1.xpose.msra.mxu0 0.0
        %3773 = vmatprep.subr.mxu0 0.0
        %3774 = vmatpush1.xpose.msra.mxu0 0.0
        %3775 = vmatprep.subr.mxu0 0.0
        %3776 = vmatpush1.xpose.msra.mxu0 0.0
        %3777 = vmatprep.subr.mxu0 0.0
        %3778 = vmatpush1.xpose.msra.mxu0 0.0
        %3779 = vmatprep.subr.mxu0 0.0
        %3780 = vmatpush1.xpose.msra.mxu0 0.0
        %3781 = vmatprep.subr.mxu0 0.0
        %3782 = vmatpush1.xpose.msra.mxu0 0.0
        %3783 = vmatprep.subr.mxu0 0.0
        %3784 = vmatpush1.xpose.msra.mxu0 0.0
        %3785 = vmatprep.subr.mxu0 0.0
        %3786 = vmatpush1.xpose.msra.mxu0 0.0
        %3787 = vmatprep.subr.mxu0 0.0
        %3788 = vmatpush1.xpose.msra.mxu0 0.0
        %3789 = vmatprep.subr.mxu0 0.0
        %3790 = vmatpush1.xpose.msra.mxu0 0.0
        %3791 = vmatprep.subr.mxu0 0.0
        %3792 = vmatpush1.xpose.msra.mxu0 0.0
        %3793 = vmatprep.subr.mxu0 0.0
        %3794 = vmatpush1.xpose.msra.mxu0 0.0
        %3795 = vmatprep.subr.mxu0 0.0
        %3796 = vmatpush1.xpose.msra.mxu0 0.0
        %3797 = vmatprep.subr.mxu0 0.0
        %3798 = vmatpush1.xpose.msra.mxu0 0.0
        %3799 = vmatprep.subr.mxu0 0.0
        %3800 = vmatpush1.xpose.msra.mxu0 0.0
        %3801 = vmatprep.subr.mxu0 0.0
        %3802 = vmatpush1.xpose.msra.mxu0 0.0
        %3803 = vmatprep.subr.mxu0 0.0
        %3804 = vmatpush1.xpose.msra.mxu0 0.0
        %3805 = vmatprep.subr.mxu0 0.0
        %3806 = vmatpush1.xpose.msra.mxu0 0.0
        %3807 = vmatprep.subr.mxu0 0.0
        %3808 = vmatpush1.xpose.msra.mxu0 0.0
        %3809 = vmatprep.subr.mxu0 0.0
        %3810 = vmatpush1.xpose.msra.mxu0 0.0
        %3811 = vmatprep.subr.mxu0 0.0
        %3812 = vmatpush1.xpose.msra.mxu0 0.0
        %3813 = vmatprep.subr.mxu0 0.0
        %3814 = vmatpush1.xpose.msra.mxu0 0.0
        %3815 = vmatprep.subr.mxu0 0.0
        %3816 = vmatpush1.xpose.msra.mxu0 0.0
        %3817 = vmatprep.mubr.f32.mxu0 0.0
        %3818 = vmatmul.mubr.f32.gmra.mrb[0].mxu0 %v3751
        %v3819 = vpop.f32.mrb[0].mxu0
        %v3820 = vadd.f32 0.0, %v3819
        %v3821 = vpop.f32.mrb[0].mxu0
        %3822 = vdwg.mxu0
        %v3824 = vsel %vm629, %v1279, 0
        %3826 = vmatprep.subr.mxu0 0.0
        %3827 = vmatpush1.xpose.msra.mxu0 %v3824
        %3828 = vmatprep.subr.mxu0 0.0
        %3829 = vmatpush1.xpose.msra.mxu0 0.0
        %3830 = vmatprep.subr.mxu0 0.0
        %3831 = vmatpush1.xpose.msra.mxu0 0.0
        %3832 = vmatprep.subr.mxu0 0.0
        %3833 = vmatpush1.xpose.msra.mxu0 0.0
        %3834 = vmatprep.subr.mxu0 0.0
        %3835 = vmatpush1.xpose.msra.mxu0 0.0
        %3836 = vmatprep.subr.mxu0 0.0
        %3837 = vmatpush1.xpose.msra.mxu0 0.0
        %3838 = vmatprep.subr.mxu0 0.0
        %3839 = vmatpush1.xpose.msra.mxu0 0.0
        %3840 = vmatprep.subr.mxu0 0.0
        %3841 = vmatpush1.xpose.msra.mxu0 0.0
        %3842 = vmatprep.subr.mxu0 0.0
        %3843 = vmatpush1.xpose.msra.mxu0 0.0
        %3844 = vmatprep.subr.mxu0 0.0
        %3845 = vmatpush1.xpose.msra.mxu0 0.0
        %3846 = vmatprep.subr.mxu0 0.0
        %3847 = vmatpush1.xpose.msra.mxu0 0.0
        %3848 = vmatprep.subr.mxu0 0.0
        %3849 = vmatpush1.xpose.msra.mxu0 0.0
        %3850 = vmatprep.subr.mxu0 0.0
        %3851 = vmatpush1.xpose.msra.mxu0 0.0
        %3852 = vmatprep.subr.mxu0 0.0
        %3853 = vmatpush1.xpose.msra.mxu0 0.0
        %3854 = vmatprep.subr.mxu0 0.0
        %3855 = vmatpush1.xpose.msra.mxu0 0.0
        %3856 = vmatprep.subr.mxu0 0.0
        %3857 = vmatpush1.xpose.msra.mxu0 0.0
        %3858 = vmatprep.subr.mxu0 0.0
        %3859 = vmatpush1.xpose.msra.mxu0 0.0
        %3860 = vmatprep.subr.mxu0 0.0
        %3861 = vmatpush1.xpose.msra.mxu0 0.0
        %3862 = vmatprep.subr.mxu0 0.0
        %3863 = vmatpush1.xpose.msra.mxu0 0.0
        %3864 = vmatprep.subr.mxu0 0.0
        %3865 = vmatpush1.xpose.msra.mxu0 0.0
        %3866 = vmatprep.subr.mxu0 0.0
        %3867 = vmatpush1.xpose.msra.mxu0 0.0
        %3868 = vmatprep.subr.mxu0 0.0
        %3869 = vmatpush1.xpose.msra.mxu0 0.0
        %3870 = vmatprep.subr.mxu0 0.0
        %3871 = vmatpush1.xpose.msra.mxu0 0.0
        %3872 = vmatprep.subr.mxu0 0.0
        %3873 = vmatpush1.xpose.msra.mxu0 0.0
        %3874 = vmatprep.subr.mxu0 0.0
        %3875 = vmatpush1.xpose.msra.mxu0 0.0
        %3876 = vmatprep.subr.mxu0 0.0
        %3877 = vmatpush1.xpose.msra.mxu0 0.0
        %3878 = vmatprep.subr.mxu0 0.0
        %3879 = vmatpush1.xpose.msra.mxu0 0.0
        %3880 = vmatprep.subr.mxu0 0.0
        %3881 = vmatpush1.xpose.msra.mxu0 0.0
        %3882 = vmatprep.subr.mxu0 0.0
        %3883 = vmatpush1.xpose.msra.mxu0 0.0
        %3884 = vmatprep.subr.mxu0 0.0
        %3885 = vmatpush1.xpose.msra.mxu0 0.0
        %3886 = vmatprep.subr.mxu0 0.0
        %3887 = vmatpush1.xpose.msra.mxu0 0.0
        %3888 = vmatprep.subr.mxu0 0.0
        %3889 = vmatpush1.xpose.msra.mxu0 0.0
        %3890 = vmatprep.mubr.f32.mxu0 0.0
        %3891 = vmatmul.mubr.f32.gmra.mrb[0].mxu0 %v3824
        %v3892 = vpop.f32.mrb[0].mxu0
        %v3893 = vadd.f32 0.0, %v3892
        %v3894 = vpop.f32.mrb[0].mxu0
        %3895 = vdwg.mxu0
        %v3897 = vsel %vm629, %v1280, 0
        %3899 = vmatprep.subr.mxu0 0.0
        %3900 = vmatpush1.xpose.msra.mxu0 %v3897
        %3901 = vmatprep.subr.mxu0 0.0
        %3902 = vmatpush1.xpose.msra.mxu0 0.0
        %3903 = vmatprep.subr.mxu0 0.0
        %3904 = vmatpush1.xpose.msra.mxu0 0.0
        %3905 = vmatprep.subr.mxu0 0.0
        %3906 = vmatpush1.xpose.msra.mxu0 0.0
        %3907 = vmatprep.subr.mxu0 0.0
        %3908 = vmatpush1.xpose.msra.mxu0 0.0
        %3909 = vmatprep.subr.mxu0 0.0
        %3910 = vmatpush1.xpose.msra.mxu0 0.0
        %3911 = vmatprep.subr.mxu0 0.0
        %3912 = vmatpush1.xpose.msra.mxu0 0.0
        %3913 = vmatprep.subr.mxu0 0.0
        %3914 = vmatpush1.xpose.msra.mxu0 0.0
        %3915 = vmatprep.subr.mxu0 0.0
        %3916 = vmatpush1.xpose.msra.mxu0 0.0
        %3917 = vmatprep.subr.mxu0 0.0
        %3918 = vmatpush1.xpose.msra.mxu0 0.0
        %3919 = vmatprep.subr.mxu0 0.0
        %3920 = vmatpush1.xpose.msra.mxu0 0.0
        %3921 = vmatprep.subr.mxu0 0.0
        %3922 = vmatpush1.xpose.msra.mxu0 0.0
        %3923 = vmatprep.subr.mxu0 0.0
        %3924 = vmatpush1.xpose.msra.mxu0 0.0
        %3925 = vmatprep.subr.mxu0 0.0
        %3926 = vmatpush1.xpose.msra.mxu0 0.0
        %3927 = vmatprep.subr.mxu0 0.0
        %3928 = vmatpush1.xpose.msra.mxu0 0.0
        %3929 = vmatprep.subr.mxu0 0.0
        %3930 = vmatpush1.xpose.msra.mxu0 0.0
        %3931 = vmatprep.subr.mxu0 0.0
        %3932 = vmatpush1.xpose.msra.mxu0 0.0
        %3933 = vmatprep.subr.mxu0 0.0
        %3934 = vmatpush1.xpose.msra.mxu0 0.0
        %3935 = vmatprep.subr.mxu0 0.0
        %3936 = vmatpush1.xpose.msra.mxu0 0.0
        %3937 = vmatprep.subr.mxu0 0.0
        %3938 = vmatpush1.xpose.msra.mxu0 0.0
        %3939 = vmatprep.subr.mxu0 0.0
        %3940 = vmatpush1.xpose.msra.mxu0 0.0
        %3941 = vmatprep.subr.mxu0 0.0
        %3942 = vmatpush1.xpose.msra.mxu0 0.0
        %3943 = vmatprep.subr.mxu0 0.0
        %3944 = vmatpush1.xpose.msra.mxu0 0.0
        %3945 = vmatprep.subr.mxu0 0.0
        %3946 = vmatpush1.xpose.msra.mxu0 0.0
        %3947 = vmatprep.subr.mxu0 0.0
        %3948 = vmatpush1.xpose.msra.mxu0 0.0
        %3949 = vmatprep.subr.mxu0 0.0
        %3950 = vmatpush1.xpose.msra.mxu0 0.0
        %3951 = vmatprep.subr.mxu0 0.0
        %3952 = vmatpush1.xpose.msra.mxu0 0.0
        %3953 = vmatprep.subr.mxu0 0.0
        %3954 = vmatpush1.xpose.msra.mxu0 0.0
        %3955 = vmatprep.subr.mxu0 0.0
        %3956 = vmatpush1.xpose.msra.mxu0 0.0
        %3957 = vmatprep.subr.mxu0 0.0
        %3958 = vmatpush1.xpose.msra.mxu0 0.0
        %3959 = vmatprep.subr.mxu0 0.0
        %3960 = vmatpush1.xpose.msra.mxu0 0.0
        %3961 = vmatprep.subr.mxu0 0.0
        %3962 = vmatpush1.xpose.msra.mxu0 0.0
        %3963 = vmatprep.mubr.f32.mxu0 0.0
        %3964 = vmatmul.mubr.f32.gmra.mrb[0].mxu0 %v3897
        %v3965 = vpop.f32.mrb[0].mxu0
        %v3966 = vadd.f32 0.0, %v3965
        %v3967 = vpop.f32.mrb[0].mxu0
        %3968 = vdwg.mxu0
        %3969 = vxpose.xlu0.b32.start [1/16] %v1415, 128
        %3970 = vxpose.xlu0.b32.cont [2/16] 0.0, 128
        %3971 = vxpose.xlu0.b32.cont [3/16] 0.0, 128
        %3972 = vxpose.xlu0.b32.cont [4/16] 0.0, 128
        %3973 = vxpose.xlu0.b32.cont [5/16] 0.0, 128
        %3974 = vxpose.xlu0.b32.cont [6/16] 0.0, 128
        %3975 = vxpose.xlu0.b32.cont [7/16] 0.0, 128
        %3976 = vxpose.xlu0.b32.cont [8/16] 0.0, 128
        %3977 = vxpose.xlu0.b32.cont [9/16] 0.0, 128
        %3978 = vxpose.xlu0.b32.cont [10/16] 0.0, 128
        %3979 = vxpose.xlu0.b32.cont [11/16] 0.0, 128
        %3980 = vxpose.xlu0.b32.cont [12/16] 0.0, 128
        %3981 = vxpose.xlu0.b32.cont [13/16] 0.0, 128
        %3982 = vxpose.xlu0.b32.cont [14/16] 0.0, 128
        %3983 = vxpose.xlu0.b32.cont [15/16] 0.0, 128
        %3984 = vxpose.xlu0.b32.end [16/16] 0.0, 128
        %v3985 = vpop.trf.xlu0
        %v3986 = vpop.trf.xlu0
        %v3987 = vpop.trf.xlu0
        %v3988 = vpop.trf.xlu0
        %v3989 = vpop.trf.xlu0
        %v3990 = vpop.trf.xlu0
        %v3991 = vpop.trf.xlu0
        %v3992 = vpop.trf.xlu0
        %v3993 = vpop.trf.xlu0
        %v3994 = vpop.trf.xlu0
        %v3995 = vpop.trf.xlu0
        %v3996 = vpop.trf.xlu0
        %v3997 = vpop.trf.xlu0
        %v3998 = vpop.trf.xlu0
        %v3999 = vpop.trf.xlu0
        %v4000 = vpop.trf.xlu0
        %4001 = vxpose.xlu0.b32.start [1/16] %v1422, 128
        %4002 = vxpose.xlu0.b32.cont [2/16] 0.0, 128
        %4003 = vxpose.xlu0.b32.cont [3/16] 0.0, 128
        %4004 = vxpose.xlu0.b32.cont [4/16] 0.0, 128
        %4005 = vxpose.xlu0.b32.cont [5/16] 0.0, 128
        %4006 = vxpose.xlu0.b32.cont [6/16] 0.0, 128
        %4007 = vxpose.xlu0.b32.cont [7/16] 0.0, 128
        %4008 = vxpose.xlu0.b32.cont [8/16] 0.0, 128
        %4009 = vxpose.xlu0.b32.cont [9/16] 0.0, 128
        %4010 = vxpose.xlu0.b32.cont [10/16] 0.0, 128
        %4011 = vxpose.xlu0.b32.cont [11/16] 0.0, 128
        %4012 = vxpose.xlu0.b32.cont [12/16] 0.0, 128
        %4013 = vxpose.xlu0.b32.cont [13/16] 0.0, 128
        %4014 = vxpose.xlu0.b32.cont [14/16] 0.0, 128
        %4015 = vxpose.xlu0.b32.cont [15/16] 0.0, 128
        %4016 = vxpose.xlu0.b32.end [16/16] 0.0, 128
        %v4017 = vpop.trf.xlu0
        %v4018 = vpop.trf.xlu0
        %v4019 = vpop.trf.xlu0
        %v4020 = vpop.trf.xlu0
        %v4021 = vpop.trf.xlu0
        %v4022 = vpop.trf.xlu0
        %v4023 = vpop.trf.xlu0
        %v4024 = vpop.trf.xlu0
        %v4025 = vpop.trf.xlu0
        %v4026 = vpop.trf.xlu0
        %v4027 = vpop.trf.xlu0
        %v4028 = vpop.trf.xlu0
        %v4029 = vpop.trf.xlu0
        %v4030 = vpop.trf.xlu0
        %v4031 = vpop.trf.xlu0
        %v4032 = vpop.trf.xlu0
        %4033 = vxpose.xlu0.b32.start [1/16] %v1429, 128
        %4034 = vxpose.xlu0.b32.cont [2/16] 0.0, 128
        %4035 = vxpose.xlu0.b32.cont [3/16] 0.0, 128
        %4036 = vxpose.xlu0.b32.cont [4/16] 0.0, 128
        %4037 = vxpose.xlu0.b32.cont [5/16] 0.0, 128
        %4038 = vxpose.xlu0.b32.cont [6/16] 0.0, 128
        %4039 = vxpose.xlu0.b32.cont [7/16] 0.0, 128
        %4040 = vxpose.xlu0.b32.cont [8/16] 0.0, 128
        %4041 = vxpose.xlu0.b32.cont [9/16] 0.0, 128
        %4042 = vxpose.xlu0.b32.cont [10/16] 0.0, 128
        %4043 = vxpose.xlu0.b32.cont [11/16] 0.0, 128
        %4044 = vxpose.xlu0.b32.cont [12/16] 0.0, 128
        %4045 = vxpose.xlu0.b32.cont [13/16] 0.0, 128
        %4046 = vxpose.xlu0.b32.cont [14/16] 0.0, 128
        %4047 = vxpose.xlu0.b32.cont [15/16] 0.0, 128
        %4048 = vxpose.xlu0.b32.end [16/16] 0.0, 128
        %v4049 = vpop.trf.xlu0
        %v4050 = vpop.trf.xlu0
        %v4051 = vpop.trf.xlu0
        %v4052 = vpop.trf.xlu0
        %v4053 = vpop.trf.xlu0
        %v4054 = vpop.trf.xlu0
        %v4055 = vpop.trf.xlu0
        %v4056 = vpop.trf.xlu0
        %v4057 = vpop.trf.xlu0
        %v4058 = vpop.trf.xlu0
        %v4059 = vpop.trf.xlu0
        %v4060 = vpop.trf.xlu0
        %v4061 = vpop.trf.xlu0
        %v4062 = vpop.trf.xlu0
        %v4063 = vpop.trf.xlu0
        %v4064 = vpop.trf.xlu0
        %4065 = vxpose.xlu0.b32.start [1/16] %v1436, 128
        %4066 = vxpose.xlu0.b32.cont [2/16] 0.0, 128
        %4067 = vxpose.xlu0.b32.cont [3/16] 0.0, 128
        %4068 = vxpose.xlu0.b32.cont [4/16] 0.0, 128
        %4069 = vxpose.xlu0.b32.cont [5/16] 0.0, 128
        %4070 = vxpose.xlu0.b32.cont [6/16] 0.0, 128
        %4071 = vxpose.xlu0.b32.cont [7/16] 0.0, 128
        %4072 = vxpose.xlu0.b32.cont [8/16] 0.0, 128
        %4073 = vxpose.xlu0.b32.cont [9/16] 0.0, 128
        %4074 = vxpose.xlu0.b32.cont [10/16] 0.0, 128
        %4075 = vxpose.xlu0.b32.cont [11/16] 0.0, 128
        %4076 = vxpose.xlu0.b32.cont [12/16] 0.0, 128
        %4077 = vxpose.xlu0.b32.cont [13/16] 0.0, 128
        %4078 = vxpose.xlu0.b32.cont [14/16] 0.0, 128
        %4079 = vxpose.xlu0.b32.cont [15/16] 0.0, 128
        %4080 = vxpose.xlu0.b32.end [16/16] 0.0, 128
        %v4081 = vpop.trf.xlu0
        %v4082 = vpop.trf.xlu0
        %v4083 = vpop.trf.xlu0
        %v4084 = vpop.trf.xlu0
        %v4085 = vpop.trf.xlu0
        %v4086 = vpop.trf.xlu0
        %v4087 = vpop.trf.xlu0
        %v4088 = vpop.trf.xlu0
        %v4089 = vpop.trf.xlu0
        %v4090 = vpop.trf.xlu0
        %v4091 = vpop.trf.xlu0
        %v4092 = vpop.trf.xlu0
        %v4093 = vpop.trf.xlu0
        %v4094 = vpop.trf.xlu0
        %v4095 = vpop.trf.xlu0
        %v4096 = vpop.trf.xlu0
        %4097 = vxpose.xlu0.b32.start [1/16] %v1443, 128
        %4098 = vxpose.xlu0.b32.cont [2/16] 0.0, 128
        %4099 = vxpose.xlu0.b32.cont [3/16] 0.0, 128
        %4100 = vxpose.xlu0.b32.cont [4/16] 0.0, 128
        %4101 = vxpose.xlu0.b32.cont [5/16] 0.0, 128
        %4102 = vxpose.xlu0.b32.cont [6/16] 0.0, 128
        %4103 = vxpose.xlu0.b32.cont [7/16] 0.0, 128
        %4104 = vxpose.xlu0.b32.cont [8/16] 0.0, 128
        %4105 = vxpose.xlu0.b32.cont [9/16] 0.0, 128
        %4106 = vxpose.xlu0.b32.cont [10/16] 0.0, 128
        %4107 = vxpose.xlu0.b32.cont [11/16] 0.0, 128
        %4108 = vxpose.xlu0.b32.cont [12/16] 0.0, 128
        %4109 = vxpose.xlu0.b32.cont [13/16] 0.0, 128
        %4110 = vxpose.xlu0.b32.cont [14/16] 0.0, 128
        %4111 = vxpose.xlu0.b32.cont [15/16] 0.0, 128
        %4112 = vxpose.xlu0.b32.end [16/16] 0.0, 128
        %v4113 = vpop.trf.xlu0
        %v4114 = vpop.trf.xlu0
        %v4115 = vpop.trf.xlu0
        %v4116 = vpop.trf.xlu0
        %v4117 = vpop.trf.xlu0
        %v4118 = vpop.trf.xlu0
        %v4119 = vpop.trf.xlu0
        %v4120 = vpop.trf.xlu0
        %v4121 = vpop.trf.xlu0
        %v4122 = vpop.trf.xlu0
        %v4123 = vpop.trf.xlu0
        %v4124 = vpop.trf.xlu0
        %v4125 = vpop.trf.xlu0
        %v4126 = vpop.trf.xlu0
        %v4127 = vpop.trf.xlu0
        %v4128 = vpop.trf.xlu0
        %4129 = vxpose.xlu0.b32.start [1/16] %v1450, 128
        %4130 = vxpose.xlu0.b32.cont [2/16] 0.0, 128
        %4131 = vxpose.xlu0.b32.cont [3/16] 0.0, 128
        %4132 = vxpose.xlu0.b32.cont [4/16] 0.0, 128
        %4133 = vxpose.xlu0.b32.cont [5/16] 0.0, 128
        %4134 = vxpose.xlu0.b32.cont [6/16] 0.0, 128
        %4135 = vxpose.xlu0.b32.cont [7/16] 0.0, 128
        %4136 = vxpose.xlu0.b32.cont [8/16] 0.0, 128
        %4137 = vxpose.xlu0.b32.cont [9/16] 0.0, 128
        %4138 = vxpose.xlu0.b32.cont [10/16] 0.0, 128
        %4139 = vxpose.xlu0.b32.cont [11/16] 0.0, 128
        %4140 = vxpose.xlu0.b32.cont [12/16] 0.0, 128
        %4141 = vxpose.xlu0.b32.cont [13/16] 0.0, 128
        %4142 = vxpose.xlu0.b32.cont [14/16] 0.0, 128
        %4143 = vxpose.xlu0.b32.cont [15/16] 0.0, 128
        %4144 = vxpose.xlu0.b32.end [16/16] 0.0, 128
        %v4145 = vpop.trf.xlu0
        %v4146 = vpop.trf.xlu0
        %v4147 = vpop.trf.xlu0
        %v4148 = vpop.trf.xlu0
        %v4149 = vpop.trf.xlu0
        %v4150 = vpop.trf.xlu0
        %v4151 = vpop.trf.xlu0
        %v4152 = vpop.trf.xlu0
        %v4153 = vpop.trf.xlu0
        %v4154 = vpop.trf.xlu0
        %v4155 = vpop.trf.xlu0
        %v4156 = vpop.trf.xlu0
        %v4157 = vpop.trf.xlu0
        %v4158 = vpop.trf.xlu0
        %v4159 = vpop.trf.xlu0
        %v4160 = vpop.trf.xlu0
        %4161 = vxpose.xlu0.b32.start [1/16] %v1457, 128
        %4162 = vxpose.xlu0.b32.cont [2/16] 0.0, 128
        %4163 = vxpose.xlu0.b32.cont [3/16] 0.0, 128
        %4164 = vxpose.xlu0.b32.cont [4/16] 0.0, 128
        %4165 = vxpose.xlu0.b32.cont [5/16] 0.0, 128
        %4166 = vxpose.xlu0.b32.cont [6/16] 0.0, 128
        %4167 = vxpose.xlu0.b32.cont [7/16] 0.0, 128
        %4168 = vxpose.xlu0.b32.cont [8/16] 0.0, 128
        %4169 = vxpose.xlu0.b32.cont [9/16] 0.0, 128
        %4170 = vxpose.xlu0.b32.cont [10/16] 0.0, 128
        %4171 = vxpose.xlu0.b32.cont [11/16] 0.0, 128
        %4172 = vxpose.xlu0.b32.cont [12/16] 0.0, 128
        %4173 = vxpose.xlu0.b32.cont [13/16] 0.0, 128
        %4174 = vxpose.xlu0.b32.cont [14/16] 0.0, 128
        %4175 = vxpose.xlu0.b32.cont [15/16] 0.0, 128
        %4176 = vxpose.xlu0.b32.end [16/16] 0.0, 128
        %v4177 = vpop.trf.xlu0
        %v4178 = vpop.trf.xlu0
        %v4179 = vpop.trf.xlu0
        %v4180 = vpop.trf.xlu0
        %v4181 = vpop.trf.xlu0
        %v4182 = vpop.trf.xlu0
        %v4183 = vpop.trf.xlu0
        %v4184 = vpop.trf.xlu0
        %v4185 = vpop.trf.xlu0
        %v4186 = vpop.trf.xlu0
        %v4187 = vpop.trf.xlu0
        %v4188 = vpop.trf.xlu0
        %v4189 = vpop.trf.xlu0
        %v4190 = vpop.trf.xlu0
        %v4191 = vpop.trf.xlu0
        %v4192 = vpop.trf.xlu0
        %4193 = vxpose.xlu0.b32.start [1/16] %v1464, 128
        %4194 = vxpose.xlu0.b32.cont [2/16] 0.0, 128
        %4195 = vxpose.xlu0.b32.cont [3/16] 0.0, 128
        %4196 = vxpose.xlu0.b32.cont [4/16] 0.0, 128
        %4197 = vxpose.xlu0.b32.cont [5/16] 0.0, 128
        %4198 = vxpose.xlu0.b32.cont [6/16] 0.0, 128
        %4199 = vxpose.xlu0.b32.cont [7/16] 0.0, 128
        %4200 = vxpose.xlu0.b32.cont [8/16] 0.0, 128
        %4201 = vxpose.xlu0.b32.cont [9/16] 0.0, 128
        %4202 = vxpose.xlu0.b32.cont [10/16] 0.0, 128
        %4203 = vxpose.xlu0.b32.cont [11/16] 0.0, 128
        %4204 = vxpose.xlu0.b32.cont [12/16] 0.0, 128
        %4205 = vxpose.xlu0.b32.cont [13/16] 0.0, 128
        %4206 = vxpose.xlu0.b32.cont [14/16] 0.0, 128
        %4207 = vxpose.xlu0.b32.cont [15/16] 0.0, 128
        %4208 = vxpose.xlu0.b32.end [16/16] 0.0, 128
        %v4209 = vpop.trf.xlu0
        %v4210 = vpop.trf.xlu0
        %v4211 = vpop.trf.xlu0
        %v4212 = vpop.trf.xlu0
        %v4213 = vpop.trf.xlu0
        %v4214 = vpop.trf.xlu0
        %v4215 = vpop.trf.xlu0
        %v4216 = vpop.trf.xlu0
        %v4217 = vpop.trf.xlu0
        %v4218 = vpop.trf.xlu0
        %v4219 = vpop.trf.xlu0
        %v4220 = vpop.trf.xlu0
        %v4221 = vpop.trf.xlu0
        %v4222 = vpop.trf.xlu0
        %v4223 = vpop.trf.xlu0
        %v4224 = vpop.trf.xlu0
        %4225 = vxpose.xlu0.b32.start [1/16] %v1471, 128
        %4226 = vxpose.xlu0.b32.cont [2/16] 0.0, 128
        %4227 = vxpose.xlu0.b32.cont [3/16] 0.0, 128
        %4228 = vxpose.xlu0.b32.cont [4/16] 0.0, 128
        %4229 = vxpose.xlu0.b32.cont [5/16] 0.0, 128
        %4230 = vxpose.xlu0.b32.cont [6/16] 0.0, 128
        %4231 = vxpose.xlu0.b32.cont [7/16] 0.0, 128
        %4232 = vxpose.xlu0.b32.cont [8/16] 0.0, 128
        %4233 = vxpose.xlu0.b32.cont [9/16] 0.0, 128
        %4234 = vxpose.xlu0.b32.cont [10/16] 0.0, 128
        %4235 = vxpose.xlu0.b32.cont [11/16] 0.0, 128
        %4236 = vxpose.xlu0.b32.cont [12/16] 0.0, 128
        %4237 = vxpose.xlu0.b32.cont [13/16] 0.0, 128
        %4238 = vxpose.xlu0.b32.cont [14/16] 0.0, 128
        %4239 = vxpose.xlu0.b32.cont [15/16] 0.0, 128
        %4240 = vxpose.xlu0.b32.end [16/16] 0.0, 128
        %v4241 = vpop.trf.xlu0
        %v4242 = vpop.trf.xlu0
        %v4243 = vpop.trf.xlu0
        %v4244 = vpop.trf.xlu0
        %v4245 = vpop.trf.xlu0
        %v4246 = vpop.trf.xlu0
        %v4247 = vpop.trf.xlu0
        %v4248 = vpop.trf.xlu0
        %v4249 = vpop.trf.xlu0
        %v4250 = vpop.trf.xlu0
        %v4251 = vpop.trf.xlu0
        %v4252 = vpop.trf.xlu0
        %v4253 = vpop.trf.xlu0
        %v4254 = vpop.trf.xlu0
        %v4255 = vpop.trf.xlu0
        %v4256 = vpop.trf.xlu0
        %4257 = vxpose.xlu0.b32.start [1/16] %v1478, 128
        %4258 = vxpose.xlu0.b32.cont [2/16] 0.0, 128
        %4259 = vxpose.xlu0.b32.cont [3/16] 0.0, 128
        %4260 = vxpose.xlu0.b32.cont [4/16] 0.0, 128
        %4261 = vxpose.xlu0.b32.cont [5/16] 0.0, 128
        %4262 = vxpose.xlu0.b32.cont [6/16] 0.0, 128
        %4263 = vxpose.xlu0.b32.cont [7/16] 0.0, 128
        %4264 = vxpose.xlu0.b32.cont [8/16] 0.0, 128
        %4265 = vxpose.xlu0.b32.cont [9/16] 0.0, 128
        %4266 = vxpose.xlu0.b32.cont [10/16] 0.0, 128
        %4267 = vxpose.xlu0.b32.cont [11/16] 0.0, 128
        %4268 = vxpose.xlu0.b32.cont [12/16] 0.0, 128
        %4269 = vxpose.xlu0.b32.cont [13/16] 0.0, 128
        %4270 = vxpose.xlu0.b32.cont [14/16] 0.0, 128
        %4271 = vxpose.xlu0.b32.cont [15/16] 0.0, 128
        %4272 = vxpose.xlu0.b32.end [16/16] 0.0, 128
        %v4273 = vpop.trf.xlu0
        %v4274 = vpop.trf.xlu0
        %v4275 = vpop.trf.xlu0
        %v4276 = vpop.trf.xlu0
        %v4277 = vpop.trf.xlu0
        %v4278 = vpop.trf.xlu0
        %v4279 = vpop.trf.xlu0
        %v4280 = vpop.trf.xlu0
        %v4281 = vpop.trf.xlu0
        %v4282 = vpop.trf.xlu0
        %v4283 = vpop.trf.xlu0
        %v4284 = vpop.trf.xlu0
        %v4285 = vpop.trf.xlu0
        %v4286 = vpop.trf.xlu0
        %v4287 = vpop.trf.xlu0
        %v4288 = vpop.trf.xlu0
        %4289 = vxpose.xlu0.b32.start [1/16] %v1485, 128
        %4290 = vxpose.xlu0.b32.cont [2/16] 0.0, 128
        %4291 = vxpose.xlu0.b32.cont [3/16] 0.0, 128
        %4292 = vxpose.xlu0.b32.cont [4/16] 0.0, 128
        %4293 = vxpose.xlu0.b32.cont [5/16] 0.0, 128
        %4294 = vxpose.xlu0.b32.cont [6/16] 0.0, 128
        %4295 = vxpose.xlu0.b32.cont [7/16] 0.0, 128
        %4296 = vxpose.xlu0.b32.cont [8/16] 0.0, 128
        %4297 = vxpose.xlu0.b32.cont [9/16] 0.0, 128
        %4298 = vxpose.xlu0.b32.cont [10/16] 0.0, 128
        %4299 = vxpose.xlu0.b32.cont [11/16] 0.0, 128
        %4300 = vxpose.xlu0.b32.cont [12/16] 0.0, 128
        %4301 = vxpose.xlu0.b32.cont [13/16] 0.0, 128
        %4302 = vxpose.xlu0.b32.cont [14/16] 0.0, 128
        %4303 = vxpose.xlu0.b32.cont [15/16] 0.0, 128
        %4304 = vxpose.xlu0.b32.end [16/16] 0.0, 128
        %v4305 = vpop.trf.xlu0
        %v4306 = vpop.trf.xlu0
        %v4307 = vpop.trf.xlu0
        %v4308 = vpop.trf.xlu0
        %v4309 = vpop.trf.xlu0
        %v4310 = vpop.trf.xlu0
        %v4311 = vpop.trf.xlu0
        %v4312 = vpop.trf.xlu0
        %v4313 = vpop.trf.xlu0
        %v4314 = vpop.trf.xlu0
        %v4315 = vpop.trf.xlu0
        %v4316 = vpop.trf.xlu0
        %v4317 = vpop.trf.xlu0
        %v4318 = vpop.trf.xlu0
        %v4319 = vpop.trf.xlu0
        %v4320 = vpop.trf.xlu0
        %4321 = vxpose.xlu0.b32.start [1/16] %v1492, 128
        %4322 = vxpose.xlu0.b32.cont [2/16] 0.0, 128
        %4323 = vxpose.xlu0.b32.cont [3/16] 0.0, 128
        %4324 = vxpose.xlu0.b32.cont [4/16] 0.0, 128
        %4325 = vxpose.xlu0.b32.cont [5/16] 0.0, 128
        %4326 = vxpose.xlu0.b32.cont [6/16] 0.0, 128
        %4327 = vxpose.xlu0.b32.cont [7/16] 0.0, 128
        %4328 = vxpose.xlu0.b32.cont [8/16] 0.0, 128
        %4329 = vxpose.xlu0.b32.cont [9/16] 0.0, 128
        %4330 = vxpose.xlu0.b32.cont [10/16] 0.0, 128
        %4331 = vxpose.xlu0.b32.cont [11/16] 0.0, 128
        %4332 = vxpose.xlu0.b32.cont [12/16] 0.0, 128
        %4333 = vxpose.xlu0.b32.cont [13/16] 0.0, 128
        %4334 = vxpose.xlu0.b32.cont [14/16] 0.0, 128
        %4335 = vxpose.xlu0.b32.cont [15/16] 0.0, 128
        %4336 = vxpose.xlu0.b32.end [16/16] 0.0, 128
        %v4337 = vpop.trf.xlu0
        %v4338 = vpop.trf.xlu0
        %v4339 = vpop.trf.xlu0
        %v4340 = vpop.trf.xlu0
        %v4341 = vpop.trf.xlu0
        %v4342 = vpop.trf.xlu0
        %v4343 = vpop.trf.xlu0
        %v4344 = vpop.trf.xlu0
        %v4345 = vpop.trf.xlu0
        %v4346 = vpop.trf.xlu0
        %v4347 = vpop.trf.xlu0
        %v4348 = vpop.trf.xlu0
        %v4349 = vpop.trf.xlu0
        %v4350 = vpop.trf.xlu0
        %v4351 = vpop.trf.xlu0
        %v4352 = vpop.trf.xlu0
        %4353 = vxpose.xlu0.b32.start [1/16] %v1499, 128
        %4354 = vxpose.xlu0.b32.cont [2/16] 0.0, 128
        %4355 = vxpose.xlu0.b32.cont [3/16] 0.0, 128
        %4356 = vxpose.xlu0.b32.cont [4/16] 0.0, 128
        %4357 = vxpose.xlu0.b32.cont [5/16] 0.0, 128
        %4358 = vxpose.xlu0.b32.cont [6/16] 0.0, 128
        %4359 = vxpose.xlu0.b32.cont [7/16] 0.0, 128
        %4360 = vxpose.xlu0.b32.cont [8/16] 0.0, 128
        %4361 = vxpose.xlu0.b32.cont [9/16] 0.0, 128
        %4362 = vxpose.xlu0.b32.cont [10/16] 0.0, 128
        %4363 = vxpose.xlu0.b32.cont [11/16] 0.0, 128
        %4364 = vxpose.xlu0.b32.cont [12/16] 0.0, 128
        %4365 = vxpose.xlu0.b32.cont [13/16] 0.0, 128
        %4366 = vxpose.xlu0.b32.cont [14/16] 0.0, 128
        %4367 = vxpose.xlu0.b32.cont [15/16] 0.0, 128
        %4368 = vxpose.xlu0.b32.end [16/16] 0.0, 128
        %v4369 = vpop.trf.xlu0
        %v4370 = vpop.trf.xlu0
        %v4371 = vpop.trf.xlu0
        %v4372 = vpop.trf.xlu0
        %v4373 = vpop.trf.xlu0
        %v4374 = vpop.trf.xlu0
        %v4375 = vpop.trf.xlu0
        %v4376 = vpop.trf.xlu0
        %v4377 = vpop.trf.xlu0
        %v4378 = vpop.trf.xlu0
        %v4379 = vpop.trf.xlu0
        %v4380 = vpop.trf.xlu0
        %v4381 = vpop.trf.xlu0
        %v4382 = vpop.trf.xlu0
        %v4383 = vpop.trf.xlu0
        %v4384 = vpop.trf.xlu0
        %4385 = vxpose.xlu0.b32.start [1/16] %v1506, 128
        %4386 = vxpose.xlu0.b32.cont [2/16] 0.0, 128
        %4387 = vxpose.xlu0.b32.cont [3/16] 0.0, 128
        %4388 = vxpose.xlu0.b32.cont [4/16] 0.0, 128
        %4389 = vxpose.xlu0.b32.cont [5/16] 0.0, 128
        %4390 = vxpose.xlu0.b32.cont [6/16] 0.0, 128
        %4391 = vxpose.xlu0.b32.cont [7/16] 0.0, 128
        %4392 = vxpose.xlu0.b32.cont [8/16] 0.0, 128
        %4393 = vxpose.xlu0.b32.cont [9/16] 0.0, 128
        %4394 = vxpose.xlu0.b32.cont [10/16] 0.0, 128
        %4395 = vxpose.xlu0.b32.cont [11/16] 0.0, 128
        %4396 = vxpose.xlu0.b32.cont [12/16] 0.0, 128
        %4397 = vxpose.xlu0.b32.cont [13/16] 0.0, 128
        %4398 = vxpose.xlu0.b32.cont [14/16] 0.0, 128
        %4399 = vxpose.xlu0.b32.cont [15/16] 0.0, 128
        %4400 = vxpose.xlu0.b32.end [16/16] 0.0, 128
        %v4401 = vpop.trf.xlu0
        %v4402 = vpop.trf.xlu0
        %v4403 = vpop.trf.xlu0
        %v4404 = vpop.trf.xlu0
        %v4405 = vpop.trf.xlu0
        %v4406 = vpop.trf.xlu0
        %v4407 = vpop.trf.xlu0
        %v4408 = vpop.trf.xlu0
        %v4409 = vpop.trf.xlu0
        %v4410 = vpop.trf.xlu0
        %v4411 = vpop.trf.xlu0
        %v4412 = vpop.trf.xlu0
        %v4413 = vpop.trf.xlu0
        %v4414 = vpop.trf.xlu0
        %v4415 = vpop.trf.xlu0
        %v4416 = vpop.trf.xlu0
        %4417 = vxpose.xlu0.b32.start [1/16] %v1513, 128
        %4418 = vxpose.xlu0.b32.cont [2/16] 0.0, 128
        %4419 = vxpose.xlu0.b32.cont [3/16] 0.0, 128
        %4420 = vxpose.xlu0.b32.cont [4/16] 0.0, 128
        %4421 = vxpose.xlu0.b32.cont [5/16] 0.0, 128
        %4422 = vxpose.xlu0.b32.cont [6/16] 0.0, 128
        %4423 = vxpose.xlu0.b32.cont [7/16] 0.0, 128
        %4424 = vxpose.xlu0.b32.cont [8/16] 0.0, 128
        %4425 = vxpose.xlu0.b32.cont [9/16] 0.0, 128
        %4426 = vxpose.xlu0.b32.cont [10/16] 0.0, 128
        %4427 = vxpose.xlu0.b32.cont [11/16] 0.0, 128
        %4428 = vxpose.xlu0.b32.cont [12/16] 0.0, 128
        %4429 = vxpose.xlu0.b32.cont [13/16] 0.0, 128
        %4430 = vxpose.xlu0.b32.cont [14/16] 0.0, 128
        %4431 = vxpose.xlu0.b32.cont [15/16] 0.0, 128
        %4432 = vxpose.xlu0.b32.end [16/16] 0.0, 128
        %v4433 = vpop.trf.xlu0
        %v4434 = vpop.trf.xlu0
        %v4435 = vpop.trf.xlu0
        %v4436 = vpop.trf.xlu0
        %v4437 = vpop.trf.xlu0
        %v4438 = vpop.trf.xlu0
        %v4439 = vpop.trf.xlu0
        %v4440 = vpop.trf.xlu0
        %v4441 = vpop.trf.xlu0
        %v4442 = vpop.trf.xlu0
        %v4443 = vpop.trf.xlu0
        %v4444 = vpop.trf.xlu0
        %v4445 = vpop.trf.xlu0
        %v4446 = vpop.trf.xlu0
        %v4447 = vpop.trf.xlu0
        %v4448 = vpop.trf.xlu0
        %4449 = vxpose.xlu0.b32.start [1/16] %v1520, 128
        %4450 = vxpose.xlu0.b32.cont [2/16] 0.0, 128
        %4451 = vxpose.xlu0.b32.cont [3/16] 0.0, 128
        %4452 = vxpose.xlu0.b32.cont [4/16] 0.0, 128
        %4453 = vxpose.xlu0.b32.cont [5/16] 0.0, 128
        %4454 = vxpose.xlu0.b32.cont [6/16] 0.0, 128
        %4455 = vxpose.xlu0.b32.cont [7/16] 0.0, 128
        %4456 = vxpose.xlu0.b32.cont [8/16] 0.0, 128
        %4457 = vxpose.xlu0.b32.cont [9/16] 0.0, 128
        %4458 = vxpose.xlu0.b32.cont [10/16] 0.0, 128
        %4459 = vxpose.xlu0.b32.cont [11/16] 0.0, 128
        %4460 = vxpose.xlu0.b32.cont [12/16] 0.0, 128
        %4461 = vxpose.xlu0.b32.cont [13/16] 0.0, 128
        %4462 = vxpose.xlu0.b32.cont [14/16] 0.0, 128
        %4463 = vxpose.xlu0.b32.cont [15/16] 0.0, 128
        %4464 = vxpose.xlu0.b32.end [16/16] 0.0, 128
        %v4465 = vpop.trf.xlu0
        %v4466 = vpop.trf.xlu0
        %v4467 = vpop.trf.xlu0
        %v4468 = vpop.trf.xlu0
        %v4469 = vpop.trf.xlu0
        %v4470 = vpop.trf.xlu0
        %v4471 = vpop.trf.xlu0
        %v4472 = vpop.trf.xlu0
        %v4473 = vpop.trf.xlu0
        %v4474 = vpop.trf.xlu0
        %v4475 = vpop.trf.xlu0
        %v4476 = vpop.trf.xlu0
        %v4477 = vpop.trf.xlu0
        %v4478 = vpop.trf.xlu0
        %v4479 = vpop.trf.xlu0
        %v4480 = vpop.trf.xlu0
        %4481 = vxpose.xlu0.b32.start [1/16] %v1527, 128
        %4482 = vxpose.xlu0.b32.cont [2/16] 0.0, 128
        %4483 = vxpose.xlu0.b32.cont [3/16] 0.0, 128
        %4484 = vxpose.xlu0.b32.cont [4/16] 0.0, 128
        %4485 = vxpose.xlu0.b32.cont [5/16] 0.0, 128
        %4486 = vxpose.xlu0.b32.cont [6/16] 0.0, 128
        %4487 = vxpose.xlu0.b32.cont [7/16] 0.0, 128
        %4488 = vxpose.xlu0.b32.cont [8/16] 0.0, 128
        %4489 = vxpose.xlu0.b32.cont [9/16] 0.0, 128
        %4490 = vxpose.xlu0.b32.cont [10/16] 0.0, 128
        %4491 = vxpose.xlu0.b32.cont [11/16] 0.0, 128
        %4492 = vxpose.xlu0.b32.cont [12/16] 0.0, 128
        %4493 = vxpose.xlu0.b32.cont [13/16] 0.0, 128
        %4494 = vxpose.xlu0.b32.cont [14/16] 0.0, 128
        %4495 = vxpose.xlu0.b32.cont [15/16] 0.0, 128
        %4496 = vxpose.xlu0.b32.end [16/16] 0.0, 128
        %v4497 = vpop.trf.xlu0
        %v4498 = vpop.trf.xlu0
        %v4499 = vpop.trf.xlu0
        %v4500 = vpop.trf.xlu0
        %v4501 = vpop.trf.xlu0
        %v4502 = vpop.trf.xlu0
        %v4503 = vpop.trf.xlu0
        %v4504 = vpop.trf.xlu0
        %v4505 = vpop.trf.xlu0
        %v4506 = vpop.trf.xlu0
        %v4507 = vpop.trf.xlu0
        %v4508 = vpop.trf.xlu0
        %v4509 = vpop.trf.xlu0
        %v4510 = vpop.trf.xlu0
        %v4511 = vpop.trf.xlu0
        %v4512 = vpop.trf.xlu0
        %4513 = vxpose.xlu0.b32.start [1/16] %v1534, 128
        %4514 = vxpose.xlu0.b32.cont [2/16] 0.0, 128
        %4515 = vxpose.xlu0.b32.cont [3/16] 0.0, 128
        %4516 = vxpose.xlu0.b32.cont [4/16] 0.0, 128
        %4517 = vxpose.xlu0.b32.cont [5/16] 0.0, 128
        %4518 = vxpose.xlu0.b32.cont [6/16] 0.0, 128
        %4519 = vxpose.xlu0.b32.cont [7/16] 0.0, 128
        %4520 = vxpose.xlu0.b32.cont [8/16] 0.0, 128
        %4521 = vxpose.xlu0.b32.cont [9/16] 0.0, 128
        %4522 = vxpose.xlu0.b32.cont [10/16] 0.0, 128
        %4523 = vxpose.xlu0.b32.cont [11/16] 0.0, 128
        %4524 = vxpose.xlu0.b32.cont [12/16] 0.0, 128
        %4525 = vxpose.xlu0.b32.cont [13/16] 0.0, 128
        %4526 = vxpose.xlu0.b32.cont [14/16] 0.0, 128
        %4527 = vxpose.xlu0.b32.cont [15/16] 0.0, 128
        %4528 = vxpose.xlu0.b32.end [16/16] 0.0, 128
        %v4529 = vpop.trf.xlu0
        %v4530 = vpop.trf.xlu0
        %v4531 = vpop.trf.xlu0
        %v4532 = vpop.trf.xlu0
        %v4533 = vpop.trf.xlu0
        %v4534 = vpop.trf.xlu0
        %v4535 = vpop.trf.xlu0
        %v4536 = vpop.trf.xlu0
        %v4537 = vpop.trf.xlu0
        %v4538 = vpop.trf.xlu0
        %v4539 = vpop.trf.xlu0
        %v4540 = vpop.trf.xlu0
        %v4541 = vpop.trf.xlu0
        %v4542 = vpop.trf.xlu0
        %v4543 = vpop.trf.xlu0
        %v4544 = vpop.trf.xlu0
        %4545 = vxpose.xlu0.b32.start [1/16] %v1541, 128
        %4546 = vxpose.xlu0.b32.cont [2/16] 0.0, 128
        %4547 = vxpose.xlu0.b32.cont [3/16] 0.0, 128
        %4548 = vxpose.xlu0.b32.cont [4/16] 0.0, 128
        %4549 = vxpose.xlu0.b32.cont [5/16] 0.0, 128
        %4550 = vxpose.xlu0.b32.cont [6/16] 0.0, 128
        %4551 = vxpose.xlu0.b32.cont [7/16] 0.0, 128
        %4552 = vxpose.xlu0.b32.cont [8/16] 0.0, 128
        %4553 = vxpose.xlu0.b32.cont [9/16] 0.0, 128
        %4554 = vxpose.xlu0.b32.cont [10/16] 0.0, 128
        %4555 = vxpose.xlu0.b32.cont [11/16] 0.0, 128
        %4556 = vxpose.xlu0.b32.cont [12/16] 0.0, 128
        %4557 = vxpose.xlu0.b32.cont [13/16] 0.0, 128
        %4558 = vxpose.xlu0.b32.cont [14/16] 0.0, 128
        %4559 = vxpose.xlu0.b32.cont [15/16] 0.0, 128
        %4560 = vxpose.xlu0.b32.end [16/16] 0.0, 128
        %v4561 = vpop.trf.xlu0
        %v4562 = vpop.trf.xlu0
        %v4563 = vpop.trf.xlu0
        %v4564 = vpop.trf.xlu0
        %v4565 = vpop.trf.xlu0
        %v4566 = vpop.trf.xlu0
        %v4567 = vpop.trf.xlu0
        %v4568 = vpop.trf.xlu0
        %v4569 = vpop.trf.xlu0
        %v4570 = vpop.trf.xlu0
        %v4571 = vpop.trf.xlu0
        %v4572 = vpop.trf.xlu0
        %v4573 = vpop.trf.xlu0
        %v4574 = vpop.trf.xlu0
        %v4575 = vpop.trf.xlu0
        %v4576 = vpop.trf.xlu0
        %4577 = vxpose.xlu0.b32.start [1/16] %v1548, 128
        %4578 = vxpose.xlu0.b32.cont [2/16] 0.0, 128
        %4579 = vxpose.xlu0.b32.cont [3/16] 0.0, 128
        %4580 = vxpose.xlu0.b32.cont [4/16] 0.0, 128
        %4581 = vxpose.xlu0.b32.cont [5/16] 0.0, 128
        %4582 = vxpose.xlu0.b32.cont [6/16] 0.0, 128
        %4583 = vxpose.xlu0.b32.cont [7/16] 0.0, 128
        %4584 = vxpose.xlu0.b32.cont [8/16] 0.0, 128
        %4585 = vxpose.xlu0.b32.cont [9/16] 0.0, 128
        %4586 = vxpose.xlu0.b32.cont [10/16] 0.0, 128
        %4587 = vxpose.xlu0.b32.cont [11/16] 0.0, 128
        %4588 = vxpose.xlu0.b32.cont [12/16] 0.0, 128
        %4589 = vxpose.xlu0.b32.cont [13/16] 0.0, 128
        %4590 = vxpose.xlu0.b32.cont [14/16] 0.0, 128
        %4591 = vxpose.xlu0.b32.cont [15/16] 0.0, 128
        %4592 = vxpose.xlu0.b32.end [16/16] 0.0, 128
        %v4593 = vpop.trf.xlu0
        %v4594 = vpop.trf.xlu0
        %v4595 = vpop.trf.xlu0
        %v4596 = vpop.trf.xlu0
        %v4597 = vpop.trf.xlu0
        %v4598 = vpop.trf.xlu0
        %v4599 = vpop.trf.xlu0
        %v4600 = vpop.trf.xlu0
        %v4601 = vpop.trf.xlu0
        %v4602 = vpop.trf.xlu0
        %v4603 = vpop.trf.xlu0
        %v4604 = vpop.trf.xlu0
        %v4605 = vpop.trf.xlu0
        %v4606 = vpop.trf.xlu0
        %v4607 = vpop.trf.xlu0
        %v4608 = vpop.trf.xlu0
        %4609 = vxpose.xlu0.b32.start [1/16] %v1555, 128
        %4610 = vxpose.xlu0.b32.cont [2/16] 0.0, 128
        %4611 = vxpose.xlu0.b32.cont [3/16] 0.0, 128
        %4612 = vxpose.xlu0.b32.cont [4/16] 0.0, 128
        %4613 = vxpose.xlu0.b32.cont [5/16] 0.0, 128
        %4614 = vxpose.xlu0.b32.cont [6/16] 0.0, 128
        %4615 = vxpose.xlu0.b32.cont [7/16] 0.0, 128
        %4616 = vxpose.xlu0.b32.cont [8/16] 0.0, 128
        %4617 = vxpose.xlu0.b32.cont [9/16] 0.0, 128
        %4618 = vxpose.xlu0.b32.cont [10/16] 0.0, 128
        %4619 = vxpose.xlu0.b32.cont [11/16] 0.0, 128
        %4620 = vxpose.xlu0.b32.cont [12/16] 0.0, 128
        %4621 = vxpose.xlu0.b32.cont [13/16] 0.0, 128
        %4622 = vxpose.xlu0.b32.cont [14/16] 0.0, 128
        %4623 = vxpose.xlu0.b32.cont [15/16] 0.0, 128
        %4624 = vxpose.xlu0.b32.end [16/16] 0.0, 128
        %v4625 = vpop.trf.xlu0
        %v4626 = vpop.trf.xlu0
        %v4627 = vpop.trf.xlu0
        %v4628 = vpop.trf.xlu0
        %v4629 = vpop.trf.xlu0
        %v4630 = vpop.trf.xlu0
        %v4631 = vpop.trf.xlu0
        %v4632 = vpop.trf.xlu0
        %v4633 = vpop.trf.xlu0
        %v4634 = vpop.trf.xlu0
        %v4635 = vpop.trf.xlu0
        %v4636 = vpop.trf.xlu0
        %v4637 = vpop.trf.xlu0
        %v4638 = vpop.trf.xlu0
        %v4639 = vpop.trf.xlu0
        %v4640 = vpop.trf.xlu0
        %4641 = vxpose.xlu0.b32.start [1/16] %v1562, 128
        %4642 = vxpose.xlu0.b32.cont [2/16] 0.0, 128
        %4643 = vxpose.xlu0.b32.cont [3/16] 0.0, 128
        %4644 = vxpose.xlu0.b32.cont [4/16] 0.0, 128
        %4645 = vxpose.xlu0.b32.cont [5/16] 0.0, 128
        %4646 = vxpose.xlu0.b32.cont [6/16] 0.0, 128
        %4647 = vxpose.xlu0.b32.cont [7/16] 0.0, 128
        %4648 = vxpose.xlu0.b32.cont [8/16] 0.0, 128
        %4649 = vxpose.xlu0.b32.cont [9/16] 0.0, 128
        %4650 = vxpose.xlu0.b32.cont [10/16] 0.0, 128
        %4651 = vxpose.xlu0.b32.cont [11/16] 0.0, 128
        %4652 = vxpose.xlu0.b32.cont [12/16] 0.0, 128
        %4653 = vxpose.xlu0.b32.cont [13/16] 0.0, 128
        %4654 = vxpose.xlu0.b32.cont [14/16] 0.0, 128
        %4655 = vxpose.xlu0.b32.cont [15/16] 0.0, 128
        %4656 = vxpose.xlu0.b32.end [16/16] 0.0, 128
        %v4657 = vpop.trf.xlu0
        %v4658 = vpop.trf.xlu0
        %v4659 = vpop.trf.xlu0
        %v4660 = vpop.trf.xlu0
        %v4661 = vpop.trf.xlu0
        %v4662 = vpop.trf.xlu0
        %v4663 = vpop.trf.xlu0
        %v4664 = vpop.trf.xlu0
        %v4665 = vpop.trf.xlu0
        %v4666 = vpop.trf.xlu0
        %v4667 = vpop.trf.xlu0
        %v4668 = vpop.trf.xlu0
        %v4669 = vpop.trf.xlu0
        %v4670 = vpop.trf.xlu0
        %v4671 = vpop.trf.xlu0
        %v4672 = vpop.trf.xlu0
        %4673 = vxpose.xlu0.b32.start [1/16] %v1569, 128
        %4674 = vxpose.xlu0.b32.cont [2/16] 0.0, 128
        %4675 = vxpose.xlu0.b32.cont [3/16] 0.0, 128
        %4676 = vxpose.xlu0.b32.cont [4/16] 0.0, 128
        %4677 = vxpose.xlu0.b32.cont [5/16] 0.0, 128
        %4678 = vxpose.xlu0.b32.cont [6/16] 0.0, 128
        %4679 = vxpose.xlu0.b32.cont [7/16] 0.0, 128
        %4680 = vxpose.xlu0.b32.cont [8/16] 0.0, 128
        %4681 = vxpose.xlu0.b32.cont [9/16] 0.0, 128
        %4682 = vxpose.xlu0.b32.cont [10/16] 0.0, 128
        %4683 = vxpose.xlu0.b32.cont [11/16] 0.0, 128
        %4684 = vxpose.xlu0.b32.cont [12/16] 0.0, 128
        %4685 = vxpose.xlu0.b32.cont [13/16] 0.0, 128
        %4686 = vxpose.xlu0.b32.cont [14/16] 0.0, 128
        %4687 = vxpose.xlu0.b32.cont [15/16] 0.0, 128
        %4688 = vxpose.xlu0.b32.end [16/16] 0.0, 128
        %v4689 = vpop.trf.xlu0
        %v4690 = vpop.trf.xlu0
        %v4691 = vpop.trf.xlu0
        %v4692 = vpop.trf.xlu0
        %v4693 = vpop.trf.xlu0
        %v4694 = vpop.trf.xlu0
        %v4695 = vpop.trf.xlu0
        %v4696 = vpop.trf.xlu0
        %v4697 = vpop.trf.xlu0
        %v4698 = vpop.trf.xlu0
        %v4699 = vpop.trf.xlu0
        %v4700 = vpop.trf.xlu0
        %v4701 = vpop.trf.xlu0
        %v4702 = vpop.trf.xlu0
        %v4703 = vpop.trf.xlu0
        %v4704 = vpop.trf.xlu0
        %4705 = vxpose.xlu0.b32.start [1/16] %v1576, 128
        %4706 = vxpose.xlu0.b32.cont [2/16] 0.0, 128
        %4707 = vxpose.xlu0.b32.cont [3/16] 0.0, 128
        %4708 = vxpose.xlu0.b32.cont [4/16] 0.0, 128
        %4709 = vxpose.xlu0.b32.cont [5/16] 0.0, 128
        %4710 = vxpose.xlu0.b32.cont [6/16] 0.0, 128
        %4711 = vxpose.xlu0.b32.cont [7/16] 0.0, 128
        %4712 = vxpose.xlu0.b32.cont [8/16] 0.0, 128
        %4713 = vxpose.xlu0.b32.cont [9/16] 0.0, 128
        %4714 = vxpose.xlu0.b32.cont [10/16] 0.0, 128
        %4715 = vxpose.xlu0.b32.cont [11/16] 0.0, 128
        %4716 = vxpose.xlu0.b32.cont [12/16] 0.0, 128
        %4717 = vxpose.xlu0.b32.cont [13/16] 0.0, 128
        %4718 = vxpose.xlu0.b32.cont [14/16] 0.0, 128
        %4719 = vxpose.xlu0.b32.cont [15/16] 0.0, 128
        %4720 = vxpose.xlu0.b32.end [16/16] 0.0, 128
        %v4721 = vpop.trf.xlu0
        %v4722 = vpop.trf.xlu0
        %v4723 = vpop.trf.xlu0
        %v4724 = vpop.trf.xlu0
        %v4725 = vpop.trf.xlu0
        %v4726 = vpop.trf.xlu0
        %v4727 = vpop.trf.xlu0
        %v4728 = vpop.trf.xlu0
        %v4729 = vpop.trf.xlu0
        %v4730 = vpop.trf.xlu0
        %v4731 = vpop.trf.xlu0
        %v4732 = vpop.trf.xlu0
        %v4733 = vpop.trf.xlu0
        %v4734 = vpop.trf.xlu0
        %v4735 = vpop.trf.xlu0
        %v4736 = vpop.trf.xlu0
        %4737 = vxpose.xlu0.b32.start [1/16] %v1583, 128
        %4738 = vxpose.xlu0.b32.cont [2/16] 0.0, 128
        %4739 = vxpose.xlu0.b32.cont [3/16] 0.0, 128
        %4740 = vxpose.xlu0.b32.cont [4/16] 0.0, 128
        %4741 = vxpose.xlu0.b32.cont [5/16] 0.0, 128
        %4742 = vxpose.xlu0.b32.cont [6/16] 0.0, 128
        %4743 = vxpose.xlu0.b32.cont [7/16] 0.0, 128
        %4744 = vxpose.xlu0.b32.cont [8/16] 0.0, 128
        %4745 = vxpose.xlu0.b32.cont [9/16] 0.0, 128
        %4746 = vxpose.xlu0.b32.cont [10/16] 0.0, 128
        %4747 = vxpose.xlu0.b32.cont [11/16] 0.0, 128
        %4748 = vxpose.xlu0.b32.cont [12/16] 0.0, 128
        %4749 = vxpose.xlu0.b32.cont [13/16] 0.0, 128
        %4750 = vxpose.xlu0.b32.cont [14/16] 0.0, 128
        %4751 = vxpose.xlu0.b32.cont [15/16] 0.0, 128
        %4752 = vxpose.xlu0.b32.end [16/16] 0.0, 128
        %v4753 = vpop.trf.xlu0
        %v4754 = vpop.trf.xlu0
        %v4755 = vpop.trf.xlu0
        %v4756 = vpop.trf.xlu0
        %v4757 = vpop.trf.xlu0
        %v4758 = vpop.trf.xlu0
        %v4759 = vpop.trf.xlu0
        %v4760 = vpop.trf.xlu0
        %v4761 = vpop.trf.xlu0
        %v4762 = vpop.trf.xlu0
        %v4763 = vpop.trf.xlu0
        %v4764 = vpop.trf.xlu0
        %v4765 = vpop.trf.xlu0
        %v4766 = vpop.trf.xlu0
        %v4767 = vpop.trf.xlu0
        %v4768 = vpop.trf.xlu0
        %4769 = vxpose.xlu0.b32.start [1/16] %v1590, 128
        %4770 = vxpose.xlu0.b32.cont [2/16] 0.0, 128
        %4771 = vxpose.xlu0.b32.cont [3/16] 0.0, 128
        %4772 = vxpose.xlu0.b32.cont [4/16] 0.0, 128
        %4773 = vxpose.xlu0.b32.cont [5/16] 0.0, 128
        %4774 = vxpose.xlu0.b32.cont [6/16] 0.0, 128
        %4775 = vxpose.xlu0.b32.cont [7/16] 0.0, 128
        %4776 = vxpose.xlu0.b32.cont [8/16] 0.0, 128
        %4777 = vxpose.xlu0.b32.cont [9/16] 0.0, 128
        %4778 = vxpose.xlu0.b32.cont [10/16] 0.0, 128
        %4779 = vxpose.xlu0.b32.cont [11/16] 0.0, 128
        %4780 = vxpose.xlu0.b32.cont [12/16] 0.0, 128
        %4781 = vxpose.xlu0.b32.cont [13/16] 0.0, 128
        %4782 = vxpose.xlu0.b32.cont [14/16] 0.0, 128
        %4783 = vxpose.xlu0.b32.cont [15/16] 0.0, 128
        %4784 = vxpose.xlu0.b32.end [16/16] 0.0, 128
        %v4785 = vpop.trf.xlu0
        %v4786 = vpop.trf.xlu0
        %v4787 = vpop.trf.xlu0
        %v4788 = vpop.trf.xlu0
        %v4789 = vpop.trf.xlu0
        %v4790 = vpop.trf.xlu0
        %v4791 = vpop.trf.xlu0
        %v4792 = vpop.trf.xlu0
        %v4793 = vpop.trf.xlu0
        %v4794 = vpop.trf.xlu0
        %v4795 = vpop.trf.xlu0
        %v4796 = vpop.trf.xlu0
        %v4797 = vpop.trf.xlu0
        %v4798 = vpop.trf.xlu0
        %v4799 = vpop.trf.xlu0
        %v4800 = vpop.trf.xlu0
        %4801 = vxpose.xlu0.b32.start [1/16] %v1597, 128
        %4802 = vxpose.xlu0.b32.cont [2/16] 0.0, 128
        %4803 = vxpose.xlu0.b32.cont [3/16] 0.0, 128
        %4804 = vxpose.xlu0.b32.cont [4/16] 0.0, 128
        %4805 = vxpose.xlu0.b32.cont [5/16] 0.0, 128
        %4806 = vxpose.xlu0.b32.cont [6/16] 0.0, 128
        %4807 = vxpose.xlu0.b32.cont [7/16] 0.0, 128
        %4808 = vxpose.xlu0.b32.cont [8/16] 0.0, 128
        %4809 = vxpose.xlu0.b32.cont [9/16] 0.0, 128
        %4810 = vxpose.xlu0.b32.cont [10/16] 0.0, 128
        %4811 = vxpose.xlu0.b32.cont [11/16] 0.0, 128
        %4812 = vxpose.xlu0.b32.cont [12/16] 0.0, 128
        %4813 = vxpose.xlu0.b32.cont [13/16] 0.0, 128
        %4814 = vxpose.xlu0.b32.cont [14/16] 0.0, 128
        %4815 = vxpose.xlu0.b32.cont [15/16] 0.0, 128
        %4816 = vxpose.xlu0.b32.end [16/16] 0.0, 128
        %v4817 = vpop.trf.xlu0
        %v4818 = vpop.trf.xlu0
        %v4819 = vpop.trf.xlu0
        %v4820 = vpop.trf.xlu0
        %v4821 = vpop.trf.xlu0
        %v4822 = vpop.trf.xlu0
        %v4823 = vpop.trf.xlu0
        %v4824 = vpop.trf.xlu0
        %v4825 = vpop.trf.xlu0
        %v4826 = vpop.trf.xlu0
        %v4827 = vpop.trf.xlu0
        %v4828 = vpop.trf.xlu0
        %v4829 = vpop.trf.xlu0
        %v4830 = vpop.trf.xlu0
        %v4831 = vpop.trf.xlu0
        %v4832 = vpop.trf.xlu0
        %4833 = vxpose.xlu0.b32.start [1/16] %v1604, 128
        %4834 = vxpose.xlu0.b32.cont [2/16] 0.0, 128
        %4835 = vxpose.xlu0.b32.cont [3/16] 0.0, 128
        %4836 = vxpose.xlu0.b32.cont [4/16] 0.0, 128
        %4837 = vxpose.xlu0.b32.cont [5/16] 0.0, 128
        %4838 = vxpose.xlu0.b32.cont [6/16] 0.0, 128
        %4839 = vxpose.xlu0.b32.cont [7/16] 0.0, 128
        %4840 = vxpose.xlu0.b32.cont [8/16] 0.0, 128
        %4841 = vxpose.xlu0.b32.cont [9/16] 0.0, 128
        %4842 = vxpose.xlu0.b32.cont [10/16] 0.0, 128
        %4843 = vxpose.xlu0.b32.cont [11/16] 0.0, 128
        %4844 = vxpose.xlu0.b32.cont [12/16] 0.0, 128
        %4845 = vxpose.xlu0.b32.cont [13/16] 0.0, 128
        %4846 = vxpose.xlu0.b32.cont [14/16] 0.0, 128
        %4847 = vxpose.xlu0.b32.cont [15/16] 0.0, 128
        %4848 = vxpose.xlu0.b32.end [16/16] 0.0, 128
        %v4849 = vpop.trf.xlu0
        %v4850 = vpop.trf.xlu0
        %v4851 = vpop.trf.xlu0
        %v4852 = vpop.trf.xlu0
        %v4853 = vpop.trf.xlu0
        %v4854 = vpop.trf.xlu0
        %v4855 = vpop.trf.xlu0
        %v4856 = vpop.trf.xlu0
        %v4857 = vpop.trf.xlu0
        %v4858 = vpop.trf.xlu0
        %v4859 = vpop.trf.xlu0
        %v4860 = vpop.trf.xlu0
        %v4861 = vpop.trf.xlu0
        %v4862 = vpop.trf.xlu0
        %v4863 = vpop.trf.xlu0
        %v4864 = vpop.trf.xlu0
        %4865 = vxpose.xlu0.b32.start [1/16] %v1611, 128
        %4866 = vxpose.xlu0.b32.cont [2/16] 0.0, 128
        %4867 = vxpose.xlu0.b32.cont [3/16] 0.0, 128
        %4868 = vxpose.xlu0.b32.cont [4/16] 0.0, 128
        %4869 = vxpose.xlu0.b32.cont [5/16] 0.0, 128
        %4870 = vxpose.xlu0.b32.cont [6/16] 0.0, 128
        %4871 = vxpose.xlu0.b32.cont [7/16] 0.0, 128
        %4872 = vxpose.xlu0.b32.cont [8/16] 0.0, 128
        %4873 = vxpose.xlu0.b32.cont [9/16] 0.0, 128
        %4874 = vxpose.xlu0.b32.cont [10/16] 0.0, 128
        %4875 = vxpose.xlu0.b32.cont [11/16] 0.0, 128
        %4876 = vxpose.xlu0.b32.cont [12/16] 0.0, 128
        %4877 = vxpose.xlu0.b32.cont [13/16] 0.0, 128
        %4878 = vxpose.xlu0.b32.cont [14/16] 0.0, 128
        %4879 = vxpose.xlu0.b32.cont [15/16] 0.0, 128
        %4880 = vxpose.xlu0.b32.end [16/16] 0.0, 128
        %v4881 = vpop.trf.xlu0
        %v4882 = vpop.trf.xlu0
        %v4883 = vpop.trf.xlu0
        %v4884 = vpop.trf.xlu0
        %v4885 = vpop.trf.xlu0
        %v4886 = vpop.trf.xlu0
        %v4887 = vpop.trf.xlu0
        %v4888 = vpop.trf.xlu0
        %v4889 = vpop.trf.xlu0
        %v4890 = vpop.trf.xlu0
        %v4891 = vpop.trf.xlu0
        %v4892 = vpop.trf.xlu0
        %v4893 = vpop.trf.xlu0
        %v4894 = vpop.trf.xlu0
        %v4895 = vpop.trf.xlu0
        %v4896 = vpop.trf.xlu0
        %4897 = vxpose.xlu0.b32.start [1/16] %v1618, 128
        %4898 = vxpose.xlu0.b32.cont [2/16] 0.0, 128
        %4899 = vxpose.xlu0.b32.cont [3/16] 0.0, 128
        %4900 = vxpose.xlu0.b32.cont [4/16] 0.0, 128
        %4901 = vxpose.xlu0.b32.cont [5/16] 0.0, 128
        %4902 = vxpose.xlu0.b32.cont [6/16] 0.0, 128
        %4903 = vxpose.xlu0.b32.cont [7/16] 0.0, 128
        %4904 = vxpose.xlu0.b32.cont [8/16] 0.0, 128
        %4905 = vxpose.xlu0.b32.cont [9/16] 0.0, 128
        %4906 = vxpose.xlu0.b32.cont [10/16] 0.0, 128
        %4907 = vxpose.xlu0.b32.cont [11/16] 0.0, 128
        %4908 = vxpose.xlu0.b32.cont [12/16] 0.0, 128
        %4909 = vxpose.xlu0.b32.cont [13/16] 0.0, 128
        %4910 = vxpose.xlu0.b32.cont [14/16] 0.0, 128
        %4911 = vxpose.xlu0.b32.cont [15/16] 0.0, 128
        %4912 = vxpose.xlu0.b32.end [16/16] 0.0, 128
        %v4913 = vpop.trf.xlu0
        %v4914 = vpop.trf.xlu0
        %v4915 = vpop.trf.xlu0
        %v4916 = vpop.trf.xlu0
        %v4917 = vpop.trf.xlu0
        %v4918 = vpop.trf.xlu0
        %v4919 = vpop.trf.xlu0
        %v4920 = vpop.trf.xlu0
        %v4921 = vpop.trf.xlu0
        %v4922 = vpop.trf.xlu0
        %v4923 = vpop.trf.xlu0
        %v4924 = vpop.trf.xlu0
        %v4925 = vpop.trf.xlu0
        %v4926 = vpop.trf.xlu0
        %v4927 = vpop.trf.xlu0
        %v4928 = vpop.trf.xlu0
        %4929 = vxpose.xlu0.b32.start [1/16] %v1625, 128
        %4930 = vxpose.xlu0.b32.cont [2/16] 0.0, 128
        %4931 = vxpose.xlu0.b32.cont [3/16] 0.0, 128
        %4932 = vxpose.xlu0.b32.cont [4/16] 0.0, 128
        %4933 = vxpose.xlu0.b32.cont [5/16] 0.0, 128
        %4934 = vxpose.xlu0.b32.cont [6/16] 0.0, 128
        %4935 = vxpose.xlu0.b32.cont [7/16] 0.0, 128
        %4936 = vxpose.xlu0.b32.cont [8/16] 0.0, 128
        %4937 = vxpose.xlu0.b32.cont [9/16] 0.0, 128
        %4938 = vxpose.xlu0.b32.cont [10/16] 0.0, 128
        %4939 = vxpose.xlu0.b32.cont [11/16] 0.0, 128
        %4940 = vxpose.xlu0.b32.cont [12/16] 0.0, 128
        %4941 = vxpose.xlu0.b32.cont [13/16] 0.0, 128
        %4942 = vxpose.xlu0.b32.cont [14/16] 0.0, 128
        %4943 = vxpose.xlu0.b32.cont [15/16] 0.0, 128
        %4944 = vxpose.xlu0.b32.end [16/16] 0.0, 128
        %v4945 = vpop.trf.xlu0
        %v4946 = vpop.trf.xlu0
        %v4947 = vpop.trf.xlu0
        %v4948 = vpop.trf.xlu0
        %v4949 = vpop.trf.xlu0
        %v4950 = vpop.trf.xlu0
        %v4951 = vpop.trf.xlu0
        %v4952 = vpop.trf.xlu0
        %v4953 = vpop.trf.xlu0
        %v4954 = vpop.trf.xlu0
        %v4955 = vpop.trf.xlu0
        %v4956 = vpop.trf.xlu0
        %v4957 = vpop.trf.xlu0
        %v4958 = vpop.trf.xlu0
        %v4959 = vpop.trf.xlu0
        %v4960 = vpop.trf.xlu0
        %4961 = vxpose.xlu0.b32.start [1/16] %v1632, 128
        %4962 = vxpose.xlu0.b32.cont [2/16] 0.0, 128
        %4963 = vxpose.xlu0.b32.cont [3/16] 0.0, 128
        %4964 = vxpose.xlu0.b32.cont [4/16] 0.0, 128
        %4965 = vxpose.xlu0.b32.cont [5/16] 0.0, 128
        %4966 = vxpose.xlu0.b32.cont [6/16] 0.0, 128
        %4967 = vxpose.xlu0.b32.cont [7/16] 0.0, 128
        %4968 = vxpose.xlu0.b32.cont [8/16] 0.0, 128
        %4969 = vxpose.xlu0.b32.cont [9/16] 0.0, 128
        %4970 = vxpose.xlu0.b32.cont [10/16] 0.0, 128
        %4971 = vxpose.xlu0.b32.cont [11/16] 0.0, 128
        %4972 = vxpose.xlu0.b32.cont [12/16] 0.0, 128
        %4973 = vxpose.xlu0.b32.cont [13/16] 0.0, 128
        %4974 = vxpose.xlu0.b32.cont [14/16] 0.0, 128
        %4975 = vxpose.xlu0.b32.cont [15/16] 0.0, 128
        %4976 = vxpose.xlu0.b32.end [16/16] 0.0, 128
        %v4977 = vpop.trf.xlu0
        %v4978 = vpop.trf.xlu0
        %v4979 = vpop.trf.xlu0
        %v4980 = vpop.trf.xlu0
        %v4981 = vpop.trf.xlu0
        %v4982 = vpop.trf.xlu0
        %v4983 = vpop.trf.xlu0
        %v4984 = vpop.trf.xlu0
        %v4985 = vpop.trf.xlu0
        %v4986 = vpop.trf.xlu0
        %v4987 = vpop.trf.xlu0
        %v4988 = vpop.trf.xlu0
        %v4989 = vpop.trf.xlu0
        %v4990 = vpop.trf.xlu0
        %v4991 = vpop.trf.xlu0
        %v4992 = vpop.trf.xlu0
        %v4993 = vlaneseq
        %v4994 = vshrl.u32 %v4993, 7
        %v4995 = vsub.s32 0, %v4994
        %v4996 = vrot.slane %v3985, %v4995
        %v4997 = vlaneseq
        %v4998 = vshrl.u32 %v4997, 7
        %v4999 = vsub.s32 0, %v4998
        %v5000 = vrot.slane %v4017, %v4999
        %v5001 = vlaneseq
        %v5002 = vshrl.u32 %v5001, 7
        %v5003 = vsub.s32 0, %v5002
        %v5004 = vrot.slane %v4049, %v5003
        %v5005 = vlaneseq
        %v5006 = vshrl.u32 %v5005, 7
        %v5007 = vsub.s32 0, %v5006
        %v5008 = vrot.slane %v4081, %v5007
        %v5009 = vlaneseq
        %v5010 = vshrl.u32 %v5009, 7
        %v5011 = vsub.s32 0, %v5010
        %v5012 = vrot.slane %v4113, %v5011
        %v5013 = vlaneseq
        %v5014 = vshrl.u32 %v5013, 7
        %v5015 = vsub.s32 0, %v5014
        %v5016 = vrot.slane %v4145, %v5015
        %v5017 = vlaneseq
        %v5018 = vshrl.u32 %v5017, 7
        %v5019 = vsub.s32 0, %v5018
        %v5020 = vrot.slane %v4177, %v5019
        %v5021 = vlaneseq
        %v5022 = vshrl.u32 %v5021, 7
        %v5023 = vsub.s32 0, %v5022
        %v5024 = vrot.slane %v4209, %v5023
        %v5025 = vlaneseq
        %v5026 = vshrl.u32 %v5025, 7
        %v5027 = vsub.s32 0, %v5026
        %v5028 = vrot.slane %v4241, %v5027
        %v5029 = vlaneseq
        %v5030 = vshrl.u32 %v5029, 7
        %v5031 = vsub.s32 0, %v5030
        %v5032 = vrot.slane %v4273, %v5031
        %v5033 = vlaneseq
        %v5034 = vshrl.u32 %v5033, 7
        %v5035 = vsub.s32 0, %v5034
        %v5036 = vrot.slane %v4305, %v5035
        %v5037 = vlaneseq
        %v5038 = vshrl.u32 %v5037, 7
        %v5039 = vsub.s32 0, %v5038
        %v5040 = vrot.slane %v4337, %v5039
        %v5041 = vlaneseq
        %v5042 = vshrl.u32 %v5041, 7
        %v5043 = vsub.s32 0, %v5042
        %v5044 = vrot.slane %v4369, %v5043
        %v5045 = vlaneseq
        %v5046 = vshrl.u32 %v5045, 7
        %v5047 = vsub.s32 0, %v5046
        %v5048 = vrot.slane %v4401, %v5047
        %v5049 = vlaneseq
        %v5050 = vshrl.u32 %v5049, 7
        %v5051 = vsub.s32 0, %v5050
        %v5052 = vrot.slane %v4433, %v5051
        %v5053 = vlaneseq
        %v5054 = vshrl.u32 %v5053, 7
        %v5055 = vsub.s32 0, %v5054
        %v5056 = vrot.slane %v4465, %v5055
        %v5057 = vlaneseq
        %v5058 = vshrl.u32 %v5057, 7
        %v5059 = vsub.s32 0, %v5058
        %v5060 = vrot.slane %v4497, %v5059
        %v5061 = vlaneseq
        %v5062 = vshrl.u32 %v5061, 7
        %v5063 = vsub.s32 0, %v5062
        %v5064 = vrot.slane %v4529, %v5063
        %v5065 = vlaneseq
        %v5066 = vshrl.u32 %v5065, 7
        %v5067 = vsub.s32 0, %v5066
        %v5068 = vrot.slane %v4561, %v5067
        %v5069 = vlaneseq
        %v5070 = vshrl.u32 %v5069, 7
        %v5071 = vsub.s32 0, %v5070
        %v5072 = vrot.slane %v4593, %v5071
        %v5073 = vlaneseq
        %v5074 = vshrl.u32 %v5073, 7
        %v5075 = vsub.s32 0, %v5074
        %v5076 = vrot.slane %v4625, %v5075
        %v5077 = vlaneseq
        %v5078 = vshrl.u32 %v5077, 7
        %v5079 = vsub.s32 0, %v5078
        %v5080 = vrot.slane %v4657, %v5079
        %v5081 = vlaneseq
        %v5082 = vshrl.u32 %v5081, 7
        %v5083 = vsub.s32 0, %v5082
        %v5084 = vrot.slane %v4689, %v5083
        %v5085 = vlaneseq
        %v5086 = vshrl.u32 %v5085, 7
        %v5087 = vsub.s32 0, %v5086
        %v5088 = vrot.slane %v4721, %v5087
        %v5089 = vlaneseq
        %v5090 = vshrl.u32 %v5089, 7
        %v5091 = vsub.s32 0, %v5090
        %v5092 = vrot.slane %v4753, %v5091
        %v5093 = vlaneseq
        %v5094 = vshrl.u32 %v5093, 7
        %v5095 = vsub.s32 0, %v5094
        %v5096 = vrot.slane %v4785, %v5095
        %v5097 = vlaneseq
        %v5098 = vshrl.u32 %v5097, 7
        %v5099 = vsub.s32 0, %v5098
        %v5100 = vrot.slane %v4817, %v5099
        %v5101 = vlaneseq
        %v5102 = vshrl.u32 %v5101, 7
        %v5103 = vsub.s32 0, %v5102
        %v5104 = vrot.slane %v4849, %v5103
        %v5105 = vlaneseq
        %v5106 = vshrl.u32 %v5105, 7
        %v5107 = vsub.s32 0, %v5106
        %v5108 = vrot.slane %v4881, %v5107
        %v5109 = vlaneseq
        %v5110 = vshrl.u32 %v5109, 7
        %v5111 = vsub.s32 0, %v5110
        %v5112 = vrot.slane %v4913, %v5111
        %v5113 = vlaneseq
        %v5114 = vshrl.u32 %v5113, 7
        %v5115 = vsub.s32 0, %v5114
        %v5116 = vrot.slane %v4945, %v5115
        %v5117 = vlaneseq
        %v5118 = vshrl.u32 %v5117, 7
        %v5119 = vsub.s32 0, %v5118
        %v5120 = vrot.slane %v4977, %v5119
        %v5121 = vmul.f32 %v1415, %v4996
        %v5122 = vmul.f32 %v1422, %v5000
        %v5123 = vmul.f32 %v1429, %v5004
        %v5124 = vmul.f32 %v1436, %v5008
        %v5125 = vmul.f32 %v1443, %v5012
        %v5126 = vmul.f32 %v1450, %v5016
        %v5127 = vmul.f32 %v1457, %v5020
        %v5128 = vmul.f32 %v1464, %v5024
        %v5129 = vmul.f32 %v1471, %v5028
        %v5130 = vmul.f32 %v1478, %v5032
        %v5131 = vmul.f32 %v1485, %v5036
        %v5132 = vmul.f32 %v1492, %v5040
        %v5133 = vmul.f32 %v1499, %v5044
        %v5134 = vmul.f32 %v1506, %v5048
        %v5135 = vmul.f32 %v1513, %v5052
        %v5136 = vmul.f32 %v1520, %v5056
        %v5137 = vmul.f32 %v1527, %v5060
        %v5138 = vmul.f32 %v1534, %v5064
        %v5139 = vmul.f32 %v1541, %v5068
        %v5140 = vmul.f32 %v1548, %v5072
        %v5141 = vmul.f32 %v1555, %v5076
        %v5142 = vmul.f32 %v1562, %v5080
        %v5143 = vmul.f32 %v1569, %v5084
        %v5144 = vmul.f32 %v1576, %v5088
        %v5145 = vmul.f32 %v1583, %v5092
        %v5146 = vmul.f32 %v1590, %v5096
        %v5147 = vmul.f32 %v1597, %v5100
        %v5148 = vmul.f32 %v1604, %v5104
        %v5149 = vmul.f32 %v1611, %v5108
        %v5150 = vmul.f32 %v1618, %v5112
        %v5151 = vmul.f32 %v1625, %v5116
        %v5152 = vmul.f32 %v1632, %v5120
        %v5153 = vadd.f32 %v5121, 0.00015
        %v5154 = vadd.f32 %v5122, 0.00015
        %v5155 = vadd.f32 %v5123, 0.00015
        %v5156 = vadd.f32 %v5124, 0.00015
        %v5157 = vadd.f32 %v5125, 0.00015
        %v5158 = vadd.f32 %v5126, 0.00015
        %v5159 = vadd.f32 %v5127, 0.00015
        %v5160 = vadd.f32 %v5128, 0.00015
        %v5161 = vadd.f32 %v5129, 0.00015
        %v5162 = vadd.f32 %v5130, 0.00015
        %v5163 = vadd.f32 %v5131, 0.00015
        %v5164 = vadd.f32 %v5132, 0.00015
        %v5165 = vadd.f32 %v5133, 0.00015
        %v5166 = vadd.f32 %v5134, 0.00015
        %v5167 = vadd.f32 %v5135, 0.00015
        %v5168 = vadd.f32 %v5136, 0.00015
        %v5169 = vadd.f32 %v5137, 0.00015
        %v5170 = vadd.f32 %v5138, 0.00015
        %v5171 = vadd.f32 %v5139, 0.00015
        %v5172 = vadd.f32 %v5140, 0.00015
        %v5173 = vadd.f32 %v5141, 0.00015
        %v5174 = vadd.f32 %v5142, 0.00015
        %v5175 = vadd.f32 %v5143, 0.00015
        %v5176 = vadd.f32 %v5144, 0.00015
        %v5177 = vadd.f32 %v5145, 0.00015
        %v5178 = vadd.f32 %v5146, 0.00015
        %v5179 = vadd.f32 %v5147, 0.00015
        %v5180 = vadd.f32 %v5148, 0.00015
        %v5181 = vadd.f32 %v5149, 0.00015
        %v5182 = vadd.f32 %v5150, 0.00015
        %v5183 = vadd.f32 %v5151, 0.00015
        %v5184 = vadd.f32 %v5152, 0.00015
        %v5185 = vrcp.pop %v5153
        %v5186 = vrcp.pop %v5154
        %v5187 = vrcp.pop %v5155
        %v5188 = vrcp.pop %v5156
        %v5189 = vrcp.pop %v5157
        %v5190 = vrcp.pop %v5158
        %v5191 = vrcp.pop %v5159
        %v5192 = vrcp.pop %v5160
        %v5193 = vrcp.pop %v5161
        %v5194 = vrcp.pop %v5162
        %v5195 = vrcp.pop %v5163
        %v5196 = vrcp.pop %v5164
        %v5197 = vrcp.pop %v5165
        %v5198 = vrcp.pop %v5166
        %v5199 = vrcp.pop %v5167
        %v5200 = vrcp.pop %v5168
        %v5201 = vrcp.pop %v5169
        %v5202 = vrcp.pop %v5170
        %v5203 = vrcp.pop %v5171
        %v5204 = vrcp.pop %v5172
        %v5205 = vrcp.pop %v5173
        %v5206 = vrcp.pop %v5174
        %v5207 = vrcp.pop %v5175
        %v5208 = vrcp.pop %v5176
        %v5209 = vrcp.pop %v5177
        %v5210 = vrcp.pop %v5178
        %v5211 = vrcp.pop %v5179
        %v5212 = vrcp.pop %v5180
        %v5213 = vrcp.pop %v5181
        %v5214 = vrcp.pop %v5182
        %v5215 = vrcp.pop %v5183
        %v5216 = vrcp.pop %v5184
        %v5217 = vmul.f32 %v1703, %v5185
        %v5218 = vmul.f32 %v1776, %v5186
        %v5219 = vmul.f32 %v1849, %v5187
        %v5220 = vmul.f32 %v1922, %v5188
        %v5221 = vmul.f32 %v1995, %v5189
        %v5222 = vmul.f32 %v2068, %v5190
        %v5223 = vmul.f32 %v2141, %v5191
        %v5224 = vmul.f32 %v2214, %v5192
        %v5225 = vmul.f32 %v2287, %v5193
        %v5226 = vmul.f32 %v2360, %v5194
        %v5227 = vmul.f32 %v2433, %v5195
        %v5228 = vmul.f32 %v2506, %v5196
        %v5229 = vmul.f32 %v2579, %v5197
        %v5230 = vmul.f32 %v2652, %v5198
        %v5231 = vmul.f32 %v2725, %v5199
        %v5232 = vmul.f32 %v2798, %v5200
        %v5233 = vmul.f32 %v2871, %v5201
        %v5234 = vmul.f32 %v2944, %v5202
        %v5235 = vmul.f32 %v3017, %v5203
        %v5236 = vmul.f32 %v3090, %v5204
        %v5237 = vmul.f32 %v3163, %v5205
        %v5238 = vmul.f32 %v3236, %v5206
        %v5239 = vmul.f32 %v3309, %v5207
        %v5240 = vmul.f32 %v3382, %v5208
        %v5241 = vmul.f32 %v3455, %v5209
        %v5242 = vmul.f32 %v3528, %v5210
        %v5243 = vmul.f32 %v3601, %v5211
        %v5244 = vmul.f32 %v3674, %v5212
        %v5245 = vmul.f32 %v3747, %v5213
        %v5246 = vmul.f32 %v3820, %v5214
        %v5247 = vmul.f32 %v3893, %v5215
        %v5248 = vmul.f32 %v3966, %v5216
        %v5249 = vlaneseq
        %v5250 = vshrl.u32 %v5249, 7
        %v5251 = vlaneseq
        %v5252 = vand.u32 %v5251, 127
        %vm5253 = vcmp.eq.s32.totalorder %v5250, %v5252
        %v5254 = vsel %vm5253, 0.0, %v5217
        %v5255 = vsel %vm5253, 0.0, %v5218
        %v5256 = vsel %vm5253, 0.0, %v5219
        %v5257 = vsel %vm5253, 0.0, %v5220
        %v5258 = vsel %vm5253, 0.0, %v5221
        %v5259 = vsel %vm5253, 0.0, %v5222
        %v5260 = vsel %vm5253, 0.0, %v5223
        %v5261 = vsel %vm5253, 0.0, %v5224
        %v5262 = vsel %vm5253, 0.0, %v5225
        %v5263 = vsel %vm5253, 0.0, %v5226
        %v5264 = vsel %vm5253, 0.0, %v5227
        %v5265 = vsel %vm5253, 0.0, %v5228
        %v5266 = vsel %vm5253, 0.0, %v5229
        %v5267 = vsel %vm5253, 0.0, %v5230
        %v5268 = vsel %vm5253, 0.0, %v5231
        %v5269 = vsel %vm5253, 0.0, %v5232
        %v5270 = vsel %vm5253, 0.0, %v5233
        %v5271 = vsel %vm5253, 0.0, %v5234
        %v5272 = vsel %vm5253, 0.0, %v5235
        %v5273 = vsel %vm5253, 0.0, %v5236
        %v5274 = vsel %vm5253, 0.0, %v5237
        %v5275 = vsel %vm5253, 0.0, %v5238
        %v5276 = vsel %vm5253, 0.0, %v5239
        %v5277 = vsel %vm5253, 0.0, %v5240
        %v5278 = vsel %vm5253, 0.0, %v5241
        %v5279 = vsel %vm5253, 0.0, %v5242
        %v5280 = vsel %vm5253, 0.0, %v5243
        %v5281 = vsel %vm5253, 0.0, %v5244
        %v5282 = vsel %vm5253, 0.0, %v5245
        %v5283 = vsel %vm5253, 0.0, %v5246
        %v5284 = vsel %vm5253, 0.0, %v5247
        %v5285 = vsel %vm5253, 0.0, %v5248
        %s5286 = sld [smem:[#allocation3]]
        %s5287 = sld [smem:[#allocation3 + $0x1]]
        %s5288 = sld [smem:[#allocation3 + $0x2]]
        %s5289 = sld [smem:[#allocation3 + $0x3]]
        %s5290 = sld [smem:[#allocation3 + $0x4]]
        %s5291 = sld [smem:[#allocation3 + $0x5]]
        %s5292 = sld [smem:[#allocation3 + $0x6]]
        %s5293 = sld [smem:[#allocation3 + $0x7]]
        %s5294 = sld [smem:[#allocation5]]
        %s5295 = sld [smem:[#allocation5 + $0x1]]
        %s5296 = sld [smem:[#allocation5 + $0x2]]
        %s5297 = sld [smem:[#allocation5 + $0x3]]
        %s5298 = sld [smem:[#allocation5 + $0x4]]
        %s5299 = sld [smem:[#allocation5 + $0x5]]
        %s5300 = sld [smem:[#allocation5 + $0x6]]
        %s5301 = sld [smem:[#allocation5 + $0x7]]
        %s5302 = sld [smem:[#allocation7]]
        %s5303 = sld [smem:[#allocation7 + $0x1]]
        %s5304 = sld [smem:[#allocation7 + $0x2]]
        %s5305 = sld [smem:[#allocation7 + $0x3]]
        %s5306 = sld [smem:[#allocation7 + $0x4]]
        %s5307 = sld [smem:[#allocation7 + $0x5]]
        %s5308 = sld [smem:[#allocation7 + $0x6]]
        %s5309 = sld [smem:[#allocation7 + $0x7]]
        %v5310 = vstv %s5286
        %v5311 = vmul.f32 %v5254, %v5310
        %v5312 = vmul.f32 %v5255, %v5310
        %v5313 = vmul.f32 %v5256, %v5310
        %v5314 = vmul.f32 %v5257, %v5310
        %v5315 = vmul.f32 %v5258, %v5310
        %v5316 = vmul.f32 %v5259, %v5310
        %v5317 = vmul.f32 %v5260, %v5310
        %v5318 = vmul.f32 %v5261, %v5310
        %v5319 = vmul.f32 %v5262, %v5310
        %v5320 = vmul.f32 %v5263, %v5310
        %v5321 = vmul.f32 %v5264, %v5310
        %v5322 = vmul.f32 %v5265, %v5310
        %v5323 = vmul.f32 %v5266, %v5310
        %v5324 = vmul.f32 %v5267, %v5310
        %v5325 = vmul.f32 %v5268, %v5310
        %v5326 = vmul.f32 %v5269, %v5310
        %v5327 = vmul.f32 %v5270, %v5310
        %v5328 = vmul.f32 %v5271, %v5310
        %v5329 = vmul.f32 %v5272, %v5310
        %v5330 = vmul.f32 %v5273, %v5310
        %v5331 = vmul.f32 %v5274, %v5310
        %v5332 = vmul.f32 %v5275, %v5310
        %v5333 = vmul.f32 %v5276, %v5310
        %v5334 = vmul.f32 %v5277, %v5310
        %v5335 = vmul.f32 %v5278, %v5310
        %v5336 = vmul.f32 %v5279, %v5310
        %v5337 = vmul.f32 %v5280, %v5310
        %v5338 = vmul.f32 %v5281, %v5310
        %v5339 = vmul.f32 %v5282, %v5310
        %v5340 = vmul.f32 %v5283, %v5310
        %v5341 = vmul.f32 %v5284, %v5310
        %v5342 = vmul.f32 %v5285, %v5310
        %v5343 = vstv %s5294
        %v5344 = vadd.f32 %v5311, %v5343
        %v5345 = vadd.f32 %v5312, %v5343
        %v5346 = vadd.f32 %v5313, %v5343
        %v5347 = vadd.f32 %v5314, %v5343
        %v5348 = vadd.f32 %v5315, %v5343
        %v5349 = vadd.f32 %v5316, %v5343
        %v5350 = vadd.f32 %v5317, %v5343
        %v5351 = vadd.f32 %v5318, %v5343
        %v5352 = vadd.f32 %v5319, %v5343
        %v5353 = vadd.f32 %v5320, %v5343
        %v5354 = vadd.f32 %v5321, %v5343
        %v5355 = vadd.f32 %v5322, %v5343
        %v5356 = vadd.f32 %v5323, %v5343
        %v5357 = vadd.f32 %v5324, %v5343
        %v5358 = vadd.f32 %v5325, %v5343
        %v5359 = vadd.f32 %v5326, %v5343
        %v5360 = vadd.f32 %v5327, %v5343
        %v5361 = vadd.f32 %v5328, %v5343
        %v5362 = vadd.f32 %v5329, %v5343
        %v5363 = vadd.f32 %v5330, %v5343
        %v5364 = vadd.f32 %v5331, %v5343
        %v5365 = vadd.f32 %v5332, %v5343
        %v5366 = vadd.f32 %v5333, %v5343
        %v5367 = vadd.f32 %v5334, %v5343
        %v5368 = vadd.f32 %v5335, %v5343
        %v5369 = vadd.f32 %v5336, %v5343
        %v5370 = vadd.f32 %v5337, %v5343
        %v5371 = vadd.f32 %v5338, %v5343
        %v5372 = vadd.f32 %v5339, %v5343
        %v5373 = vadd.f32 %v5340, %v5343
        %v5374 = vadd.f32 %v5341, %v5343
        %v5375 = vadd.f32 %v5342, %v5343
        %v5376 = vtanh.pop %v5344
        %v5377 = vtanh.pop %v5345
        %v5378 = vtanh.pop %v5346
        %v5379 = vtanh.pop %v5347
        %v5380 = vtanh.pop %v5348
        %v5381 = vtanh.pop %v5349
        %v5382 = vtanh.pop %v5350
        %v5383 = vtanh.pop %v5351
        %v5384 = vtanh.pop %v5352
        %v5385 = vtanh.pop %v5353
        %v5386 = vtanh.pop %v5354
        %v5387 = vtanh.pop %v5355
        %v5388 = vtanh.pop %v5356
        %v5389 = vtanh.pop %v5357
        %v5390 = vtanh.pop %v5358
        %v5391 = vtanh.pop %v5359
        %v5392 = vtanh.pop %v5360
        %v5393 = vtanh.pop %v5361
        %v5394 = vtanh.pop %v5362
        %v5395 = vtanh.pop %v5363
        %v5396 = vtanh.pop %v5364
        %v5397 = vtanh.pop %v5365
        %v5398 = vtanh.pop %v5366
        %v5399 = vtanh.pop %v5367
        %v5400 = vtanh.pop %v5368
        %v5401 = vtanh.pop %v5369
        %v5402 = vtanh.pop %v5370
        %v5403 = vtanh.pop %v5371
        %v5404 = vtanh.pop %v5372
        %v5405 = vtanh.pop %v5373
        %v5406 = vtanh.pop %v5374
        %v5407 = vtanh.pop %v5375
        %v5408 = vstv %s5302
        %v5409 = vmul.f32 %v5408, %v5376
        %v5410 = vmul.f32 %v5408, %v5377
        %v5411 = vmul.f32 %v5408, %v5378
        %v5412 = vmul.f32 %v5408, %v5379
        %v5413 = vmul.f32 %v5408, %v5380
        %v5414 = vmul.f32 %v5408, %v5381
        %v5415 = vmul.f32 %v5408, %v5382
        %v5416 = vmul.f32 %v5408, %v5383
        %v5417 = vmul.f32 %v5408, %v5384
        %v5418 = vmul.f32 %v5408, %v5385
        %v5419 = vmul.f32 %v5408, %v5386
        %v5420 = vmul.f32 %v5408, %v5387
        %v5421 = vmul.f32 %v5408, %v5388
        %v5422 = vmul.f32 %v5408, %v5389
        %v5423 = vmul.f32 %v5408, %v5390
        %v5424 = vmul.f32 %v5408, %v5391
        %v5425 = vmul.f32 %v5408, %v5392
        %v5426 = vmul.f32 %v5408, %v5393
        %v5427 = vmul.f32 %v5408, %v5394
        %v5428 = vmul.f32 %v5408, %v5395
        %v5429 = vmul.f32 %v5408, %v5396
        %v5430 = vmul.f32 %v5408, %v5397
        %v5431 = vmul.f32 %v5408, %v5398
        %v5432 = vmul.f32 %v5408, %v5399
        %v5433 = vmul.f32 %v5408, %v5400
        %v5434 = vmul.f32 %v5408, %v5401
        %v5435 = vmul.f32 %v5408, %v5402
        %v5436 = vmul.f32 %v5408, %v5403
        %v5437 = vmul.f32 %v5408, %v5404
        %v5438 = vmul.f32 %v5408, %v5405
        %v5439 = vmul.f32 %v5408, %v5406
        %v5440 = vmul.f32 %v5408, %v5407
        %v5441 = vstv %s5287
        %v5442 = vmul.f32 %v5254, %v5441
        %v5443 = vmul.f32 %v5255, %v5441
        %v5444 = vmul.f32 %v5256, %v5441
        %v5445 = vmul.f32 %v5257, %v5441
        %v5446 = vmul.f32 %v5258, %v5441
        %v5447 = vmul.f32 %v5259, %v5441
        %v5448 = vmul.f32 %v5260, %v5441
        %v5449 = vmul.f32 %v5261, %v5441
        %v5450 = vmul.f32 %v5262, %v5441
        %v5451 = vmul.f32 %v5263, %v5441
        %v5452 = vmul.f32 %v5264, %v5441
        %v5453 = vmul.f32 %v5265, %v5441
        %v5454 = vmul.f32 %v5266, %v5441
        %v5455 = vmul.f32 %v5267, %v5441
        %v5456 = vmul.f32 %v5268, %v5441
        %v5457 = vmul.f32 %v5269, %v5441
        %v5458 = vmul.f32 %v5270, %v5441
        %v5459 = vmul.f32 %v5271, %v5441
        %v5460 = vmul.f32 %v5272, %v5441
        %v5461 = vmul.f32 %v5273, %v5441
        %v5462 = vmul.f32 %v5274, %v5441
        %v5463 = vmul.f32 %v5275, %v5441
        %v5464 = vmul.f32 %v5276, %v5441
        %v5465 = vmul.f32 %v5277, %v5441
        %v5466 = vmul.f32 %v5278, %v5441
        %v5467 = vmul.f32 %v5279, %v5441
        %v5468 = vmul.f32 %v5280, %v5441
        %v5469 = vmul.f32 %v5281, %v5441
        %v5470 = vmul.f32 %v5282, %v5441
        %v5471 = vmul.f32 %v5283, %v5441
        %v5472 = vmul.f32 %v5284, %v5441
        %v5473 = vmul.f32 %v5285, %v5441
        %v5474 = vstv %s5295
        %v5475 = vadd.f32 %v5442, %v5474
        %v5476 = vadd.f32 %v5443, %v5474
        %v5477 = vadd.f32 %v5444, %v5474
        %v5478 = vadd.f32 %v5445, %v5474
        %v5479 = vadd.f32 %v5446, %v5474
        %v5480 = vadd.f32 %v5447, %v5474
        %v5481 = vadd.f32 %v5448, %v5474
        %v5482 = vadd.f32 %v5449, %v5474
        %v5483 = vadd.f32 %v5450, %v5474
        %v5484 = vadd.f32 %v5451, %v5474
        %v5485 = vadd.f32 %v5452, %v5474
        %v5486 = vadd.f32 %v5453, %v5474
        %v5487 = vadd.f32 %v5454, %v5474
        %v5488 = vadd.f32 %v5455, %v5474
        %v5489 = vadd.f32 %v5456, %v5474
        %v5490 = vadd.f32 %v5457, %v5474
        %v5491 = vadd.f32 %v5458, %v5474
        %v5492 = vadd.f32 %v5459, %v5474
        %v5493 = vadd.f32 %v5460, %v5474
        %v5494 = vadd.f32 %v5461, %v5474
        %v5495 = vadd.f32 %v5462, %v5474
        %v5496 = vadd.f32 %v5463, %v5474
        %v5497 = vadd.f32 %v5464, %v5474
        %v5498 = vadd.f32 %v5465, %v5474
        %v5499 = vadd.f32 %v5466, %v5474
        %v5500 = vadd.f32 %v5467, %v5474
        %v5501 = vadd.f32 %v5468, %v5474
        %v5502 = vadd.f32 %v5469, %v5474
        %v5503 = vadd.f32 %v5470, %v5474
        %v5504 = vadd.f32 %v5471, %v5474
        %v5505 = vadd.f32 %v5472, %v5474
        %v5506 = vadd.f32 %v5473, %v5474
        %v5507 = vtanh.pop %v5475
        %v5508 = vtanh.pop %v5476
        %v5509 = vtanh.pop %v5477
        %v5510 = vtanh.pop %v5478
        %v5511 = vtanh.pop %v5479
        %v5512 = vtanh.pop %v5480
        %v5513 = vtanh.pop %v5481
        %v5514 = vtanh.pop %v5482
        %v5515 = vtanh.pop %v5483
        %v5516 = vtanh.pop %v5484
        %v5517 = vtanh.pop %v5485
        %v5518 = vtanh.pop %v5486
        %v5519 = vtanh.pop %v5487
        %v5520 = vtanh.pop %v5488
        %v5521 = vtanh.pop %v5489
        %v5522 = vtanh.pop %v5490
        %v5523 = vtanh.pop %v5491
        %v5524 = vtanh.pop %v5492
        %v5525 = vtanh.pop %v5493
        %v5526 = vtanh.pop %v5494
        %v5527 = vtanh.pop %v5495
        %v5528 = vtanh.pop %v5496
        %v5529 = vtanh.pop %v5497
        %v5530 = vtanh.pop %v5498
        %v5531 = vtanh.pop %v5499
        %v5532 = vtanh.pop %v5500
        %v5533 = vtanh.pop %v5501
        %v5534 = vtanh.pop %v5502
        %v5535 = vtanh.pop %v5503
        %v5536 = vtanh.pop %v5504
        %v5537 = vtanh.pop %v5505
        %v5538 = vtanh.pop %v5506
        %v5539 = vstv %s5303
        %v5540 = vmul.f32 %v5539, %v5507
        %v5541 = vmul.f32 %v5539, %v5508
        %v5542 = vmul.f32 %v5539, %v5509
        %v5543 = vmul.f32 %v5539, %v5510
        %v5544 = vmul.f32 %v5539, %v5511
        %v5545 = vmul.f32 %v5539, %v5512
        %v5546 = vmul.f32 %v5539, %v5513
        %v5547 = vmul.f32 %v5539, %v5514
        %v5548 = vmul.f32 %v5539, %v5515
        %v5549 = vmul.f32 %v5539, %v5516
        %v5550 = vmul.f32 %v5539, %v5517
        %v5551 = vmul.f32 %v5539, %v5518
        %v5552 = vmul.f32 %v5539, %v5519
        %v5553 = vmul.f32 %v5539, %v5520
        %v5554 = vmul.f32 %v5539, %v5521
        %v5555 = vmul.f32 %v5539, %v5522
        %v5556 = vmul.f32 %v5539, %v5523
        %v5557 = vmul.f32 %v5539, %v5524
        %v5558 = vmul.f32 %v5539, %v5525
        %v5559 = vmul.f32 %v5539, %v5526
        %v5560 = vmul.f32 %v5539, %v5527
        %v5561 = vmul.f32 %v5539, %v5528
        %v5562 = vmul.f32 %v5539, %v5529
        %v5563 = vmul.f32 %v5539, %v5530
        %v5564 = vmul.f32 %v5539, %v5531
        %v5565 = vmul.f32 %v5539, %v5532
        %v5566 = vmul.f32 %v5539, %v5533
        %v5567 = vmul.f32 %v5539, %v5534
        %v5568 = vmul.f32 %v5539, %v5535
        %v5569 = vmul.f32 %v5539, %v5536
        %v5570 = vmul.f32 %v5539, %v5537
        %v5571 = vmul.f32 %v5539, %v5538
        %v5572 = vadd.f32 %v5409, %v5540
        %v5573 = vadd.f32 %v5410, %v5541
        %v5574 = vadd.f32 %v5411, %v5542
        %v5575 = vadd.f32 %v5412, %v5543
        %v5576 = vadd.f32 %v5413, %v5544
        %v5577 = vadd.f32 %v5414, %v5545
        %v5578 = vadd.f32 %v5415, %v5546
        %v5579 = vadd.f32 %v5416, %v5547
        %v5580 = vadd.f32 %v5417, %v5548
        %v5581 = vadd.f32 %v5418, %v5549
        %v5582 = vadd.f32 %v5419, %v5550
        %v5583 = vadd.f32 %v5420, %v5551
        %v5584 = vadd.f32 %v5421, %v5552
        %v5585 = vadd.f32 %v5422, %v5553
        %v5586 = vadd.f32 %v5423, %v5554
        %v5587 = vadd.f32 %v5424, %v5555
        %v5588 = vadd.f32 %v5425, %v5556
        %v5589 = vadd.f32 %v5426, %v5557
        %v5590 = vadd.f32 %v5427, %v5558
        %v5591 = vadd.f32 %v5428, %v5559
        %v5592 = vadd.f32 %v5429, %v5560
        %v5593 = vadd.f32 %v5430, %v5561
        %v5594 = vadd.f32 %v5431, %v5562
        %v5595 = vadd.f32 %v5432, %v5563
        %v5596 = vadd.f32 %v5433, %v5564
        %v5597 = vadd.f32 %v5434, %v5565
        %v5598 = vadd.f32 %v5435, %v5566
        %v5599 = vadd.f32 %v5436, %v5567
        %v5600 = vadd.f32 %v5437, %v5568
        %v5601 = vadd.f32 %v5438, %v5569
        %v5602 = vadd.f32 %v5439, %v5570
        %v5603 = vadd.f32 %v5440, %v5571
        %v5604 = vstv %s5288
        %v5605 = vmul.f32 %v5254, %v5604
        %v5606 = vmul.f32 %v5255, %v5604
        %v5607 = vmul.f32 %v5256, %v5604
        %v5608 = vmul.f32 %v5257, %v5604
        %v5609 = vmul.f32 %v5258, %v5604
        %v5610 = vmul.f32 %v5259, %v5604
        %v5611 = vmul.f32 %v5260, %v5604
        %v5612 = vmul.f32 %v5261, %v5604
        %v5613 = vmul.f32 %v5262, %v5604
        %v5614 = vmul.f32 %v5263, %v5604
        %v5615 = vmul.f32 %v5264, %v5604
        %v5616 = vmul.f32 %v5265, %v5604
        %v5617 = vmul.f32 %v5266, %v5604
        %v5618 = vmul.f32 %v5267, %v5604
        %v5619 = vmul.f32 %v5268, %v5604
        %v5620 = vmul.f32 %v5269, %v5604
        %v5621 = vmul.f32 %v5270, %v5604
        %v5622 = vmul.f32 %v5271, %v5604
        %v5623 = vmul.f32 %v5272, %v5604
        %v5624 = vmul.f32 %v5273, %v5604
        %v5625 = vmul.f32 %v5274, %v5604
        %v5626 = vmul.f32 %v5275, %v5604
        %v5627 = vmul.f32 %v5276, %v5604
        %v5628 = vmul.f32 %v5277, %v5604
        %v5629 = vmul.f32 %v5278, %v5604
        %v5630 = vmul.f32 %v5279, %v5604
        %v5631 = vmul.f32 %v5280, %v5604
        %v5632 = vmul.f32 %v5281, %v5604
        %v5633 = vmul.f32 %v5282, %v5604
        %v5634 = vmul.f32 %v5283, %v5604
        %v5635 = vmul.f32 %v5284, %v5604
        %v5636 = vmul.f32 %v5285, %v5604
        %v5637 = vstv %s5296
        %v5638 = vadd.f32 %v5605, %v5637
        %v5639 = vadd.f32 %v5606, %v5637
        %v5640 = vadd.f32 %v5607, %v5637
        %v5641 = vadd.f32 %v5608, %v5637
        %v5642 = vadd.f32 %v5609, %v5637
        %v5643 = vadd.f32 %v5610, %v5637
        %v5644 = vadd.f32 %v5611, %v5637
        %v5645 = vadd.f32 %v5612, %v5637
        %v5646 = vadd.f32 %v5613, %v5637
        %v5647 = vadd.f32 %v5614, %v5637
        %v5648 = vadd.f32 %v5615, %v5637
        %v5649 = vadd.f32 %v5616, %v5637
        %v5650 = vadd.f32 %v5617, %v5637
        %v5651 = vadd.f32 %v5618, %v5637
        %v5652 = vadd.f32 %v5619, %v5637
        %v5653 = vadd.f32 %v5620, %v5637
        %v5654 = vadd.f32 %v5621, %v5637
        %v5655 = vadd.f32 %v5622, %v5637
        %v5656 = vadd.f32 %v5623, %v5637
        %v5657 = vadd.f32 %v5624, %v5637
        %v5658 = vadd.f32 %v5625, %v5637
        %v5659 = vadd.f32 %v5626, %v5637
        %v5660 = vadd.f32 %v5627, %v5637
        %v5661 = vadd.f32 %v5628, %v5637
        %v5662 = vadd.f32 %v5629, %v5637
        %v5663 = vadd.f32 %v5630, %v5637
        %v5664 = vadd.f32 %v5631, %v5637
        %v5665 = vadd.f32 %v5632, %v5637
        %v5666 = vadd.f32 %v5633, %v5637
        %v5667 = vadd.f32 %v5634, %v5637
        %v5668 = vadd.f32 %v5635, %v5637
        %v5669 = vadd.f32 %v5636, %v5637
        %v5670 = vtanh.pop %v5638
        %v5671 = vtanh.pop %v5639
        %v5672 = vtanh.pop %v5640
        %v5673 = vtanh.pop %v5641
        %v5674 = vtanh.pop %v5642
        %v5675 = vtanh.pop %v5643
        %v5676 = vtanh.pop %v5644
        %v5677 = vtanh.pop %v5645
        %v5678 = vtanh.pop %v5646
        %v5679 = vtanh.pop %v5647
        %v5680 = vtanh.pop %v5648
        %v5681 = vtanh.pop %v5649
        %v5682 = vtanh.pop %v5650
        %v5683 = vtanh.pop %v5651
        %v5684 = vtanh.pop %v5652
        %v5685 = vtanh.pop %v5653
        %v5686 = vtanh.pop %v5654
        %v5687 = vtanh.pop %v5655
        %v5688 = vtanh.pop %v5656
        %v5689 = vtanh.pop %v5657
        %v5690 = vtanh.pop %v5658
        %v5691 = vtanh.pop %v5659
        %v5692 = vtanh.pop %v5660
        %v5693 = vtanh.pop %v5661
        %v5694 = vtanh.pop %v5662
        %v5695 = vtanh.pop %v5663
        %v5696 = vtanh.pop %v5664
        %v5697 = vtanh.pop %v5665
        %v5698 = vtanh.pop %v5666
        %v5699 = vtanh.pop %v5667
        %v5700 = vtanh.pop %v5668
        %v5701 = vtanh.pop %v5669
        %v5702 = vstv %s5304
        %v5703 = vmul.f32 %v5702, %v5670
        %v5704 = vmul.f32 %v5702, %v5671
        %v5705 = vmul.f32 %v5702, %v5672
        %v5706 = vmul.f32 %v5702, %v5673
        %v5707 = vmul.f32 %v5702, %v5674
        %v5708 = vmul.f32 %v5702, %v5675
        %v5709 = vmul.f32 %v5702, %v5676
        %v5710 = vmul.f32 %v5702, %v5677
        %v5711 = vmul.f32 %v5702, %v5678
        %v5712 = vmul.f32 %v5702, %v5679
        %v5713 = vmul.f32 %v5702, %v5680
        %v5714 = vmul.f32 %v5702, %v5681
        %v5715 = vmul.f32 %v5702, %v5682
        %v5716 = vmul.f32 %v5702, %v5683
        %v5717 = vmul.f32 %v5702, %v5684
        %v5718 = vmul.f32 %v5702, %v5685
        %v5719 = vmul.f32 %v5702, %v5686
        %v5720 = vmul.f32 %v5702, %v5687
        %v5721 = vmul.f32 %v5702, %v5688
        %v5722 = vmul.f32 %v5702, %v5689
        %v5723 = vmul.f32 %v5702, %v5690
        %v5724 = vmul.f32 %v5702, %v5691
        %v5725 = vmul.f32 %v5702, %v5692
        %v5726 = vmul.f32 %v5702, %v5693
        %v5727 = vmul.f32 %v5702, %v5694
        %v5728 = vmul.f32 %v5702, %v5695
        %v5729 = vmul.f32 %v5702, %v5696
        %v5730 = vmul.f32 %v5702, %v5697
        %v5731 = vmul.f32 %v5702, %v5698
        %v5732 = vmul.f32 %v5702, %v5699
        %v5733 = vmul.f32 %v5702, %v5700
        %v5734 = vmul.f32 %v5702, %v5701
        %v5735 = vadd.f32 %v5572, %v5703
        %v5736 = vadd.f32 %v5573, %v5704
        %v5737 = vadd.f32 %v5574, %v5705
        %v5738 = vadd.f32 %v5575, %v5706
        %v5739 = vadd.f32 %v5576, %v5707
        %v5740 = vadd.f32 %v5577, %v5708
        %v5741 = vadd.f32 %v5578, %v5709
        %v5742 = vadd.f32 %v5579, %v5710
        %v5743 = vadd.f32 %v5580, %v5711
        %v5744 = vadd.f32 %v5581, %v5712
        %v5745 = vadd.f32 %v5582, %v5713
        %v5746 = vadd.f32 %v5583, %v5714
        %v5747 = vadd.f32 %v5584, %v5715
        %v5748 = vadd.f32 %v5585, %v5716
        %v5749 = vadd.f32 %v5586, %v5717
        %v5750 = vadd.f32 %v5587, %v5718
        %v5751 = vadd.f32 %v5588, %v5719
        %v5752 = vadd.f32 %v5589, %v5720
        %v5753 = vadd.f32 %v5590, %v5721
        %v5754 = vadd.f32 %v5591, %v5722
        %v5755 = vadd.f32 %v5592, %v5723
        %v5756 = vadd.f32 %v5593, %v5724
        %v5757 = vadd.f32 %v5594, %v5725
        %v5758 = vadd.f32 %v5595, %v5726
        %v5759 = vadd.f32 %v5596, %v5727
        %v5760 = vadd.f32 %v5597, %v5728
        %v5761 = vadd.f32 %v5598, %v5729
        %v5762 = vadd.f32 %v5599, %v5730
        %v5763 = vadd.f32 %v5600, %v5731
        %v5764 = vadd.f32 %v5601, %v5732
        %v5765 = vadd.f32 %v5602, %v5733
        %v5766 = vadd.f32 %v5603, %v5734
        %v5767 = vstv %s5289
        %v5768 = vmul.f32 %v5254, %v5767
        %v5769 = vmul.f32 %v5255, %v5767
        %v5770 = vmul.f32 %v5256, %v5767
        %v5771 = vmul.f32 %v5257, %v5767
        %v5772 = vmul.f32 %v5258, %v5767
        %v5773 = vmul.f32 %v5259, %v5767
        %v5774 = vmul.f32 %v5260, %v5767
        %v5775 = vmul.f32 %v5261, %v5767
        %v5776 = vmul.f32 %v5262, %v5767
        %v5777 = vmul.f32 %v5263, %v5767
        %v5778 = vmul.f32 %v5264, %v5767
        %v5779 = vmul.f32 %v5265, %v5767
        %v5780 = vmul.f32 %v5266, %v5767
        %v5781 = vmul.f32 %v5267, %v5767
        %v5782 = vmul.f32 %v5268, %v5767
        %v5783 = vmul.f32 %v5269, %v5767
        %v5784 = vmul.f32 %v5270, %v5767
        %v5785 = vmul.f32 %v5271, %v5767
        %v5786 = vmul.f32 %v5272, %v5767
        %v5787 = vmul.f32 %v5273, %v5767
        %v5788 = vmul.f32 %v5274, %v5767
        %v5789 = vmul.f32 %v5275, %v5767
        %v5790 = vmul.f32 %v5276, %v5767
        %v5791 = vmul.f32 %v5277, %v5767
        %v5792 = vmul.f32 %v5278, %v5767
        %v5793 = vmul.f32 %v5279, %v5767
        %v5794 = vmul.f32 %v5280, %v5767
        %v5795 = vmul.f32 %v5281, %v5767
        %v5796 = vmul.f32 %v5282, %v5767
        %v5797 = vmul.f32 %v5283, %v5767
        %v5798 = vmul.f32 %v5284, %v5767
        %v5799 = vmul.f32 %v5285, %v5767
        %v5800 = vstv %s5297
        %v5801 = vadd.f32 %v5768, %v5800
        %v5802 = vadd.f32 %v5769, %v5800
        %v5803 = vadd.f32 %v5770, %v5800
        %v5804 = vadd.f32 %v5771, %v5800
        %v5805 = vadd.f32 %v5772, %v5800
        %v5806 = vadd.f32 %v5773, %v5800
        %v5807 = vadd.f32 %v5774, %v5800
        %v5808 = vadd.f32 %v5775, %v5800
        %v5809 = vadd.f32 %v5776, %v5800
        %v5810 = vadd.f32 %v5777, %v5800
        %v5811 = vadd.f32 %v5778, %v5800
        %v5812 = vadd.f32 %v5779, %v5800
        %v5813 = vadd.f32 %v5780, %v5800
        %v5814 = vadd.f32 %v5781, %v5800
        %v5815 = vadd.f32 %v5782, %v5800
        %v5816 = vadd.f32 %v5783, %v5800
        %v5817 = vadd.f32 %v5784, %v5800
        %v5818 = vadd.f32 %v5785, %v5800
        %v5819 = vadd.f32 %v5786, %v5800
        %v5820 = vadd.f32 %v5787, %v5800
        %v5821 = vadd.f32 %v5788, %v5800
        %v5822 = vadd.f32 %v5789, %v5800
        %v5823 = vadd.f32 %v5790, %v5800
        %v5824 = vadd.f32 %v5791, %v5800
        %v5825 = vadd.f32 %v5792, %v5800
        %v5826 = vadd.f32 %v5793, %v5800
        %v5827 = vadd.f32 %v5794, %v5800
        %v5828 = vadd.f32 %v5795, %v5800
        %v5829 = vadd.f32 %v5796, %v5800
        %v5830 = vadd.f32 %v5797, %v5800
        %v5831 = vadd.f32 %v5798, %v5800
        %v5832 = vadd.f32 %v5799, %v5800
        %v5833 = vtanh.pop %v5801
        %v5834 = vtanh.pop %v5802
        %v5835 = vtanh.pop %v5803
        %v5836 = vtanh.pop %v5804
        %v5837 = vtanh.pop %v5805
        %v5838 = vtanh.pop %v5806
        %v5839 = vtanh.pop %v5807
        %v5840 = vtanh.pop %v5808
        %v5841 = vtanh.pop %v5809
        %v5842 = vtanh.pop %v5810
        %v5843 = vtanh.pop %v5811
        %v5844 = vtanh.pop %v5812
        %v5845 = vtanh.pop %v5813
        %v5846 = vtanh.pop %v5814
        %v5847 = vtanh.pop %v5815
        %v5848 = vtanh.pop %v5816
        %v5849 = vtanh.pop %v5817
        %v5850 = vtanh.pop %v5818
        %v5851 = vtanh.pop %v5819
        %v5852 = vtanh.pop %v5820
        %v5853 = vtanh.pop %v5821
        %v5854 = vtanh.pop %v5822
        %v5855 = vtanh.pop %v5823
        %v5856 = vtanh.pop %v5824
        %v5857 = vtanh.pop %v5825
        %v5858 = vtanh.pop %v5826
        %v5859 = vtanh.pop %v5827
        %v5860 = vtanh.pop %v5828
        %v5861 = vtanh.pop %v5829
        %v5862 = vtanh.pop %v5830
        %v5863 = vtanh.pop %v5831
        %v5864 = vtanh.pop %v5832
        %v5865 = vstv %s5305
        %v5866 = vmul.f32 %v5865, %v5833
        %v5867 = vmul.f32 %v5865, %v5834
        %v5868 = vmul.f32 %v5865, %v5835
        %v5869 = vmul.f32 %v5865, %v5836
        %v5870 = vmul.f32 %v5865, %v5837
        %v5871 = vmul.f32 %v5865, %v5838
        %v5872 = vmul.f32 %v5865, %v5839
        %v5873 = vmul.f32 %v5865, %v5840
        %v5874 = vmul.f32 %v5865, %v5841
        %v5875 = vmul.f32 %v5865, %v5842
        %v5876 = vmul.f32 %v5865, %v5843
        %v5877 = vmul.f32 %v5865, %v5844
        %v5878 = vmul.f32 %v5865, %v5845
        %v5879 = vmul.f32 %v5865, %v5846
        %v5880 = vmul.f32 %v5865, %v5847
        %v5881 = vmul.f32 %v5865, %v5848
        %v5882 = vmul.f32 %v5865, %v5849
        %v5883 = vmul.f32 %v5865, %v5850
        %v5884 = vmul.f32 %v5865, %v5851
        %v5885 = vmul.f32 %v5865, %v5852
        %v5886 = vmul.f32 %v5865, %v5853
        %v5887 = vmul.f32 %v5865, %v5854
        %v5888 = vmul.f32 %v5865, %v5855
        %v5889 = vmul.f32 %v5865, %v5856
        %v5890 = vmul.f32 %v5865, %v5857
        %v5891 = vmul.f32 %v5865, %v5858
        %v5892 = vmul.f32 %v5865, %v5859
        %v5893 = vmul.f32 %v5865, %v5860
        %v5894 = vmul.f32 %v5865, %v5861
        %v5895 = vmul.f32 %v5865, %v5862
        %v5896 = vmul.f32 %v5865, %v5863
        %v5897 = vmul.f32 %v5865, %v5864
        %v5898 = vadd.f32 %v5735, %v5866
        %v5899 = vadd.f32 %v5736, %v5867
        %v5900 = vadd.f32 %v5737, %v5868
        %v5901 = vadd.f32 %v5738, %v5869
        %v5902 = vadd.f32 %v5739, %v5870
        %v5903 = vadd.f32 %v5740, %v5871
        %v5904 = vadd.f32 %v5741, %v5872
        %v5905 = vadd.f32 %v5742, %v5873
        %v5906 = vadd.f32 %v5743, %v5874
        %v5907 = vadd.f32 %v5744, %v5875
        %v5908 = vadd.f32 %v5745, %v5876
        %v5909 = vadd.f32 %v5746, %v5877
        %v5910 = vadd.f32 %v5747, %v5878
        %v5911 = vadd.f32 %v5748, %v5879
        %v5912 = vadd.f32 %v5749, %v5880
        %v5913 = vadd.f32 %v5750, %v5881
        %v5914 = vadd.f32 %v5751, %v5882
        %v5915 = vadd.f32 %v5752, %v5883
        %v5916 = vadd.f32 %v5753, %v5884
        %v5917 = vadd.f32 %v5754, %v5885
        %v5918 = vadd.f32 %v5755, %v5886
        %v5919 = vadd.f32 %v5756, %v5887
        %v5920 = vadd.f32 %v5757, %v5888
        %v5921 = vadd.f32 %v5758, %v5889
        %v5922 = vadd.f32 %v5759, %v5890
        %v5923 = vadd.f32 %v5760, %v5891
        %v5924 = vadd.f32 %v5761, %v5892
        %v5925 = vadd.f32 %v5762, %v5893
        %v5926 = vadd.f32 %v5763, %v5894
        %v5927 = vadd.f32 %v5764, %v5895
        %v5928 = vadd.f32 %v5765, %v5896
        %v5929 = vadd.f32 %v5766, %v5897
        %v5930 = vstv %s5290
        %v5931 = vmul.f32 %v5254, %v5930
        %v5932 = vmul.f32 %v5255, %v5930
        %v5933 = vmul.f32 %v5256, %v5930
        %v5934 = vmul.f32 %v5257, %v5930
        %v5935 = vmul.f32 %v5258, %v5930
        %v5936 = vmul.f32 %v5259, %v5930
        %v5937 = vmul.f32 %v5260, %v5930
        %v5938 = vmul.f32 %v5261, %v5930
        %v5939 = vmul.f32 %v5262, %v5930
        %v5940 = vmul.f32 %v5263, %v5930
        %v5941 = vmul.f32 %v5264, %v5930
        %v5942 = vmul.f32 %v5265, %v5930
        %v5943 = vmul.f32 %v5266, %v5930
        %v5944 = vmul.f32 %v5267, %v5930
        %v5945 = vmul.f32 %v5268, %v5930
        %v5946 = vmul.f32 %v5269, %v5930
        %v5947 = vmul.f32 %v5270, %v5930
        %v5948 = vmul.f32 %v5271, %v5930
        %v5949 = vmul.f32 %v5272, %v5930
        %v5950 = vmul.f32 %v5273, %v5930
        %v5951 = vmul.f32 %v5274, %v5930
        %v5952 = vmul.f32 %v5275, %v5930
        %v5953 = vmul.f32 %v5276, %v5930
        %v5954 = vmul.f32 %v5277, %v5930
        %v5955 = vmul.f32 %v5278, %v5930
        %v5956 = vmul.f32 %v5279, %v5930
        %v5957 = vmul.f32 %v5280, %v5930
        %v5958 = vmul.f32 %v5281, %v5930
        %v5959 = vmul.f32 %v5282, %v5930
        %v5960 = vmul.f32 %v5283, %v5930
        %v5961 = vmul.f32 %v5284, %v5930
        %v5962 = vmul.f32 %v5285, %v5930
        %v5963 = vstv %s5298
        %v5964 = vadd.f32 %v5931, %v5963
        %v5965 = vadd.f32 %v5932, %v5963
        %v5966 = vadd.f32 %v5933, %v5963
        %v5967 = vadd.f32 %v5934, %v5963
        %v5968 = vadd.f32 %v5935, %v5963
        %v5969 = vadd.f32 %v5936, %v5963
        %v5970 = vadd.f32 %v5937, %v5963
        %v5971 = vadd.f32 %v5938, %v5963
        %v5972 = vadd.f32 %v5939, %v5963
        %v5973 = vadd.f32 %v5940, %v5963
        %v5974 = vadd.f32 %v5941, %v5963
        %v5975 = vadd.f32 %v5942, %v5963
        %v5976 = vadd.f32 %v5943, %v5963
        %v5977 = vadd.f32 %v5944, %v5963
        %v5978 = vadd.f32 %v5945, %v5963
        %v5979 = vadd.f32 %v5946, %v5963
        %v5980 = vadd.f32 %v5947, %v5963
        %v5981 = vadd.f32 %v5948, %v5963
        %v5982 = vadd.f32 %v5949, %v5963
        %v5983 = vadd.f32 %v5950, %v5963
        %v5984 = vadd.f32 %v5951, %v5963
        %v5985 = vadd.f32 %v5952, %v5963
        %v5986 = vadd.f32 %v5953, %v5963
        %v5987 = vadd.f32 %v5954, %v5963
        %v5988 = vadd.f32 %v5955, %v5963
        %v5989 = vadd.f32 %v5956, %v5963
        %v5990 = vadd.f32 %v5957, %v5963
        %v5991 = vadd.f32 %v5958, %v5963
        %v5992 = vadd.f32 %v5959, %v5963
        %v5993 = vadd.f32 %v5960, %v5963
        %v5994 = vadd.f32 %v5961, %v5963
        %v5995 = vadd.f32 %v5962, %v5963
        %v5996 = vtanh.pop %v5964
        %v5997 = vtanh.pop %v5965
        %v5998 = vtanh.pop %v5966
        %v5999 = vtanh.pop %v5967
        %v6000 = vtanh.pop %v5968
        %v6001 = vtanh.pop %v5969
        %v6002 = vtanh.pop %v5970
        %v6003 = vtanh.pop %v5971
        %v6004 = vtanh.pop %v5972
        %v6005 = vtanh.pop %v5973
        %v6006 = vtanh.pop %v5974
        %v6007 = vtanh.pop %v5975
        %v6008 = vtanh.pop %v5976
        %v6009 = vtanh.pop %v5977
        %v6010 = vtanh.pop %v5978
        %v6011 = vtanh.pop %v5979
        %v6012 = vtanh.pop %v5980
        %v6013 = vtanh.pop %v5981
        %v6014 = vtanh.pop %v5982
        %v6015 = vtanh.pop %v5983
        %v6016 = vtanh.pop %v5984
        %v6017 = vtanh.pop %v5985
        %v6018 = vtanh.pop %v5986
        %v6019 = vtanh.pop %v5987
        %v6020 = vtanh.pop %v5988
        %v6021 = vtanh.pop %v5989
        %v6022 = vtanh.pop %v5990
        %v6023 = vtanh.pop %v5991
        %v6024 = vtanh.pop %v5992
        %v6025 = vtanh.pop %v5993
        %v6026 = vtanh.pop %v5994
        %v6027 = vtanh.pop %v5995
        %v6028 = vstv %s5306
        %v6029 = vmul.f32 %v6028, %v5996
        %v6030 = vmul.f32 %v6028, %v5997
        %v6031 = vmul.f32 %v6028, %v5998
        %v6032 = vmul.f32 %v6028, %v5999
        %v6033 = vmul.f32 %v6028, %v6000
        %v6034 = vmul.f32 %v6028, %v6001
        %v6035 = vmul.f32 %v6028, %v6002
        %v6036 = vmul.f32 %v6028, %v6003
        %v6037 = vmul.f32 %v6028, %v6004
        %v6038 = vmul.f32 %v6028, %v6005
        %v6039 = vmul.f32 %v6028, %v6006
        %v6040 = vmul.f32 %v6028, %v6007
        %v6041 = vmul.f32 %v6028, %v6008
        %v6042 = vmul.f32 %v6028, %v6009
        %v6043 = vmul.f32 %v6028, %v6010
        %v6044 = vmul.f32 %v6028, %v6011
        %v6045 = vmul.f32 %v6028, %v6012
        %v6046 = vmul.f32 %v6028, %v6013
        %v6047 = vmul.f32 %v6028, %v6014
        %v6048 = vmul.f32 %v6028, %v6015
        %v6049 = vmul.f32 %v6028, %v6016
        %v6050 = vmul.f32 %v6028, %v6017
        %v6051 = vmul.f32 %v6028, %v6018
        %v6052 = vmul.f32 %v6028, %v6019
        %v6053 = vmul.f32 %v6028, %v6020
        %v6054 = vmul.f32 %v6028, %v6021
        %v6055 = vmul.f32 %v6028, %v6022
        %v6056 = vmul.f32 %v6028, %v6023
        %v6057 = vmul.f32 %v6028, %v6024
        %v6058 = vmul.f32 %v6028, %v6025
        %v6059 = vmul.f32 %v6028, %v6026
        %v6060 = vmul.f32 %v6028, %v6027
        %v6061 = vadd.f32 %v5898, %v6029
        %v6062 = vadd.f32 %v5899, %v6030
        %v6063 = vadd.f32 %v5900, %v6031
        %v6064 = vadd.f32 %v5901, %v6032
        %v6065 = vadd.f32 %v5902, %v6033
        %v6066 = vadd.f32 %v5903, %v6034
        %v6067 = vadd.f32 %v5904, %v6035
        %v6068 = vadd.f32 %v5905, %v6036
        %v6069 = vadd.f32 %v5906, %v6037
        %v6070 = vadd.f32 %v5907, %v6038
        %v6071 = vadd.f32 %v5908, %v6039
        %v6072 = vadd.f32 %v5909, %v6040
        %v6073 = vadd.f32 %v5910, %v6041
        %v6074 = vadd.f32 %v5911, %v6042
        %v6075 = vadd.f32 %v5912, %v6043
        %v6076 = vadd.f32 %v5913, %v6044
        %v6077 = vadd.f32 %v5914, %v6045
        %v6078 = vadd.f32 %v5915, %v6046
        %v6079 = vadd.f32 %v5916, %v6047
        %v6080 = vadd.f32 %v5917, %v6048
        %v6081 = vadd.f32 %v5918, %v6049
        %v6082 = vadd.f32 %v5919, %v6050
        %v6083 = vadd.f32 %v5920, %v6051
        %v6084 = vadd.f32 %v5921, %v6052
        %v6085 = vadd.f32 %v5922, %v6053
        %v6086 = vadd.f32 %v5923, %v6054
        %v6087 = vadd.f32 %v5924, %v6055
        %v6088 = vadd.f32 %v5925, %v6056
        %v6089 = vadd.f32 %v5926, %v6057
        %v6090 = vadd.f32 %v5927, %v6058
        %v6091 = vadd.f32 %v5928, %v6059
        %v6092 = vadd.f32 %v5929, %v6060
        %v6093 = vstv %s5291
        %v6094 = vmul.f32 %v5254, %v6093
        %v6095 = vmul.f32 %v5255, %v6093
        %v6096 = vmul.f32 %v5256, %v6093
        %v6097 = vmul.f32 %v5257, %v6093
        %v6098 = vmul.f32 %v5258, %v6093
        %v6099 = vmul.f32 %v5259, %v6093
        %v6100 = vmul.f32 %v5260, %v6093
        %v6101 = vmul.f32 %v5261, %v6093
        %v6102 = vmul.f32 %v5262, %v6093
        %v6103 = vmul.f32 %v5263, %v6093
        %v6104 = vmul.f32 %v5264, %v6093
        %v6105 = vmul.f32 %v5265, %v6093
        %v6106 = vmul.f32 %v5266, %v6093
        %v6107 = vmul.f32 %v5267, %v6093
        %v6108 = vmul.f32 %v5268, %v6093
        %v6109 = vmul.f32 %v5269, %v6093
        %v6110 = vmul.f32 %v5270, %v6093
        %v6111 = vmul.f32 %v5271, %v6093
        %v6112 = vmul.f32 %v5272, %v6093
        %v6113 = vmul.f32 %v5273, %v6093
        %v6114 = vmul.f32 %v5274, %v6093
        %v6115 = vmul.f32 %v5275, %v6093
        %v6116 = vmul.f32 %v5276, %v6093
        %v6117 = vmul.f32 %v5277, %v6093
        %v6118 = vmul.f32 %v5278, %v6093
        %v6119 = vmul.f32 %v5279, %v6093
        %v6120 = vmul.f32 %v5280, %v6093
        %v6121 = vmul.f32 %v5281, %v6093
        %v6122 = vmul.f32 %v5282, %v6093
        %v6123 = vmul.f32 %v5283, %v6093
        %v6124 = vmul.f32 %v5284, %v6093
        %v6125 = vmul.f32 %v5285, %v6093
        %v6126 = vstv %s5299
        %v6127 = vadd.f32 %v6094, %v6126
        %v6128 = vadd.f32 %v6095, %v6126
        %v6129 = vadd.f32 %v6096, %v6126
        %v6130 = vadd.f32 %v6097, %v6126
        %v6131 = vadd.f32 %v6098, %v6126
        %v6132 = vadd.f32 %v6099, %v6126
        %v6133 = vadd.f32 %v6100, %v6126
        %v6134 = vadd.f32 %v6101, %v6126
        %v6135 = vadd.f32 %v6102, %v6126
        %v6136 = vadd.f32 %v6103, %v6126
        %v6137 = vadd.f32 %v6104, %v6126
        %v6138 = vadd.f32 %v6105, %v6126
        %v6139 = vadd.f32 %v6106, %v6126
        %v6140 = vadd.f32 %v6107, %v6126
        %v6141 = vadd.f32 %v6108, %v6126
        %v6142 = vadd.f32 %v6109, %v6126
        %v6143 = vadd.f32 %v6110, %v6126
        %v6144 = vadd.f32 %v6111, %v6126
        %v6145 = vadd.f32 %v6112, %v6126
        %v6146 = vadd.f32 %v6113, %v6126
        %v6147 = vadd.f32 %v6114, %v6126
        %v6148 = vadd.f32 %v6115, %v6126
        %v6149 = vadd.f32 %v6116, %v6126
        %v6150 = vadd.f32 %v6117, %v6126
        %v6151 = vadd.f32 %v6118, %v6126
        %v6152 = vadd.f32 %v6119, %v6126
        %v6153 = vadd.f32 %v6120, %v6126
        %v6154 = vadd.f32 %v6121, %v6126
        %v6155 = vadd.f32 %v6122, %v6126
        %v6156 = vadd.f32 %v6123, %v6126
        %v6157 = vadd.f32 %v6124, %v6126
        %v6158 = vadd.f32 %v6125, %v6126
        %v6159 = vtanh.pop %v6127
        %v6160 = vtanh.pop %v6128
        %v6161 = vtanh.pop %v6129
        %v6162 = vtanh.pop %v6130
        %v6163 = vtanh.pop %v6131
        %v6164 = vtanh.pop %v6132
        %v6165 = vtanh.pop %v6133
        %v6166 = vtanh.pop %v6134
        %v6167 = vtanh.pop %v6135
        %v6168 = vtanh.pop %v6136
        %v6169 = vtanh.pop %v6137
        %v6170 = vtanh.pop %v6138
        %v6171 = vtanh.pop %v6139
        %v6172 = vtanh.pop %v6140
        %v6173 = vtanh.pop %v6141
        %v6174 = vtanh.pop %v6142
        %v6175 = vtanh.pop %v6143
        %v6176 = vtanh.pop %v6144
        %v6177 = vtanh.pop %v6145
        %v6178 = vtanh.pop %v6146
        %v6179 = vtanh.pop %v6147
        %v6180 = vtanh.pop %v6148
        %v6181 = vtanh.pop %v6149
        %v6182 = vtanh.pop %v6150
        %v6183 = vtanh.pop %v6151
        %v6184 = vtanh.pop %v6152
        %v6185 = vtanh.pop %v6153
        %v6186 = vtanh.pop %v6154
        %v6187 = vtanh.pop %v6155
        %v6188 = vtanh.pop %v6156
        %v6189 = vtanh.pop %v6157
        %v6190 = vtanh.pop %v6158
        %v6191 = vstv %s5307
        %v6192 = vmul.f32 %v6191, %v6159
        %v6193 = vmul.f32 %v6191, %v6160
        %v6194 = vmul.f32 %v6191, %v6161
        %v6195 = vmul.f32 %v6191, %v6162
        %v6196 = vmul.f32 %v6191, %v6163
        %v6197 = vmul.f32 %v6191, %v6164
        %v6198 = vmul.f32 %v6191, %v6165
        %v6199 = vmul.f32 %v6191, %v6166
        %v6200 = vmul.f32 %v6191, %v6167
        %v6201 = vmul.f32 %v6191, %v6168
        %v6202 = vmul.f32 %v6191, %v6169
        %v6203 = vmul.f32 %v6191, %v6170
        %v6204 = vmul.f32 %v6191, %v6171
        %v6205 = vmul.f32 %v6191, %v6172
        %v6206 = vmul.f32 %v6191, %v6173
        %v6207 = vmul.f32 %v6191, %v6174
        %v6208 = vmul.f32 %v6191, %v6175
        %v6209 = vmul.f32 %v6191, %v6176
        %v6210 = vmul.f32 %v6191, %v6177
        %v6211 = vmul.f32 %v6191, %v6178
        %v6212 = vmul.f32 %v6191, %v6179
        %v6213 = vmul.f32 %v6191, %v6180
        %v6214 = vmul.f32 %v6191, %v6181
        %v6215 = vmul.f32 %v6191, %v6182
        %v6216 = vmul.f32 %v6191, %v6183
        %v6217 = vmul.f32 %v6191, %v6184
        %v6218 = vmul.f32 %v6191, %v6185
        %v6219 = vmul.f32 %v6191, %v6186
        %v6220 = vmul.f32 %v6191, %v6187
        %v6221 = vmul.f32 %v6191, %v6188
        %v6222 = vmul.f32 %v6191, %v6189
        %v6223 = vmul.f32 %v6191, %v6190
        %v6224 = vadd.f32 %v6061, %v6192
        %v6225 = vadd.f32 %v6062, %v6193
        %v6226 = vadd.f32 %v6063, %v6194
        %v6227 = vadd.f32 %v6064, %v6195
        %v6228 = vadd.f32 %v6065, %v6196
        %v6229 = vadd.f32 %v6066, %v6197
        %v6230 = vadd.f32 %v6067, %v6198
        %v6231 = vadd.f32 %v6068, %v6199
        %v6232 = vadd.f32 %v6069, %v6200
        %v6233 = vadd.f32 %v6070, %v6201
        %v6234 = vadd.f32 %v6071, %v6202
        %v6235 = vadd.f32 %v6072, %v6203
        %v6236 = vadd.f32 %v6073, %v6204
        %v6237 = vadd.f32 %v6074, %v6205
        %v6238 = vadd.f32 %v6075, %v6206
        %v6239 = vadd.f32 %v6076, %v6207
        %v6240 = vadd.f32 %v6077, %v6208
        %v6241 = vadd.f32 %v6078, %v6209
        %v6242 = vadd.f32 %v6079, %v6210
        %v6243 = vadd.f32 %v6080, %v6211
        %v6244 = vadd.f32 %v6081, %v6212
        %v6245 = vadd.f32 %v6082, %v6213
        %v6246 = vadd.f32 %v6083, %v6214
        %v6247 = vadd.f32 %v6084, %v6215
        %v6248 = vadd.f32 %v6085, %v6216
        %v6249 = vadd.f32 %v6086, %v6217
        %v6250 = vadd.f32 %v6087, %v6218
        %v6251 = vadd.f32 %v6088, %v6219
        %v6252 = vadd.f32 %v6089, %v6220
        %v6253 = vadd.f32 %v6090, %v6221
        %v6254 = vadd.f32 %v6091, %v6222
        %v6255 = vadd.f32 %v6092, %v6223
        %v6256 = vstv %s5292
        %v6257 = vmul.f32 %v5254, %v6256
        %v6258 = vmul.f32 %v5255, %v6256
        %v6259 = vmul.f32 %v5256, %v6256
        %v6260 = vmul.f32 %v5257, %v6256
        %v6261 = vmul.f32 %v5258, %v6256
        %v6262 = vmul.f32 %v5259, %v6256
        %v6263 = vmul.f32 %v5260, %v6256
        %v6264 = vmul.f32 %v5261, %v6256
        %v6265 = vmul.f32 %v5262, %v6256
        %v6266 = vmul.f32 %v5263, %v6256
        %v6267 = vmul.f32 %v5264, %v6256
        %v6268 = vmul.f32 %v5265, %v6256
        %v6269 = vmul.f32 %v5266, %v6256
        %v6270 = vmul.f32 %v5267, %v6256
        %v6271 = vmul.f32 %v5268, %v6256
        %v6272 = vmul.f32 %v5269, %v6256
        %v6273 = vmul.f32 %v5270, %v6256
        %v6274 = vmul.f32 %v5271, %v6256
        %v6275 = vmul.f32 %v5272, %v6256
        %v6276 = vmul.f32 %v5273, %v6256
        %v6277 = vmul.f32 %v5274, %v6256
        %v6278 = vmul.f32 %v5275, %v6256
        %v6279 = vmul.f32 %v5276, %v6256
        %v6280 = vmul.f32 %v5277, %v6256
        %v6281 = vmul.f32 %v5278, %v6256
        %v6282 = vmul.f32 %v5279, %v6256
        %v6283 = vmul.f32 %v5280, %v6256
        %v6284 = vmul.f32 %v5281, %v6256
        %v6285 = vmul.f32 %v5282, %v6256
        %v6286 = vmul.f32 %v5283, %v6256
        %v6287 = vmul.f32 %v5284, %v6256
        %v6288 = vmul.f32 %v5285, %v6256
        %v6289 = vstv %s5300
        %v6290 = vadd.f32 %v6257, %v6289
        %v6291 = vadd.f32 %v6258, %v6289
        %v6292 = vadd.f32 %v6259, %v6289
        %v6293 = vadd.f32 %v6260, %v6289
        %v6294 = vadd.f32 %v6261, %v6289
        %v6295 = vadd.f32 %v6262, %v6289
        %v6296 = vadd.f32 %v6263, %v6289
        %v6297 = vadd.f32 %v6264, %v6289
        %v6298 = vadd.f32 %v6265, %v6289
        %v6299 = vadd.f32 %v6266, %v6289
        %v6300 = vadd.f32 %v6267, %v6289
        %v6301 = vadd.f32 %v6268, %v6289
        %v6302 = vadd.f32 %v6269, %v6289
        %v6303 = vadd.f32 %v6270, %v6289
        %v6304 = vadd.f32 %v6271, %v6289
        %v6305 = vadd.f32 %v6272, %v6289
        %v6306 = vadd.f32 %v6273, %v6289
        %v6307 = vadd.f32 %v6274, %v6289
        %v6308 = vadd.f32 %v6275, %v6289
        %v6309 = vadd.f32 %v6276, %v6289
        %v6310 = vadd.f32 %v6277, %v6289
        %v6311 = vadd.f32 %v6278, %v6289
        %v6312 = vadd.f32 %v6279, %v6289
        %v6313 = vadd.f32 %v6280, %v6289
        %v6314 = vadd.f32 %v6281, %v6289
        %v6315 = vadd.f32 %v6282, %v6289
        %v6316 = vadd.f32 %v6283, %v6289
        %v6317 = vadd.f32 %v6284, %v6289
        %v6318 = vadd.f32 %v6285, %v6289
        %v6319 = vadd.f32 %v6286, %v6289
        %v6320 = vadd.f32 %v6287, %v6289
        %v6321 = vadd.f32 %v6288, %v6289
        %v6322 = vtanh.pop %v6290
        %v6323 = vtanh.pop %v6291
        %v6324 = vtanh.pop %v6292
        %v6325 = vtanh.pop %v6293
        %v6326 = vtanh.pop %v6294
        %v6327 = vtanh.pop %v6295
        %v6328 = vtanh.pop %v6296
        %v6329 = vtanh.pop %v6297
        %v6330 = vtanh.pop %v6298
        %v6331 = vtanh.pop %v6299
        %v6332 = vtanh.pop %v6300
        %v6333 = vtanh.pop %v6301
        %v6334 = vtanh.pop %v6302
        %v6335 = vtanh.pop %v6303
        %v6336 = vtanh.pop %v6304
        %v6337 = vtanh.pop %v6305
        %v6338 = vtanh.pop %v6306
        %v6339 = vtanh.pop %v6307
        %v6340 = vtanh.pop %v6308
        %v6341 = vtanh.pop %v6309
        %v6342 = vtanh.pop %v6310
        %v6343 = vtanh.pop %v6311
        %v6344 = vtanh.pop %v6312
        %v6345 = vtanh.pop %v6313
        %v6346 = vtanh.pop %v6314
        %v6347 = vtanh.pop %v6315
        %v6348 = vtanh.pop %v6316
        %v6349 = vtanh.pop %v6317
        %v6350 = vtanh.pop %v6318
        %v6351 = vtanh.pop %v6319
        %v6352 = vtanh.pop %v6320
        %v6353 = vtanh.pop %v6321
        %v6354 = vstv %s5308
        %v6355 = vmul.f32 %v6354, %v6322
        %v6356 = vmul.f32 %v6354, %v6323
        %v6357 = vmul.f32 %v6354, %v6324
        %v6358 = vmul.f32 %v6354, %v6325
        %v6359 = vmul.f32 %v6354, %v6326
        %v6360 = vmul.f32 %v6354, %v6327
        %v6361 = vmul.f32 %v6354, %v6328
        %v6362 = vmul.f32 %v6354, %v6329
        %v6363 = vmul.f32 %v6354, %v6330
        %v6364 = vmul.f32 %v6354, %v6331
        %v6365 = vmul.f32 %v6354, %v6332
        %v6366 = vmul.f32 %v6354, %v6333
        %v6367 = vmul.f32 %v6354, %v6334
        %v6368 = vmul.f32 %v6354, %v6335
        %v6369 = vmul.f32 %v6354, %v6336
        %v6370 = vmul.f32 %v6354, %v6337
        %v6371 = vmul.f32 %v6354, %v6338
        %v6372 = vmul.f32 %v6354, %v6339
        %v6373 = vmul.f32 %v6354, %v6340
        %v6374 = vmul.f32 %v6354, %v6341
        %v6375 = vmul.f32 %v6354, %v6342
        %v6376 = vmul.f32 %v6354, %v6343
        %v6377 = vmul.f32 %v6354, %v6344
        %v6378 = vmul.f32 %v6354, %v6345
        %v6379 = vmul.f32 %v6354, %v6346
        %v6380 = vmul.f32 %v6354, %v6347
        %v6381 = vmul.f32 %v6354, %v6348
        %v6382 = vmul.f32 %v6354, %v6349
        %v6383 = vmul.f32 %v6354, %v6350
        %v6384 = vmul.f32 %v6354, %v6351
        %v6385 = vmul.f32 %v6354, %v6352
        %v6386 = vmul.f32 %v6354, %v6353
        %v6387 = vadd.f32 %v6224, %v6355
        %v6388 = vadd.f32 %v6225, %v6356
        %v6389 = vadd.f32 %v6226, %v6357
        %v6390 = vadd.f32 %v6227, %v6358
        %v6391 = vadd.f32 %v6228, %v6359
        %v6392 = vadd.f32 %v6229, %v6360
        %v6393 = vadd.f32 %v6230, %v6361
        %v6394 = vadd.f32 %v6231, %v6362
        %v6395 = vadd.f32 %v6232, %v6363
        %v6396 = vadd.f32 %v6233, %v6364
        %v6397 = vadd.f32 %v6234, %v6365
        %v6398 = vadd.f32 %v6235, %v6366
        %v6399 = vadd.f32 %v6236, %v6367
        %v6400 = vadd.f32 %v6237, %v6368
        %v6401 = vadd.f32 %v6238, %v6369
        %v6402 = vadd.f32 %v6239, %v6370
        %v6403 = vadd.f32 %v6240, %v6371
        %v6404 = vadd.f32 %v6241, %v6372
        %v6405 = vadd.f32 %v6242, %v6373
        %v6406 = vadd.f32 %v6243, %v6374
        %v6407 = vadd.f32 %v6244, %v6375
        %v6408 = vadd.f32 %v6245, %v6376
        %v6409 = vadd.f32 %v6246, %v6377
        %v6410 = vadd.f32 %v6247, %v6378
        %v6411 = vadd.f32 %v6248, %v6379
        %v6412 = vadd.f32 %v6249, %v6380
        %v6413 = vadd.f32 %v6250, %v6381
        %v6414 = vadd.f32 %v6251, %v6382
        %v6415 = vadd.f32 %v6252, %v6383
        %v6416 = vadd.f32 %v6253, %v6384
        %v6417 = vadd.f32 %v6254, %v6385
        %v6418 = vadd.f32 %v6255, %v6386
        %v6419 = vstv %s5293
        %v6420 = vmul.f32 %v5254, %v6419
        %v6421 = vmul.f32 %v5255, %v6419
        %v6422 = vmul.f32 %v5256, %v6419
        %v6423 = vmul.f32 %v5257, %v6419
        %v6424 = vmul.f32 %v5258, %v6419
        %v6425 = vmul.f32 %v5259, %v6419
        %v6426 = vmul.f32 %v5260, %v6419
        %v6427 = vmul.f32 %v5261, %v6419
        %v6428 = vmul.f32 %v5262, %v6419
        %v6429 = vmul.f32 %v5263, %v6419
        %v6430 = vmul.f32 %v5264, %v6419
        %v6431 = vmul.f32 %v5265, %v6419
        %v6432 = vmul.f32 %v5266, %v6419
        %v6433 = vmul.f32 %v5267, %v6419
        %v6434 = vmul.f32 %v5268, %v6419
        %v6435 = vmul.f32 %v5269, %v6419
        %v6436 = vmul.f32 %v5270, %v6419
        %v6437 = vmul.f32 %v5271, %v6419
        %v6438 = vmul.f32 %v5272, %v6419
        %v6439 = vmul.f32 %v5273, %v6419
        %v6440 = vmul.f32 %v5274, %v6419
        %v6441 = vmul.f32 %v5275, %v6419
        %v6442 = vmul.f32 %v5276, %v6419
        %v6443 = vmul.f32 %v5277, %v6419
        %v6444 = vmul.f32 %v5278, %v6419
        %v6445 = vmul.f32 %v5279, %v6419
        %v6446 = vmul.f32 %v5280, %v6419
        %v6447 = vmul.f32 %v5281, %v6419
        %v6448 = vmul.f32 %v5282, %v6419
        %v6449 = vmul.f32 %v5283, %v6419
        %v6450 = vmul.f32 %v5284, %v6419
        %v6451 = vmul.f32 %v5285, %v6419
        %v6452 = vstv %s5301
        %v6453 = vadd.f32 %v6420, %v6452
        %v6454 = vadd.f32 %v6421, %v6452
        %v6455 = vadd.f32 %v6422, %v6452
        %v6456 = vadd.f32 %v6423, %v6452
        %v6457 = vadd.f32 %v6424, %v6452
        %v6458 = vadd.f32 %v6425, %v6452
        %v6459 = vadd.f32 %v6426, %v6452
        %v6460 = vadd.f32 %v6427, %v6452
        %v6461 = vadd.f32 %v6428, %v6452
        %v6462 = vadd.f32 %v6429, %v6452
        %v6463 = vadd.f32 %v6430, %v6452
        %v6464 = vadd.f32 %v6431, %v6452
        %v6465 = vadd.f32 %v6432, %v6452
        %v6466 = vadd.f32 %v6433, %v6452
        %v6467 = vadd.f32 %v6434, %v6452
        %v6468 = vadd.f32 %v6435, %v6452
        %v6469 = vadd.f32 %v6436, %v6452
        %v6470 = vadd.f32 %v6437, %v6452
        %v6471 = vadd.f32 %v6438, %v6452
        %v6472 = vadd.f32 %v6439, %v6452
        %v6473 = vadd.f32 %v6440, %v6452
        %v6474 = vadd.f32 %v6441, %v6452
        %v6475 = vadd.f32 %v6442, %v6452
        %v6476 = vadd.f32 %v6443, %v6452
        %v6477 = vadd.f32 %v6444, %v6452
        %v6478 = vadd.f32 %v6445, %v6452
        %v6479 = vadd.f32 %v6446, %v6452
        %v6480 = vadd.f32 %v6447, %v6452
        %v6481 = vadd.f32 %v6448, %v6452
        %v6482 = vadd.f32 %v6449, %v6452
        %v6483 = vadd.f32 %v6450, %v6452
        %v6484 = vadd.f32 %v6451, %v6452
        %v6485 = vtanh.pop %v6453
        %v6486 = vtanh.pop %v6454
        %v6487 = vtanh.pop %v6455
        %v6488 = vtanh.pop %v6456
        %v6489 = vtanh.pop %v6457
        %v6490 = vtanh.pop %v6458
        %v6491 = vtanh.pop %v6459
        %v6492 = vtanh.pop %v6460
        %v6493 = vtanh.pop %v6461
        %v6494 = vtanh.pop %v6462
        %v6495 = vtanh.pop %v6463
        %v6496 = vtanh.pop %v6464
        %v6497 = vtanh.pop %v6465
        %v6498 = vtanh.pop %v6466
        %v6499 = vtanh.pop %v6467
        %v6500 = vtanh.pop %v6468
        %v6501 = vtanh.pop %v6469
        %v6502 = vtanh.pop %v6470
        %v6503 = vtanh.pop %v6471
        %v6504 = vtanh.pop %v6472
        %v6505 = vtanh.pop %v6473
        %v6506 = vtanh.pop %v6474
        %v6507 = vtanh.pop %v6475
        %v6508 = vtanh.pop %v6476
        %v6509 = vtanh.pop %v6477
        %v6510 = vtanh.pop %v6478
        %v6511 = vtanh.pop %v6479
        %v6512 = vtanh.pop %v6480
        %v6513 = vtanh.pop %v6481
        %v6514 = vtanh.pop %v6482
        %v6515 = vtanh.pop %v6483
        %v6516 = vtanh.pop %v6484
        %v6517 = vstv %s5309
        %v6518 = vmul.f32 %v6517, %v6485
        %v6519 = vmul.f32 %v6517, %v6486
        %v6520 = vmul.f32 %v6517, %v6487
        %v6521 = vmul.f32 %v6517, %v6488
        %v6522 = vmul.f32 %v6517, %v6489
        %v6523 = vmul.f32 %v6517, %v6490
        %v6524 = vmul.f32 %v6517, %v6491
        %v6525 = vmul.f32 %v6517, %v6492
        %v6526 = vmul.f32 %v6517, %v6493
        %v6527 = vmul.f32 %v6517, %v6494
        %v6528 = vmul.f32 %v6517, %v6495
        %v6529 = vmul.f32 %v6517, %v6496
        %v6530 = vmul.f32 %v6517, %v6497
        %v6531 = vmul.f32 %v6517, %v6498
        %v6532 = vmul.f32 %v6517, %v6499
        %v6533 = vmul.f32 %v6517, %v6500
        %v6534 = vmul.f32 %v6517, %v6501
        %v6535 = vmul.f32 %v6517, %v6502
        %v6536 = vmul.f32 %v6517, %v6503
        %v6537 = vmul.f32 %v6517, %v6504
        %v6538 = vmul.f32 %v6517, %v6505
        %v6539 = vmul.f32 %v6517, %v6506
        %v6540 = vmul.f32 %v6517, %v6507
        %v6541 = vmul.f32 %v6517, %v6508
        %v6542 = vmul.f32 %v6517, %v6509
        %v6543 = vmul.f32 %v6517, %v6510
        %v6544 = vmul.f32 %v6517, %v6511
        %v6545 = vmul.f32 %v6517, %v6512
        %v6546 = vmul.f32 %v6517, %v6513
        %v6547 = vmul.f32 %v6517, %v6514
        %v6548 = vmul.f32 %v6517, %v6515
        %v6549 = vmul.f32 %v6517, %v6516
        %v6550 = vadd.f32 %v6387, %v6518
        %v6551 = vadd.f32 %v6388, %v6519
        %v6552 = vadd.f32 %v6389, %v6520
        %v6553 = vadd.f32 %v6390, %v6521
        %v6554 = vadd.f32 %v6391, %v6522
        %v6555 = vadd.f32 %v6392, %v6523
        %v6556 = vadd.f32 %v6393, %v6524
        %v6557 = vadd.f32 %v6394, %v6525
        %v6558 = vadd.f32 %v6395, %v6526
        %v6559 = vadd.f32 %v6396, %v6527
        %v6560 = vadd.f32 %v6397, %v6528
        %v6561 = vadd.f32 %v6398, %v6529
        %v6562 = vadd.f32 %v6399, %v6530
        %v6563 = vadd.f32 %v6400, %v6531
        %v6564 = vadd.f32 %v6401, %v6532
        %v6565 = vadd.f32 %v6402, %v6533
        %v6566 = vadd.f32 %v6403, %v6534
        %v6567 = vadd.f32 %v6404, %v6535
        %v6568 = vadd.f32 %v6405, %v6536
        %v6569 = vadd.f32 %v6406, %v6537
        %v6570 = vadd.f32 %v6407, %v6538
        %v6571 = vadd.f32 %v6408, %v6539
        %v6572 = vadd.f32 %v6409, %v6540
        %v6573 = vadd.f32 %v6410, %v6541
        %v6574 = vadd.f32 %v6411, %v6542
        %v6575 = vadd.f32 %v6412, %v6543
        %v6576 = vadd.f32 %v6413, %v6544
        %v6577 = vadd.f32 %v6414, %v6545
        %v6578 = vadd.f32 %v6415, %v6546
        %v6579 = vadd.f32 %v6416, %v6547
        %v6580 = vadd.f32 %v6417, %v6548
        %v6581 = vadd.f32 %v6418, %v6549
        %s6582 = sld [smem:[#allocation2]]
        %v6583 = vstv %s6582
        %v6584 = vadd.f32 %v6550, %v6583
        %v6585 = vadd.f32 %v6551, %v6583
        %v6586 = vadd.f32 %v6552, %v6583
        %v6587 = vadd.f32 %v6553, %v6583
        %v6588 = vadd.f32 %v6554, %v6583
        %v6589 = vadd.f32 %v6555, %v6583
        %v6590 = vadd.f32 %v6556, %v6583
        %v6591 = vadd.f32 %v6557, %v6583
        %v6592 = vadd.f32 %v6558, %v6583
        %v6593 = vadd.f32 %v6559, %v6583
        %v6594 = vadd.f32 %v6560, %v6583
        %v6595 = vadd.f32 %v6561, %v6583
        %v6596 = vadd.f32 %v6562, %v6583
        %v6597 = vadd.f32 %v6563, %v6583
        %v6598 = vadd.f32 %v6564, %v6583
        %v6599 = vadd.f32 %v6565, %v6583
        %v6600 = vadd.f32 %v6566, %v6583
        %v6601 = vadd.f32 %v6567, %v6583
        %v6602 = vadd.f32 %v6568, %v6583
        %v6603 = vadd.f32 %v6569, %v6583
        %v6604 = vadd.f32 %v6570, %v6583
        %v6605 = vadd.f32 %v6571, %v6583
        %v6606 = vadd.f32 %v6572, %v6583
        %v6607 = vadd.f32 %v6573, %v6583
        %v6608 = vadd.f32 %v6574, %v6583
        %v6609 = vadd.f32 %v6575, %v6583
        %v6610 = vadd.f32 %v6576, %v6583
        %v6611 = vadd.f32 %v6577, %v6583
        %v6612 = vadd.f32 %v6578, %v6583
        %v6613 = vadd.f32 %v6579, %v6583
        %v6614 = vadd.f32 %v6580, %v6583
        %v6615 = vadd.f32 %v6581, %v6583
        %v6616 = vpack.c.bf16 %v997, %v994
        %v6617 = vpack.c.bf16 %v1005, %v1002
        %v6618 = vpack.c.bf16 %v1013, %v1010
        %v6619 = vpack.c.bf16 %v1021, %v1018
        %v6620 = vpack.c.bf16 %v1029, %v1026
        %v6621 = vpack.c.bf16 %v1037, %v1034
        %v6622 = vpack.c.bf16 %v1045, %v1042
        %v6623 = vpack.c.bf16 %v1053, %v1050
        %v6624 = vpack.c.bf16 %v1061, %v1058
        %v6625 = vpack.c.bf16 %v1069, %v1066
        %v6626 = vpack.c.bf16 %v1077, %v1074
        %v6627 = vpack.c.bf16 %v1085, %v1082
        %v6628 = vpack.c.bf16 %v1093, %v1090
        %v6629 = vpack.c.bf16 %v1101, %v1098
        %v6630 = vpack.c.bf16 %v1109, %v1106
        %v6631 = vpack.c.bf16 %v1117, %v1114
        %v6632 = vld [vmem:[%s5] sm:$0xf]
        %v6633 = vld [vmem:[%s5 + $0x4] sm:$0xf]
        %v6634 = vld [vmem:[%s6] sm:$0x1]
        %v6636 = vlaneseq
        %v6637 = vshrl.u32 %v6636, 7
        %v6638 = vsub.s32 0, %v6637
        %v6639 = vrot.slane %v6634, %v6638
        %v6643 = vunpack.c.l.b16 %v6632
        %v6644 = vunpack.c.l.b16 %v6633
        %v6645 = vpack.c.b16 %v6644, %v6643
        %v6648 = vsel %vm629, %v6616, 0
        %v6651 = vsel %vm629, %v6617, 0
        %v6654 = vsel %vm629, %v6618, 0
        %v6657 = vsel %vm629, %v6619, 0
        %v6660 = vsel %vm629, %v6620, 0
        %v6663 = vsel %vm629, %v6621, 0
        %v6666 = vsel %vm629, %v6622, 0
        %v6669 = vsel %vm629, %v6623, 0
        %v6672 = vsel %vm629, %v6624, 0
        %v6675 = vsel %vm629, %v6625, 0
        %v6678 = vsel %vm629, %v6626, 0
        %v6681 = vsel %vm629, %v6627, 0
        %v6684 = vsel %vm629, %v6628, 0
        %v6687 = vsel %vm629, %v6629, 0
        %v6690 = vsel %vm629, %v6630, 0
        %v6693 = vsel %vm629, %v6631, 0
        %6695 = vmatprep.subr.bf16.mxu0 0
        %6696 = vmatpush1.bf16.msra.mxu0 %v6645
        %6697 = vmatprep.subr.bf16.mxu0 0
        %6698 = vmatpush1.bf16.msra.mxu0 0
        %6699 = vmatprep.subr.bf16.mxu0 0
        %6700 = vmatpush1.bf16.msra.mxu0 0
        %6701 = vmatprep.subr.bf16.mxu0 0
        %6702 = vmatpush1.bf16.msra.mxu0 0
        %6703 = vmatprep.subr.bf16.mxu0 0
        %6704 = vmatpush1.bf16.msra.mxu0 0
        %6705 = vmatprep.subr.bf16.mxu0 0
        %6706 = vmatpush1.bf16.msra.mxu0 0
        %6707 = vmatprep.subr.bf16.mxu0 0
        %6708 = vmatpush1.bf16.msra.mxu0 0
        %6709 = vmatprep.subr.bf16.mxu0 0
        %6710 = vmatpush1.bf16.msra.mxu0 0
        %6711 = vmatprep.subr.bf16.mxu0 0
        %6712 = vmatpush1.bf16.msra.mxu0 0
        %6713 = vmatprep.subr.bf16.mxu0 0
        %6714 = vmatpush1.bf16.msra.mxu0 0
        %6715 = vmatprep.subr.bf16.mxu0 0
        %6716 = vmatpush1.bf16.msra.mxu0 0
        %6717 = vmatprep.subr.bf16.mxu0 0
        %6718 = vmatpush1.bf16.msra.mxu0 0
        %6719 = vmatprep.subr.bf16.mxu0 0
        %6720 = vmatpush1.bf16.msra.mxu0 0
        %6721 = vmatprep.subr.bf16.mxu0 0
        %6722 = vmatpush1.bf16.msra.mxu0 0
        %6723 = vmatprep.subr.bf16.mxu0 0
        %6724 = vmatpush1.bf16.msra.mxu0 0
        %6725 = vmatprep.subr.bf16.mxu0 0
        %6726 = vmatpush1.bf16.msra.mxu0 0
        %6727 = vmatprep.mubr.bf16.mxu0 0
        %6728 = vmatmul.mubr.bf16.gmra.mrb[0].mxu0 %v6648
        %v6729 = vpop.f32.mrb[0].mxu0
        %v6730 = vadd.f32 %v6639, %v6729
        %v6731 = vpop.f32.mrb[0].mxu0
        %v6732 = vpop.f32.mrb[0].mxu0
        %v6733 = vadd.f32 %v6639, %v6732
        %v6734 = vpop.f32.mrb[0].mxu0
        %6735 = vmatprep.mubr.bf16.mxu0 0
        %6736 = vmatmul.mubr.bf16.gmra.mrb[0].mxu0 %v6651
        %v6737 = vpop.f32.mrb[0].mxu0
        %v6738 = vadd.f32 %v6639, %v6737
        %v6739 = vpop.f32.mrb[0].mxu0
        %v6740 = vpop.f32.mrb[0].mxu0
        %v6741 = vadd.f32 %v6639, %v6740
        %v6742 = vpop.f32.mrb[0].mxu0
        %6743 = vmatprep.mubr.bf16.mxu0 0
        %6744 = vmatmul.mubr.bf16.gmra.mrb[0].mxu0 %v6654
        %v6745 = vpop.f32.mrb[0].mxu0
        %v6746 = vadd.f32 %v6639, %v6745
        %v6747 = vpop.f32.mrb[0].mxu0
        %v6748 = vpop.f32.mrb[0].mxu0
        %v6749 = vadd.f32 %v6639, %v6748
        %v6750 = vpop.f32.mrb[0].mxu0
        %6751 = vmatprep.mubr.bf16.mxu0 0
        %6752 = vmatmul.mubr.bf16.gmra.mrb[0].mxu0 %v6657
        %v6753 = vpop.f32.mrb[0].mxu0
        %v6754 = vadd.f32 %v6639, %v6753
        %v6755 = vpop.f32.mrb[0].mxu0
        %v6756 = vpop.f32.mrb[0].mxu0
        %v6757 = vadd.f32 %v6639, %v6756
        %v6758 = vpop.f32.mrb[0].mxu0
        %6759 = vmatprep.mubr.bf16.mxu0 0
        %6760 = vmatmul.mubr.bf16.gmra.mrb[0].mxu0 %v6660
        %v6761 = vpop.f32.mrb[0].mxu0
        %v6762 = vadd.f32 %v6639, %v6761
        %v6763 = vpop.f32.mrb[0].mxu0
        %v6764 = vpop.f32.mrb[0].mxu0
        %v6765 = vadd.f32 %v6639, %v6764
        %v6766 = vpop.f32.mrb[0].mxu0
        %6767 = vmatprep.mubr.bf16.mxu0 0
        %6768 = vmatmul.mubr.bf16.gmra.mrb[0].mxu0 %v6663
        %v6769 = vpop.f32.mrb[0].mxu0
        %v6770 = vadd.f32 %v6639, %v6769
        %v6771 = vpop.f32.mrb[0].mxu0
        %v6772 = vpop.f32.mrb[0].mxu0
        %v6773 = vadd.f32 %v6639, %v6772
        %v6774 = vpop.f32.mrb[0].mxu0
        %6775 = vmatprep.mubr.bf16.mxu0 0
        %6776 = vmatmul.mubr.bf16.gmra.mrb[0].mxu0 %v6666
        %v6777 = vpop.f32.mrb[0].mxu0
        %v6778 = vadd.f32 %v6639, %v6777
        %v6779 = vpop.f32.mrb[0].mxu0
        %v6780 = vpop.f32.mrb[0].mxu0
        %v6781 = vadd.f32 %v6639, %v6780
        %v6782 = vpop.f32.mrb[0].mxu0
        %6783 = vmatprep.mubr.bf16.mxu0 0
        %6784 = vmatmul.mubr.bf16.gmra.mrb[0].mxu0 %v6669
        %v6785 = vpop.f32.mrb[0].mxu0
        %v6786 = vadd.f32 %v6639, %v6785
        %v6787 = vpop.f32.mrb[0].mxu0
        %v6788 = vpop.f32.mrb[0].mxu0
        %v6789 = vadd.f32 %v6639, %v6788
        %v6790 = vpop.f32.mrb[0].mxu0
        %6791 = vmatprep.mubr.bf16.mxu0 0
        %6792 = vmatmul.mubr.bf16.gmra.mrb[0].mxu0 %v6672
        %v6793 = vpop.f32.mrb[0].mxu0
        %v6794 = vadd.f32 %v6639, %v6793
        %v6795 = vpop.f32.mrb[0].mxu0
        %v6796 = vpop.f32.mrb[0].mxu0
        %v6797 = vadd.f32 %v6639, %v6796
        %v6798 = vpop.f32.mrb[0].mxu0
        %6799 = vmatprep.mubr.bf16.mxu0 0
        %6800 = vmatmul.mubr.bf16.gmra.mrb[0].mxu0 %v6675
        %v6801 = vpop.f32.mrb[0].mxu0
        %v6802 = vadd.f32 %v6639, %v6801
        %v6803 = vpop.f32.mrb[0].mxu0
        %v6804 = vpop.f32.mrb[0].mxu0
        %v6805 = vadd.f32 %v6639, %v6804
        %v6806 = vpop.f32.mrb[0].mxu0
        %6807 = vmatprep.mubr.bf16.mxu0 0
        %6808 = vmatmul.mubr.bf16.gmra.mrb[0].mxu0 %v6678
        %v6809 = vpop.f32.mrb[0].mxu0
        %v6810 = vadd.f32 %v6639, %v6809
        %v6811 = vpop.f32.mrb[0].mxu0
        %v6812 = vpop.f32.mrb[0].mxu0
        %v6813 = vadd.f32 %v6639, %v6812
        %v6814 = vpop.f32.mrb[0].mxu0
        %6815 = vmatprep.mubr.bf16.mxu0 0
        %6816 = vmatmul.mubr.bf16.gmra.mrb[0].mxu0 %v6681
        %v6817 = vpop.f32.mrb[0].mxu0
        %v6818 = vadd.f32 %v6639, %v6817
        %v6819 = vpop.f32.mrb[0].mxu0
        %v6820 = vpop.f32.mrb[0].mxu0
        %v6821 = vadd.f32 %v6639, %v6820
        %v6822 = vpop.f32.mrb[0].mxu0
        %6823 = vmatprep.mubr.bf16.mxu0 0
        %6824 = vmatmul.mubr.bf16.gmra.mrb[0].mxu0 %v6684
        %v6825 = vpop.f32.mrb[0].mxu0
        %v6826 = vadd.f32 %v6639, %v6825
        %v6827 = vpop.f32.mrb[0].mxu0
        %v6828 = vpop.f32.mrb[0].mxu0
        %v6829 = vadd.f32 %v6639, %v6828
        %v6830 = vpop.f32.mrb[0].mxu0
        %6831 = vmatprep.mubr.bf16.mxu0 0
        %6832 = vmatmul.mubr.bf16.gmra.mrb[0].mxu0 %v6687
        %v6833 = vpop.f32.mrb[0].mxu0
        %v6834 = vadd.f32 %v6639, %v6833
        %v6835 = vpop.f32.mrb[0].mxu0
        %v6836 = vpop.f32.mrb[0].mxu0
        %v6837 = vadd.f32 %v6639, %v6836
        %v6838 = vpop.f32.mrb[0].mxu0
        %6839 = vmatprep.mubr.bf16.mxu0 0
        %6840 = vmatmul.mubr.bf16.gmra.mrb[0].mxu0 %v6690
        %v6841 = vpop.f32.mrb[0].mxu0
        %v6842 = vadd.f32 %v6639, %v6841
        %v6843 = vpop.f32.mrb[0].mxu0
        %v6844 = vpop.f32.mrb[0].mxu0
        %v6845 = vadd.f32 %v6639, %v6844
        %v6846 = vpop.f32.mrb[0].mxu0
        %6847 = vmatprep.mubr.bf16.mxu0 0
        %6848 = vmatmul.mubr.bf16.gmra.mrb[0].mxu0 %v6693
        %v6849 = vpop.f32.mrb[0].mxu0
        %v6850 = vadd.f32 %v6639, %v6849
        %v6851 = vpop.f32.mrb[0].mxu0
        %v6852 = vpop.f32.mrb[0].mxu0
        %v6853 = vadd.f32 %v6639, %v6852
        %v6854 = vpop.f32.mrb[0].mxu0
        %6855 = vdwg.mxu0
        %v6856 = vtanh.pop %v6730
        %v6857 = vtanh.pop %v6733
        %v6858 = vtanh.pop %v6738
        %v6859 = vtanh.pop %v6741
        %v6860 = vtanh.pop %v6746
        %v6861 = vtanh.pop %v6749
        %v6862 = vtanh.pop %v6754
        %v6863 = vtanh.pop %v6757
        %v6864 = vtanh.pop %v6762
        %v6865 = vtanh.pop %v6765
        %v6866 = vtanh.pop %v6770
        %v6867 = vtanh.pop %v6773
        %v6868 = vtanh.pop %v6778
        %v6869 = vtanh.pop %v6781
        %v6870 = vtanh.pop %v6786
        %v6871 = vtanh.pop %v6789
        %v6872 = vtanh.pop %v6794
        %v6873 = vtanh.pop %v6797
        %v6874 = vtanh.pop %v6802
        %v6875 = vtanh.pop %v6805
        %v6876 = vtanh.pop %v6810
        %v6877 = vtanh.pop %v6813
        %v6878 = vtanh.pop %v6818
        %v6879 = vtanh.pop %v6821
        %v6880 = vtanh.pop %v6826
        %v6881 = vtanh.pop %v6829
        %v6882 = vtanh.pop %v6834
        %v6883 = vtanh.pop %v6837
        %v6884 = vtanh.pop %v6842
        %v6885 = vtanh.pop %v6845
        %v6886 = vtanh.pop %v6850
        %v6887 = vtanh.pop %v6853
        %v6888 = vpack.c.bf16 %v6857, %v6856
        %v6889 = vpack.c.bf16 %v6859, %v6858
        %v6890 = vpack.c.bf16 %v6861, %v6860
        %v6891 = vpack.c.bf16 %v6863, %v6862
        %v6892 = vpack.c.bf16 %v6865, %v6864
        %v6893 = vpack.c.bf16 %v6867, %v6866
        %v6894 = vpack.c.bf16 %v6869, %v6868
        %v6895 = vpack.c.bf16 %v6871, %v6870
        %v6896 = vpack.c.bf16 %v6873, %v6872
        %v6897 = vpack.c.bf16 %v6875, %v6874
        %v6898 = vpack.c.bf16 %v6877, %v6876
        %v6899 = vpack.c.bf16 %v6879, %v6878
        %v6900 = vpack.c.bf16 %v6881, %v6880
        %v6901 = vpack.c.bf16 %v6883, %v6882
        %v6902 = vpack.c.bf16 %v6885, %v6884
        %v6903 = vpack.c.bf16 %v6887, %v6886
        %v6904 = vld [vmem:[%s7] sm:$0xf]
        %v6905 = vld [vmem:[%s7 + $0x4] sm:$0xf]
        %v6906 = vld [vmem:[%s7 + $0x8] sm:$0xf]
        %v6907 = vld [vmem:[%s7 + $0xc] sm:$0xf]
        %v6908 = vld [vmem:[%s8] sm:$0x1]
        %v6910 = vlaneseq
        %v6911 = vshrl.u32 %v6910, 7
        %v6912 = vsub.s32 0, %v6911
        %v6913 = vrot.slane %v6908, %v6912
        %v6919 = vunpack.c.l.b16 %v6904
        %v6920 = vunpack.c.l.b16 %v6905
        %v6921 = vunpack.c.l.b16 %v6906
        %v6922 = vunpack.c.l.b16 %v6907
        %v6923 = vpack.c.b16 %v6920, %v6919
        %v6924 = vpack.c.b16 %v6922, %v6921
        %v6928 = vsel %vm910, %v6888, 0
        %v6931 = vsel %vm910, %v6889, 0
        %v6934 = vsel %vm910, %v6890, 0
        %v6937 = vsel %vm910, %v6891, 0
        %v6940 = vsel %vm910, %v6892, 0
        %v6943 = vsel %vm910, %v6893, 0
        %v6946 = vsel %vm910, %v6894, 0
        %v6949 = vsel %vm910, %v6895, 0
        %v6952 = vsel %vm910, %v6896, 0
        %v6955 = vsel %vm910, %v6897, 0
        %v6958 = vsel %vm910, %v6898, 0
        %v6961 = vsel %vm910, %v6899, 0
        %v6964 = vsel %vm910, %v6900, 0
        %v6967 = vsel %vm910, %v6901, 0
        %v6970 = vsel %vm910, %v6902, 0
        %v6973 = vsel %vm910, %v6903, 0
        %6975 = vmatprep.subr.bf16.mxu0 0
        %6976 = vmatpush1.bf16.msra.mxu0 %v6923
        %6977 = vmatprep.subr.bf16.mxu0 0
        %6978 = vmatpush1.bf16.msra.mxu0 %v6924
        %6979 = vmatprep.subr.bf16.mxu0 0
        %6980 = vmatpush1.bf16.msra.mxu0 0
        %6981 = vmatprep.subr.bf16.mxu0 0
        %6982 = vmatpush1.bf16.msra.mxu0 0
        %6983 = vmatprep.subr.bf16.mxu0 0
        %6984 = vmatpush1.bf16.msra.mxu0 0
        %6985 = vmatprep.subr.bf16.mxu0 0
        %6986 = vmatpush1.bf16.msra.mxu0 0
        %6987 = vmatprep.subr.bf16.mxu0 0
        %6988 = vmatpush1.bf16.msra.mxu0 0
        %6989 = vmatprep.subr.bf16.mxu0 0
        %6990 = vmatpush1.bf16.msra.mxu0 0
        %6991 = vmatprep.subr.bf16.mxu0 0
        %6992 = vmatpush1.bf16.msra.mxu0 0
        %6993 = vmatprep.subr.bf16.mxu0 0
        %6994 = vmatpush1.bf16.msra.mxu0 0
        %6995 = vmatprep.subr.bf16.mxu0 0
        %6996 = vmatpush1.bf16.msra.mxu0 0
        %6997 = vmatprep.subr.bf16.mxu0 0
        %6998 = vmatpush1.bf16.msra.mxu0 0
        %6999 = vmatprep.subr.bf16.mxu0 0
        %7000 = vmatpush1.bf16.msra.mxu0 0
        %7001 = vmatprep.subr.bf16.mxu0 0
        %7002 = vmatpush1.bf16.msra.mxu0 0
        %7003 = vmatprep.subr.bf16.mxu0 0
        %7004 = vmatpush1.bf16.msra.mxu0 0
        %7005 = vmatprep.subr.bf16.mxu0 0
        %7006 = vmatpush1.bf16.msra.mxu0 0
        %7007 = vmatprep.mubr.bf16.mxu0 0
        %7008 = vmatmul.mubr.bf16.gmra.mrb[0].mxu0 %v6928
        %v7009 = vpop.f32.mrb[0].mxu0
        %v7010 = vadd.f32 %v6913, %v7009
        %v7011 = vpop.f32.mrb[0].mxu0
        %v7012 = vpop.f32.mrb[0].mxu0
        %v7013 = vadd.f32 %v6913, %v7012
        %v7014 = vpop.f32.mrb[0].mxu0
        %7015 = vmatprep.mubr.bf16.mxu0 0
        %7016 = vmatmul.mubr.bf16.gmra.mrb[0].mxu0 %v6931
        %v7017 = vpop.f32.mrb[0].mxu0
        %v7018 = vadd.f32 %v6913, %v7017
        %v7019 = vpop.f32.mrb[0].mxu0
        %v7020 = vpop.f32.mrb[0].mxu0
        %v7021 = vadd.f32 %v6913, %v7020
        %v7022 = vpop.f32.mrb[0].mxu0
        %7023 = vmatprep.mubr.bf16.mxu0 0
        %7024 = vmatmul.mubr.bf16.gmra.mrb[0].mxu0 %v6934
        %v7025 = vpop.f32.mrb[0].mxu0
        %v7026 = vadd.f32 %v6913, %v7025
        %v7027 = vpop.f32.mrb[0].mxu0
        %v7028 = vpop.f32.mrb[0].mxu0
        %v7029 = vadd.f32 %v6913, %v7028
        %v7030 = vpop.f32.mrb[0].mxu0
        %7031 = vmatprep.mubr.bf16.mxu0 0
        %7032 = vmatmul.mubr.bf16.gmra.mrb[0].mxu0 %v6937
        %v7033 = vpop.f32.mrb[0].mxu0
        %v7034 = vadd.f32 %v6913, %v7033
        %v7035 = vpop.f32.mrb[0].mxu0
        %v7036 = vpop.f32.mrb[0].mxu0
        %v7037 = vadd.f32 %v6913, %v7036
        %v7038 = vpop.f32.mrb[0].mxu0
        %7039 = vmatprep.mubr.bf16.mxu0 0
        %7040 = vmatmul.mubr.bf16.gmra.mrb[0].mxu0 %v6940
        %v7041 = vpop.f32.mrb[0].mxu0
        %v7042 = vadd.f32 %v6913, %v7041
        %v7043 = vpop.f32.mrb[0].mxu0
        %v7044 = vpop.f32.mrb[0].mxu0
        %v7045 = vadd.f32 %v6913, %v7044
        %v7046 = vpop.f32.mrb[0].mxu0
        %7047 = vmatprep.mubr.bf16.mxu0 0
        %7048 = vmatmul.mubr.bf16.gmra.mrb[0].mxu0 %v6943
        %v7049 = vpop.f32.mrb[0].mxu0
        %v7050 = vadd.f32 %v6913, %v7049
        %v7051 = vpop.f32.mrb[0].mxu0
        %v7052 = vpop.f32.mrb[0].mxu0
        %v7053 = vadd.f32 %v6913, %v7052
        %v7054 = vpop.f32.mrb[0].mxu0
        %7055 = vmatprep.mubr.bf16.mxu0 0
        %7056 = vmatmul.mubr.bf16.gmra.mrb[0].mxu0 %v6946
        %v7057 = vpop.f32.mrb[0].mxu0
        %v7058 = vadd.f32 %v6913, %v7057
        %v7059 = vpop.f32.mrb[0].mxu0
        %v7060 = vpop.f32.mrb[0].mxu0
        %v7061 = vadd.f32 %v6913, %v7060
        %v7062 = vpop.f32.mrb[0].mxu0
        %7063 = vmatprep.mubr.bf16.mxu0 0
        %7064 = vmatmul.mubr.bf16.gmra.mrb[0].mxu0 %v6949
        %v7065 = vpop.f32.mrb[0].mxu0
        %v7066 = vadd.f32 %v6913, %v7065
        %v7067 = vpop.f32.mrb[0].mxu0
        %v7068 = vpop.f32.mrb[0].mxu0
        %v7069 = vadd.f32 %v6913, %v7068
        %v7070 = vpop.f32.mrb[0].mxu0
        %7071 = vmatprep.mubr.bf16.mxu0 0
        %7072 = vmatmul.mubr.bf16.gmra.mrb[0].mxu0 %v6952
        %v7073 = vpop.f32.mrb[0].mxu0
        %v7074 = vadd.f32 %v6913, %v7073
        %v7075 = vpop.f32.mrb[0].mxu0
        %v7076 = vpop.f32.mrb[0].mxu0
        %v7077 = vadd.f32 %v6913, %v7076
        %v7078 = vpop.f32.mrb[0].mxu0
        %7079 = vmatprep.mubr.bf16.mxu0 0
        %7080 = vmatmul.mubr.bf16.gmra.mrb[0].mxu0 %v6955
        %v7081 = vpop.f32.mrb[0].mxu0
        %v7082 = vadd.f32 %v6913, %v7081
        %v7083 = vpop.f32.mrb[0].mxu0
        %v7084 = vpop.f32.mrb[0].mxu0
        %v7085 = vadd.f32 %v6913, %v7084
        %v7086 = vpop.f32.mrb[0].mxu0
        %7087 = vmatprep.mubr.bf16.mxu0 0
        %7088 = vmatmul.mubr.bf16.gmra.mrb[0].mxu0 %v6958
        %v7089 = vpop.f32.mrb[0].mxu0
        %v7090 = vadd.f32 %v6913, %v7089
        %v7091 = vpop.f32.mrb[0].mxu0
        %v7092 = vpop.f32.mrb[0].mxu0
        %v7093 = vadd.f32 %v6913, %v7092
        %v7094 = vpop.f32.mrb[0].mxu0
        %7095 = vmatprep.mubr.bf16.mxu0 0
        %7096 = vmatmul.mubr.bf16.gmra.mrb[0].mxu0 %v6961
        %v7097 = vpop.f32.mrb[0].mxu0
        %v7098 = vadd.f32 %v6913, %v7097
        %v7099 = vpop.f32.mrb[0].mxu0
        %v7100 = vpop.f32.mrb[0].mxu0
        %v7101 = vadd.f32 %v6913, %v7100
        %v7102 = vpop.f32.mrb[0].mxu0
        %7103 = vmatprep.mubr.bf16.mxu0 0
        %7104 = vmatmul.mubr.bf16.gmra.mrb[0].mxu0 %v6964
        %v7105 = vpop.f32.mrb[0].mxu0
        %v7106 = vadd.f32 %v6913, %v7105
        %v7107 = vpop.f32.mrb[0].mxu0
        %v7108 = vpop.f32.mrb[0].mxu0
        %v7109 = vadd.f32 %v6913, %v7108
        %v7110 = vpop.f32.mrb[0].mxu0
        %7111 = vmatprep.mubr.bf16.mxu0 0
        %7112 = vmatmul.mubr.bf16.gmra.mrb[0].mxu0 %v6967
        %v7113 = vpop.f32.mrb[0].mxu0
        %v7114 = vadd.f32 %v6913, %v7113
        %v7115 = vpop.f32.mrb[0].mxu0
        %v7116 = vpop.f32.mrb[0].mxu0
        %v7117 = vadd.f32 %v6913, %v7116
        %v7118 = vpop.f32.mrb[0].mxu0
        %7119 = vmatprep.mubr.bf16.mxu0 0
        %7120 = vmatmul.mubr.bf16.gmra.mrb[0].mxu0 %v6970
        %v7121 = vpop.f32.mrb[0].mxu0
        %v7122 = vadd.f32 %v6913, %v7121
        %v7123 = vpop.f32.mrb[0].mxu0
        %v7124 = vpop.f32.mrb[0].mxu0
        %v7125 = vadd.f32 %v6913, %v7124
        %v7126 = vpop.f32.mrb[0].mxu0
        %7127 = vmatprep.mubr.bf16.mxu0 0
        %7128 = vmatmul.mubr.bf16.gmra.mrb[0].mxu0 %v6973
        %v7129 = vpop.f32.mrb[0].mxu0
        %v7130 = vadd.f32 %v6913, %v7129
        %v7131 = vpop.f32.mrb[0].mxu0
        %v7132 = vpop.f32.mrb[0].mxu0
        %v7133 = vadd.f32 %v6913, %v7132
        %v7134 = vpop.f32.mrb[0].mxu0
        %7135 = vdwg.mxu0
        %7136 = vst.msk [vmem:[%s551] sm:$0xff] %vm629, %v994
        %7137 = vst.msk [vmem:[%s551 + $0x8] sm:$0xff] %vm629, %v997
        %7138 = vst.msk [vmem:[%s551 + $0x10] sm:$0xff] %vm629, %v1002
        %7139 = vst.msk [vmem:[%s551 + $0x18] sm:$0xff] %vm629, %v1005
        %7140 = vst.msk [vmem:[%s551 + $0x20] sm:$0xff] %vm629, %v1010
        %7141 = vst.msk [vmem:[%s551 + $0x28] sm:$0xff] %vm629, %v1013
        %7142 = vst.msk [vmem:[%s551 + $0x30] sm:$0xff] %vm629, %v1018
        %7143 = vst.msk [vmem:[%s551 + $0x38] sm:$0xff] %vm629, %v1021
        %7144 = vst.msk [vmem:[%s551 + $0x40] sm:$0xff] %vm629, %v1026
        %7145 = vst.msk [vmem:[%s551 + $0x48] sm:$0xff] %vm629, %v1029
        %7146 = vst.msk [vmem:[%s551 + $0x50] sm:$0xff] %vm629, %v1034
        %7147 = vst.msk [vmem:[%s551 + $0x58] sm:$0xff] %vm629, %v1037
        %7148 = vst.msk [vmem:[%s551 + $0x60] sm:$0xff] %vm629, %v1042
        %7149 = vst.msk [vmem:[%s551 + $0x68] sm:$0xff] %vm629, %v1045
        %7150 = vst.msk [vmem:[%s551 + $0x70] sm:$0xff] %vm629, %v1050
        %7151 = vst.msk [vmem:[%s551 + $0x78] sm:$0xff] %vm629, %v1053
        %7152 = vst.msk [vmem:[%s551 + $0x80] sm:$0xff] %vm629, %v1058
        %7153 = vst.msk [vmem:[%s551 + $0x88] sm:$0xff] %vm629, %v1061
        %7154 = vst.msk [vmem:[%s551 + $0x90] sm:$0xff] %vm629, %v1066
        %7155 = vst.msk [vmem:[%s551 + $0x98] sm:$0xff] %vm629, %v1069
        %7156 = vst.msk [vmem:[%s551 + $0xa0] sm:$0xff] %vm629, %v1074
        %7157 = vst.msk [vmem:[%s551 + $0xa8] sm:$0xff] %vm629, %v1077
        %7158 = vst.msk [vmem:[%s551 + $0xb0] sm:$0xff] %vm629, %v1082
        %7159 = vst.msk [vmem:[%s551 + $0xb8] sm:$0xff] %vm629, %v1085
        %7160 = vst.msk [vmem:[%s551 + $0xc0] sm:$0xff] %vm629, %v1090
        %7161 = vst.msk [vmem:[%s551 + $0xc8] sm:$0xff] %vm629, %v1093
        %7162 = vst.msk [vmem:[%s551 + $0xd0] sm:$0xff] %vm629, %v1098
        %7163 = vst.msk [vmem:[%s551 + $0xd8] sm:$0xff] %vm629, %v1101
        %7164 = vst.msk [vmem:[%s551 + $0xe0] sm:$0xff] %vm629, %v1106
        %7165 = vst.msk [vmem:[%s551 + $0xe8] sm:$0xff] %vm629, %v1109
        %7166 = vst.msk [vmem:[%s551 + $0xf0] sm:$0xff] %vm629, %v1114
        %7167 = vst.msk [vmem:[%s551 + $0xf8] sm:$0xff] %vm629, %v1117
        %vm7168 = vcmask 64512
        %7169 = vst.msk [vmem:[%s557] sm:$0xff] %vm7168, %v6584
        %7170 = vst.msk [vmem:[%s557 + $0x8] sm:$0xff] %vm7168, %v6585
        %7171 = vst.msk [vmem:[%s557 + $0x10] sm:$0xff] %vm7168, %v6586
        %7172 = vst.msk [vmem:[%s557 + $0x18] sm:$0xff] %vm7168, %v6587
        %7173 = vst.msk [vmem:[%s557 + $0x20] sm:$0xff] %vm7168, %v6588
        %7174 = vst.msk [vmem:[%s557 + $0x28] sm:$0xff] %vm7168, %v6589
        %7175 = vst.msk [vmem:[%s557 + $0x30] sm:$0xff] %vm7168, %v6590
        %7176 = vst.msk [vmem:[%s557 + $0x38] sm:$0xff] %vm7168, %v6591
        %7177 = vst.msk [vmem:[%s557 + $0x40] sm:$0xff] %vm7168, %v6592
        %7178 = vst.msk [vmem:[%s557 + $0x48] sm:$0xff] %vm7168, %v6593
        %7179 = vst.msk [vmem:[%s557 + $0x50] sm:$0xff] %vm7168, %v6594
        %7180 = vst.msk [vmem:[%s557 + $0x58] sm:$0xff] %vm7168, %v6595
        %7181 = vst.msk [vmem:[%s557 + $0x60] sm:$0xff] %vm7168, %v6596
        %7182 = vst.msk [vmem:[%s557 + $0x68] sm:$0xff] %vm7168, %v6597
        %7183 = vst.msk [vmem:[%s557 + $0x70] sm:$0xff] %vm7168, %v6598
        %7184 = vst.msk [vmem:[%s557 + $0x78] sm:$0xff] %vm7168, %v6599
        %7185 = vst.msk [vmem:[%s557 + $0x80] sm:$0xff] %vm7168, %v6600
        %7186 = vst.msk [vmem:[%s557 + $0x88] sm:$0xff] %vm7168, %v6601
        %7187 = vst.msk [vmem:[%s557 + $0x90] sm:$0xff] %vm7168, %v6602
        %7188 = vst.msk [vmem:[%s557 + $0x98] sm:$0xff] %vm7168, %v6603
        %7189 = vst.msk [vmem:[%s557 + $0xa0] sm:$0xff] %vm7168, %v6604
        %7190 = vst.msk [vmem:[%s557 + $0xa8] sm:$0xff] %vm7168, %v6605
        %7191 = vst.msk [vmem:[%s557 + $0xb0] sm:$0xff] %vm7168, %v6606
        %7192 = vst.msk [vmem:[%s557 + $0xb8] sm:$0xff] %vm7168, %v6607
        %7193 = vst.msk [vmem:[%s557 + $0xc0] sm:$0xff] %vm7168, %v6608
        %7194 = vst.msk [vmem:[%s557 + $0xc8] sm:$0xff] %vm7168, %v6609
        %7195 = vst.msk [vmem:[%s557 + $0xd0] sm:$0xff] %vm7168, %v6610
        %7196 = vst.msk [vmem:[%s557 + $0xd8] sm:$0xff] %vm7168, %v6611
        %7197 = vst.msk [vmem:[%s557 + $0xe0] sm:$0xff] %vm7168, %v6612
        %7198 = vst.msk [vmem:[%s557 + $0xe8] sm:$0xff] %vm7168, %v6613
        %7199 = vst.msk [vmem:[%s557 + $0xf0] sm:$0xff] %vm7168, %v6614
        %7200 = vst.msk [vmem:[%s557 + $0xf8] sm:$0xff] %vm7168, %v6615
        %7201 = vst.msk [vmem:[%s563] sm:$0xff] %vm629, %v7010
        %7202 = vst.msk [vmem:[%s563 + $0x8] sm:$0xff] %vm629, %v7013
        %7203 = vst.msk [vmem:[%s563 + $0x10] sm:$0xff] %vm629, %v7018
        %7204 = vst.msk [vmem:[%s563 + $0x18] sm:$0xff] %vm629, %v7021
        %7205 = vst.msk [vmem:[%s563 + $0x20] sm:$0xff] %vm629, %v7026
        %7206 = vst.msk [vmem:[%s563 + $0x28] sm:$0xff] %vm629, %v7029
        %7207 = vst.msk [vmem:[%s563 + $0x30] sm:$0xff] %vm629, %v7034
        %7208 = vst.msk [vmem:[%s563 + $0x38] sm:$0xff] %vm629, %v7037
        %7209 = vst.msk [vmem:[%s563 + $0x40] sm:$0xff] %vm629, %v7042
        %7210 = vst.msk [vmem:[%s563 + $0x48] sm:$0xff] %vm629, %v7045
        %7211 = vst.msk [vmem:[%s563 + $0x50] sm:$0xff] %vm629, %v7050
        %7212 = vst.msk [vmem:[%s563 + $0x58] sm:$0xff] %vm629, %v7053
        %7213 = vst.msk [vmem:[%s563 + $0x60] sm:$0xff] %vm629, %v7058
        %7214 = vst.msk [vmem:[%s563 + $0x68] sm:$0xff] %vm629, %v7061
        %7215 = vst.msk [vmem:[%s563 + $0x70] sm:$0xff] %vm629, %v7066
        %7216 = vst.msk [vmem:[%s563 + $0x78] sm:$0xff] %vm629, %v7069
        %7217 = vst.msk [vmem:[%s563 + $0x80] sm:$0xff] %vm629, %v7074
        %7218 = vst.msk [vmem:[%s563 + $0x88] sm:$0xff] %vm629, %v7077
        %7219 = vst.msk [vmem:[%s563 + $0x90] sm:$0xff] %vm629, %v7082
        %7220 = vst.msk [vmem:[%s563 + $0x98] sm:$0xff] %vm629, %v7085
        %7221 = vst.msk [vmem:[%s563 + $0xa0] sm:$0xff] %vm629, %v7090
        %7222 = vst.msk [vmem:[%s563 + $0xa8] sm:$0xff] %vm629, %v7093
        %7223 = vst.msk [vmem:[%s563 + $0xb0] sm:$0xff] %vm629, %v7098
        %7224 = vst.msk [vmem:[%s563 + $0xb8] sm:$0xff] %vm629, %v7101
        %7225 = vst.msk [vmem:[%s563 + $0xc0] sm:$0xff] %vm629, %v7106
        %7226 = vst.msk [vmem:[%s563 + $0xc8] sm:$0xff] %vm629, %v7109
        %7227 = vst.msk [vmem:[%s563 + $0xd0] sm:$0xff] %vm629, %v7114
        %7228 = vst.msk [vmem:[%s563 + $0xd8] sm:$0xff] %vm629, %v7117
        %7229 = vst.msk [vmem:[%s563 + $0xe0] sm:$0xff] %vm629, %v7122
        %7230 = vst.msk [vmem:[%s563 + $0xe8] sm:$0xff] %vm629, %v7125
        %7231 = vst.msk [vmem:[%s563 + $0xf0] sm:$0xff] %vm629, %v7130
        %7232 = vst.msk [vmem:[%s563 + $0xf8] sm:$0xff] %vm629, %v7133
        %s7233 = smul.u32 32, %s30
        %p7234 = scmp.lt.s32.totalorder %s7233, 63
        %s7235 = scalar_select %p7234, %s7233, 63
        %s7236 = smul.addr %s7235, 8
        %s7237 = scalar_lea.vmem %s13, %s7236
        %s7238 = smul.u32 32, %s30
        %p7239 = scmp.lt.s32.totalorder %s7238, 63
        %s7240 = scalar_select %p7239, %s7238, 63
        %s7241 = smul.addr %s7240, 8
        %s7242 = scalar_lea.vmem %s14, %s7241
        %s7243 = smul.u32 32, %s30
        %p7244 = scmp.lt.s32.totalorder %s7243, 63
        %s7245 = scalar_select %p7244, %s7243, 63
        %s7246 = smul.addr %s7245, 8
        %s7247 = scalar_lea.vmem %s15, %s7246
        // Predicated region
        $region85: #{tpu_custom_call.1} parent=71 // pred_check
          %p7248 = pneg %p326
        $region86: #{tpu_custom_call.1} parent=71 // pred_check_branch
          %7250 = sbr.rel (%p7248) target = $region88
        $region87: #{tpu_custom_call.1} parent=71 // pred_region
          %s7251 = smul.u32 32, %s30
        $region88: #{tpu_custom_call.1} parent=71 // pred_fallthru
          _
        // Predicated region
        $region89: #{tpu_custom_call.1} parent=71 // pred_check
          %p7252 = pneg %p352
        $region90: #{tpu_custom_call.1} parent=71 // pred_check_branch
          %7254 = sbr.rel (%p7252) target = $region92
        $region91: #{tpu_custom_call.1} parent=71 // pred_region
          %s7255 = smul.u32 32, %s30
        $region92: #{tpu_custom_call.1} parent=71 // pred_fallthru
          _
        // Predicated region
        $region93: #{tpu_custom_call.1} parent=71 // pred_check
          %p7256 = pneg %p378
        $region94: #{tpu_custom_call.1} parent=71 // pred_check_branch
          %7258 = sbr.rel (%p7256) target = $region96
        $region95: #{tpu_custom_call.1} parent=71 // pred_region
          %s7259 = smul.u32 32, %s30
        $region96: #{tpu_custom_call.1} parent=71 // pred_fallthru
          _
      $region72: #{tpu_custom_call.1} parent=5 // pred_fallthru
        _
      %p7260 = scmp.le.s32.totalorder 2, %s25
      // Predicated region
      $region97: #{tpu_custom_call.1} parent=5 // pred_check
        %p7261 = pneg %p7260
      $region98: #{tpu_custom_call.1} parent=5 // pred_check_branch
        %7263 = sbr.rel (%p7261) target = $region100
      $region99: #{tpu_custom_call.1} parent=5 // pred_region
        %s7264 = ssub.s32 %s25, 2
        // Predicated region
        $region101: #{tpu_custom_call.1} parent=99 // pred_check
          %p7265 = pneg %p332
        $region102: #{tpu_custom_call.1} parent=99 // pred_check_branch
          %7267 = sbr.rel (%p7265) target = $region104
        $region103: #{tpu_custom_call.1} parent=99 // pred_region
          %s7268 = smul.u32 32, %s31
          %p7269 = scmp.lt.s32.totalorder %s7268, 63
          %s7270 = scalar_select %p7269, %s7268, 63
          %s7271 = smul.addr %s7270, 8
          %s7272 = scalar_lea.vmem %s13, %s7271
        $region104: #{tpu_custom_call.1} parent=99 // pred_fallthru
          _
        // Predicated region
        $region105: #{tpu_custom_call.1} parent=99 // pred_check
          %p7273 = pneg %p358
        $region106: #{tpu_custom_call.1} parent=99 // pred_check_branch
          %7275 = sbr.rel (%p7273) target = $region108
        $region107: #{tpu_custom_call.1} parent=99 // pred_region
          %s7276 = smul.u32 32, %s31
          %p7277 = scmp.lt.s32.totalorder %s7276, 63
          %s7278 = scalar_select %p7277, %s7276, 63
          %s7279 = smul.addr %s7278, 8
          %s7280 = scalar_lea.vmem %s14, %s7279
        $region108: #{tpu_custom_call.1} parent=99 // pred_fallthru
          _
        // Predicated region
        $region109: #{tpu_custom_call.1} parent=99 // pred_check
          %p7281 = pneg %p384
        $region110: #{tpu_custom_call.1} parent=99 // pred_check_branch
          %7283 = sbr.rel (%p7281) target = $region112
        $region111: #{tpu_custom_call.1} parent=99 // pred_region
          %s7284 = smul.u32 32, %s31
          %p7285 = scmp.lt.s32.totalorder %s7284, 63
          %s7286 = scalar_select %p7285, %s7284, 63
          %s7287 = smul.addr %s7286, 8
          %s7288 = scalar_lea.vmem %s15, %s7287
        $region112: #{tpu_custom_call.1} parent=99 // pred_fallthru
          _
      $region100: #{tpu_custom_call.1} parent=5 // pred_fallthru
        _
    $region6: #{tpu_custom_call.1} parent=1 // loop_footer
      %s29 = sadd.s32 1, %s25
    $region7: #{tpu_custom_call.1} parent=1 // loop_footer_branch
      %24 = sbr.rel target = $region3
    $region8: #{tpu_custom_call.1} parent=1 // loop_exit
      _
    %7289 = vsyncpa [#allocation4], 1
    %s7290 = scalar_lea.sflag [#allocation4], 1
    %7291 = vsyncpa %s7290, 1
    %7292 = vsyncpa [#allocation6], 1

</llo_original>
